<compile_context>
chip_gen: v5e
topology: v5e:2x2
jax: 0.10.0
libtpu: 0.0.40
codegen_flags: <defaults>
</compile_context>

<pallas_src>
import functools

import jax
import jax.numpy as jnp
from jax.experimental import pallas as pl
from jax.experimental.pallas import tpu as pltpu


def _self_attn_kernel(x_ref, wqkv_ref, wfc_ref, ln_ref, out_ref, attn_ref,
                      *, batch, seq, n_head, d_k, d_v, eps):
    B, L, H = batch, seq, n_head
    hk = H * d_k

    x = x_ref[...]                                    # [B*L, D] f32 (also the residual)

    # ---- fused QKV projection: one bf16 MXU pass, f32 accumulation ----
    qkv = jnp.dot(x.astype(jnp.bfloat16), wqkv_ref[...],
                  preferred_element_type=jnp.float32)           # [B*L, H*(2*d_k + d_v)]

    # ---- head-major Q/K/V: [B*H, L, d] via aligned slices + leading-axis stack ----
    # (d_k = d_v = 256 and L = 8 keep every slice vreg-aligned; cheaper and safer than an
    #  in-kernel relayout transpose at these tiny shapes.)
    def split_heads(col0, d):
        return jnp.stack(
            [qkv[b * L:(b + 1) * L, col0 + h * d: col0 + (h + 1) * d]
             for b in range(B) for h in range(H)], axis=0)      # [B*H, L, d]

    q_h = split_heads(0, d_k)
    k_h = split_heads(hk, d_k)
    v_h = split_heads(2 * hk, d_v)

    # ---- scaled dot-product attention, all B*H (batch, head) pairs batched ----
    inv_temp = 1.0 / (d_k ** 0.5)
    s = jnp.einsum("gqd,gkd->gqk", q_h, k_h,
                   preferred_element_type=jnp.float32) * inv_temp      # [B*H, L, L]
    s = s - jnp.max(s, axis=-1, keepdims=True)
    e = jnp.exp(s)
    denom = jnp.sum(e, axis=-1, keepdims=True)
    r = pl.reciprocal(denom, approx=True)         # EUP slot
    r = r * (2.0 - denom * r)                     # one Newton step -> near-exact 1/denom
    attn = e * r                                                        # [B*H, L, L]

    attn_ref[...] = attn.astype(attn_ref.dtype)

    ctx = jnp.einsum("gqk,gkd->gqd", attn, v_h,
                     preferred_element_type=jnp.float32)                # [B*H, L, d_v]

    # concat heads along lanes (256-aligned) and batches along sublanes (8-aligned)
    o = jnp.concatenate(
        [jnp.concatenate([ctx[b * H + h] for h in range(H)], axis=-1)
         for b in range(B)], axis=0)                                    # [B*L, H*d_v]

    # output projection: w_fc arrives as bf16 (half the HBM traffic), upcast once in VMEM
    # so the fc matmul keeps the previously validated f32 precision.
    o = jnp.dot(o, wfc_ref[...].astype(jnp.float32),
                preferred_element_type=jnp.float32)                     # [B*L, D]

    # residual + LayerNorm(d_model, eps=1e-6)
    o = o + x
    mu = jnp.mean(o, axis=-1, keepdims=True)
    var = jnp.mean((o - mu) * (o - mu), axis=-1, keepdims=True)
    o = (o - mu) * jax.lax.rsqrt(var + eps)
    o = o * ln_ref[0] + ln_ref[1]

    out_ref[...] = o.astype(out_ref.dtype)


def self_attention_block(x, params, *, n_head, d_k, d_v, eps=1e-6):
    """x: [B, L, D] f32. Returns (out [B, L, D], attn [B, H, L, L])."""
    B, L, D = x.shape
    H = n_head

    # Wrapper-side packing (free under XLA):
    #   * Wq|Wk|Wv fused into one [D, H*(2*d_k + d_v)] weight -> one MXU operand, one DMA.
    #   * weights stored/streamed as bf16 (halves the dominant HBM weight traffic);
    #     activations / residual / LayerNorm stay f32, matmuls accumulate in f32.
    #   * gamma/beta packed into one [2, D] param.
    w_qkv = jnp.concatenate([params["wq"], params["wk"], params["wv"]],
                            axis=1).astype(jnp.bfloat16)        # [D, H*(2*d_k + d_v)]
    w_fc = params["wfc"].astype(jnp.bfloat16)                   # [H*d_v, D]
    ln = jnp.stack([params["gamma"], params["beta"]], axis=0).astype(jnp.float32)

    kernel = functools.partial(_self_attn_kernel, batch=B, seq=L,
                               n_head=H, d_k=d_k, d_v=d_v, eps=eps)

    # No grid: single invocation, whole arrays resident in VMEM, single-buffered inputs
    # (no double-buffering of the constant weights), no per-step overhead.
    vmem = pl.BlockSpec(memory_space=pltpu.MemorySpace.VMEM)

    out2d, attn_g = pl.pallas_call(
        kernel,
        out_shape=(
            jax.ShapeDtypeStruct((B * L, D), x.dtype),           # lane-dense (D = 256)
            jax.ShapeDtypeStruct((B * H, L, L), jnp.float32),
        ),
        in_specs=[vmem, vmem, vmem, vmem],
        out_specs=(vmem, vmem),
    )(x.reshape(B * L, D), w_qkv, w_fc, ln)

    return out2d.reshape(B, L, D), attn_g.reshape(B, H, L, L)


def _reference(x, params, *, n_head, d_k, d_v, eps=1e-6):
    """Pure-JAX mirror of the PyTorch forward (q=k=v=x, dropout = identity), using the
    same bf16 weight quantization the kernel applies."""
    B, L, D = x.shape
    rt = lambda a: a.astype(jnp.bfloat16).astype(jnp.float32)   # mirror kernel quantization
    residual = x
    xq = rt(x)
    Q = (xq @ rt(params["wq"])).reshape(B, L, n_head, d_k).transpose(0, 2, 1, 3)
    K = (xq @ rt(params["wk"])).reshape(B, L, n_head, d_k).transpose(0, 2, 1, 3)
    V = (xq @ rt(params["wv"])).reshape(B, L, n_head, d_v).transpose(0, 2, 1, 3)
    s = jnp.einsum("bhqd,bhkd->bhqk", Q / (d_k ** 0.5), K)
    attn = jax.nn.softmax(s, axis=-1)
    o = jnp.einsum("bhqk,bhkd->bhqd", attn, V)
    o = o.transpose(0, 2, 1, 3).reshape(B, L, n_head * d_v)
    o = o @ rt(params["wfc"])
    o = o + residual
    mu = jnp.mean(o, axis=-1, keepdims=True)
    var = jnp.mean((o - mu) ** 2, axis=-1, keepdims=True)
    o = (o - mu) / jnp.sqrt(var + eps)
    o = o * params["gamma"] + params["beta"]
    return o, attn


if __name__ == "__main__":
    # SelfAttentionBlock1 hard-codes n_head=8, d_model=256, d_k=d_v=256 (all bias=False).
    B, L = 2, 8
    n_head, d_model, d_k, d_v = 8, 256, 256, 256

    key = jax.random.PRNGKey(0)
    kx, kwq, kwk, kwv, kwf = jax.random.split(key, 5)

    x = jax.random.normal(kx, (B, L, d_model), dtype=jnp.float32)

    params = {
        "wq": jax.random.normal(kwq, (d_model, n_head * d_k), jnp.float32) * (d_model ** -0.5),
        "wk": jax.random.normal(kwk, (d_model, n_head * d_k), jnp.float32) * (d_model ** -0.5),
        "wv": jax.random.normal(kwv, (d_model, n_head * d_v), jnp.float32) * (d_model ** -0.5),
        "wfc": jax.random.normal(kwf, (n_head * d_v, d_model), jnp.float32)
               * ((n_head * d_v) ** -0.5),
        "gamma": jnp.ones((d_model,), jnp.float32),   # LayerNorm weight
        "beta": jnp.zeros((d_model,), jnp.float32),   # LayerNorm bias
    }

    out, attn = self_attention_block(x, params, n_head=n_head, d_k=d_k, d_v=d_v)
    out = jax.block_until_ready(out)
    attn = jax.block_until_ready(attn)

    ref_out, ref_attn = _reference(x, params, n_head=n_head, d_k=d_k, d_v=d_v)

    assert out.shape == (B, L, d_model)
    assert attn.shape == (B, n_head, L, L)
    attn_err = float(jnp.max(jnp.abs(attn - ref_attn)))
    out_err = float(jnp.max(jnp.abs(out - ref_out)))
    assert jnp.allclose(attn, ref_attn, atol=2e-3, rtol=2e-3), attn_err
    assert jnp.allclose(out, ref_out, atol=3e-3, rtol=3e-3), out_err

    print("KERNEL_OK")
</pallas_src>

<mosaic_0001>
module attributes {stable_mosaic.version = 11 : i64} {
  func.func @_self_attn_kernel(%arg0: memref<16x256xf32, #tpu.memory_space<vmem>>, %arg1: memref<256x6144xbf16, #tpu.memory_space<vmem>>, %arg2: memref<2048x256xbf16, #tpu.memory_space<vmem>>, %arg3: memref<2x256xf32, #tpu.memory_space<vmem>>, %arg4: memref<16x256xf32, #tpu.memory_space<vmem>>, %arg5: memref<16x8x8xf32, #tpu.memory_space<vmem>>) attributes {dimension_semantics = [], scalar_prefetch = 0 : i64, scratch_operands = 0 : i64, tpu.core_type = #tpu.core_type<tc>} {
    %c0 = arith.constant 0 : index
    %c0_0 = arith.constant 0 : index
    %0 = vector.load %arg0[%c0, %c0_0] : memref<16x256xf32, #tpu.memory_space<vmem>>, vector<16x256xf32>
    %1 = arith.truncf %0 : vector<16x256xf32> to vector<16x256xbf16>
    %c0_1 = arith.constant 0 : index
    %c0_2 = arith.constant 0 : index
    %2 = vector.load %arg1[%c0_1, %c0_2] : memref<256x6144xbf16, #tpu.memory_space<vmem>>, vector<256x6144xbf16>
    %cst = arith.constant dense<0.000000e+00> : vector<16x6144xf32>
    %3 = tpu.matmul %1, %2, %cst {dimension_numbers = #tpu.dot_dimension_numbers<[1], [0], [0], [1], [0, 0, 1, 1], [], []>} : vector<16x256xbf16>, vector<256x6144xbf16>, vector<16x6144xf32> -> vector<16x6144xf32>
    %4 = vector.extract_strided_slice %3 {offsets = [0, 0], sizes = [8, 256], strides = [1, 1]} : vector<16x6144xf32> to vector<8x256xf32>
    %5 = vector.extract_strided_slice %3 {offsets = [0, 256], sizes = [8, 256], strides = [1, 1]} : vector<16x6144xf32> to vector<8x256xf32>
    %6 = vector.extract_strided_slice %3 {offsets = [0, 512], sizes = [8, 256], strides = [1, 1]} : vector<16x6144xf32> to vector<8x256xf32>
    %7 = vector.extract_strided_slice %3 {offsets = [0, 768], sizes = [8, 256], strides = [1, 1]} : vector<16x6144xf32> to vector<8x256xf32>
    %8 = vector.extract_strided_slice %3 {offsets = [0, 1024], sizes = [8, 256], strides = [1, 1]} : vector<16x6144xf32> to vector<8x256xf32>
    %9 = vector.extract_strided_slice %3 {offsets = [0, 1280], sizes = [8, 256], strides = [1, 1]} : vector<16x6144xf32> to vector<8x256xf32>
    %10 = vector.extract_strided_slice %3 {offsets = [0, 1536], sizes = [8, 256], strides = [1, 1]} : vector<16x6144xf32> to vector<8x256xf32>
    %11 = vector.extract_strided_slice %3 {offsets = [0, 1792], sizes = [8, 256], strides = [1, 1]} : vector<16x6144xf32> to vector<8x256xf32>
    %12 = vector.extract_strided_slice %3 {offsets = [8, 0], sizes = [8, 256], strides = [1, 1]} : vector<16x6144xf32> to vector<8x256xf32>
    %13 = vector.extract_strided_slice %3 {offsets = [8, 256], sizes = [8, 256], strides = [1, 1]} : vector<16x6144xf32> to vector<8x256xf32>
    %14 = vector.extract_strided_slice %3 {offsets = [8, 512], sizes = [8, 256], strides = [1, 1]} : vector<16x6144xf32> to vector<8x256xf32>
    %15 = vector.extract_strided_slice %3 {offsets = [8, 768], sizes = [8, 256], strides = [1, 1]} : vector<16x6144xf32> to vector<8x256xf32>
    %16 = vector.extract_strided_slice %3 {offsets = [8, 1024], sizes = [8, 256], strides = [1, 1]} : vector<16x6144xf32> to vector<8x256xf32>
    %17 = vector.extract_strided_slice %3 {offsets = [8, 1280], sizes = [8, 256], strides = [1, 1]} : vector<16x6144xf32> to vector<8x256xf32>
    %18 = vector.extract_strided_slice %3 {offsets = [8, 1536], sizes = [8, 256], strides = [1, 1]} : vector<16x6144xf32> to vector<8x256xf32>
    %19 = vector.extract_strided_slice %3 {offsets = [8, 1792], sizes = [8, 256], strides = [1, 1]} : vector<16x6144xf32> to vector<8x256xf32>
    %20 = vector.shape_cast %4 : vector<8x256xf32> to vector<1x8x256xf32>
    %21 = vector.shape_cast %5 : vector<8x256xf32> to vector<1x8x256xf32>
    %22 = vector.shape_cast %6 : vector<8x256xf32> to vector<1x8x256xf32>
    %23 = vector.shape_cast %7 : vector<8x256xf32> to vector<1x8x256xf32>
    %24 = vector.shape_cast %8 : vector<8x256xf32> to vector<1x8x256xf32>
    %25 = vector.shape_cast %9 : vector<8x256xf32> to vector<1x8x256xf32>
    %26 = vector.shape_cast %10 : vector<8x256xf32> to vector<1x8x256xf32>
    %27 = vector.shape_cast %11 : vector<8x256xf32> to vector<1x8x256xf32>
    %28 = vector.shape_cast %12 : vector<8x256xf32> to vector<1x8x256xf32>
    %29 = vector.shape_cast %13 : vector<8x256xf32> to vector<1x8x256xf32>
    %30 = vector.shape_cast %14 : vector<8x256xf32> to vector<1x8x256xf32>
    %31 = vector.shape_cast %15 : vector<8x256xf32> to vector<1x8x256xf32>
    %32 = vector.shape_cast %16 : vector<8x256xf32> to vector<1x8x256xf32>
    %33 = vector.shape_cast %17 : vector<8x256xf32> to vector<1x8x256xf32>
    %34 = vector.shape_cast %18 : vector<8x256xf32> to vector<1x8x256xf32>
    %35 = vector.shape_cast %19 : vector<8x256xf32> to vector<1x8x256xf32>
    %36 = tpu.concatenate %20, %21, %22, %23, %24, %25, %26, %27, %28, %29, %30, %31, %32, %33, %34, %35 in 0 : vector<1x8x256xf32>, vector<1x8x256xf32>, vector<1x8x256xf32>, vector<1x8x256xf32>, vector<1x8x256xf32>, vector<1x8x256xf32>, vector<1x8x256xf32>, vector<1x8x256xf32>, vector<1x8x256xf32>, vector<1x8x256xf32>, vector<1x8x256xf32>, vector<1x8x256xf32>, vector<1x8x256xf32>, vector<1x8x256xf32>, vector<1x8x256xf32>, vector<1x8x256xf32> -> vector<16x8x256xf32>
    %37 = vector.extract_strided_slice %3 {offsets = [0, 2048], sizes = [8, 256], strides = [1, 1]} : vector<16x6144xf32> to vector<8x256xf32>
    %38 = vector.extract_strided_slice %3 {offsets = [0, 2304], sizes = [8, 256], strides = [1, 1]} : vector<16x6144xf32> to vector<8x256xf32>
    %39 = vector.extract_strided_slice %3 {offsets = [0, 2560], sizes = [8, 256], strides = [1, 1]} : vector<16x6144xf32> to vector<8x256xf32>
    %40 = vector.extract_strided_slice %3 {offsets = [0, 2816], sizes = [8, 256], strides = [1, 1]} : vector<16x6144xf32> to vector<8x256xf32>
    %41 = vector.extract_strided_slice %3 {offsets = [0, 3072], sizes = [8, 256], strides = [1, 1]} : vector<16x6144xf32> to vector<8x256xf32>
    %42 = vector.extract_strided_slice %3 {offsets = [0, 3328], sizes = [8, 256], strides = [1, 1]} : vector<16x6144xf32> to vector<8x256xf32>
    %43 = vector.extract_strided_slice %3 {offsets = [0, 3584], sizes = [8, 256], strides = [1, 1]} : vector<16x6144xf32> to vector<8x256xf32>
    %44 = vector.extract_strided_slice %3 {offsets = [0, 3840], sizes = [8, 256], strides = [1, 1]} : vector<16x6144xf32> to vector<8x256xf32>
    %45 = vector.extract_strided_slice %3 {offsets = [8, 2048], sizes = [8, 256], strides = [1, 1]} : vector<16x6144xf32> to vector<8x256xf32>
    %46 = vector.extract_strided_slice %3 {offsets = [8, 2304], sizes = [8, 256], strides = [1, 1]} : vector<16x6144xf32> to vector<8x256xf32>
    %47 = vector.extract_strided_slice %3 {offsets = [8, 2560], sizes = [8, 256], strides = [1, 1]} : vector<16x6144xf32> to vector<8x256xf32>
    %48 = vector.extract_strided_slice %3 {offsets = [8, 2816], sizes = [8, 256], strides = [1, 1]} : vector<16x6144xf32> to vector<8x256xf32>
    %49 = vector.extract_strided_slice %3 {offsets = [8, 3072], sizes = [8, 256], strides = [1, 1]} : vector<16x6144xf32> to vector<8x256xf32>
    %50 = vector.extract_strided_slice %3 {offsets = [8, 3328], sizes = [8, 256], strides = [1, 1]} : vector<16x6144xf32> to vector<8x256xf32>
    %51 = vector.extract_strided_slice %3 {offsets = [8, 3584], sizes = [8, 256], strides = [1, 1]} : vector<16x6144xf32> to vector<8x256xf32>
    %52 = vector.extract_strided_slice %3 {offsets = [8, 3840], sizes = [8, 256], strides = [1, 1]} : vector<16x6144xf32> to vector<8x256xf32>
    %53 = vector.shape_cast %37 : vector<8x256xf32> to vector<1x8x256xf32>
    %54 = vector.shape_cast %38 : vector<8x256xf32> to vector<1x8x256xf32>
    %55 = vector.shape_cast %39 : vector<8x256xf32> to vector<1x8x256xf32>
    %56 = vector.shape_cast %40 : vector<8x256xf32> to vector<1x8x256xf32>
    %57 = vector.shape_cast %41 : vector<8x256xf32> to vector<1x8x256xf32>
    %58 = vector.shape_cast %42 : vector<8x256xf32> to vector<1x8x256xf32>
    %59 = vector.shape_cast %43 : vector<8x256xf32> to vector<1x8x256xf32>
    %60 = vector.shape_cast %44 : vector<8x256xf32> to vector<1x8x256xf32>
    %61 = vector.shape_cast %45 : vector<8x256xf32> to vector<1x8x256xf32>
    %62 = vector.shape_cast %46 : vector<8x256xf32> to vector<1x8x256xf32>
    %63 = vector.shape_cast %47 : vector<8x256xf32> to vector<1x8x256xf32>
    %64 = vector.shape_cast %48 : vector<8x256xf32> to vector<1x8x256xf32>
    %65 = vector.shape_cast %49 : vector<8x256xf32> to vector<1x8x256xf32>
    %66 = vector.shape_cast %50 : vector<8x256xf32> to vector<1x8x256xf32>
    %67 = vector.shape_cast %51 : vector<8x256xf32> to vector<1x8x256xf32>
    %68 = vector.shape_cast %52 : vector<8x256xf32> to vector<1x8x256xf32>
    %69 = tpu.concatenate %53, %54, %55, %56, %57, %58, %59, %60, %61, %62, %63, %64, %65, %66, %67, %68 in 0 : vector<1x8x256xf32>, vector<1x8x256xf32>, vector<1x8x256xf32>, vector<1x8x256xf32>, vector<1x8x256xf32>, vector<1x8x256xf32>, vector<1x8x256xf32>, vector<1x8x256xf32>, vector<1x8x256xf32>, vector<1x8x256xf32>, vector<1x8x256xf32>, vector<1x8x256xf32>, vector<1x8x256xf32>, vector<1x8x256xf32>, vector<1x8x256xf32>, vector<1x8x256xf32> -> vector<16x8x256xf32>
    %70 = vector.extract_strided_slice %3 {offsets = [0, 4096], sizes = [8, 256], strides = [1, 1]} : vector<16x6144xf32> to vector<8x256xf32>
    %71 = vector.extract_strided_slice %3 {offsets = [0, 4352], sizes = [8, 256], strides = [1, 1]} : vector<16x6144xf32> to vector<8x256xf32>
    %72 = vector.extract_strided_slice %3 {offsets = [0, 4608], sizes = [8, 256], strides = [1, 1]} : vector<16x6144xf32> to vector<8x256xf32>
    %73 = vector.extract_strided_slice %3 {offsets = [0, 4864], sizes = [8, 256], strides = [1, 1]} : vector<16x6144xf32> to vector<8x256xf32>
    %74 = vector.extract_strided_slice %3 {offsets = [0, 5120], sizes = [8, 256], strides = [1, 1]} : vector<16x6144xf32> to vector<8x256xf32>
    %75 = vector.extract_strided_slice %3 {offsets = [0, 5376], sizes = [8, 256], strides = [1, 1]} : vector<16x6144xf32> to vector<8x256xf32>
    %76 = vector.extract_strided_slice %3 {offsets = [0, 5632], sizes = [8, 256], strides = [1, 1]} : vector<16x6144xf32> to vector<8x256xf32>
    %77 = vector.extract_strided_slice %3 {offsets = [0, 5888], sizes = [8, 256], strides = [1, 1]} : vector<16x6144xf32> to vector<8x256xf32>
    %78 = vector.extract_strided_slice %3 {offsets = [8, 4096], sizes = [8, 256], strides = [1, 1]} : vector<16x6144xf32> to vector<8x256xf32>
    %79 = vector.extract_strided_slice %3 {offsets = [8, 4352], sizes = [8, 256], strides = [1, 1]} : vector<16x6144xf32> to vector<8x256xf32>
    %80 = vector.extract_strided_slice %3 {offsets = [8, 4608], sizes = [8, 256], strides = [1, 1]} : vector<16x6144xf32> to vector<8x256xf32>
    %81 = vector.extract_strided_slice %3 {offsets = [8, 4864], sizes = [8, 256], strides = [1, 1]} : vector<16x6144xf32> to vector<8x256xf32>
    %82 = vector.extract_strided_slice %3 {offsets = [8, 5120], sizes = [8, 256], strides = [1, 1]} : vector<16x6144xf32> to vector<8x256xf32>
    %83 = vector.extract_strided_slice %3 {offsets = [8, 5376], sizes = [8, 256], strides = [1, 1]} : vector<16x6144xf32> to vector<8x256xf32>
    %84 = vector.extract_strided_slice %3 {offsets = [8, 5632], sizes = [8, 256], strides = [1, 1]} : vector<16x6144xf32> to vector<8x256xf32>
    %85 = vector.extract_strided_slice %3 {offsets = [8, 5888], sizes = [8, 256], strides = [1, 1]} : vector<16x6144xf32> to vector<8x256xf32>
    %86 = vector.shape_cast %70 : vector<8x256xf32> to vector<1x8x256xf32>
    %87 = vector.shape_cast %71 : vector<8x256xf32> to vector<1x8x256xf32>
    %88 = vector.shape_cast %72 : vector<8x256xf32> to vector<1x8x256xf32>
    %89 = vector.shape_cast %73 : vector<8x256xf32> to vector<1x8x256xf32>
    %90 = vector.shape_cast %74 : vector<8x256xf32> to vector<1x8x256xf32>
    %91 = vector.shape_cast %75 : vector<8x256xf32> to vector<1x8x256xf32>
    %92 = vector.shape_cast %76 : vector<8x256xf32> to vector<1x8x256xf32>
    %93 = vector.shape_cast %77 : vector<8x256xf32> to vector<1x8x256xf32>
    %94 = vector.shape_cast %78 : vector<8x256xf32> to vector<1x8x256xf32>
    %95 = vector.shape_cast %79 : vector<8x256xf32> to vector<1x8x256xf32>
    %96 = vector.shape_cast %80 : vector<8x256xf32> to vector<1x8x256xf32>
    %97 = vector.shape_cast %81 : vector<8x256xf32> to vector<1x8x256xf32>
    %98 = vector.shape_cast %82 : vector<8x256xf32> to vector<1x8x256xf32>
    %99 = vector.shape_cast %83 : vector<8x256xf32> to vector<1x8x256xf32>
    %100 = vector.shape_cast %84 : vector<8x256xf32> to vector<1x8x256xf32>
    %101 = vector.shape_cast %85 : vector<8x256xf32> to vector<1x8x256xf32>
    %102 = tpu.concatenate %86, %87, %88, %89, %90, %91, %92, %93, %94, %95, %96, %97, %98, %99, %100, %101 in 0 : vector<1x8x256xf32>, vector<1x8x256xf32>, vector<1x8x256xf32>, vector<1x8x256xf32>, vector<1x8x256xf32>, vector<1x8x256xf32>, vector<1x8x256xf32>, vector<1x8x256xf32>, vector<1x8x256xf32>, vector<1x8x256xf32>, vector<1x8x256xf32>, vector<1x8x256xf32>, vector<1x8x256xf32>, vector<1x8x256xf32>, vector<1x8x256xf32>, vector<1x8x256xf32> -> vector<16x8x256xf32>
    "tpu.trace_start"() <{level = 10 : i32, message = "gqd,gkd->gqk"}> : () -> ()
    %cst_3 = arith.constant dense<0.000000e+00> : vector<16x8x8xf32>
    %103 = tpu.matmul %36, %69, %cst_3 {dimension_numbers = #tpu.dot_dimension_numbers<[2], [2], [1], [1], [0, 0, 0, 1, 1, 1], [0], [0]>} : vector<16x8x256xf32>, vector<16x8x256xf32>, vector<16x8x8xf32> -> vector<16x8x8xf32>
    "tpu.trace_stop"() : () -> ()
    %cst_4 = arith.constant 6.250000e-02 : f32
    %104 = vector.broadcast %cst_4 : f32 to vector<16x8x8xf32>
    %105 = arith.mulf %103, %104 : vector<16x8x8xf32>
    %cst_5 = arith.constant dense<0xFF800000> : vector<16x8xf32>
    %106 = vector.multi_reduction <maximumf>, %105, %cst_5 [2] : vector<16x8x8xf32> to vector<16x8xf32>
    %107 = vector.shape_cast %106 : vector<16x8xf32> to vector<16x8x1xf32>
    %108 = vector.broadcast %107 : vector<16x8x1xf32> to vector<16x8x8xf32>
    %109 = arith.subf %105, %108 : vector<16x8x8xf32>
    %110 = math.exp %109 : vector<16x8x8xf32>
    %cst_6 = arith.constant dense<0.000000e+00> : vector<16x8xf32>
    %111 = vector.multi_reduction <add>, %110, %cst_6 [2] : vector<16x8x8xf32> to vector<16x8xf32>
    %112 = vector.shape_cast %111 : vector<16x8xf32> to vector<16x8x1xf32>
    %113 = tpu.reciprocal %112 {approx = true} : vector<16x8x1xf32> -> vector<16x8x1xf32>
    %114 = arith.mulf %112, %113 : vector<16x8x1xf32>
    %cst_7 = arith.constant 2.000000e+00 : f32
    %115 = vector.broadcast %cst_7 : f32 to vector<16x8x1xf32>
    %116 = arith.subf %115, %114 : vector<16x8x1xf32>
    %117 = arith.mulf %113, %116 : vector<16x8x1xf32>
    %118 = vector.broadcast %117 : vector<16x8x1xf32> to vector<16x8x8xf32>
    %119 = arith.mulf %110, %118 : vector<16x8x8xf32>
    %c0_8 = arith.constant 0 : index
    %c0_9 = arith.constant 0 : index
    %c0_10 = arith.constant 0 : index
    %120 = vector.load %arg5[%c0_8, %c0_9, %c0_10] : memref<16x8x8xf32, #tpu.memory_space<vmem>>, vector<16x8x8xf32>
    tpu.vector_store %arg5[%c0_8, %c0_9, %c0_10], %119 {strides = array<i32>} : memref<16x8x8xf32, #tpu.memory_space<vmem>>, vector<16x8x8xf32>,
    "tpu.trace_start"() <{level = 10 : i32, message = "gqk,gkd->gqd"}> : () -> ()
    %cst_11 = arith.constant dense<0.000000e+00> : vector<16x8x256xf32>
    %121 = tpu.matmul %119, %102, %cst_11 {dimension_numbers = #tpu.dot_dimension_numbers<[2], [1], [1], [2], [0, 0, 0, 1, 1, 2], [0], [0]>} : vector<16x8x8xf32>, vector<16x8x256xf32>, vector<16x8x256xf32> -> vector<16x8x256xf32>
    "tpu.trace_stop"() : () -> ()
    %122 = vector.extract_strided_slice %121 {offsets = [0, 0, 0], sizes = [1, 8, 256], strides = [1, 1, 1]} : vector<16x8x256xf32> to vector<1x8x256xf32>
    %123 = vector.shape_cast %122 : vector<1x8x256xf32> to vector<8x256xf32>
    %124 = vector.extract_strided_slice %121 {offsets = [1, 0, 0], sizes = [1, 8, 256], strides = [1, 1, 1]} : vector<16x8x256xf32> to vector<1x8x256xf32>
    %125 = vector.shape_cast %124 : vector<1x8x256xf32> to vector<8x256xf32>
    %126 = vector.extract_strided_slice %121 {offsets = [2, 0, 0], sizes = [1, 8, 256], strides = [1, 1, 1]} : vector<16x8x256xf32> to vector<1x8x256xf32>
    %127 = vector.shape_cast %126 : vector<1x8x256xf32> to vector<8x256xf32>
    %128 = vector.extract_strided_slice %121 {offsets = [3, 0, 0], sizes = [1, 8, 256], strides = [1, 1, 1]} : vector<16x8x256xf32> to vector<1x8x256xf32>
    %129 = vector.shape_cast %128 : vector<1x8x256xf32> to vector<8x256xf32>
    %130 = vector.extract_strided_slice %121 {offsets = [4, 0, 0], sizes = [1, 8, 256], strides = [1, 1, 1]} : vector<16x8x256xf32> to vector<1x8x256xf32>
    %131 = vector.shape_cast %130 : vector<1x8x256xf32> to vector<8x256xf32>
    %132 = vector.extract_strided_slice %121 {offsets = [5, 0, 0], sizes = [1, 8, 256], strides = [1, 1, 1]} : vector<16x8x256xf32> to vector<1x8x256xf32>
    %133 = vector.shape_cast %132 : vector<1x8x256xf32> to vector<8x256xf32>
    %134 = vector.extract_strided_slice %121 {offsets = [6, 0, 0], sizes = [1, 8, 256], strides = [1, 1, 1]} : vector<16x8x256xf32> to vector<1x8x256xf32>
    %135 = vector.shape_cast %134 : vector<1x8x256xf32> to vector<8x256xf32>
    %136 = vector.extract_strided_slice %121 {offsets = [7, 0, 0], sizes = [1, 8, 256], strides = [1, 1, 1]} : vector<16x8x256xf32> to vector<1x8x256xf32>
    %137 = vector.shape_cast %136 : vector<1x8x256xf32> to vector<8x256xf32>
    %138 = tpu.concatenate %123, %125, %127, %129, %131, %133, %135, %137 in 1 : vector<8x256xf32>, vector<8x256xf32>, vector<8x256xf32>, vector<8x256xf32>, vector<8x256xf32>, vector<8x256xf32>, vector<8x256xf32>, vector<8x256xf32> -> vector<8x2048xf32>
    %139 = vector.extract_strided_slice %121 {offsets = [8, 0, 0], sizes = [1, 8, 256], strides = [1, 1, 1]} : vector<16x8x256xf32> to vector<1x8x256xf32>
    %140 = vector.shape_cast %139 : vector<1x8x256xf32> to vector<8x256xf32>
    %141 = vector.extract_strided_slice %121 {offsets = [9, 0, 0], sizes = [1, 8, 256], strides = [1, 1, 1]} : vector<16x8x256xf32> to vector<1x8x256xf32>
    %142 = vector.shape_cast %141 : vector<1x8x256xf32> to vector<8x256xf32>
    %143 = vector.extract_strided_slice %121 {offsets = [10, 0, 0], sizes = [1, 8, 256], strides = [1, 1, 1]} : vector<16x8x256xf32> to vector<1x8x256xf32>
    %144 = vector.shape_cast %143 : vector<1x8x256xf32> to vector<8x256xf32>
    %145 = vector.extract_strided_slice %121 {offsets = [11, 0, 0], sizes = [1, 8, 256], strides = [1, 1, 1]} : vector<16x8x256xf32> to vector<1x8x256xf32>
    %146 = vector.shape_cast %145 : vector<1x8x256xf32> to vector<8x256xf32>
    %147 = vector.extract_strided_slice %121 {offsets = [12, 0, 0], sizes = [1, 8, 256], strides = [1, 1, 1]} : vector<16x8x256xf32> to vector<1x8x256xf32>
    %148 = vector.shape_cast %147 : vector<1x8x256xf32> to vector<8x256xf32>
    %149 = vector.extract_strided_slice %121 {offsets = [13, 0, 0], sizes = [1, 8, 256], strides = [1, 1, 1]} : vector<16x8x256xf32> to vector<1x8x256xf32>
    %150 = vector.shape_cast %149 : vector<1x8x256xf32> to vector<8x256xf32>
    %151 = vector.extract_strided_slice %121 {offsets = [14, 0, 0], sizes = [1, 8, 256], strides = [1, 1, 1]} : vector<16x8x256xf32> to vector<1x8x256xf32>
    %152 = vector.shape_cast %151 : vector<1x8x256xf32> to vector<8x256xf32>
    %153 = vector.extract_strided_slice %121 {offsets = [15, 0, 0], sizes = [1, 8, 256], strides = [1, 1, 1]} : vector<16x8x256xf32> to vector<1x8x256xf32>
    %154 = vector.shape_cast %153 : vector<1x8x256xf32> to vector<8x256xf32>
    %155 = tpu.concatenate %140, %142, %144, %146, %148, %150, %152, %154 in 1 : vector<8x256xf32>, vector<8x256xf32>, vector<8x256xf32>, vector<8x256xf32>, vector<8x256xf32>, vector<8x256xf32>, vector<8x256xf32>, vector<8x256xf32> -> vector<8x2048xf32>
    %156 = tpu.concatenate %138, %155 in 0 : vector<8x2048xf32>, vector<8x2048xf32> -> vector<16x2048xf32>
    %c0_12 = arith.constant 0 : index
    %c0_13 = arith.constant 0 : index
    %157 = vector.load %arg2[%c0_12, %c0_13] : memref<2048x256xbf16, #tpu.memory_space<vmem>>, vector<2048x256xbf16>
    %158 = arith.extf %157 : vector<2048x256xbf16> to vector<2048x256xf32>
    %cst_14 = arith.constant dense<0.000000e+00> : vector<16x256xf32>
    %159 = tpu.matmul %156, %158, %cst_14 {dimension_numbers = #tpu.dot_dimension_numbers<[1], [0], [0], [1], [0, 0, 1, 1], [], []>} : vector<16x2048xf32>, vector<2048x256xf32>, vector<16x256xf32> -> vector<16x256xf32>
    %160 = arith.addf %159, %0 : vector<16x256xf32>
    %cst_15 = arith.constant dense<0.000000e+00> : vector<16xf32>
    %161 = vector.multi_reduction <add>, %160, %cst_15 [1] : vector<16x256xf32> to vector<16xf32>
    %162 = vector.shape_cast %161 : vector<16xf32> to vector<16x1xf32>
    %cst_16 = arith.constant 2.560000e+02 : f32
    %163 = vector.broadcast %cst_16 : f32 to vector<16x1xf32>
    %164 = arith.divf %162, %163 : vector<16x1xf32>
    %165 = vector.broadcast %164 : vector<16x1xf32> to vector<16x256xf32>
    %166 = arith.subf %160, %165 : vector<16x256xf32>
    %167 = vector.broadcast %164 : vector<16x1xf32> to vector<16x256xf32>
    %168 = arith.subf %160, %167 : vector<16x256xf32>
    %169 = arith.mulf %166, %168 : vector<16x256xf32>
    %cst_17 = arith.constant dense<0.000000e+00> : vector<16xf32>
    %170 = vector.multi_reduction <add>, %169, %cst_17 [1] : vector<16x256xf32> to vector<16xf32>
    %171 = vector.shape_cast %170 : vector<16xf32> to vector<16x1xf32>
    %cst_18 = arith.constant 2.560000e+02 : f32
    %172 = vector.broadcast %cst_18 : f32 to vector<16x1xf32>
    %173 = arith.divf %171, %172 : vector<16x1xf32>
    %174 = vector.broadcast %164 : vector<16x1xf32> to vector<16x256xf32>
    %175 = arith.subf %160, %174 : vector<16x256xf32>
    %cst_19 = arith.constant 9.99999997E-7 : f32
    %176 = vector.broadcast %cst_19 : f32 to vector<16x1xf32>
    %177 = arith.addf %173, %176 : vector<16x1xf32>
    %178 = math.rsqrt %177 : vector<16x1xf32>
    %179 = vector.broadcast %178 : vector<16x1xf32> to vector<16x256xf32>
    %180 = arith.mulf %175, %179 : vector<16x256xf32>
    %c0_20 = arith.constant 0 : index
    %c0_21 = arith.constant 0 : index
    %181 = vector.load %arg3[%c0_20, %c0_21] : memref<2x256xf32, #tpu.memory_space<vmem>>, vector<1x256xf32>
    %182 = vector.shape_cast %181 : vector<1x256xf32> to vector<256xf32>
    %183 = vector.shape_cast %182 : vector<256xf32> to vector<1x256xf32>
    %184 = vector.broadcast %183 : vector<1x256xf32> to vector<16x256xf32>
    %185 = arith.mulf %180, %184 : vector<16x256xf32>
    %c1 = arith.constant 1 : index
    %c0_22 = arith.constant 0 : index
    %186 = vector.load %arg3[%c1, %c0_22] : memref<2x256xf32, #tpu.memory_space<vmem>>, vector<1x256xf32>
    %187 = vector.shape_cast %186 : vector<1x256xf32> to vector<256xf32>
    %188 = vector.shape_cast %187 : vector<256xf32> to vector<1x256xf32>
    %189 = vector.broadcast %188 : vector<1x256xf32> to vector<16x256xf32>
    %190 = arith.addf %185, %189 : vector<16x256xf32>
    %c0_23 = arith.constant 0 : index
    %c0_24 = arith.constant 0 : index
    %191 = vector.load %arg4[%c0_23, %c0_24] : memref<16x256xf32, #tpu.memory_space<vmem>>, vector<16x256xf32>
    tpu.vector_store %arg4[%c0_23, %c0_24], %190 {strides = array<i32>} : memref<16x256xf32, #tpu.memory_space<vmem>>, vector<16x256xf32>,
    return
  }
}

</mosaic_0001>

<llo_original>
// kernel: tpu_custom_call.1
$region0: #{tpu_custom_call.1}
  #allocation0 [shape = 'u32[]', space=smem, size = 0x4, offset = 0x4, fixed_abs, tag = 'smem constant byte address 0x4 - core index']
  #allocation1 [shape = 'u32[72,128]{1,0:T(1,128)}', space=vmem, size = 0x9000, scoped, tag = 'internal scratch']
  %s0 = inlined_call_operand.hbm [shape: f32[16,256], index: 0, kind: input, shape index: {}]
  %s1 = inlined_call_operand.hbm [shape: bf16[256,6144], index: 1, kind: input, shape index: {}]
  %s2 = inlined_call_operand.hbm [shape: bf16[2048,256], index: 2, kind: input, shape index: {}]
  %s3 = inlined_call_operand.hbm [shape: f32[2,256], index: 3, kind: input, shape index: {}]
  %s4 = inlined_call_operand.hbm [shape: f32[16,256], index: 4, kind: output, shape index: {0}]
  %s5 = inlined_call_operand.vmem [shape: f32[16,8,8], index: 5, kind: output, shape index: {1}]
  %6 = xla_tuple %s4, %s5
  %s7 = sld [smem:[#allocation0]]
  $region50: #{tpu_custom_call.1} parent=0
    _
  %s9 = ssub.s32 1, %s7
  %s10 = scalar_select 0, %s9, %s7
  $region1: #{tpu_custom_call.1} parent=0
    #allocation2 [shape = 'u8[16384]{0}', space=vmem, size = 0x4000, scoped, tag = 'input window, operand 0, single buffered']
    #allocation3 [shape = 's32[1]{0}', space=sflag, size = 0x4, scoped, tag = 'scoped memory for tpu_custom_call.1']
    #allocation4 [shape = 's32[1]{0}', space=sflag, size = 0x4, scoped, tag = 'scoped memory for tpu_custom_call.1']
    #allocation5 [shape = 'u8[3145728]{0}', space=vmem, size = 0x300000, scoped, tag = 'input window, operand 1, single buffered']
    #allocation6 [shape = 's32[1]{0}', space=sflag, size = 0x4, scoped, tag = 'scoped memory for tpu_custom_call.1']
    #allocation7 [shape = 'u8[1048576]{0}', space=vmem, size = 0x100000, scoped, tag = 'input window, operand 2, single buffered']
    #allocation8 [shape = 'u8[2048]{0}', space=vmem, size = 0x800, scoped, tag = 'input window, operand 3, single buffered']
    #allocation9 [shape = 's32[1]{0}', space=sflag, size = 0x4, scoped, tag = 'scoped memory for tpu_custom_call.1']
    #allocation10 [shape = 'u8[16384]{0}', space=vmem, size = 0x4000, scoped, tag = 'output window, operand 0, single buffered']
    %11 = vsyncpa [#allocation3], 0
    %12 = vsyncpa [#allocation6], 0
    %13 = vsyncpa [#allocation9], 0
    %14 = vsyncpa [#allocation4], 0
    // Predicated region
    $region2: #{tpu_custom_call.1} parent=1 // pred_check
      _
    $region3: #{tpu_custom_call.1} parent=1 // pred_check_branch
      %16 = sbr.rel (0) target = $region5
    $region4: #{tpu_custom_call.1} parent=1 // pred_region
      %18 = vsyncadd [#allocation3], 0
      %s19 = sshll.u32 %s0, 4
      %s20 = int_to_ptr.hbm [resolvable:$true] %s19
      %s21 = sshll.u32 [#allocation2], 4
      %s22 = int_to_ptr.vmem [resolvable:$true] %s21
      %27 = dma.hbm_to_vmem [thread:$0]  %s20, 512, %s22, [#allocation3], 256, 256, 16
    $region5: #{tpu_custom_call.1} parent=1 // pred_fallthru
      _
    // Predicated region
    $region6: #{tpu_custom_call.1} parent=1 // pred_check
      _
    $region7: #{tpu_custom_call.1} parent=1 // pred_check_branch
      %29 = sbr.rel (0) target = $region9
    $region8: #{tpu_custom_call.1} parent=1 // pred_region
      %31 = vsyncadd [#allocation6], 0
      %s32 = sshll.u32 %s1, 4
      %s33 = int_to_ptr.hbm [resolvable:$true] %s32
      %s34 = sshll.u32 [#allocation5], 4
      %s35 = int_to_ptr.vmem [resolvable:$true] %s34
      %40 = dma.hbm_to_vmem [thread:$0]  %s33, 98304, %s35, [#allocation6], 3072, 3072, 192
    $region9: #{tpu_custom_call.1} parent=1 // pred_fallthru
      _
    // Predicated region
    $region10: #{tpu_custom_call.1} parent=1 // pred_check
      _
    $region11: #{tpu_custom_call.1} parent=1 // pred_check_branch
      %42 = sbr.rel (0) target = $region13
    $region12: #{tpu_custom_call.1} parent=1 // pred_region
      %44 = vsyncadd [#allocation6], 0
      %s45 = sshll.u32 %s2, 4
      %s46 = int_to_ptr.hbm [resolvable:$true] %s45
      %s47 = sshll.u32 [#allocation7], 4
      %s48 = int_to_ptr.vmem [resolvable:$true] %s47
      %53 = dma.hbm_to_vmem [thread:$0]  %s46, 32768, %s48, [#allocation6], 128, 128, 8
    $region13: #{tpu_custom_call.1} parent=1 // pred_fallthru
      _
    // Predicated region
    $region14: #{tpu_custom_call.1} parent=1 // pred_check
      _
    $region15: #{tpu_custom_call.1} parent=1 // pred_check_branch
      %55 = sbr.rel (0) target = $region17
    $region16: #{tpu_custom_call.1} parent=1 // pred_region
      %57 = vsyncadd [#allocation9], 0
      %s59 = sshll.u32 %s3, 4
      %s60 = int_to_ptr.hbm [resolvable:$true] %s59
      %s61 = sshll.u32 [#allocation8], 4
      %s62 = int_to_ptr.vmem [resolvable:$true] %s61
      %64 = dma.hbm_to_vmem [thread:$0]  %s60, 64, %s62, [#allocation9]
    $region17: #{tpu_custom_call.1} parent=1 // pred_fallthru
      _
    // Predicated region
    $region18: #{tpu_custom_call.1} parent=1 // pred_check
      _
    $region19: #{tpu_custom_call.1} parent=1 // pred_check_branch
      %66 = sbr.rel (0) target = $region21
    $region20: #{tpu_custom_call.1} parent=1 // pred_region
      %68 = dma.done [#allocation3], 512
    $region21: #{tpu_custom_call.1} parent=1 // pred_fallthru
      _
    // Predicated region
    $region22: #{tpu_custom_call.1} parent=1 // pred_check
      _
    $region23: #{tpu_custom_call.1} parent=1 // pred_check_branch
      %70 = sbr.rel (0) target = $region25
    $region24: #{tpu_custom_call.1} parent=1 // pred_region
      %72 = dma.done [#allocation6], 98304
    $region25: #{tpu_custom_call.1} parent=1 // pred_fallthru
      _
    // Predicated region
    $region26: #{tpu_custom_call.1} parent=1 // pred_check
      _
    $region27: #{tpu_custom_call.1} parent=1 // pred_check_branch
      %74 = sbr.rel (0) target = $region29
    $region28: #{tpu_custom_call.1} parent=1 // pred_region
      %76 = dma.done [#allocation6], 32768
    $region29: #{tpu_custom_call.1} parent=1 // pred_fallthru
      _
    // Predicated region
    $region30: #{tpu_custom_call.1} parent=1 // pred_check
      _
    $region31: #{tpu_custom_call.1} parent=1 // pred_check_branch
      %78 = sbr.rel (0) target = $region33
    $region32: #{tpu_custom_call.1} parent=1 // pred_region
      %80 = dma.done [#allocation9], 64
    $region33: #{tpu_custom_call.1} parent=1 // pred_fallthru
      _
    %v81 = vld [vmem:[#allocation2] sm:$0xff]
    %v82 = vld [vmem:[#allocation2 + $0x8] sm:$0xff]
    %v83 = vld [vmem:[#allocation2 + $0x10] sm:$0xff]
    %v84 = vld [vmem:[#allocation2 + $0x18] sm:$0xff]
    %v85 = vpack.c.bf16 %v83, %v81
    %v86 = vpack.c.bf16 %v84, %v82
    %v87 = vld [vmem:[#allocation5] sm:$0xff]
    %v88 = vld [vmem:[#allocation5 + $0x8] sm:$0xff]
    %v89 = vld [vmem:[#allocation5 + $0x10] sm:$0xff]
    %v90 = vld [vmem:[#allocation5 + $0x18] sm:$0xff]
    %v91 = vld [vmem:[#allocation5 + $0x20] sm:$0xff]
    %v92 = vld [vmem:[#allocation5 + $0x28] sm:$0xff]
    %v93 = vld [vmem:[#allocation5 + $0x30] sm:$0xff]
    %v94 = vld [vmem:[#allocation5 + $0x38] sm:$0xff]
    %v95 = vld [vmem:[#allocation5 + $0x40] sm:$0xff]
    %v96 = vld [vmem:[#allocation5 + $0x48] sm:$0xff]
    %v97 = vld [vmem:[#allocation5 + $0x50] sm:$0xff]
    %v98 = vld [vmem:[#allocation5 + $0x58] sm:$0xff]
    %v99 = vld [vmem:[#allocation5 + $0x60] sm:$0xff]
    %v100 = vld [vmem:[#allocation5 + $0x68] sm:$0xff]
    %v101 = vld [vmem:[#allocation5 + $0x70] sm:$0xff]
    %v102 = vld [vmem:[#allocation5 + $0x78] sm:$0xff]
    %v103 = vld [vmem:[#allocation5 + $0x80] sm:$0xff]
    %v104 = vld [vmem:[#allocation5 + $0x88] sm:$0xff]
    %v105 = vld [vmem:[#allocation5 + $0x90] sm:$0xff]
    %v106 = vld [vmem:[#allocation5 + $0x98] sm:$0xff]
    %v107 = vld [vmem:[#allocation5 + $0xa0] sm:$0xff]
    %v108 = vld [vmem:[#allocation5 + $0xa8] sm:$0xff]
    %v109 = vld [vmem:[#allocation5 + $0xb0] sm:$0xff]
    %v110 = vld [vmem:[#allocation5 + $0xb8] sm:$0xff]
    %v111 = vld [vmem:[#allocation5 + $0xc0] sm:$0xff]
    %v112 = vld [vmem:[#allocation5 + $0xc8] sm:$0xff]
    %v113 = vld [vmem:[#allocation5 + $0xd0] sm:$0xff]
    %v114 = vld [vmem:[#allocation5 + $0xd8] sm:$0xff]
    %v115 = vld [vmem:[#allocation5 + $0xe0] sm:$0xff]
    %v116 = vld [vmem:[#allocation5 + $0xe8] sm:$0xff]
    %v117 = vld [vmem:[#allocation5 + $0xf0] sm:$0xff]
    %v118 = vld [vmem:[#allocation5 + $0xf8] sm:$0xff]
    %v119 = vld [vmem:[#allocation5 + $0x100] sm:$0xff]
    %v120 = vld [vmem:[#allocation5 + $0x108] sm:$0xff]
    %v121 = vld [vmem:[#allocation5 + $0x110] sm:$0xff]
    %v122 = vld [vmem:[#allocation5 + $0x118] sm:$0xff]
    %v123 = vld [vmem:[#allocation5 + $0x120] sm:$0xff]
    %v124 = vld [vmem:[#allocation5 + $0x128] sm:$0xff]
    %v125 = vld [vmem:[#allocation5 + $0x130] sm:$0xff]
    %v126 = vld [vmem:[#allocation5 + $0x138] sm:$0xff]
    %v127 = vld [vmem:[#allocation5 + $0x140] sm:$0xff]
    %v128 = vld [vmem:[#allocation5 + $0x148] sm:$0xff]
    %v129 = vld [vmem:[#allocation5 + $0x150] sm:$0xff]
    %v130 = vld [vmem:[#allocation5 + $0x158] sm:$0xff]
    %v131 = vld [vmem:[#allocation5 + $0x160] sm:$0xff]
    %v132 = vld [vmem:[#allocation5 + $0x168] sm:$0xff]
    %v133 = vld [vmem:[#allocation5 + $0x170] sm:$0xff]
    %v134 = vld [vmem:[#allocation5 + $0x178] sm:$0xff]
    %v135 = vld [vmem:[#allocation5 + $0x180] sm:$0xff]
    %v136 = vld [vmem:[#allocation5 + $0x188] sm:$0xff]
    %v137 = vld [vmem:[#allocation5 + $0x190] sm:$0xff]
    %v138 = vld [vmem:[#allocation5 + $0x198] sm:$0xff]
    %v139 = vld [vmem:[#allocation5 + $0x1a0] sm:$0xff]
    %v140 = vld [vmem:[#allocation5 + $0x1a8] sm:$0xff]
    %v141 = vld [vmem:[#allocation5 + $0x1b0] sm:$0xff]
    %v142 = vld [vmem:[#allocation5 + $0x1b8] sm:$0xff]
    %v143 = vld [vmem:[#allocation5 + $0x1c0] sm:$0xff]
    %v144 = vld [vmem:[#allocation5 + $0x1c8] sm:$0xff]
    %v145 = vld [vmem:[#allocation5 + $0x1d0] sm:$0xff]
    %v146 = vld [vmem:[#allocation5 + $0x1d8] sm:$0xff]
    %v147 = vld [vmem:[#allocation5 + $0x1e0] sm:$0xff]
    %v148 = vld [vmem:[#allocation5 + $0x1e8] sm:$0xff]
    %v149 = vld [vmem:[#allocation5 + $0x1f0] sm:$0xff]
    %v150 = vld [vmem:[#allocation5 + $0x1f8] sm:$0xff]
    %v151 = vld [vmem:[#allocation5 + $0x200] sm:$0xff]
    %v152 = vld [vmem:[#allocation5 + $0x208] sm:$0xff]
    %v153 = vld [vmem:[#allocation5 + $0x210] sm:$0xff]
    %v154 = vld [vmem:[#allocation5 + $0x218] sm:$0xff]
    %v155 = vld [vmem:[#allocation5 + $0x220] sm:$0xff]
    %v156 = vld [vmem:[#allocation5 + $0x228] sm:$0xff]
    %v157 = vld [vmem:[#allocation5 + $0x230] sm:$0xff]
    %v158 = vld [vmem:[#allocation5 + $0x238] sm:$0xff]
    %v159 = vld [vmem:[#allocation5 + $0x240] sm:$0xff]
    %v160 = vld [vmem:[#allocation5 + $0x248] sm:$0xff]
    %v161 = vld [vmem:[#allocation5 + $0x250] sm:$0xff]
    %v162 = vld [vmem:[#allocation5 + $0x258] sm:$0xff]
    %v163 = vld [vmem:[#allocation5 + $0x260] sm:$0xff]
    %v164 = vld [vmem:[#allocation5 + $0x268] sm:$0xff]
    %v165 = vld [vmem:[#allocation5 + $0x270] sm:$0xff]
    %v166 = vld [vmem:[#allocation5 + $0x278] sm:$0xff]
    %v167 = vld [vmem:[#allocation5 + $0x280] sm:$0xff]
    %v168 = vld [vmem:[#allocation5 + $0x288] sm:$0xff]
    %v169 = vld [vmem:[#allocation5 + $0x290] sm:$0xff]
    %v170 = vld [vmem:[#allocation5 + $0x298] sm:$0xff]
    %v171 = vld [vmem:[#allocation5 + $0x2a0] sm:$0xff]
    %v172 = vld [vmem:[#allocation5 + $0x2a8] sm:$0xff]
    %v173 = vld [vmem:[#allocation5 + $0x2b0] sm:$0xff]
    %v174 = vld [vmem:[#allocation5 + $0x2b8] sm:$0xff]
    %v175 = vld [vmem:[#allocation5 + $0x2c0] sm:$0xff]
    %v176 = vld [vmem:[#allocation5 + $0x2c8] sm:$0xff]
    %v177 = vld [vmem:[#allocation5 + $0x2d0] sm:$0xff]
    %v178 = vld [vmem:[#allocation5 + $0x2d8] sm:$0xff]
    %v179 = vld [vmem:[#allocation5 + $0x2e0] sm:$0xff]
    %v180 = vld [vmem:[#allocation5 + $0x2e8] sm:$0xff]
    %v181 = vld [vmem:[#allocation5 + $0x2f0] sm:$0xff]
    %v182 = vld [vmem:[#allocation5 + $0x2f8] sm:$0xff]
    %v183 = vld [vmem:[#allocation5 + $0x300] sm:$0xff]
    %v184 = vld [vmem:[#allocation5 + $0x308] sm:$0xff]
    %v185 = vld [vmem:[#allocation5 + $0x310] sm:$0xff]
    %v186 = vld [vmem:[#allocation5 + $0x318] sm:$0xff]
    %v187 = vld [vmem:[#allocation5 + $0x320] sm:$0xff]
    %v188 = vld [vmem:[#allocation5 + $0x328] sm:$0xff]
    %v189 = vld [vmem:[#allocation5 + $0x330] sm:$0xff]
    %v190 = vld [vmem:[#allocation5 + $0x338] sm:$0xff]
    %v191 = vld [vmem:[#allocation5 + $0x340] sm:$0xff]
    %v192 = vld [vmem:[#allocation5 + $0x348] sm:$0xff]
    %v193 = vld [vmem:[#allocation5 + $0x350] sm:$0xff]
    %v194 = vld [vmem:[#allocation5 + $0x358] sm:$0xff]
    %v195 = vld [vmem:[#allocation5 + $0x360] sm:$0xff]
    %v196 = vld [vmem:[#allocation5 + $0x368] sm:$0xff]
    %v197 = vld [vmem:[#allocation5 + $0x370] sm:$0xff]
    %v198 = vld [vmem:[#allocation5 + $0x378] sm:$0xff]
    %v199 = vld [vmem:[#allocation5 + $0x380] sm:$0xff]
    %v200 = vld [vmem:[#allocation5 + $0x388] sm:$0xff]
    %v201 = vld [vmem:[#allocation5 + $0x390] sm:$0xff]
    %v202 = vld [vmem:[#allocation5 + $0x398] sm:$0xff]
    %v203 = vld [vmem:[#allocation5 + $0x3a0] sm:$0xff]
    %v204 = vld [vmem:[#allocation5 + $0x3a8] sm:$0xff]
    %v205 = vld [vmem:[#allocation5 + $0x3b0] sm:$0xff]
    %v206 = vld [vmem:[#allocation5 + $0x3b8] sm:$0xff]
    %v207 = vld [vmem:[#allocation5 + $0x3c0] sm:$0xff]
    %v208 = vld [vmem:[#allocation5 + $0x3c8] sm:$0xff]
    %v209 = vld [vmem:[#allocation5 + $0x3d0] sm:$0xff]
    %v210 = vld [vmem:[#allocation5 + $0x3d8] sm:$0xff]
    %v211 = vld [vmem:[#allocation5 + $0x3e0] sm:$0xff]
    %v212 = vld [vmem:[#allocation5 + $0x3e8] sm:$0xff]
    %v213 = vld [vmem:[#allocation5 + $0x3f0] sm:$0xff]
    %v214 = vld [vmem:[#allocation5 + $0x3f8] sm:$0xff]
    %v215 = vld [vmem:[#allocation5 + $0x400] sm:$0xff]
    %v216 = vld [vmem:[#allocation5 + $0x408] sm:$0xff]
    %v217 = vld [vmem:[#allocation5 + $0x410] sm:$0xff]
    %v218 = vld [vmem:[#allocation5 + $0x418] sm:$0xff]
    %v219 = vld [vmem:[#allocation5 + $0x420] sm:$0xff]
    %v220 = vld [vmem:[#allocation5 + $0x428] sm:$0xff]
    %v221 = vld [vmem:[#allocation5 + $0x430] sm:$0xff]
    %v222 = vld [vmem:[#allocation5 + $0x438] sm:$0xff]
    %v223 = vld [vmem:[#allocation5 + $0x440] sm:$0xff]
    %v224 = vld [vmem:[#allocation5 + $0x448] sm:$0xff]
    %v225 = vld [vmem:[#allocation5 + $0x450] sm:$0xff]
    %v226 = vld [vmem:[#allocation5 + $0x458] sm:$0xff]
    %v227 = vld [vmem:[#allocation5 + $0x460] sm:$0xff]
    %v228 = vld [vmem:[#allocation5 + $0x468] sm:$0xff]
    %v229 = vld [vmem:[#allocation5 + $0x470] sm:$0xff]
    %v230 = vld [vmem:[#allocation5 + $0x478] sm:$0xff]
    %v231 = vld [vmem:[#allocation5 + $0x480] sm:$0xff]
    %v232 = vld [vmem:[#allocation5 + $0x488] sm:$0xff]
    %v233 = vld [vmem:[#allocation5 + $0x490] sm:$0xff]
    %v234 = vld [vmem:[#allocation5 + $0x498] sm:$0xff]
    %v235 = vld [vmem:[#allocation5 + $0x4a0] sm:$0xff]
    %v236 = vld [vmem:[#allocation5 + $0x4a8] sm:$0xff]
    %v237 = vld [vmem:[#allocation5 + $0x4b0] sm:$0xff]
    %v238 = vld [vmem:[#allocation5 + $0x4b8] sm:$0xff]
    %v239 = vld [vmem:[#allocation5 + $0x4c0] sm:$0xff]
    %v240 = vld [vmem:[#allocation5 + $0x4c8] sm:$0xff]
    %v241 = vld [vmem:[#allocation5 + $0x4d0] sm:$0xff]
    %v242 = vld [vmem:[#allocation5 + $0x4d8] sm:$0xff]
    %v243 = vld [vmem:[#allocation5 + $0x4e0] sm:$0xff]
    %v244 = vld [vmem:[#allocation5 + $0x4e8] sm:$0xff]
    %v245 = vld [vmem:[#allocation5 + $0x4f0] sm:$0xff]
    %v246 = vld [vmem:[#allocation5 + $0x4f8] sm:$0xff]
    %v247 = vld [vmem:[#allocation5 + $0x500] sm:$0xff]
    %v248 = vld [vmem:[#allocation5 + $0x508] sm:$0xff]
    %v249 = vld [vmem:[#allocation5 + $0x510] sm:$0xff]
    %v250 = vld [vmem:[#allocation5 + $0x518] sm:$0xff]
    %v251 = vld [vmem:[#allocation5 + $0x520] sm:$0xff]
    %v252 = vld [vmem:[#allocation5 + $0x528] sm:$0xff]
    %v253 = vld [vmem:[#allocation5 + $0x530] sm:$0xff]
    %v254 = vld [vmem:[#allocation5 + $0x538] sm:$0xff]
    %v255 = vld [vmem:[#allocation5 + $0x540] sm:$0xff]
    %v256 = vld [vmem:[#allocation5 + $0x548] sm:$0xff]
    %v257 = vld [vmem:[#allocation5 + $0x550] sm:$0xff]
    %v258 = vld [vmem:[#allocation5 + $0x558] sm:$0xff]
    %v259 = vld [vmem:[#allocation5 + $0x560] sm:$0xff]
    %v260 = vld [vmem:[#allocation5 + $0x568] sm:$0xff]
    %v261 = vld [vmem:[#allocation5 + $0x570] sm:$0xff]
    %v262 = vld [vmem:[#allocation5 + $0x578] sm:$0xff]
    %v263 = vld [vmem:[#allocation5 + $0x580] sm:$0xff]
    %v264 = vld [vmem:[#allocation5 + $0x588] sm:$0xff]
    %v265 = vld [vmem:[#allocation5 + $0x590] sm:$0xff]
    %v266 = vld [vmem:[#allocation5 + $0x598] sm:$0xff]
    %v267 = vld [vmem:[#allocation5 + $0x5a0] sm:$0xff]
    %v268 = vld [vmem:[#allocation5 + $0x5a8] sm:$0xff]
    %v269 = vld [vmem:[#allocation5 + $0x5b0] sm:$0xff]
    %v270 = vld [vmem:[#allocation5 + $0x5b8] sm:$0xff]
    %v271 = vld [vmem:[#allocation5 + $0x5c0] sm:$0xff]
    %v272 = vld [vmem:[#allocation5 + $0x5c8] sm:$0xff]
    %v273 = vld [vmem:[#allocation5 + $0x5d0] sm:$0xff]
    %v274 = vld [vmem:[#allocation5 + $0x5d8] sm:$0xff]
    %v275 = vld [vmem:[#allocation5 + $0x5e0] sm:$0xff]
    %v276 = vld [vmem:[#allocation5 + $0x5e8] sm:$0xff]
    %v277 = vld [vmem:[#allocation5 + $0x5f0] sm:$0xff]
    %v278 = vld [vmem:[#allocation5 + $0x5f8] sm:$0xff]
    %v279 = vld [vmem:[#allocation5 + $0x600] sm:$0xff]
    %v280 = vld [vmem:[#allocation5 + $0x608] sm:$0xff]
    %v281 = vld [vmem:[#allocation5 + $0x610] sm:$0xff]
    %v282 = vld [vmem:[#allocation5 + $0x618] sm:$0xff]
    %v283 = vld [vmem:[#allocation5 + $0x620] sm:$0xff]
    %v284 = vld [vmem:[#allocation5 + $0x628] sm:$0xff]
    %v285 = vld [vmem:[#allocation5 + $0x630] sm:$0xff]
    %v286 = vld [vmem:[#allocation5 + $0x638] sm:$0xff]
    %v287 = vld [vmem:[#allocation5 + $0x640] sm:$0xff]
    %v288 = vld [vmem:[#allocation5 + $0x648] sm:$0xff]
    %v289 = vld [vmem:[#allocation5 + $0x650] sm:$0xff]
    %v290 = vld [vmem:[#allocation5 + $0x658] sm:$0xff]
    %v291 = vld [vmem:[#allocation5 + $0x660] sm:$0xff]
    %v292 = vld [vmem:[#allocation5 + $0x668] sm:$0xff]
    %v293 = vld [vmem:[#allocation5 + $0x670] sm:$0xff]
    %v294 = vld [vmem:[#allocation5 + $0x678] sm:$0xff]
    %v295 = vld [vmem:[#allocation5 + $0x680] sm:$0xff]
    %v296 = vld [vmem:[#allocation5 + $0x688] sm:$0xff]
    %v297 = vld [vmem:[#allocation5 + $0x690] sm:$0xff]
    %v298 = vld [vmem:[#allocation5 + $0x698] sm:$0xff]
    %v299 = vld [vmem:[#allocation5 + $0x6a0] sm:$0xff]
    %v300 = vld [vmem:[#allocation5 + $0x6a8] sm:$0xff]
    %v301 = vld [vmem:[#allocation5 + $0x6b0] sm:$0xff]
    %v302 = vld [vmem:[#allocation5 + $0x6b8] sm:$0xff]
    %v303 = vld [vmem:[#allocation5 + $0x6c0] sm:$0xff]
    %v304 = vld [vmem:[#allocation5 + $0x6c8] sm:$0xff]
    %v305 = vld [vmem:[#allocation5 + $0x6d0] sm:$0xff]
    %v306 = vld [vmem:[#allocation5 + $0x6d8] sm:$0xff]
    %v307 = vld [vmem:[#allocation5 + $0x6e0] sm:$0xff]
    %v308 = vld [vmem:[#allocation5 + $0x6e8] sm:$0xff]
    %v309 = vld [vmem:[#allocation5 + $0x6f0] sm:$0xff]
    %v310 = vld [vmem:[#allocation5 + $0x6f8] sm:$0xff]
    %v311 = vld [vmem:[#allocation5 + $0x700] sm:$0xff]
    %v312 = vld [vmem:[#allocation5 + $0x708] sm:$0xff]
    %v313 = vld [vmem:[#allocation5 + $0x710] sm:$0xff]
    %v314 = vld [vmem:[#allocation5 + $0x718] sm:$0xff]
    %v315 = vld [vmem:[#allocation5 + $0x720] sm:$0xff]
    %v316 = vld [vmem:[#allocation5 + $0x728] sm:$0xff]
    %v317 = vld [vmem:[#allocation5 + $0x730] sm:$0xff]
    %v318 = vld [vmem:[#allocation5 + $0x738] sm:$0xff]
    %v319 = vld [vmem:[#allocation5 + $0x740] sm:$0xff]
    %v320 = vld [vmem:[#allocation5 + $0x748] sm:$0xff]
    %v321 = vld [vmem:[#allocation5 + $0x750] sm:$0xff]
    %v322 = vld [vmem:[#allocation5 + $0x758] sm:$0xff]
    %v323 = vld [vmem:[#allocation5 + $0x760] sm:$0xff]
    %v324 = vld [vmem:[#allocation5 + $0x768] sm:$0xff]
    %v325 = vld [vmem:[#allocation5 + $0x770] sm:$0xff]
    %v326 = vld [vmem:[#allocation5 + $0x778] sm:$0xff]
    %v327 = vld [vmem:[#allocation5 + $0x780] sm:$0xff]
    %v328 = vld [vmem:[#allocation5 + $0x788] sm:$0xff]
    %v329 = vld [vmem:[#allocation5 + $0x790] sm:$0xff]
    %v330 = vld [vmem:[#allocation5 + $0x798] sm:$0xff]
    %v331 = vld [vmem:[#allocation5 + $0x7a0] sm:$0xff]
    %v332 = vld [vmem:[#allocation5 + $0x7a8] sm:$0xff]
    %v333 = vld [vmem:[#allocation5 + $0x7b0] sm:$0xff]
    %v334 = vld [vmem:[#allocation5 + $0x7b8] sm:$0xff]
    %v335 = vld [vmem:[#allocation5 + $0x7c0] sm:$0xff]
    %v336 = vld [vmem:[#allocation5 + $0x7c8] sm:$0xff]
    %v337 = vld [vmem:[#allocation5 + $0x7d0] sm:$0xff]
    %v338 = vld [vmem:[#allocation5 + $0x7d8] sm:$0xff]
    %v339 = vld [vmem:[#allocation5 + $0x7e0] sm:$0xff]
    %v340 = vld [vmem:[#allocation5 + $0x7e8] sm:$0xff]
    %v341 = vld [vmem:[#allocation5 + $0x7f0] sm:$0xff]
    %v342 = vld [vmem:[#allocation5 + $0x7f8] sm:$0xff]
    %v343 = vld [vmem:[#allocation5 + $0x800] sm:$0xff]
    %v344 = vld [vmem:[#allocation5 + $0x808] sm:$0xff]
    %v345 = vld [vmem:[#allocation5 + $0x810] sm:$0xff]
    %v346 = vld [vmem:[#allocation5 + $0x818] sm:$0xff]
    %v347 = vld [vmem:[#allocation5 + $0x820] sm:$0xff]
    %v348 = vld [vmem:[#allocation5 + $0x828] sm:$0xff]
    %v349 = vld [vmem:[#allocation5 + $0x830] sm:$0xff]
    %v350 = vld [vmem:[#allocation5 + $0x838] sm:$0xff]
    %v351 = vld [vmem:[#allocation5 + $0x840] sm:$0xff]
    %v352 = vld [vmem:[#allocation5 + $0x848] sm:$0xff]
    %v353 = vld [vmem:[#allocation5 + $0x850] sm:$0xff]
    %v354 = vld [vmem:[#allocation5 + $0x858] sm:$0xff]
    %v355 = vld [vmem:[#allocation5 + $0x860] sm:$0xff]
    %v356 = vld [vmem:[#allocation5 + $0x868] sm:$0xff]
    %v357 = vld [vmem:[#allocation5 + $0x870] sm:$0xff]
    %v358 = vld [vmem:[#allocation5 + $0x878] sm:$0xff]
    %v359 = vld [vmem:[#allocation5 + $0x880] sm:$0xff]
    %v360 = vld [vmem:[#allocation5 + $0x888] sm:$0xff]
    %v361 = vld [vmem:[#allocation5 + $0x890] sm:$0xff]
    %v362 = vld [vmem:[#allocation5 + $0x898] sm:$0xff]
    %v363 = vld [vmem:[#allocation5 + $0x8a0] sm:$0xff]
    %v364 = vld [vmem:[#allocation5 + $0x8a8] sm:$0xff]
    %v365 = vld [vmem:[#allocation5 + $0x8b0] sm:$0xff]
    %v366 = vld [vmem:[#allocation5 + $0x8b8] sm:$0xff]
    %v367 = vld [vmem:[#allocation5 + $0x8c0] sm:$0xff]
    %v368 = vld [vmem:[#allocation5 + $0x8c8] sm:$0xff]
    %v369 = vld [vmem:[#allocation5 + $0x8d0] sm:$0xff]
    %v370 = vld [vmem:[#allocation5 + $0x8d8] sm:$0xff]
    %v371 = vld [vmem:[#allocation5 + $0x8e0] sm:$0xff]
    %v372 = vld [vmem:[#allocation5 + $0x8e8] sm:$0xff]
    %v373 = vld [vmem:[#allocation5 + $0x8f0] sm:$0xff]
    %v374 = vld [vmem:[#allocation5 + $0x8f8] sm:$0xff]
    %v375 = vld [vmem:[#allocation5 + $0x900] sm:$0xff]
    %v376 = vld [vmem:[#allocation5 + $0x908] sm:$0xff]
    %v377 = vld [vmem:[#allocation5 + $0x910] sm:$0xff]
    %v378 = vld [vmem:[#allocation5 + $0x918] sm:$0xff]
    %v379 = vld [vmem:[#allocation5 + $0x920] sm:$0xff]
    %v380 = vld [vmem:[#allocation5 + $0x928] sm:$0xff]
    %v381 = vld [vmem:[#allocation5 + $0x930] sm:$0xff]
    %v382 = vld [vmem:[#allocation5 + $0x938] sm:$0xff]
    %v383 = vld [vmem:[#allocation5 + $0x940] sm:$0xff]
    %v384 = vld [vmem:[#allocation5 + $0x948] sm:$0xff]
    %v385 = vld [vmem:[#allocation5 + $0x950] sm:$0xff]
    %v386 = vld [vmem:[#allocation5 + $0x958] sm:$0xff]
    %v387 = vld [vmem:[#allocation5 + $0x960] sm:$0xff]
    %v388 = vld [vmem:[#allocation5 + $0x968] sm:$0xff]
    %v389 = vld [vmem:[#allocation5 + $0x970] sm:$0xff]
    %v390 = vld [vmem:[#allocation5 + $0x978] sm:$0xff]
    %v391 = vld [vmem:[#allocation5 + $0x980] sm:$0xff]
    %v392 = vld [vmem:[#allocation5 + $0x988] sm:$0xff]
    %v393 = vld [vmem:[#allocation5 + $0x990] sm:$0xff]
    %v394 = vld [vmem:[#allocation5 + $0x998] sm:$0xff]
    %v395 = vld [vmem:[#allocation5 + $0x9a0] sm:$0xff]
    %v396 = vld [vmem:[#allocation5 + $0x9a8] sm:$0xff]
    %v397 = vld [vmem:[#allocation5 + $0x9b0] sm:$0xff]
    %v398 = vld [vmem:[#allocation5 + $0x9b8] sm:$0xff]
    %v399 = vld [vmem:[#allocation5 + $0x9c0] sm:$0xff]
    %v400 = vld [vmem:[#allocation5 + $0x9c8] sm:$0xff]
    %v401 = vld [vmem:[#allocation5 + $0x9d0] sm:$0xff]
    %v402 = vld [vmem:[#allocation5 + $0x9d8] sm:$0xff]
    %v403 = vld [vmem:[#allocation5 + $0x9e0] sm:$0xff]
    %v404 = vld [vmem:[#allocation5 + $0x9e8] sm:$0xff]
    %v405 = vld [vmem:[#allocation5 + $0x9f0] sm:$0xff]
    %v406 = vld [vmem:[#allocation5 + $0x9f8] sm:$0xff]
    %v407 = vld [vmem:[#allocation5 + $0xa00] sm:$0xff]
    %v408 = vld [vmem:[#allocation5 + $0xa08] sm:$0xff]
    %v409 = vld [vmem:[#allocation5 + $0xa10] sm:$0xff]
    %v410 = vld [vmem:[#allocation5 + $0xa18] sm:$0xff]
    %v411 = vld [vmem:[#allocation5 + $0xa20] sm:$0xff]
    %v412 = vld [vmem:[#allocation5 + $0xa28] sm:$0xff]
    %v413 = vld [vmem:[#allocation5 + $0xa30] sm:$0xff]
    %v414 = vld [vmem:[#allocation5 + $0xa38] sm:$0xff]
    %v415 = vld [vmem:[#allocation5 + $0xa40] sm:$0xff]
    %v416 = vld [vmem:[#allocation5 + $0xa48] sm:$0xff]
    %v417 = vld [vmem:[#allocation5 + $0xa50] sm:$0xff]
    %v418 = vld [vmem:[#allocation5 + $0xa58] sm:$0xff]
    %v419 = vld [vmem:[#allocation5 + $0xa60] sm:$0xff]
    %v420 = vld [vmem:[#allocation5 + $0xa68] sm:$0xff]
    %v421 = vld [vmem:[#allocation5 + $0xa70] sm:$0xff]
    %v422 = vld [vmem:[#allocation5 + $0xa78] sm:$0xff]
    %v423 = vld [vmem:[#allocation5 + $0xa80] sm:$0xff]
    %v424 = vld [vmem:[#allocation5 + $0xa88] sm:$0xff]
    %v425 = vld [vmem:[#allocation5 + $0xa90] sm:$0xff]
    %v426 = vld [vmem:[#allocation5 + $0xa98] sm:$0xff]
    %v427 = vld [vmem:[#allocation5 + $0xaa0] sm:$0xff]
    %v428 = vld [vmem:[#allocation5 + $0xaa8] sm:$0xff]
    %v429 = vld [vmem:[#allocation5 + $0xab0] sm:$0xff]
    %v430 = vld [vmem:[#allocation5 + $0xab8] sm:$0xff]
    %v431 = vld [vmem:[#allocation5 + $0xac0] sm:$0xff]
    %v432 = vld [vmem:[#allocation5 + $0xac8] sm:$0xff]
    %v433 = vld [vmem:[#allocation5 + $0xad0] sm:$0xff]
    %v434 = vld [vmem:[#allocation5 + $0xad8] sm:$0xff]
    %v435 = vld [vmem:[#allocation5 + $0xae0] sm:$0xff]
    %v436 = vld [vmem:[#allocation5 + $0xae8] sm:$0xff]
    %v437 = vld [vmem:[#allocation5 + $0xaf0] sm:$0xff]
    %v438 = vld [vmem:[#allocation5 + $0xaf8] sm:$0xff]
    %v439 = vld [vmem:[#allocation5 + $0xb00] sm:$0xff]
    %v440 = vld [vmem:[#allocation5 + $0xb08] sm:$0xff]
    %v441 = vld [vmem:[#allocation5 + $0xb10] sm:$0xff]
    %v442 = vld [vmem:[#allocation5 + $0xb18] sm:$0xff]
    %v443 = vld [vmem:[#allocation5 + $0xb20] sm:$0xff]
    %v444 = vld [vmem:[#allocation5 + $0xb28] sm:$0xff]
    %v445 = vld [vmem:[#allocation5 + $0xb30] sm:$0xff]
    %v446 = vld [vmem:[#allocation5 + $0xb38] sm:$0xff]
    %v447 = vld [vmem:[#allocation5 + $0xb40] sm:$0xff]
    %v448 = vld [vmem:[#allocation5 + $0xb48] sm:$0xff]
    %v449 = vld [vmem:[#allocation5 + $0xb50] sm:$0xff]
    %v450 = vld [vmem:[#allocation5 + $0xb58] sm:$0xff]
    %v451 = vld [vmem:[#allocation5 + $0xb60] sm:$0xff]
    %v452 = vld [vmem:[#allocation5 + $0xb68] sm:$0xff]
    %v453 = vld [vmem:[#allocation5 + $0xb70] sm:$0xff]
    %v454 = vld [vmem:[#allocation5 + $0xb78] sm:$0xff]
    %v455 = vld [vmem:[#allocation5 + $0xb80] sm:$0xff]
    %v456 = vld [vmem:[#allocation5 + $0xb88] sm:$0xff]
    %v457 = vld [vmem:[#allocation5 + $0xb90] sm:$0xff]
    %v458 = vld [vmem:[#allocation5 + $0xb98] sm:$0xff]
    %v459 = vld [vmem:[#allocation5 + $0xba0] sm:$0xff]
    %v460 = vld [vmem:[#allocation5 + $0xba8] sm:$0xff]
    %v461 = vld [vmem:[#allocation5 + $0xbb0] sm:$0xff]
    %v462 = vld [vmem:[#allocation5 + $0xbb8] sm:$0xff]
    %v463 = vld [vmem:[#allocation5 + $0xbc0] sm:$0xff]
    %v464 = vld [vmem:[#allocation5 + $0xbc8] sm:$0xff]
    %v465 = vld [vmem:[#allocation5 + $0xbd0] sm:$0xff]
    %v466 = vld [vmem:[#allocation5 + $0xbd8] sm:$0xff]
    %v467 = vld [vmem:[#allocation5 + $0xbe0] sm:$0xff]
    %v468 = vld [vmem:[#allocation5 + $0xbe8] sm:$0xff]
    %v469 = vld [vmem:[#allocation5 + $0xbf0] sm:$0xff]
    %v470 = vld [vmem:[#allocation5 + $0xbf8] sm:$0xff]
    %v471 = vld [vmem:[#allocation5 + $0xc00] sm:$0xff]
    %v472 = vld [vmem:[#allocation5 + $0xc08] sm:$0xff]
    %v473 = vld [vmem:[#allocation5 + $0xc10] sm:$0xff]
    %v474 = vld [vmem:[#allocation5 + $0xc18] sm:$0xff]
    %v475 = vld [vmem:[#allocation5 + $0xc20] sm:$0xff]
    %v476 = vld [vmem:[#allocation5 + $0xc28] sm:$0xff]
    %v477 = vld [vmem:[#allocation5 + $0xc30] sm:$0xff]
    %v478 = vld [vmem:[#allocation5 + $0xc38] sm:$0xff]
    %v479 = vld [vmem:[#allocation5 + $0xc40] sm:$0xff]
    %v480 = vld [vmem:[#allocation5 + $0xc48] sm:$0xff]
    %v481 = vld [vmem:[#allocation5 + $0xc50] sm:$0xff]
    %v482 = vld [vmem:[#allocation5 + $0xc58] sm:$0xff]
    %v483 = vld [vmem:[#allocation5 + $0xc60] sm:$0xff]
    %v484 = vld [vmem:[#allocation5 + $0xc68] sm:$0xff]
    %v485 = vld [vmem:[#allocation5 + $0xc70] sm:$0xff]
    %v486 = vld [vmem:[#allocation5 + $0xc78] sm:$0xff]
    %v487 = vld [vmem:[#allocation5 + $0xc80] sm:$0xff]
    %v488 = vld [vmem:[#allocation5 + $0xc88] sm:$0xff]
    %v489 = vld [vmem:[#allocation5 + $0xc90] sm:$0xff]
    %v490 = vld [vmem:[#allocation5 + $0xc98] sm:$0xff]
    %v491 = vld [vmem:[#allocation5 + $0xca0] sm:$0xff]
    %v492 = vld [vmem:[#allocation5 + $0xca8] sm:$0xff]
    %v493 = vld [vmem:[#allocation5 + $0xcb0] sm:$0xff]
    %v494 = vld [vmem:[#allocation5 + $0xcb8] sm:$0xff]
    %v495 = vld [vmem:[#allocation5 + $0xcc0] sm:$0xff]
    %v496 = vld [vmem:[#allocation5 + $0xcc8] sm:$0xff]
    %v497 = vld [vmem:[#allocation5 + $0xcd0] sm:$0xff]
    %v498 = vld [vmem:[#allocation5 + $0xcd8] sm:$0xff]
    %v499 = vld [vmem:[#allocation5 + $0xce0] sm:$0xff]
    %v500 = vld [vmem:[#allocation5 + $0xce8] sm:$0xff]
    %v501 = vld [vmem:[#allocation5 + $0xcf0] sm:$0xff]
    %v502 = vld [vmem:[#allocation5 + $0xcf8] sm:$0xff]
    %v503 = vld [vmem:[#allocation5 + $0xd00] sm:$0xff]
    %v504 = vld [vmem:[#allocation5 + $0xd08] sm:$0xff]
    %v505 = vld [vmem:[#allocation5 + $0xd10] sm:$0xff]
    %v506 = vld [vmem:[#allocation5 + $0xd18] sm:$0xff]
    %v507 = vld [vmem:[#allocation5 + $0xd20] sm:$0xff]
    %v508 = vld [vmem:[#allocation5 + $0xd28] sm:$0xff]
    %v509 = vld [vmem:[#allocation5 + $0xd30] sm:$0xff]
    %v510 = vld [vmem:[#allocation5 + $0xd38] sm:$0xff]
    %v511 = vld [vmem:[#allocation5 + $0xd40] sm:$0xff]
    %v512 = vld [vmem:[#allocation5 + $0xd48] sm:$0xff]
    %v513 = vld [vmem:[#allocation5 + $0xd50] sm:$0xff]
    %v514 = vld [vmem:[#allocation5 + $0xd58] sm:$0xff]
    %v515 = vld [vmem:[#allocation5 + $0xd60] sm:$0xff]
    %v516 = vld [vmem:[#allocation5 + $0xd68] sm:$0xff]
    %v517 = vld [vmem:[#allocation5 + $0xd70] sm:$0xff]
    %v518 = vld [vmem:[#allocation5 + $0xd78] sm:$0xff]
    %v519 = vld [vmem:[#allocation5 + $0xd80] sm:$0xff]
    %v520 = vld [vmem:[#allocation5 + $0xd88] sm:$0xff]
    %v521 = vld [vmem:[#allocation5 + $0xd90] sm:$0xff]
    %v522 = vld [vmem:[#allocation5 + $0xd98] sm:$0xff]
    %v523 = vld [vmem:[#allocation5 + $0xda0] sm:$0xff]
    %v524 = vld [vmem:[#allocation5 + $0xda8] sm:$0xff]
    %v525 = vld [vmem:[#allocation5 + $0xdb0] sm:$0xff]
    %v526 = vld [vmem:[#allocation5 + $0xdb8] sm:$0xff]
    %v527 = vld [vmem:[#allocation5 + $0xdc0] sm:$0xff]
    %v528 = vld [vmem:[#allocation5 + $0xdc8] sm:$0xff]
    %v529 = vld [vmem:[#allocation5 + $0xdd0] sm:$0xff]
    %v530 = vld [vmem:[#allocation5 + $0xdd8] sm:$0xff]
    %v531 = vld [vmem:[#allocation5 + $0xde0] sm:$0xff]
    %v532 = vld [vmem:[#allocation5 + $0xde8] sm:$0xff]
    %v533 = vld [vmem:[#allocation5 + $0xdf0] sm:$0xff]
    %v534 = vld [vmem:[#allocation5 + $0xdf8] sm:$0xff]
    %v535 = vld [vmem:[#allocation5 + $0xe00] sm:$0xff]
    %v536 = vld [vmem:[#allocation5 + $0xe08] sm:$0xff]
    %v537 = vld [vmem:[#allocation5 + $0xe10] sm:$0xff]
    %v538 = vld [vmem:[#allocation5 + $0xe18] sm:$0xff]
    %v539 = vld [vmem:[#allocation5 + $0xe20] sm:$0xff]
    %v540 = vld [vmem:[#allocation5 + $0xe28] sm:$0xff]
    %v541 = vld [vmem:[#allocation5 + $0xe30] sm:$0xff]
    %v542 = vld [vmem:[#allocation5 + $0xe38] sm:$0xff]
    %v543 = vld [vmem:[#allocation5 + $0xe40] sm:$0xff]
    %v544 = vld [vmem:[#allocation5 + $0xe48] sm:$0xff]
    %v545 = vld [vmem:[#allocation5 + $0xe50] sm:$0xff]
    %v546 = vld [vmem:[#allocation5 + $0xe58] sm:$0xff]
    %v547 = vld [vmem:[#allocation5 + $0xe60] sm:$0xff]
    %v548 = vld [vmem:[#allocation5 + $0xe68] sm:$0xff]
    %v549 = vld [vmem:[#allocation5 + $0xe70] sm:$0xff]
    %v550 = vld [vmem:[#allocation5 + $0xe78] sm:$0xff]
    %v551 = vld [vmem:[#allocation5 + $0xe80] sm:$0xff]
    %v552 = vld [vmem:[#allocation5 + $0xe88] sm:$0xff]
    %v553 = vld [vmem:[#allocation5 + $0xe90] sm:$0xff]
    %v554 = vld [vmem:[#allocation5 + $0xe98] sm:$0xff]
    %v555 = vld [vmem:[#allocation5 + $0xea0] sm:$0xff]
    %v556 = vld [vmem:[#allocation5 + $0xea8] sm:$0xff]
    %v557 = vld [vmem:[#allocation5 + $0xeb0] sm:$0xff]
    %v558 = vld [vmem:[#allocation5 + $0xeb8] sm:$0xff]
    %v559 = vld [vmem:[#allocation5 + $0xec0] sm:$0xff]
    %v560 = vld [vmem:[#allocation5 + $0xec8] sm:$0xff]
    %v561 = vld [vmem:[#allocation5 + $0xed0] sm:$0xff]
    %v562 = vld [vmem:[#allocation5 + $0xed8] sm:$0xff]
    %v563 = vld [vmem:[#allocation5 + $0xee0] sm:$0xff]
    %v564 = vld [vmem:[#allocation5 + $0xee8] sm:$0xff]
    %v565 = vld [vmem:[#allocation5 + $0xef0] sm:$0xff]
    %v566 = vld [vmem:[#allocation5 + $0xef8] sm:$0xff]
    %v567 = vld [vmem:[#allocation5 + $0xf00] sm:$0xff]
    %v568 = vld [vmem:[#allocation5 + $0xf08] sm:$0xff]
    %v569 = vld [vmem:[#allocation5 + $0xf10] sm:$0xff]
    %v570 = vld [vmem:[#allocation5 + $0xf18] sm:$0xff]
    %v571 = vld [vmem:[#allocation5 + $0xf20] sm:$0xff]
    %v572 = vld [vmem:[#allocation5 + $0xf28] sm:$0xff]
    %v573 = vld [vmem:[#allocation5 + $0xf30] sm:$0xff]
    %v574 = vld [vmem:[#allocation5 + $0xf38] sm:$0xff]
    %v575 = vld [vmem:[#allocation5 + $0xf40] sm:$0xff]
    %v576 = vld [vmem:[#allocation5 + $0xf48] sm:$0xff]
    %v577 = vld [vmem:[#allocation5 + $0xf50] sm:$0xff]
    %v578 = vld [vmem:[#allocation5 + $0xf58] sm:$0xff]
    %v579 = vld [vmem:[#allocation5 + $0xf60] sm:$0xff]
    %v580 = vld [vmem:[#allocation5 + $0xf68] sm:$0xff]
    %v581 = vld [vmem:[#allocation5 + $0xf70] sm:$0xff]
    %v582 = vld [vmem:[#allocation5 + $0xf78] sm:$0xff]
    %v583 = vld [vmem:[#allocation5 + $0xf80] sm:$0xff]
    %v584 = vld [vmem:[#allocation5 + $0xf88] sm:$0xff]
    %v585 = vld [vmem:[#allocation5 + $0xf90] sm:$0xff]
    %v586 = vld [vmem:[#allocation5 + $0xf98] sm:$0xff]
    %v587 = vld [vmem:[#allocation5 + $0xfa0] sm:$0xff]
    %v588 = vld [vmem:[#allocation5 + $0xfa8] sm:$0xff]
    %v589 = vld [vmem:[#allocation5 + $0xfb0] sm:$0xff]
    %v590 = vld [vmem:[#allocation5 + $0xfb8] sm:$0xff]
    %v591 = vld [vmem:[#allocation5 + $0xfc0] sm:$0xff]
    %v592 = vld [vmem:[#allocation5 + $0xfc8] sm:$0xff]
    %v593 = vld [vmem:[#allocation5 + $0xfd0] sm:$0xff]
    %v594 = vld [vmem:[#allocation5 + $0xfd8] sm:$0xff]
    %v595 = vld [vmem:[#allocation5 + $0xfe0] sm:$0xff]
    %v596 = vld [vmem:[#allocation5 + $0xfe8] sm:$0xff]
    %v597 = vld [vmem:[#allocation5 + $0xff0] sm:$0xff]
    %v598 = vld [vmem:[#allocation5 + $0xff8] sm:$0xff]
    %v599 = vld [vmem:[#allocation5 + $0x1000] sm:$0xff]
    %v600 = vld [vmem:[#allocation5 + $0x1008] sm:$0xff]
    %v601 = vld [vmem:[#allocation5 + $0x1010] sm:$0xff]
    %v602 = vld [vmem:[#allocation5 + $0x1018] sm:$0xff]
    %v603 = vld [vmem:[#allocation5 + $0x1020] sm:$0xff]
    %v604 = vld [vmem:[#allocation5 + $0x1028] sm:$0xff]
    %v605 = vld [vmem:[#allocation5 + $0x1030] sm:$0xff]
    %v606 = vld [vmem:[#allocation5 + $0x1038] sm:$0xff]
    %v607 = vld [vmem:[#allocation5 + $0x1040] sm:$0xff]
    %v608 = vld [vmem:[#allocation5 + $0x1048] sm:$0xff]
    %v609 = vld [vmem:[#allocation5 + $0x1050] sm:$0xff]
    %v610 = vld [vmem:[#allocation5 + $0x1058] sm:$0xff]
    %v611 = vld [vmem:[#allocation5 + $0x1060] sm:$0xff]
    %v612 = vld [vmem:[#allocation5 + $0x1068] sm:$0xff]
    %v613 = vld [vmem:[#allocation5 + $0x1070] sm:$0xff]
    %v614 = vld [vmem:[#allocation5 + $0x1078] sm:$0xff]
    %v615 = vld [vmem:[#allocation5 + $0x1080] sm:$0xff]
    %v616 = vld [vmem:[#allocation5 + $0x1088] sm:$0xff]
    %v617 = vld [vmem:[#allocation5 + $0x1090] sm:$0xff]
    %v618 = vld [vmem:[#allocation5 + $0x1098] sm:$0xff]
    %v619 = vld [vmem:[#allocation5 + $0x10a0] sm:$0xff]
    %v620 = vld [vmem:[#allocation5 + $0x10a8] sm:$0xff]
    %v621 = vld [vmem:[#allocation5 + $0x10b0] sm:$0xff]
    %v622 = vld [vmem:[#allocation5 + $0x10b8] sm:$0xff]
    %v623 = vld [vmem:[#allocation5 + $0x10c0] sm:$0xff]
    %v624 = vld [vmem:[#allocation5 + $0x10c8] sm:$0xff]
    %v625 = vld [vmem:[#allocation5 + $0x10d0] sm:$0xff]
    %v626 = vld [vmem:[#allocation5 + $0x10d8] sm:$0xff]
    %v627 = vld [vmem:[#allocation5 + $0x10e0] sm:$0xff]
    %v628 = vld [vmem:[#allocation5 + $0x10e8] sm:$0xff]
    %v629 = vld [vmem:[#allocation5 + $0x10f0] sm:$0xff]
    %v630 = vld [vmem:[#allocation5 + $0x10f8] sm:$0xff]
    %v631 = vld [vmem:[#allocation5 + $0x1100] sm:$0xff]
    %v632 = vld [vmem:[#allocation5 + $0x1108] sm:$0xff]
    %v633 = vld [vmem:[#allocation5 + $0x1110] sm:$0xff]
    %v634 = vld [vmem:[#allocation5 + $0x1118] sm:$0xff]
    %v635 = vld [vmem:[#allocation5 + $0x1120] sm:$0xff]
    %v636 = vld [vmem:[#allocation5 + $0x1128] sm:$0xff]
    %v637 = vld [vmem:[#allocation5 + $0x1130] sm:$0xff]
    %v638 = vld [vmem:[#allocation5 + $0x1138] sm:$0xff]
    %v639 = vld [vmem:[#allocation5 + $0x1140] sm:$0xff]
    %v640 = vld [vmem:[#allocation5 + $0x1148] sm:$0xff]
    %v641 = vld [vmem:[#allocation5 + $0x1150] sm:$0xff]
    %v642 = vld [vmem:[#allocation5 + $0x1158] sm:$0xff]
    %v643 = vld [vmem:[#allocation5 + $0x1160] sm:$0xff]
    %v644 = vld [vmem:[#allocation5 + $0x1168] sm:$0xff]
    %v645 = vld [vmem:[#allocation5 + $0x1170] sm:$0xff]
    %v646 = vld [vmem:[#allocation5 + $0x1178] sm:$0xff]
    %v647 = vld [vmem:[#allocation5 + $0x1180] sm:$0xff]
    %v648 = vld [vmem:[#allocation5 + $0x1188] sm:$0xff]
    %v649 = vld [vmem:[#allocation5 + $0x1190] sm:$0xff]
    %v650 = vld [vmem:[#allocation5 + $0x1198] sm:$0xff]
    %v651 = vld [vmem:[#allocation5 + $0x11a0] sm:$0xff]
    %v652 = vld [vmem:[#allocation5 + $0x11a8] sm:$0xff]
    %v653 = vld [vmem:[#allocation5 + $0x11b0] sm:$0xff]
    %v654 = vld [vmem:[#allocation5 + $0x11b8] sm:$0xff]
    %v655 = vld [vmem:[#allocation5 + $0x11c0] sm:$0xff]
    %v656 = vld [vmem:[#allocation5 + $0x11c8] sm:$0xff]
    %v657 = vld [vmem:[#allocation5 + $0x11d0] sm:$0xff]
    %v658 = vld [vmem:[#allocation5 + $0x11d8] sm:$0xff]
    %v659 = vld [vmem:[#allocation5 + $0x11e0] sm:$0xff]
    %v660 = vld [vmem:[#allocation5 + $0x11e8] sm:$0xff]
    %v661 = vld [vmem:[#allocation5 + $0x11f0] sm:$0xff]
    %v662 = vld [vmem:[#allocation5 + $0x11f8] sm:$0xff]
    %v663 = vld [vmem:[#allocation5 + $0x1200] sm:$0xff]
    %v664 = vld [vmem:[#allocation5 + $0x1208] sm:$0xff]
    %v665 = vld [vmem:[#allocation5 + $0x1210] sm:$0xff]
    %v666 = vld [vmem:[#allocation5 + $0x1218] sm:$0xff]
    %v667 = vld [vmem:[#allocation5 + $0x1220] sm:$0xff]
    %v668 = vld [vmem:[#allocation5 + $0x1228] sm:$0xff]
    %v669 = vld [vmem:[#allocation5 + $0x1230] sm:$0xff]
    %v670 = vld [vmem:[#allocation5 + $0x1238] sm:$0xff]
    %v671 = vld [vmem:[#allocation5 + $0x1240] sm:$0xff]
    %v672 = vld [vmem:[#allocation5 + $0x1248] sm:$0xff]
    %v673 = vld [vmem:[#allocation5 + $0x1250] sm:$0xff]
    %v674 = vld [vmem:[#allocation5 + $0x1258] sm:$0xff]
    %v675 = vld [vmem:[#allocation5 + $0x1260] sm:$0xff]
    %v676 = vld [vmem:[#allocation5 + $0x1268] sm:$0xff]
    %v677 = vld [vmem:[#allocation5 + $0x1270] sm:$0xff]
    %v678 = vld [vmem:[#allocation5 + $0x1278] sm:$0xff]
    %v679 = vld [vmem:[#allocation5 + $0x1280] sm:$0xff]
    %v680 = vld [vmem:[#allocation5 + $0x1288] sm:$0xff]
    %v681 = vld [vmem:[#allocation5 + $0x1290] sm:$0xff]
    %v682 = vld [vmem:[#allocation5 + $0x1298] sm:$0xff]
    %v683 = vld [vmem:[#allocation5 + $0x12a0] sm:$0xff]
    %v684 = vld [vmem:[#allocation5 + $0x12a8] sm:$0xff]
    %v685 = vld [vmem:[#allocation5 + $0x12b0] sm:$0xff]
    %v686 = vld [vmem:[#allocation5 + $0x12b8] sm:$0xff]
    %v687 = vld [vmem:[#allocation5 + $0x12c0] sm:$0xff]
    %v688 = vld [vmem:[#allocation5 + $0x12c8] sm:$0xff]
    %v689 = vld [vmem:[#allocation5 + $0x12d0] sm:$0xff]
    %v690 = vld [vmem:[#allocation5 + $0x12d8] sm:$0xff]
    %v691 = vld [vmem:[#allocation5 + $0x12e0] sm:$0xff]
    %v692 = vld [vmem:[#allocation5 + $0x12e8] sm:$0xff]
    %v693 = vld [vmem:[#allocation5 + $0x12f0] sm:$0xff]
    %v694 = vld [vmem:[#allocation5 + $0x12f8] sm:$0xff]
    %v695 = vld [vmem:[#allocation5 + $0x1300] sm:$0xff]
    %v696 = vld [vmem:[#allocation5 + $0x1308] sm:$0xff]
    %v697 = vld [vmem:[#allocation5 + $0x1310] sm:$0xff]
    %v698 = vld [vmem:[#allocation5 + $0x1318] sm:$0xff]
    %v699 = vld [vmem:[#allocation5 + $0x1320] sm:$0xff]
    %v700 = vld [vmem:[#allocation5 + $0x1328] sm:$0xff]
    %v701 = vld [vmem:[#allocation5 + $0x1330] sm:$0xff]
    %v702 = vld [vmem:[#allocation5 + $0x1338] sm:$0xff]
    %v703 = vld [vmem:[#allocation5 + $0x1340] sm:$0xff]
    %v704 = vld [vmem:[#allocation5 + $0x1348] sm:$0xff]
    %v705 = vld [vmem:[#allocation5 + $0x1350] sm:$0xff]
    %v706 = vld [vmem:[#allocation5 + $0x1358] sm:$0xff]
    %v707 = vld [vmem:[#allocation5 + $0x1360] sm:$0xff]
    %v708 = vld [vmem:[#allocation5 + $0x1368] sm:$0xff]
    %v709 = vld [vmem:[#allocation5 + $0x1370] sm:$0xff]
    %v710 = vld [vmem:[#allocation5 + $0x1378] sm:$0xff]
    %v711 = vld [vmem:[#allocation5 + $0x1380] sm:$0xff]
    %v712 = vld [vmem:[#allocation5 + $0x1388] sm:$0xff]
    %v713 = vld [vmem:[#allocation5 + $0x1390] sm:$0xff]
    %v714 = vld [vmem:[#allocation5 + $0x1398] sm:$0xff]
    %v715 = vld [vmem:[#allocation5 + $0x13a0] sm:$0xff]
    %v716 = vld [vmem:[#allocation5 + $0x13a8] sm:$0xff]
    %v717 = vld [vmem:[#allocation5 + $0x13b0] sm:$0xff]
    %v718 = vld [vmem:[#allocation5 + $0x13b8] sm:$0xff]
    %v719 = vld [vmem:[#allocation5 + $0x13c0] sm:$0xff]
    %v720 = vld [vmem:[#allocation5 + $0x13c8] sm:$0xff]
    %v721 = vld [vmem:[#allocation5 + $0x13d0] sm:$0xff]
    %v722 = vld [vmem:[#allocation5 + $0x13d8] sm:$0xff]
    %v723 = vld [vmem:[#allocation5 + $0x13e0] sm:$0xff]
    %v724 = vld [vmem:[#allocation5 + $0x13e8] sm:$0xff]
    %v725 = vld [vmem:[#allocation5 + $0x13f0] sm:$0xff]
    %v726 = vld [vmem:[#allocation5 + $0x13f8] sm:$0xff]
    %v727 = vld [vmem:[#allocation5 + $0x1400] sm:$0xff]
    %v728 = vld [vmem:[#allocation5 + $0x1408] sm:$0xff]
    %v729 = vld [vmem:[#allocation5 + $0x1410] sm:$0xff]
    %v730 = vld [vmem:[#allocation5 + $0x1418] sm:$0xff]
    %v731 = vld [vmem:[#allocation5 + $0x1420] sm:$0xff]
    %v732 = vld [vmem:[#allocation5 + $0x1428] sm:$0xff]
    %v733 = vld [vmem:[#allocation5 + $0x1430] sm:$0xff]
    %v734 = vld [vmem:[#allocation5 + $0x1438] sm:$0xff]
    %v735 = vld [vmem:[#allocation5 + $0x1440] sm:$0xff]
    %v736 = vld [vmem:[#allocation5 + $0x1448] sm:$0xff]
    %v737 = vld [vmem:[#allocation5 + $0x1450] sm:$0xff]
    %v738 = vld [vmem:[#allocation5 + $0x1458] sm:$0xff]
    %v739 = vld [vmem:[#allocation5 + $0x1460] sm:$0xff]
    %v740 = vld [vmem:[#allocation5 + $0x1468] sm:$0xff]
    %v741 = vld [vmem:[#allocation5 + $0x1470] sm:$0xff]
    %v742 = vld [vmem:[#allocation5 + $0x1478] sm:$0xff]
    %v743 = vld [vmem:[#allocation5 + $0x1480] sm:$0xff]
    %v744 = vld [vmem:[#allocation5 + $0x1488] sm:$0xff]
    %v745 = vld [vmem:[#allocation5 + $0x1490] sm:$0xff]
    %v746 = vld [vmem:[#allocation5 + $0x1498] sm:$0xff]
    %v747 = vld [vmem:[#allocation5 + $0x14a0] sm:$0xff]
    %v748 = vld [vmem:[#allocation5 + $0x14a8] sm:$0xff]
    %v749 = vld [vmem:[#allocation5 + $0x14b0] sm:$0xff]
    %v750 = vld [vmem:[#allocation5 + $0x14b8] sm:$0xff]
    %v751 = vld [vmem:[#allocation5 + $0x14c0] sm:$0xff]
    %v752 = vld [vmem:[#allocation5 + $0x14c8] sm:$0xff]
    %v753 = vld [vmem:[#allocation5 + $0x14d0] sm:$0xff]
    %v754 = vld [vmem:[#allocation5 + $0x14d8] sm:$0xff]
    %v755 = vld [vmem:[#allocation5 + $0x14e0] sm:$0xff]
    %v756 = vld [vmem:[#allocation5 + $0x14e8] sm:$0xff]
    %v757 = vld [vmem:[#allocation5 + $0x14f0] sm:$0xff]
    %v758 = vld [vmem:[#allocation5 + $0x14f8] sm:$0xff]
    %v759 = vld [vmem:[#allocation5 + $0x1500] sm:$0xff]
    %v760 = vld [vmem:[#allocation5 + $0x1508] sm:$0xff]
    %v761 = vld [vmem:[#allocation5 + $0x1510] sm:$0xff]
    %v762 = vld [vmem:[#allocation5 + $0x1518] sm:$0xff]
    %v763 = vld [vmem:[#allocation5 + $0x1520] sm:$0xff]
    %v764 = vld [vmem:[#allocation5 + $0x1528] sm:$0xff]
    %v765 = vld [vmem:[#allocation5 + $0x1530] sm:$0xff]
    %v766 = vld [vmem:[#allocation5 + $0x1538] sm:$0xff]
    %v767 = vld [vmem:[#allocation5 + $0x1540] sm:$0xff]
    %v768 = vld [vmem:[#allocation5 + $0x1548] sm:$0xff]
    %v769 = vld [vmem:[#allocation5 + $0x1550] sm:$0xff]
    %v770 = vld [vmem:[#allocation5 + $0x1558] sm:$0xff]
    %v771 = vld [vmem:[#allocation5 + $0x1560] sm:$0xff]
    %v772 = vld [vmem:[#allocation5 + $0x1568] sm:$0xff]
    %v773 = vld [vmem:[#allocation5 + $0x1570] sm:$0xff]
    %v774 = vld [vmem:[#allocation5 + $0x1578] sm:$0xff]
    %v775 = vld [vmem:[#allocation5 + $0x1580] sm:$0xff]
    %v776 = vld [vmem:[#allocation5 + $0x1588] sm:$0xff]
    %v777 = vld [vmem:[#allocation5 + $0x1590] sm:$0xff]
    %v778 = vld [vmem:[#allocation5 + $0x1598] sm:$0xff]
    %v779 = vld [vmem:[#allocation5 + $0x15a0] sm:$0xff]
    %v780 = vld [vmem:[#allocation5 + $0x15a8] sm:$0xff]
    %v781 = vld [vmem:[#allocation5 + $0x15b0] sm:$0xff]
    %v782 = vld [vmem:[#allocation5 + $0x15b8] sm:$0xff]
    %v783 = vld [vmem:[#allocation5 + $0x15c0] sm:$0xff]
    %v784 = vld [vmem:[#allocation5 + $0x15c8] sm:$0xff]
    %v785 = vld [vmem:[#allocation5 + $0x15d0] sm:$0xff]
    %v786 = vld [vmem:[#allocation5 + $0x15d8] sm:$0xff]
    %v787 = vld [vmem:[#allocation5 + $0x15e0] sm:$0xff]
    %v788 = vld [vmem:[#allocation5 + $0x15e8] sm:$0xff]
    %v789 = vld [vmem:[#allocation5 + $0x15f0] sm:$0xff]
    %v790 = vld [vmem:[#allocation5 + $0x15f8] sm:$0xff]
    %v791 = vld [vmem:[#allocation5 + $0x1600] sm:$0xff]
    %v792 = vld [vmem:[#allocation5 + $0x1608] sm:$0xff]
    %v793 = vld [vmem:[#allocation5 + $0x1610] sm:$0xff]
    %v794 = vld [vmem:[#allocation5 + $0x1618] sm:$0xff]
    %v795 = vld [vmem:[#allocation5 + $0x1620] sm:$0xff]
    %v796 = vld [vmem:[#allocation5 + $0x1628] sm:$0xff]
    %v797 = vld [vmem:[#allocation5 + $0x1630] sm:$0xff]
    %v798 = vld [vmem:[#allocation5 + $0x1638] sm:$0xff]
    %v799 = vld [vmem:[#allocation5 + $0x1640] sm:$0xff]
    %v800 = vld [vmem:[#allocation5 + $0x1648] sm:$0xff]
    %v801 = vld [vmem:[#allocation5 + $0x1650] sm:$0xff]
    %v802 = vld [vmem:[#allocation5 + $0x1658] sm:$0xff]
    %v803 = vld [vmem:[#allocation5 + $0x1660] sm:$0xff]
    %v804 = vld [vmem:[#allocation5 + $0x1668] sm:$0xff]
    %v805 = vld [vmem:[#allocation5 + $0x1670] sm:$0xff]
    %v806 = vld [vmem:[#allocation5 + $0x1678] sm:$0xff]
    %v807 = vld [vmem:[#allocation5 + $0x1680] sm:$0xff]
    %v808 = vld [vmem:[#allocation5 + $0x1688] sm:$0xff]
    %v809 = vld [vmem:[#allocation5 + $0x1690] sm:$0xff]
    %v810 = vld [vmem:[#allocation5 + $0x1698] sm:$0xff]
    %v811 = vld [vmem:[#allocation5 + $0x16a0] sm:$0xff]
    %v812 = vld [vmem:[#allocation5 + $0x16a8] sm:$0xff]
    %v813 = vld [vmem:[#allocation5 + $0x16b0] sm:$0xff]
    %v814 = vld [vmem:[#allocation5 + $0x16b8] sm:$0xff]
    %v815 = vld [vmem:[#allocation5 + $0x16c0] sm:$0xff]
    %v816 = vld [vmem:[#allocation5 + $0x16c8] sm:$0xff]
    %v817 = vld [vmem:[#allocation5 + $0x16d0] sm:$0xff]
    %v818 = vld [vmem:[#allocation5 + $0x16d8] sm:$0xff]
    %v819 = vld [vmem:[#allocation5 + $0x16e0] sm:$0xff]
    %v820 = vld [vmem:[#allocation5 + $0x16e8] sm:$0xff]
    %v821 = vld [vmem:[#allocation5 + $0x16f0] sm:$0xff]
    %v822 = vld [vmem:[#allocation5 + $0x16f8] sm:$0xff]
    %v823 = vld [vmem:[#allocation5 + $0x1700] sm:$0xff]
    %v824 = vld [vmem:[#allocation5 + $0x1708] sm:$0xff]
    %v825 = vld [vmem:[#allocation5 + $0x1710] sm:$0xff]
    %v826 = vld [vmem:[#allocation5 + $0x1718] sm:$0xff]
    %v827 = vld [vmem:[#allocation5 + $0x1720] sm:$0xff]
    %v828 = vld [vmem:[#allocation5 + $0x1728] sm:$0xff]
    %v829 = vld [vmem:[#allocation5 + $0x1730] sm:$0xff]
    %v830 = vld [vmem:[#allocation5 + $0x1738] sm:$0xff]
    %v831 = vld [vmem:[#allocation5 + $0x1740] sm:$0xff]
    %v832 = vld [vmem:[#allocation5 + $0x1748] sm:$0xff]
    %v833 = vld [vmem:[#allocation5 + $0x1750] sm:$0xff]
    %v834 = vld [vmem:[#allocation5 + $0x1758] sm:$0xff]
    %v835 = vld [vmem:[#allocation5 + $0x1760] sm:$0xff]
    %v836 = vld [vmem:[#allocation5 + $0x1768] sm:$0xff]
    %v837 = vld [vmem:[#allocation5 + $0x1770] sm:$0xff]
    %v838 = vld [vmem:[#allocation5 + $0x1778] sm:$0xff]
    %v839 = vld [vmem:[#allocation5 + $0x1780] sm:$0xff]
    %v840 = vld [vmem:[#allocation5 + $0x1788] sm:$0xff]
    %v841 = vld [vmem:[#allocation5 + $0x1790] sm:$0xff]
    %v842 = vld [vmem:[#allocation5 + $0x1798] sm:$0xff]
    %v843 = vld [vmem:[#allocation5 + $0x17a0] sm:$0xff]
    %v844 = vld [vmem:[#allocation5 + $0x17a8] sm:$0xff]
    %v845 = vld [vmem:[#allocation5 + $0x17b0] sm:$0xff]
    %v846 = vld [vmem:[#allocation5 + $0x17b8] sm:$0xff]
    %v847 = vld [vmem:[#allocation5 + $0x17c0] sm:$0xff]
    %v848 = vld [vmem:[#allocation5 + $0x17c8] sm:$0xff]
    %v849 = vld [vmem:[#allocation5 + $0x17d0] sm:$0xff]
    %v850 = vld [vmem:[#allocation5 + $0x17d8] sm:$0xff]
    %v851 = vld [vmem:[#allocation5 + $0x17e0] sm:$0xff]
    %v852 = vld [vmem:[#allocation5 + $0x17e8] sm:$0xff]
    %v853 = vld [vmem:[#allocation5 + $0x17f0] sm:$0xff]
    %v854 = vld [vmem:[#allocation5 + $0x17f8] sm:$0xff]
    %v1623 = vunpack.c.l.b16 %v87
    %v1624 = vunpack.c.h.b16 %v87
    %v1625 = vunpack.c.l.b16 %v88
    %v1626 = vunpack.c.h.b16 %v88
    %v1627 = vunpack.c.l.b16 %v89
    %v1628 = vunpack.c.h.b16 %v89
    %v1629 = vunpack.c.l.b16 %v90
    %v1630 = vunpack.c.h.b16 %v90
    %v1631 = vunpack.c.l.b16 %v91
    %v1632 = vunpack.c.h.b16 %v91
    %v1633 = vunpack.c.l.b16 %v92
    %v1634 = vunpack.c.h.b16 %v92
    %v1635 = vunpack.c.l.b16 %v93
    %v1636 = vunpack.c.h.b16 %v93
    %v1637 = vunpack.c.l.b16 %v94
    %v1638 = vunpack.c.h.b16 %v94
    %v1639 = vunpack.c.l.b16 %v95
    %v1640 = vunpack.c.h.b16 %v95
    %v1641 = vunpack.c.l.b16 %v96
    %v1642 = vunpack.c.h.b16 %v96
    %v1643 = vunpack.c.l.b16 %v97
    %v1644 = vunpack.c.h.b16 %v97
    %v1645 = vunpack.c.l.b16 %v98
    %v1646 = vunpack.c.h.b16 %v98
    %v1647 = vunpack.c.l.b16 %v99
    %v1648 = vunpack.c.h.b16 %v99
    %v1649 = vunpack.c.l.b16 %v100
    %v1650 = vunpack.c.h.b16 %v100
    %v1651 = vunpack.c.l.b16 %v101
    %v1652 = vunpack.c.h.b16 %v101
    %v1653 = vunpack.c.l.b16 %v102
    %v1654 = vunpack.c.h.b16 %v102
    %v1655 = vunpack.c.l.b16 %v103
    %v1656 = vunpack.c.h.b16 %v103
    %v1657 = vunpack.c.l.b16 %v104
    %v1658 = vunpack.c.h.b16 %v104
    %v1659 = vunpack.c.l.b16 %v105
    %v1660 = vunpack.c.h.b16 %v105
    %v1661 = vunpack.c.l.b16 %v106
    %v1662 = vunpack.c.h.b16 %v106
    %v1663 = vunpack.c.l.b16 %v107
    %v1664 = vunpack.c.h.b16 %v107
    %v1665 = vunpack.c.l.b16 %v108
    %v1666 = vunpack.c.h.b16 %v108
    %v1667 = vunpack.c.l.b16 %v109
    %v1668 = vunpack.c.h.b16 %v109
    %v1669 = vunpack.c.l.b16 %v110
    %v1670 = vunpack.c.h.b16 %v110
    %v1671 = vunpack.c.l.b16 %v111
    %v1672 = vunpack.c.h.b16 %v111
    %v1673 = vunpack.c.l.b16 %v112
    %v1674 = vunpack.c.h.b16 %v112
    %v1675 = vunpack.c.l.b16 %v113
    %v1676 = vunpack.c.h.b16 %v113
    %v1677 = vunpack.c.l.b16 %v114
    %v1678 = vunpack.c.h.b16 %v114
    %v1679 = vunpack.c.l.b16 %v115
    %v1680 = vunpack.c.h.b16 %v115
    %v1681 = vunpack.c.l.b16 %v116
    %v1682 = vunpack.c.h.b16 %v116
    %v1683 = vunpack.c.l.b16 %v117
    %v1684 = vunpack.c.h.b16 %v117
    %v1685 = vunpack.c.l.b16 %v118
    %v1686 = vunpack.c.h.b16 %v118
    %v1687 = vunpack.c.l.b16 %v119
    %v1688 = vunpack.c.h.b16 %v119
    %v1689 = vunpack.c.l.b16 %v120
    %v1690 = vunpack.c.h.b16 %v120
    %v1691 = vunpack.c.l.b16 %v121
    %v1692 = vunpack.c.h.b16 %v121
    %v1693 = vunpack.c.l.b16 %v122
    %v1694 = vunpack.c.h.b16 %v122
    %v1695 = vunpack.c.l.b16 %v123
    %v1696 = vunpack.c.h.b16 %v123
    %v1697 = vunpack.c.l.b16 %v124
    %v1698 = vunpack.c.h.b16 %v124
    %v1699 = vunpack.c.l.b16 %v125
    %v1700 = vunpack.c.h.b16 %v125
    %v1701 = vunpack.c.l.b16 %v126
    %v1702 = vunpack.c.h.b16 %v126
    %v1703 = vunpack.c.l.b16 %v127
    %v1704 = vunpack.c.h.b16 %v127
    %v1705 = vunpack.c.l.b16 %v128
    %v1706 = vunpack.c.h.b16 %v128
    %v1707 = vunpack.c.l.b16 %v129
    %v1708 = vunpack.c.h.b16 %v129
    %v1709 = vunpack.c.l.b16 %v130
    %v1710 = vunpack.c.h.b16 %v130
    %v1711 = vunpack.c.l.b16 %v131
    %v1712 = vunpack.c.h.b16 %v131
    %v1713 = vunpack.c.l.b16 %v132
    %v1714 = vunpack.c.h.b16 %v132
    %v1715 = vunpack.c.l.b16 %v133
    %v1716 = vunpack.c.h.b16 %v133
    %v1717 = vunpack.c.l.b16 %v134
    %v1718 = vunpack.c.h.b16 %v134
    %v1719 = vunpack.c.l.b16 %v135
    %v1720 = vunpack.c.h.b16 %v135
    %v1721 = vunpack.c.l.b16 %v136
    %v1722 = vunpack.c.h.b16 %v136
    %v1723 = vunpack.c.l.b16 %v137
    %v1724 = vunpack.c.h.b16 %v137
    %v1725 = vunpack.c.l.b16 %v138
    %v1726 = vunpack.c.h.b16 %v138
    %v1727 = vunpack.c.l.b16 %v139
    %v1728 = vunpack.c.h.b16 %v139
    %v1729 = vunpack.c.l.b16 %v140
    %v1730 = vunpack.c.h.b16 %v140
    %v1731 = vunpack.c.l.b16 %v141
    %v1732 = vunpack.c.h.b16 %v141
    %v1733 = vunpack.c.l.b16 %v142
    %v1734 = vunpack.c.h.b16 %v142
    %v1735 = vunpack.c.l.b16 %v143
    %v1736 = vunpack.c.h.b16 %v143
    %v1737 = vunpack.c.l.b16 %v144
    %v1738 = vunpack.c.h.b16 %v144
    %v1739 = vunpack.c.l.b16 %v145
    %v1740 = vunpack.c.h.b16 %v145
    %v1741 = vunpack.c.l.b16 %v146
    %v1742 = vunpack.c.h.b16 %v146
    %v1743 = vunpack.c.l.b16 %v147
    %v1744 = vunpack.c.h.b16 %v147
    %v1745 = vunpack.c.l.b16 %v148
    %v1746 = vunpack.c.h.b16 %v148
    %v1747 = vunpack.c.l.b16 %v149
    %v1748 = vunpack.c.h.b16 %v149
    %v1749 = vunpack.c.l.b16 %v150
    %v1750 = vunpack.c.h.b16 %v150
    %v1751 = vunpack.c.l.b16 %v151
    %v1752 = vunpack.c.h.b16 %v151
    %v1753 = vunpack.c.l.b16 %v152
    %v1754 = vunpack.c.h.b16 %v152
    %v1755 = vunpack.c.l.b16 %v153
    %v1756 = vunpack.c.h.b16 %v153
    %v1757 = vunpack.c.l.b16 %v154
    %v1758 = vunpack.c.h.b16 %v154
    %v1759 = vunpack.c.l.b16 %v155
    %v1760 = vunpack.c.h.b16 %v155
    %v1761 = vunpack.c.l.b16 %v156
    %v1762 = vunpack.c.h.b16 %v156
    %v1763 = vunpack.c.l.b16 %v157
    %v1764 = vunpack.c.h.b16 %v157
    %v1765 = vunpack.c.l.b16 %v158
    %v1766 = vunpack.c.h.b16 %v158
    %v1767 = vunpack.c.l.b16 %v159
    %v1768 = vunpack.c.h.b16 %v159
    %v1769 = vunpack.c.l.b16 %v160
    %v1770 = vunpack.c.h.b16 %v160
    %v1771 = vunpack.c.l.b16 %v161
    %v1772 = vunpack.c.h.b16 %v161
    %v1773 = vunpack.c.l.b16 %v162
    %v1774 = vunpack.c.h.b16 %v162
    %v1775 = vunpack.c.l.b16 %v163
    %v1776 = vunpack.c.h.b16 %v163
    %v1777 = vunpack.c.l.b16 %v164
    %v1778 = vunpack.c.h.b16 %v164
    %v1779 = vunpack.c.l.b16 %v165
    %v1780 = vunpack.c.h.b16 %v165
    %v1781 = vunpack.c.l.b16 %v166
    %v1782 = vunpack.c.h.b16 %v166
    %v1783 = vunpack.c.l.b16 %v167
    %v1784 = vunpack.c.h.b16 %v167
    %v1785 = vunpack.c.l.b16 %v168
    %v1786 = vunpack.c.h.b16 %v168
    %v1787 = vunpack.c.l.b16 %v169
    %v1788 = vunpack.c.h.b16 %v169
    %v1789 = vunpack.c.l.b16 %v170
    %v1790 = vunpack.c.h.b16 %v170
    %v1791 = vunpack.c.l.b16 %v171
    %v1792 = vunpack.c.h.b16 %v171
    %v1793 = vunpack.c.l.b16 %v172
    %v1794 = vunpack.c.h.b16 %v172
    %v1795 = vunpack.c.l.b16 %v173
    %v1796 = vunpack.c.h.b16 %v173
    %v1797 = vunpack.c.l.b16 %v174
    %v1798 = vunpack.c.h.b16 %v174
    %v1799 = vunpack.c.l.b16 %v175
    %v1800 = vunpack.c.h.b16 %v175
    %v1801 = vunpack.c.l.b16 %v176
    %v1802 = vunpack.c.h.b16 %v176
    %v1803 = vunpack.c.l.b16 %v177
    %v1804 = vunpack.c.h.b16 %v177
    %v1805 = vunpack.c.l.b16 %v178
    %v1806 = vunpack.c.h.b16 %v178
    %v1807 = vunpack.c.l.b16 %v179
    %v1808 = vunpack.c.h.b16 %v179
    %v1809 = vunpack.c.l.b16 %v180
    %v1810 = vunpack.c.h.b16 %v180
    %v1811 = vunpack.c.l.b16 %v181
    %v1812 = vunpack.c.h.b16 %v181
    %v1813 = vunpack.c.l.b16 %v182
    %v1814 = vunpack.c.h.b16 %v182
    %v1815 = vunpack.c.l.b16 %v183
    %v1816 = vunpack.c.h.b16 %v183
    %v1817 = vunpack.c.l.b16 %v184
    %v1818 = vunpack.c.h.b16 %v184
    %v1819 = vunpack.c.l.b16 %v185
    %v1820 = vunpack.c.h.b16 %v185
    %v1821 = vunpack.c.l.b16 %v186
    %v1822 = vunpack.c.h.b16 %v186
    %v1823 = vunpack.c.l.b16 %v187
    %v1824 = vunpack.c.h.b16 %v187
    %v1825 = vunpack.c.l.b16 %v188
    %v1826 = vunpack.c.h.b16 %v188
    %v1827 = vunpack.c.l.b16 %v189
    %v1828 = vunpack.c.h.b16 %v189
    %v1829 = vunpack.c.l.b16 %v190
    %v1830 = vunpack.c.h.b16 %v190
    %v1831 = vunpack.c.l.b16 %v191
    %v1832 = vunpack.c.h.b16 %v191
    %v1833 = vunpack.c.l.b16 %v192
    %v1834 = vunpack.c.h.b16 %v192
    %v1835 = vunpack.c.l.b16 %v193
    %v1836 = vunpack.c.h.b16 %v193
    %v1837 = vunpack.c.l.b16 %v194
    %v1838 = vunpack.c.h.b16 %v194
    %v1839 = vunpack.c.l.b16 %v195
    %v1840 = vunpack.c.h.b16 %v195
    %v1841 = vunpack.c.l.b16 %v196
    %v1842 = vunpack.c.h.b16 %v196
    %v1843 = vunpack.c.l.b16 %v197
    %v1844 = vunpack.c.h.b16 %v197
    %v1845 = vunpack.c.l.b16 %v198
    %v1846 = vunpack.c.h.b16 %v198
    %v1847 = vunpack.c.l.b16 %v199
    %v1848 = vunpack.c.h.b16 %v199
    %v1849 = vunpack.c.l.b16 %v200
    %v1850 = vunpack.c.h.b16 %v200
    %v1851 = vunpack.c.l.b16 %v201
    %v1852 = vunpack.c.h.b16 %v201
    %v1853 = vunpack.c.l.b16 %v202
    %v1854 = vunpack.c.h.b16 %v202
    %v1855 = vunpack.c.l.b16 %v203
    %v1856 = vunpack.c.h.b16 %v203
    %v1857 = vunpack.c.l.b16 %v204
    %v1858 = vunpack.c.h.b16 %v204
    %v1859 = vunpack.c.l.b16 %v205
    %v1860 = vunpack.c.h.b16 %v205
    %v1861 = vunpack.c.l.b16 %v206
    %v1862 = vunpack.c.h.b16 %v206
    %v1863 = vunpack.c.l.b16 %v207
    %v1864 = vunpack.c.h.b16 %v207
    %v1865 = vunpack.c.l.b16 %v208
    %v1866 = vunpack.c.h.b16 %v208
    %v1867 = vunpack.c.l.b16 %v209
    %v1868 = vunpack.c.h.b16 %v209
    %v1869 = vunpack.c.l.b16 %v210
    %v1870 = vunpack.c.h.b16 %v210
    %v1871 = vunpack.c.l.b16 %v211
    %v1872 = vunpack.c.h.b16 %v211
    %v1873 = vunpack.c.l.b16 %v212
    %v1874 = vunpack.c.h.b16 %v212
    %v1875 = vunpack.c.l.b16 %v213
    %v1876 = vunpack.c.h.b16 %v213
    %v1877 = vunpack.c.l.b16 %v214
    %v1878 = vunpack.c.h.b16 %v214
    %v1879 = vunpack.c.l.b16 %v215
    %v1880 = vunpack.c.h.b16 %v215
    %v1881 = vunpack.c.l.b16 %v216
    %v1882 = vunpack.c.h.b16 %v216
    %v1883 = vunpack.c.l.b16 %v217
    %v1884 = vunpack.c.h.b16 %v217
    %v1885 = vunpack.c.l.b16 %v218
    %v1886 = vunpack.c.h.b16 %v218
    %v1887 = vunpack.c.l.b16 %v219
    %v1888 = vunpack.c.h.b16 %v219
    %v1889 = vunpack.c.l.b16 %v220
    %v1890 = vunpack.c.h.b16 %v220
    %v1891 = vunpack.c.l.b16 %v221
    %v1892 = vunpack.c.h.b16 %v221
    %v1893 = vunpack.c.l.b16 %v222
    %v1894 = vunpack.c.h.b16 %v222
    %v1895 = vunpack.c.l.b16 %v223
    %v1896 = vunpack.c.h.b16 %v223
    %v1897 = vunpack.c.l.b16 %v224
    %v1898 = vunpack.c.h.b16 %v224
    %v1899 = vunpack.c.l.b16 %v225
    %v1900 = vunpack.c.h.b16 %v225
    %v1901 = vunpack.c.l.b16 %v226
    %v1902 = vunpack.c.h.b16 %v226
    %v1903 = vunpack.c.l.b16 %v227
    %v1904 = vunpack.c.h.b16 %v227
    %v1905 = vunpack.c.l.b16 %v228
    %v1906 = vunpack.c.h.b16 %v228
    %v1907 = vunpack.c.l.b16 %v229
    %v1908 = vunpack.c.h.b16 %v229
    %v1909 = vunpack.c.l.b16 %v230
    %v1910 = vunpack.c.h.b16 %v230
    %v1911 = vunpack.c.l.b16 %v231
    %v1912 = vunpack.c.h.b16 %v231
    %v1913 = vunpack.c.l.b16 %v232
    %v1914 = vunpack.c.h.b16 %v232
    %v1915 = vunpack.c.l.b16 %v233
    %v1916 = vunpack.c.h.b16 %v233
    %v1917 = vunpack.c.l.b16 %v234
    %v1918 = vunpack.c.h.b16 %v234
    %v1919 = vunpack.c.l.b16 %v235
    %v1920 = vunpack.c.h.b16 %v235
    %v1921 = vunpack.c.l.b16 %v236
    %v1922 = vunpack.c.h.b16 %v236
    %v1923 = vunpack.c.l.b16 %v237
    %v1924 = vunpack.c.h.b16 %v237
    %v1925 = vunpack.c.l.b16 %v238
    %v1926 = vunpack.c.h.b16 %v238
    %v1927 = vunpack.c.l.b16 %v239
    %v1928 = vunpack.c.h.b16 %v239
    %v1929 = vunpack.c.l.b16 %v240
    %v1930 = vunpack.c.h.b16 %v240
    %v1931 = vunpack.c.l.b16 %v241
    %v1932 = vunpack.c.h.b16 %v241
    %v1933 = vunpack.c.l.b16 %v242
    %v1934 = vunpack.c.h.b16 %v242
    %v1935 = vunpack.c.l.b16 %v243
    %v1936 = vunpack.c.h.b16 %v243
    %v1937 = vunpack.c.l.b16 %v244
    %v1938 = vunpack.c.h.b16 %v244
    %v1939 = vunpack.c.l.b16 %v245
    %v1940 = vunpack.c.h.b16 %v245
    %v1941 = vunpack.c.l.b16 %v246
    %v1942 = vunpack.c.h.b16 %v246
    %v1943 = vunpack.c.l.b16 %v247
    %v1944 = vunpack.c.h.b16 %v247
    %v1945 = vunpack.c.l.b16 %v248
    %v1946 = vunpack.c.h.b16 %v248
    %v1947 = vunpack.c.l.b16 %v249
    %v1948 = vunpack.c.h.b16 %v249
    %v1949 = vunpack.c.l.b16 %v250
    %v1950 = vunpack.c.h.b16 %v250
    %v1951 = vunpack.c.l.b16 %v251
    %v1952 = vunpack.c.h.b16 %v251
    %v1953 = vunpack.c.l.b16 %v252
    %v1954 = vunpack.c.h.b16 %v252
    %v1955 = vunpack.c.l.b16 %v253
    %v1956 = vunpack.c.h.b16 %v253
    %v1957 = vunpack.c.l.b16 %v254
    %v1958 = vunpack.c.h.b16 %v254
    %v1959 = vunpack.c.l.b16 %v255
    %v1960 = vunpack.c.h.b16 %v255
    %v1961 = vunpack.c.l.b16 %v256
    %v1962 = vunpack.c.h.b16 %v256
    %v1963 = vunpack.c.l.b16 %v257
    %v1964 = vunpack.c.h.b16 %v257
    %v1965 = vunpack.c.l.b16 %v258
    %v1966 = vunpack.c.h.b16 %v258
    %v1967 = vunpack.c.l.b16 %v259
    %v1968 = vunpack.c.h.b16 %v259
    %v1969 = vunpack.c.l.b16 %v260
    %v1970 = vunpack.c.h.b16 %v260
    %v1971 = vunpack.c.l.b16 %v261
    %v1972 = vunpack.c.h.b16 %v261
    %v1973 = vunpack.c.l.b16 %v262
    %v1974 = vunpack.c.h.b16 %v262
    %v1975 = vunpack.c.l.b16 %v263
    %v1976 = vunpack.c.h.b16 %v263
    %v1977 = vunpack.c.l.b16 %v264
    %v1978 = vunpack.c.h.b16 %v264
    %v1979 = vunpack.c.l.b16 %v265
    %v1980 = vunpack.c.h.b16 %v265
    %v1981 = vunpack.c.l.b16 %v266
    %v1982 = vunpack.c.h.b16 %v266
    %v1983 = vunpack.c.l.b16 %v267
    %v1984 = vunpack.c.h.b16 %v267
    %v1985 = vunpack.c.l.b16 %v268
    %v1986 = vunpack.c.h.b16 %v268
    %v1987 = vunpack.c.l.b16 %v269
    %v1988 = vunpack.c.h.b16 %v269
    %v1989 = vunpack.c.l.b16 %v270
    %v1990 = vunpack.c.h.b16 %v270
    %v1991 = vunpack.c.l.b16 %v271
    %v1992 = vunpack.c.h.b16 %v271
    %v1993 = vunpack.c.l.b16 %v272
    %v1994 = vunpack.c.h.b16 %v272
    %v1995 = vunpack.c.l.b16 %v273
    %v1996 = vunpack.c.h.b16 %v273
    %v1997 = vunpack.c.l.b16 %v274
    %v1998 = vunpack.c.h.b16 %v274
    %v1999 = vunpack.c.l.b16 %v275
    %v2000 = vunpack.c.h.b16 %v275
    %v2001 = vunpack.c.l.b16 %v276
    %v2002 = vunpack.c.h.b16 %v276
    %v2003 = vunpack.c.l.b16 %v277
    %v2004 = vunpack.c.h.b16 %v277
    %v2005 = vunpack.c.l.b16 %v278
    %v2006 = vunpack.c.h.b16 %v278
    %v2007 = vunpack.c.l.b16 %v279
    %v2008 = vunpack.c.h.b16 %v279
    %v2009 = vunpack.c.l.b16 %v280
    %v2010 = vunpack.c.h.b16 %v280
    %v2011 = vunpack.c.l.b16 %v281
    %v2012 = vunpack.c.h.b16 %v281
    %v2013 = vunpack.c.l.b16 %v282
    %v2014 = vunpack.c.h.b16 %v282
    %v2015 = vunpack.c.l.b16 %v283
    %v2016 = vunpack.c.h.b16 %v283
    %v2017 = vunpack.c.l.b16 %v284
    %v2018 = vunpack.c.h.b16 %v284
    %v2019 = vunpack.c.l.b16 %v285
    %v2020 = vunpack.c.h.b16 %v285
    %v2021 = vunpack.c.l.b16 %v286
    %v2022 = vunpack.c.h.b16 %v286
    %v2023 = vunpack.c.l.b16 %v287
    %v2024 = vunpack.c.h.b16 %v287
    %v2025 = vunpack.c.l.b16 %v288
    %v2026 = vunpack.c.h.b16 %v288
    %v2027 = vunpack.c.l.b16 %v289
    %v2028 = vunpack.c.h.b16 %v289
    %v2029 = vunpack.c.l.b16 %v290
    %v2030 = vunpack.c.h.b16 %v290
    %v2031 = vunpack.c.l.b16 %v291
    %v2032 = vunpack.c.h.b16 %v291
    %v2033 = vunpack.c.l.b16 %v292
    %v2034 = vunpack.c.h.b16 %v292
    %v2035 = vunpack.c.l.b16 %v293
    %v2036 = vunpack.c.h.b16 %v293
    %v2037 = vunpack.c.l.b16 %v294
    %v2038 = vunpack.c.h.b16 %v294
    %v2039 = vunpack.c.l.b16 %v295
    %v2040 = vunpack.c.h.b16 %v295
    %v2041 = vunpack.c.l.b16 %v296
    %v2042 = vunpack.c.h.b16 %v296
    %v2043 = vunpack.c.l.b16 %v297
    %v2044 = vunpack.c.h.b16 %v297
    %v2045 = vunpack.c.l.b16 %v298
    %v2046 = vunpack.c.h.b16 %v298
    %v2047 = vunpack.c.l.b16 %v299
    %v2048 = vunpack.c.h.b16 %v299
    %v2049 = vunpack.c.l.b16 %v300
    %v2050 = vunpack.c.h.b16 %v300
    %v2051 = vunpack.c.l.b16 %v301
    %v2052 = vunpack.c.h.b16 %v301
    %v2053 = vunpack.c.l.b16 %v302
    %v2054 = vunpack.c.h.b16 %v302
    %v2055 = vunpack.c.l.b16 %v303
    %v2056 = vunpack.c.h.b16 %v303
    %v2057 = vunpack.c.l.b16 %v304
    %v2058 = vunpack.c.h.b16 %v304
    %v2059 = vunpack.c.l.b16 %v305
    %v2060 = vunpack.c.h.b16 %v305
    %v2061 = vunpack.c.l.b16 %v306
    %v2062 = vunpack.c.h.b16 %v306
    %v2063 = vunpack.c.l.b16 %v307
    %v2064 = vunpack.c.h.b16 %v307
    %v2065 = vunpack.c.l.b16 %v308
    %v2066 = vunpack.c.h.b16 %v308
    %v2067 = vunpack.c.l.b16 %v309
    %v2068 = vunpack.c.h.b16 %v309
    %v2069 = vunpack.c.l.b16 %v310
    %v2070 = vunpack.c.h.b16 %v310
    %v2071 = vunpack.c.l.b16 %v311
    %v2072 = vunpack.c.h.b16 %v311
    %v2073 = vunpack.c.l.b16 %v312
    %v2074 = vunpack.c.h.b16 %v312
    %v2075 = vunpack.c.l.b16 %v313
    %v2076 = vunpack.c.h.b16 %v313
    %v2077 = vunpack.c.l.b16 %v314
    %v2078 = vunpack.c.h.b16 %v314
    %v2079 = vunpack.c.l.b16 %v315
    %v2080 = vunpack.c.h.b16 %v315
    %v2081 = vunpack.c.l.b16 %v316
    %v2082 = vunpack.c.h.b16 %v316
    %v2083 = vunpack.c.l.b16 %v317
    %v2084 = vunpack.c.h.b16 %v317
    %v2085 = vunpack.c.l.b16 %v318
    %v2086 = vunpack.c.h.b16 %v318
    %v2087 = vunpack.c.l.b16 %v319
    %v2088 = vunpack.c.h.b16 %v319
    %v2089 = vunpack.c.l.b16 %v320
    %v2090 = vunpack.c.h.b16 %v320
    %v2091 = vunpack.c.l.b16 %v321
    %v2092 = vunpack.c.h.b16 %v321
    %v2093 = vunpack.c.l.b16 %v322
    %v2094 = vunpack.c.h.b16 %v322
    %v2095 = vunpack.c.l.b16 %v323
    %v2096 = vunpack.c.h.b16 %v323
    %v2097 = vunpack.c.l.b16 %v324
    %v2098 = vunpack.c.h.b16 %v324
    %v2099 = vunpack.c.l.b16 %v325
    %v2100 = vunpack.c.h.b16 %v325
    %v2101 = vunpack.c.l.b16 %v326
    %v2102 = vunpack.c.h.b16 %v326
    %v2103 = vunpack.c.l.b16 %v327
    %v2104 = vunpack.c.h.b16 %v327
    %v2105 = vunpack.c.l.b16 %v328
    %v2106 = vunpack.c.h.b16 %v328
    %v2107 = vunpack.c.l.b16 %v329
    %v2108 = vunpack.c.h.b16 %v329
    %v2109 = vunpack.c.l.b16 %v330
    %v2110 = vunpack.c.h.b16 %v330
    %v2111 = vunpack.c.l.b16 %v331
    %v2112 = vunpack.c.h.b16 %v331
    %v2113 = vunpack.c.l.b16 %v332
    %v2114 = vunpack.c.h.b16 %v332
    %v2115 = vunpack.c.l.b16 %v333
    %v2116 = vunpack.c.h.b16 %v333
    %v2117 = vunpack.c.l.b16 %v334
    %v2118 = vunpack.c.h.b16 %v334
    %v2119 = vunpack.c.l.b16 %v335
    %v2120 = vunpack.c.h.b16 %v335
    %v2121 = vunpack.c.l.b16 %v336
    %v2122 = vunpack.c.h.b16 %v336
    %v2123 = vunpack.c.l.b16 %v337
    %v2124 = vunpack.c.h.b16 %v337
    %v2125 = vunpack.c.l.b16 %v338
    %v2126 = vunpack.c.h.b16 %v338
    %v2127 = vunpack.c.l.b16 %v339
    %v2128 = vunpack.c.h.b16 %v339
    %v2129 = vunpack.c.l.b16 %v340
    %v2130 = vunpack.c.h.b16 %v340
    %v2131 = vunpack.c.l.b16 %v341
    %v2132 = vunpack.c.h.b16 %v341
    %v2133 = vunpack.c.l.b16 %v342
    %v2134 = vunpack.c.h.b16 %v342
    %v2135 = vunpack.c.l.b16 %v343
    %v2136 = vunpack.c.h.b16 %v343
    %v2137 = vunpack.c.l.b16 %v344
    %v2138 = vunpack.c.h.b16 %v344
    %v2139 = vunpack.c.l.b16 %v345
    %v2140 = vunpack.c.h.b16 %v345
    %v2141 = vunpack.c.l.b16 %v346
    %v2142 = vunpack.c.h.b16 %v346
    %v2143 = vunpack.c.l.b16 %v347
    %v2144 = vunpack.c.h.b16 %v347
    %v2145 = vunpack.c.l.b16 %v348
    %v2146 = vunpack.c.h.b16 %v348
    %v2147 = vunpack.c.l.b16 %v349
    %v2148 = vunpack.c.h.b16 %v349
    %v2149 = vunpack.c.l.b16 %v350
    %v2150 = vunpack.c.h.b16 %v350
    %v2151 = vunpack.c.l.b16 %v351
    %v2152 = vunpack.c.h.b16 %v351
    %v2153 = vunpack.c.l.b16 %v352
    %v2154 = vunpack.c.h.b16 %v352
    %v2155 = vunpack.c.l.b16 %v353
    %v2156 = vunpack.c.h.b16 %v353
    %v2157 = vunpack.c.l.b16 %v354
    %v2158 = vunpack.c.h.b16 %v354
    %v2159 = vunpack.c.l.b16 %v355
    %v2160 = vunpack.c.h.b16 %v355
    %v2161 = vunpack.c.l.b16 %v356
    %v2162 = vunpack.c.h.b16 %v356
    %v2163 = vunpack.c.l.b16 %v357
    %v2164 = vunpack.c.h.b16 %v357
    %v2165 = vunpack.c.l.b16 %v358
    %v2166 = vunpack.c.h.b16 %v358
    %v2167 = vunpack.c.l.b16 %v359
    %v2168 = vunpack.c.h.b16 %v359
    %v2169 = vunpack.c.l.b16 %v360
    %v2170 = vunpack.c.h.b16 %v360
    %v2171 = vunpack.c.l.b16 %v361
    %v2172 = vunpack.c.h.b16 %v361
    %v2173 = vunpack.c.l.b16 %v362
    %v2174 = vunpack.c.h.b16 %v362
    %v2175 = vunpack.c.l.b16 %v363
    %v2176 = vunpack.c.h.b16 %v363
    %v2177 = vunpack.c.l.b16 %v364
    %v2178 = vunpack.c.h.b16 %v364
    %v2179 = vunpack.c.l.b16 %v365
    %v2180 = vunpack.c.h.b16 %v365
    %v2181 = vunpack.c.l.b16 %v366
    %v2182 = vunpack.c.h.b16 %v366
    %v2183 = vunpack.c.l.b16 %v367
    %v2184 = vunpack.c.h.b16 %v367
    %v2185 = vunpack.c.l.b16 %v368
    %v2186 = vunpack.c.h.b16 %v368
    %v2187 = vunpack.c.l.b16 %v369
    %v2188 = vunpack.c.h.b16 %v369
    %v2189 = vunpack.c.l.b16 %v370
    %v2190 = vunpack.c.h.b16 %v370
    %v2191 = vunpack.c.l.b16 %v371
    %v2192 = vunpack.c.h.b16 %v371
    %v2193 = vunpack.c.l.b16 %v372
    %v2194 = vunpack.c.h.b16 %v372
    %v2195 = vunpack.c.l.b16 %v373
    %v2196 = vunpack.c.h.b16 %v373
    %v2197 = vunpack.c.l.b16 %v374
    %v2198 = vunpack.c.h.b16 %v374
    %v2199 = vunpack.c.l.b16 %v375
    %v2200 = vunpack.c.h.b16 %v375
    %v2201 = vunpack.c.l.b16 %v376
    %v2202 = vunpack.c.h.b16 %v376
    %v2203 = vunpack.c.l.b16 %v377
    %v2204 = vunpack.c.h.b16 %v377
    %v2205 = vunpack.c.l.b16 %v378
    %v2206 = vunpack.c.h.b16 %v378
    %v2207 = vunpack.c.l.b16 %v379
    %v2208 = vunpack.c.h.b16 %v379
    %v2209 = vunpack.c.l.b16 %v380
    %v2210 = vunpack.c.h.b16 %v380
    %v2211 = vunpack.c.l.b16 %v381
    %v2212 = vunpack.c.h.b16 %v381
    %v2213 = vunpack.c.l.b16 %v382
    %v2214 = vunpack.c.h.b16 %v382
    %v2215 = vunpack.c.l.b16 %v383
    %v2216 = vunpack.c.h.b16 %v383
    %v2217 = vunpack.c.l.b16 %v384
    %v2218 = vunpack.c.h.b16 %v384
    %v2219 = vunpack.c.l.b16 %v385
    %v2220 = vunpack.c.h.b16 %v385
    %v2221 = vunpack.c.l.b16 %v386
    %v2222 = vunpack.c.h.b16 %v386
    %v2223 = vunpack.c.l.b16 %v387
    %v2224 = vunpack.c.h.b16 %v387
    %v2225 = vunpack.c.l.b16 %v388
    %v2226 = vunpack.c.h.b16 %v388
    %v2227 = vunpack.c.l.b16 %v389
    %v2228 = vunpack.c.h.b16 %v389
    %v2229 = vunpack.c.l.b16 %v390
    %v2230 = vunpack.c.h.b16 %v390
    %v2231 = vunpack.c.l.b16 %v391
    %v2232 = vunpack.c.h.b16 %v391
    %v2233 = vunpack.c.l.b16 %v392
    %v2234 = vunpack.c.h.b16 %v392
    %v2235 = vunpack.c.l.b16 %v393
    %v2236 = vunpack.c.h.b16 %v393
    %v2237 = vunpack.c.l.b16 %v394
    %v2238 = vunpack.c.h.b16 %v394
    %v2239 = vunpack.c.l.b16 %v395
    %v2240 = vunpack.c.h.b16 %v395
    %v2241 = vunpack.c.l.b16 %v396
    %v2242 = vunpack.c.h.b16 %v396
    %v2243 = vunpack.c.l.b16 %v397
    %v2244 = vunpack.c.h.b16 %v397
    %v2245 = vunpack.c.l.b16 %v398
    %v2246 = vunpack.c.h.b16 %v398
    %v2247 = vunpack.c.l.b16 %v399
    %v2248 = vunpack.c.h.b16 %v399
    %v2249 = vunpack.c.l.b16 %v400
    %v2250 = vunpack.c.h.b16 %v400
    %v2251 = vunpack.c.l.b16 %v401
    %v2252 = vunpack.c.h.b16 %v401
    %v2253 = vunpack.c.l.b16 %v402
    %v2254 = vunpack.c.h.b16 %v402
    %v2255 = vunpack.c.l.b16 %v403
    %v2256 = vunpack.c.h.b16 %v403
    %v2257 = vunpack.c.l.b16 %v404
    %v2258 = vunpack.c.h.b16 %v404
    %v2259 = vunpack.c.l.b16 %v405
    %v2260 = vunpack.c.h.b16 %v405
    %v2261 = vunpack.c.l.b16 %v406
    %v2262 = vunpack.c.h.b16 %v406
    %v2263 = vunpack.c.l.b16 %v407
    %v2264 = vunpack.c.h.b16 %v407
    %v2265 = vunpack.c.l.b16 %v408
    %v2266 = vunpack.c.h.b16 %v408
    %v2267 = vunpack.c.l.b16 %v409
    %v2268 = vunpack.c.h.b16 %v409
    %v2269 = vunpack.c.l.b16 %v410
    %v2270 = vunpack.c.h.b16 %v410
    %v2271 = vunpack.c.l.b16 %v411
    %v2272 = vunpack.c.h.b16 %v411
    %v2273 = vunpack.c.l.b16 %v412
    %v2274 = vunpack.c.h.b16 %v412
    %v2275 = vunpack.c.l.b16 %v413
    %v2276 = vunpack.c.h.b16 %v413
    %v2277 = vunpack.c.l.b16 %v414
    %v2278 = vunpack.c.h.b16 %v414
    %v2279 = vunpack.c.l.b16 %v415
    %v2280 = vunpack.c.h.b16 %v415
    %v2281 = vunpack.c.l.b16 %v416
    %v2282 = vunpack.c.h.b16 %v416
    %v2283 = vunpack.c.l.b16 %v417
    %v2284 = vunpack.c.h.b16 %v417
    %v2285 = vunpack.c.l.b16 %v418
    %v2286 = vunpack.c.h.b16 %v418
    %v2287 = vunpack.c.l.b16 %v419
    %v2288 = vunpack.c.h.b16 %v419
    %v2289 = vunpack.c.l.b16 %v420
    %v2290 = vunpack.c.h.b16 %v420
    %v2291 = vunpack.c.l.b16 %v421
    %v2292 = vunpack.c.h.b16 %v421
    %v2293 = vunpack.c.l.b16 %v422
    %v2294 = vunpack.c.h.b16 %v422
    %v2295 = vunpack.c.l.b16 %v423
    %v2296 = vunpack.c.h.b16 %v423
    %v2297 = vunpack.c.l.b16 %v424
    %v2298 = vunpack.c.h.b16 %v424
    %v2299 = vunpack.c.l.b16 %v425
    %v2300 = vunpack.c.h.b16 %v425
    %v2301 = vunpack.c.l.b16 %v426
    %v2302 = vunpack.c.h.b16 %v426
    %v2303 = vunpack.c.l.b16 %v427
    %v2304 = vunpack.c.h.b16 %v427
    %v2305 = vunpack.c.l.b16 %v428
    %v2306 = vunpack.c.h.b16 %v428
    %v2307 = vunpack.c.l.b16 %v429
    %v2308 = vunpack.c.h.b16 %v429
    %v2309 = vunpack.c.l.b16 %v430
    %v2310 = vunpack.c.h.b16 %v430
    %v2311 = vunpack.c.l.b16 %v431
    %v2312 = vunpack.c.h.b16 %v431
    %v2313 = vunpack.c.l.b16 %v432
    %v2314 = vunpack.c.h.b16 %v432
    %v2315 = vunpack.c.l.b16 %v433
    %v2316 = vunpack.c.h.b16 %v433
    %v2317 = vunpack.c.l.b16 %v434
    %v2318 = vunpack.c.h.b16 %v434
    %v2319 = vunpack.c.l.b16 %v435
    %v2320 = vunpack.c.h.b16 %v435
    %v2321 = vunpack.c.l.b16 %v436
    %v2322 = vunpack.c.h.b16 %v436
    %v2323 = vunpack.c.l.b16 %v437
    %v2324 = vunpack.c.h.b16 %v437
    %v2325 = vunpack.c.l.b16 %v438
    %v2326 = vunpack.c.h.b16 %v438
    %v2327 = vunpack.c.l.b16 %v439
    %v2328 = vunpack.c.h.b16 %v439
    %v2329 = vunpack.c.l.b16 %v440
    %v2330 = vunpack.c.h.b16 %v440
    %v2331 = vunpack.c.l.b16 %v441
    %v2332 = vunpack.c.h.b16 %v441
    %v2333 = vunpack.c.l.b16 %v442
    %v2334 = vunpack.c.h.b16 %v442
    %v2335 = vunpack.c.l.b16 %v443
    %v2336 = vunpack.c.h.b16 %v443
    %v2337 = vunpack.c.l.b16 %v444
    %v2338 = vunpack.c.h.b16 %v444
    %v2339 = vunpack.c.l.b16 %v445
    %v2340 = vunpack.c.h.b16 %v445
    %v2341 = vunpack.c.l.b16 %v446
    %v2342 = vunpack.c.h.b16 %v446
    %v2343 = vunpack.c.l.b16 %v447
    %v2344 = vunpack.c.h.b16 %v447
    %v2345 = vunpack.c.l.b16 %v448
    %v2346 = vunpack.c.h.b16 %v448
    %v2347 = vunpack.c.l.b16 %v449
    %v2348 = vunpack.c.h.b16 %v449
    %v2349 = vunpack.c.l.b16 %v450
    %v2350 = vunpack.c.h.b16 %v450
    %v2351 = vunpack.c.l.b16 %v451
    %v2352 = vunpack.c.h.b16 %v451
    %v2353 = vunpack.c.l.b16 %v452
    %v2354 = vunpack.c.h.b16 %v452
    %v2355 = vunpack.c.l.b16 %v453
    %v2356 = vunpack.c.h.b16 %v453
    %v2357 = vunpack.c.l.b16 %v454
    %v2358 = vunpack.c.h.b16 %v454
    %v2359 = vunpack.c.l.b16 %v455
    %v2360 = vunpack.c.h.b16 %v455
    %v2361 = vunpack.c.l.b16 %v456
    %v2362 = vunpack.c.h.b16 %v456
    %v2363 = vunpack.c.l.b16 %v457
    %v2364 = vunpack.c.h.b16 %v457
    %v2365 = vunpack.c.l.b16 %v458
    %v2366 = vunpack.c.h.b16 %v458
    %v2367 = vunpack.c.l.b16 %v459
    %v2368 = vunpack.c.h.b16 %v459
    %v2369 = vunpack.c.l.b16 %v460
    %v2370 = vunpack.c.h.b16 %v460
    %v2371 = vunpack.c.l.b16 %v461
    %v2372 = vunpack.c.h.b16 %v461
    %v2373 = vunpack.c.l.b16 %v462
    %v2374 = vunpack.c.h.b16 %v462
    %v2375 = vunpack.c.l.b16 %v463
    %v2376 = vunpack.c.h.b16 %v463
    %v2377 = vunpack.c.l.b16 %v464
    %v2378 = vunpack.c.h.b16 %v464
    %v2379 = vunpack.c.l.b16 %v465
    %v2380 = vunpack.c.h.b16 %v465
    %v2381 = vunpack.c.l.b16 %v466
    %v2382 = vunpack.c.h.b16 %v466
    %v2383 = vunpack.c.l.b16 %v467
    %v2384 = vunpack.c.h.b16 %v467
    %v2385 = vunpack.c.l.b16 %v468
    %v2386 = vunpack.c.h.b16 %v468
    %v2387 = vunpack.c.l.b16 %v469
    %v2388 = vunpack.c.h.b16 %v469
    %v2389 = vunpack.c.l.b16 %v470
    %v2390 = vunpack.c.h.b16 %v470
    %v2391 = vunpack.c.l.b16 %v471
    %v2392 = vunpack.c.h.b16 %v471
    %v2393 = vunpack.c.l.b16 %v472
    %v2394 = vunpack.c.h.b16 %v472
    %v2395 = vunpack.c.l.b16 %v473
    %v2396 = vunpack.c.h.b16 %v473
    %v2397 = vunpack.c.l.b16 %v474
    %v2398 = vunpack.c.h.b16 %v474
    %v2399 = vunpack.c.l.b16 %v475
    %v2400 = vunpack.c.h.b16 %v475
    %v2401 = vunpack.c.l.b16 %v476
    %v2402 = vunpack.c.h.b16 %v476
    %v2403 = vunpack.c.l.b16 %v477
    %v2404 = vunpack.c.h.b16 %v477
    %v2405 = vunpack.c.l.b16 %v478
    %v2406 = vunpack.c.h.b16 %v478
    %v2407 = vunpack.c.l.b16 %v479
    %v2408 = vunpack.c.h.b16 %v479
    %v2409 = vunpack.c.l.b16 %v480
    %v2410 = vunpack.c.h.b16 %v480
    %v2411 = vunpack.c.l.b16 %v481
    %v2412 = vunpack.c.h.b16 %v481
    %v2413 = vunpack.c.l.b16 %v482
    %v2414 = vunpack.c.h.b16 %v482
    %v2415 = vunpack.c.l.b16 %v483
    %v2416 = vunpack.c.h.b16 %v483
    %v2417 = vunpack.c.l.b16 %v484
    %v2418 = vunpack.c.h.b16 %v484
    %v2419 = vunpack.c.l.b16 %v485
    %v2420 = vunpack.c.h.b16 %v485
    %v2421 = vunpack.c.l.b16 %v486
    %v2422 = vunpack.c.h.b16 %v486
    %v2423 = vunpack.c.l.b16 %v487
    %v2424 = vunpack.c.h.b16 %v487
    %v2425 = vunpack.c.l.b16 %v488
    %v2426 = vunpack.c.h.b16 %v488
    %v2427 = vunpack.c.l.b16 %v489
    %v2428 = vunpack.c.h.b16 %v489
    %v2429 = vunpack.c.l.b16 %v490
    %v2430 = vunpack.c.h.b16 %v490
    %v2431 = vunpack.c.l.b16 %v491
    %v2432 = vunpack.c.h.b16 %v491
    %v2433 = vunpack.c.l.b16 %v492
    %v2434 = vunpack.c.h.b16 %v492
    %v2435 = vunpack.c.l.b16 %v493
    %v2436 = vunpack.c.h.b16 %v493
    %v2437 = vunpack.c.l.b16 %v494
    %v2438 = vunpack.c.h.b16 %v494
    %v2439 = vunpack.c.l.b16 %v495
    %v2440 = vunpack.c.h.b16 %v495
    %v2441 = vunpack.c.l.b16 %v496
    %v2442 = vunpack.c.h.b16 %v496
    %v2443 = vunpack.c.l.b16 %v497
    %v2444 = vunpack.c.h.b16 %v497
    %v2445 = vunpack.c.l.b16 %v498
    %v2446 = vunpack.c.h.b16 %v498
    %v2447 = vunpack.c.l.b16 %v499
    %v2448 = vunpack.c.h.b16 %v499
    %v2449 = vunpack.c.l.b16 %v500
    %v2450 = vunpack.c.h.b16 %v500
    %v2451 = vunpack.c.l.b16 %v501
    %v2452 = vunpack.c.h.b16 %v501
    %v2453 = vunpack.c.l.b16 %v502
    %v2454 = vunpack.c.h.b16 %v502
    %v2455 = vunpack.c.l.b16 %v503
    %v2456 = vunpack.c.h.b16 %v503
    %v2457 = vunpack.c.l.b16 %v504
    %v2458 = vunpack.c.h.b16 %v504
    %v2459 = vunpack.c.l.b16 %v505
    %v2460 = vunpack.c.h.b16 %v505
    %v2461 = vunpack.c.l.b16 %v506
    %v2462 = vunpack.c.h.b16 %v506
    %v2463 = vunpack.c.l.b16 %v507
    %v2464 = vunpack.c.h.b16 %v507
    %v2465 = vunpack.c.l.b16 %v508
    %v2466 = vunpack.c.h.b16 %v508
    %v2467 = vunpack.c.l.b16 %v509
    %v2468 = vunpack.c.h.b16 %v509
    %v2469 = vunpack.c.l.b16 %v510
    %v2470 = vunpack.c.h.b16 %v510
    %v2471 = vunpack.c.l.b16 %v511
    %v2472 = vunpack.c.h.b16 %v511
    %v2473 = vunpack.c.l.b16 %v512
    %v2474 = vunpack.c.h.b16 %v512
    %v2475 = vunpack.c.l.b16 %v513
    %v2476 = vunpack.c.h.b16 %v513
    %v2477 = vunpack.c.l.b16 %v514
    %v2478 = vunpack.c.h.b16 %v514
    %v2479 = vunpack.c.l.b16 %v515
    %v2480 = vunpack.c.h.b16 %v515
    %v2481 = vunpack.c.l.b16 %v516
    %v2482 = vunpack.c.h.b16 %v516
    %v2483 = vunpack.c.l.b16 %v517
    %v2484 = vunpack.c.h.b16 %v517
    %v2485 = vunpack.c.l.b16 %v518
    %v2486 = vunpack.c.h.b16 %v518
    %v2487 = vunpack.c.l.b16 %v519
    %v2488 = vunpack.c.h.b16 %v519
    %v2489 = vunpack.c.l.b16 %v520
    %v2490 = vunpack.c.h.b16 %v520
    %v2491 = vunpack.c.l.b16 %v521
    %v2492 = vunpack.c.h.b16 %v521
    %v2493 = vunpack.c.l.b16 %v522
    %v2494 = vunpack.c.h.b16 %v522
    %v2495 = vunpack.c.l.b16 %v523
    %v2496 = vunpack.c.h.b16 %v523
    %v2497 = vunpack.c.l.b16 %v524
    %v2498 = vunpack.c.h.b16 %v524
    %v2499 = vunpack.c.l.b16 %v525
    %v2500 = vunpack.c.h.b16 %v525
    %v2501 = vunpack.c.l.b16 %v526
    %v2502 = vunpack.c.h.b16 %v526
    %v2503 = vunpack.c.l.b16 %v527
    %v2504 = vunpack.c.h.b16 %v527
    %v2505 = vunpack.c.l.b16 %v528
    %v2506 = vunpack.c.h.b16 %v528
    %v2507 = vunpack.c.l.b16 %v529
    %v2508 = vunpack.c.h.b16 %v529
    %v2509 = vunpack.c.l.b16 %v530
    %v2510 = vunpack.c.h.b16 %v530
    %v2511 = vunpack.c.l.b16 %v531
    %v2512 = vunpack.c.h.b16 %v531
    %v2513 = vunpack.c.l.b16 %v532
    %v2514 = vunpack.c.h.b16 %v532
    %v2515 = vunpack.c.l.b16 %v533
    %v2516 = vunpack.c.h.b16 %v533
    %v2517 = vunpack.c.l.b16 %v534
    %v2518 = vunpack.c.h.b16 %v534
    %v2519 = vunpack.c.l.b16 %v535
    %v2520 = vunpack.c.h.b16 %v535
    %v2521 = vunpack.c.l.b16 %v536
    %v2522 = vunpack.c.h.b16 %v536
    %v2523 = vunpack.c.l.b16 %v537
    %v2524 = vunpack.c.h.b16 %v537
    %v2525 = vunpack.c.l.b16 %v538
    %v2526 = vunpack.c.h.b16 %v538
    %v2527 = vunpack.c.l.b16 %v539
    %v2528 = vunpack.c.h.b16 %v539
    %v2529 = vunpack.c.l.b16 %v540
    %v2530 = vunpack.c.h.b16 %v540
    %v2531 = vunpack.c.l.b16 %v541
    %v2532 = vunpack.c.h.b16 %v541
    %v2533 = vunpack.c.l.b16 %v542
    %v2534 = vunpack.c.h.b16 %v542
    %v2535 = vunpack.c.l.b16 %v543
    %v2536 = vunpack.c.h.b16 %v543
    %v2537 = vunpack.c.l.b16 %v544
    %v2538 = vunpack.c.h.b16 %v544
    %v2539 = vunpack.c.l.b16 %v545
    %v2540 = vunpack.c.h.b16 %v545
    %v2541 = vunpack.c.l.b16 %v546
    %v2542 = vunpack.c.h.b16 %v546
    %v2543 = vunpack.c.l.b16 %v547
    %v2544 = vunpack.c.h.b16 %v547
    %v2545 = vunpack.c.l.b16 %v548
    %v2546 = vunpack.c.h.b16 %v548
    %v2547 = vunpack.c.l.b16 %v549
    %v2548 = vunpack.c.h.b16 %v549
    %v2549 = vunpack.c.l.b16 %v550
    %v2550 = vunpack.c.h.b16 %v550
    %v2551 = vunpack.c.l.b16 %v551
    %v2552 = vunpack.c.h.b16 %v551
    %v2553 = vunpack.c.l.b16 %v552
    %v2554 = vunpack.c.h.b16 %v552
    %v2555 = vunpack.c.l.b16 %v553
    %v2556 = vunpack.c.h.b16 %v553
    %v2557 = vunpack.c.l.b16 %v554
    %v2558 = vunpack.c.h.b16 %v554
    %v2559 = vunpack.c.l.b16 %v555
    %v2560 = vunpack.c.h.b16 %v555
    %v2561 = vunpack.c.l.b16 %v556
    %v2562 = vunpack.c.h.b16 %v556
    %v2563 = vunpack.c.l.b16 %v557
    %v2564 = vunpack.c.h.b16 %v557
    %v2565 = vunpack.c.l.b16 %v558
    %v2566 = vunpack.c.h.b16 %v558
    %v2567 = vunpack.c.l.b16 %v559
    %v2568 = vunpack.c.h.b16 %v559
    %v2569 = vunpack.c.l.b16 %v560
    %v2570 = vunpack.c.h.b16 %v560
    %v2571 = vunpack.c.l.b16 %v561
    %v2572 = vunpack.c.h.b16 %v561
    %v2573 = vunpack.c.l.b16 %v562
    %v2574 = vunpack.c.h.b16 %v562
    %v2575 = vunpack.c.l.b16 %v563
    %v2576 = vunpack.c.h.b16 %v563
    %v2577 = vunpack.c.l.b16 %v564
    %v2578 = vunpack.c.h.b16 %v564
    %v2579 = vunpack.c.l.b16 %v565
    %v2580 = vunpack.c.h.b16 %v565
    %v2581 = vunpack.c.l.b16 %v566
    %v2582 = vunpack.c.h.b16 %v566
    %v2583 = vunpack.c.l.b16 %v567
    %v2584 = vunpack.c.h.b16 %v567
    %v2585 = vunpack.c.l.b16 %v568
    %v2586 = vunpack.c.h.b16 %v568
    %v2587 = vunpack.c.l.b16 %v569
    %v2588 = vunpack.c.h.b16 %v569
    %v2589 = vunpack.c.l.b16 %v570
    %v2590 = vunpack.c.h.b16 %v570
    %v2591 = vunpack.c.l.b16 %v571
    %v2592 = vunpack.c.h.b16 %v571
    %v2593 = vunpack.c.l.b16 %v572
    %v2594 = vunpack.c.h.b16 %v572
    %v2595 = vunpack.c.l.b16 %v573
    %v2596 = vunpack.c.h.b16 %v573
    %v2597 = vunpack.c.l.b16 %v574
    %v2598 = vunpack.c.h.b16 %v574
    %v2599 = vunpack.c.l.b16 %v575
    %v2600 = vunpack.c.h.b16 %v575
    %v2601 = vunpack.c.l.b16 %v576
    %v2602 = vunpack.c.h.b16 %v576
    %v2603 = vunpack.c.l.b16 %v577
    %v2604 = vunpack.c.h.b16 %v577
    %v2605 = vunpack.c.l.b16 %v578
    %v2606 = vunpack.c.h.b16 %v578
    %v2607 = vunpack.c.l.b16 %v579
    %v2608 = vunpack.c.h.b16 %v579
    %v2609 = vunpack.c.l.b16 %v580
    %v2610 = vunpack.c.h.b16 %v580
    %v2611 = vunpack.c.l.b16 %v581
    %v2612 = vunpack.c.h.b16 %v581
    %v2613 = vunpack.c.l.b16 %v582
    %v2614 = vunpack.c.h.b16 %v582
    %v2615 = vunpack.c.l.b16 %v583
    %v2616 = vunpack.c.h.b16 %v583
    %v2617 = vunpack.c.l.b16 %v584
    %v2618 = vunpack.c.h.b16 %v584
    %v2619 = vunpack.c.l.b16 %v585
    %v2620 = vunpack.c.h.b16 %v585
    %v2621 = vunpack.c.l.b16 %v586
    %v2622 = vunpack.c.h.b16 %v586
    %v2623 = vunpack.c.l.b16 %v587
    %v2624 = vunpack.c.h.b16 %v587
    %v2625 = vunpack.c.l.b16 %v588
    %v2626 = vunpack.c.h.b16 %v588
    %v2627 = vunpack.c.l.b16 %v589
    %v2628 = vunpack.c.h.b16 %v589
    %v2629 = vunpack.c.l.b16 %v590
    %v2630 = vunpack.c.h.b16 %v590
    %v2631 = vunpack.c.l.b16 %v591
    %v2632 = vunpack.c.h.b16 %v591
    %v2633 = vunpack.c.l.b16 %v592
    %v2634 = vunpack.c.h.b16 %v592
    %v2635 = vunpack.c.l.b16 %v593
    %v2636 = vunpack.c.h.b16 %v593
    %v2637 = vunpack.c.l.b16 %v594
    %v2638 = vunpack.c.h.b16 %v594
    %v2639 = vunpack.c.l.b16 %v595
    %v2640 = vunpack.c.h.b16 %v595
    %v2641 = vunpack.c.l.b16 %v596
    %v2642 = vunpack.c.h.b16 %v596
    %v2643 = vunpack.c.l.b16 %v597
    %v2644 = vunpack.c.h.b16 %v597
    %v2645 = vunpack.c.l.b16 %v598
    %v2646 = vunpack.c.h.b16 %v598
    %v2647 = vunpack.c.l.b16 %v599
    %v2648 = vunpack.c.h.b16 %v599
    %v2649 = vunpack.c.l.b16 %v600
    %v2650 = vunpack.c.h.b16 %v600
    %v2651 = vunpack.c.l.b16 %v601
    %v2652 = vunpack.c.h.b16 %v601
    %v2653 = vunpack.c.l.b16 %v602
    %v2654 = vunpack.c.h.b16 %v602
    %v2655 = vunpack.c.l.b16 %v603
    %v2656 = vunpack.c.h.b16 %v603
    %v2657 = vunpack.c.l.b16 %v604
    %v2658 = vunpack.c.h.b16 %v604
    %v2659 = vunpack.c.l.b16 %v605
    %v2660 = vunpack.c.h.b16 %v605
    %v2661 = vunpack.c.l.b16 %v606
    %v2662 = vunpack.c.h.b16 %v606
    %v2663 = vunpack.c.l.b16 %v607
    %v2664 = vunpack.c.h.b16 %v607
    %v2665 = vunpack.c.l.b16 %v608
    %v2666 = vunpack.c.h.b16 %v608
    %v2667 = vunpack.c.l.b16 %v609
    %v2668 = vunpack.c.h.b16 %v609
    %v2669 = vunpack.c.l.b16 %v610
    %v2670 = vunpack.c.h.b16 %v610
    %v2671 = vunpack.c.l.b16 %v611
    %v2672 = vunpack.c.h.b16 %v611
    %v2673 = vunpack.c.l.b16 %v612
    %v2674 = vunpack.c.h.b16 %v612
    %v2675 = vunpack.c.l.b16 %v613
    %v2676 = vunpack.c.h.b16 %v613
    %v2677 = vunpack.c.l.b16 %v614
    %v2678 = vunpack.c.h.b16 %v614
    %v2679 = vunpack.c.l.b16 %v615
    %v2680 = vunpack.c.h.b16 %v615
    %v2681 = vunpack.c.l.b16 %v616
    %v2682 = vunpack.c.h.b16 %v616
    %v2683 = vunpack.c.l.b16 %v617
    %v2684 = vunpack.c.h.b16 %v617
    %v2685 = vunpack.c.l.b16 %v618
    %v2686 = vunpack.c.h.b16 %v618
    %v2687 = vunpack.c.l.b16 %v619
    %v2688 = vunpack.c.h.b16 %v619
    %v2689 = vunpack.c.l.b16 %v620
    %v2690 = vunpack.c.h.b16 %v620
    %v2691 = vunpack.c.l.b16 %v621
    %v2692 = vunpack.c.h.b16 %v621
    %v2693 = vunpack.c.l.b16 %v622
    %v2694 = vunpack.c.h.b16 %v622
    %v2695 = vunpack.c.l.b16 %v623
    %v2696 = vunpack.c.h.b16 %v623
    %v2697 = vunpack.c.l.b16 %v624
    %v2698 = vunpack.c.h.b16 %v624
    %v2699 = vunpack.c.l.b16 %v625
    %v2700 = vunpack.c.h.b16 %v625
    %v2701 = vunpack.c.l.b16 %v626
    %v2702 = vunpack.c.h.b16 %v626
    %v2703 = vunpack.c.l.b16 %v627
    %v2704 = vunpack.c.h.b16 %v627
    %v2705 = vunpack.c.l.b16 %v628
    %v2706 = vunpack.c.h.b16 %v628
    %v2707 = vunpack.c.l.b16 %v629
    %v2708 = vunpack.c.h.b16 %v629
    %v2709 = vunpack.c.l.b16 %v630
    %v2710 = vunpack.c.h.b16 %v630
    %v2711 = vunpack.c.l.b16 %v631
    %v2712 = vunpack.c.h.b16 %v631
    %v2713 = vunpack.c.l.b16 %v632
    %v2714 = vunpack.c.h.b16 %v632
    %v2715 = vunpack.c.l.b16 %v633
    %v2716 = vunpack.c.h.b16 %v633
    %v2717 = vunpack.c.l.b16 %v634
    %v2718 = vunpack.c.h.b16 %v634
    %v2719 = vunpack.c.l.b16 %v635
    %v2720 = vunpack.c.h.b16 %v635
    %v2721 = vunpack.c.l.b16 %v636
    %v2722 = vunpack.c.h.b16 %v636
    %v2723 = vunpack.c.l.b16 %v637
    %v2724 = vunpack.c.h.b16 %v637
    %v2725 = vunpack.c.l.b16 %v638
    %v2726 = vunpack.c.h.b16 %v638
    %v2727 = vunpack.c.l.b16 %v639
    %v2728 = vunpack.c.h.b16 %v639
    %v2729 = vunpack.c.l.b16 %v640
    %v2730 = vunpack.c.h.b16 %v640
    %v2731 = vunpack.c.l.b16 %v641
    %v2732 = vunpack.c.h.b16 %v641
    %v2733 = vunpack.c.l.b16 %v642
    %v2734 = vunpack.c.h.b16 %v642
    %v2735 = vunpack.c.l.b16 %v643
    %v2736 = vunpack.c.h.b16 %v643
    %v2737 = vunpack.c.l.b16 %v644
    %v2738 = vunpack.c.h.b16 %v644
    %v2739 = vunpack.c.l.b16 %v645
    %v2740 = vunpack.c.h.b16 %v645
    %v2741 = vunpack.c.l.b16 %v646
    %v2742 = vunpack.c.h.b16 %v646
    %v2743 = vunpack.c.l.b16 %v647
    %v2744 = vunpack.c.h.b16 %v647
    %v2745 = vunpack.c.l.b16 %v648
    %v2746 = vunpack.c.h.b16 %v648
    %v2747 = vunpack.c.l.b16 %v649
    %v2748 = vunpack.c.h.b16 %v649
    %v2749 = vunpack.c.l.b16 %v650
    %v2750 = vunpack.c.h.b16 %v650
    %v2751 = vunpack.c.l.b16 %v651
    %v2752 = vunpack.c.h.b16 %v651
    %v2753 = vunpack.c.l.b16 %v652
    %v2754 = vunpack.c.h.b16 %v652
    %v2755 = vunpack.c.l.b16 %v653
    %v2756 = vunpack.c.h.b16 %v653
    %v2757 = vunpack.c.l.b16 %v654
    %v2758 = vunpack.c.h.b16 %v654
    %v2759 = vunpack.c.l.b16 %v655
    %v2760 = vunpack.c.h.b16 %v655
    %v2761 = vunpack.c.l.b16 %v656
    %v2762 = vunpack.c.h.b16 %v656
    %v2763 = vunpack.c.l.b16 %v657
    %v2764 = vunpack.c.h.b16 %v657
    %v2765 = vunpack.c.l.b16 %v658
    %v2766 = vunpack.c.h.b16 %v658
    %v2767 = vunpack.c.l.b16 %v659
    %v2768 = vunpack.c.h.b16 %v659
    %v2769 = vunpack.c.l.b16 %v660
    %v2770 = vunpack.c.h.b16 %v660
    %v2771 = vunpack.c.l.b16 %v661
    %v2772 = vunpack.c.h.b16 %v661
    %v2773 = vunpack.c.l.b16 %v662
    %v2774 = vunpack.c.h.b16 %v662
    %v2775 = vunpack.c.l.b16 %v663
    %v2776 = vunpack.c.h.b16 %v663
    %v2777 = vunpack.c.l.b16 %v664
    %v2778 = vunpack.c.h.b16 %v664
    %v2779 = vunpack.c.l.b16 %v665
    %v2780 = vunpack.c.h.b16 %v665
    %v2781 = vunpack.c.l.b16 %v666
    %v2782 = vunpack.c.h.b16 %v666
    %v2783 = vunpack.c.l.b16 %v667
    %v2784 = vunpack.c.h.b16 %v667
    %v2785 = vunpack.c.l.b16 %v668
    %v2786 = vunpack.c.h.b16 %v668
    %v2787 = vunpack.c.l.b16 %v669
    %v2788 = vunpack.c.h.b16 %v669
    %v2789 = vunpack.c.l.b16 %v670
    %v2790 = vunpack.c.h.b16 %v670
    %v2791 = vunpack.c.l.b16 %v671
    %v2792 = vunpack.c.h.b16 %v671
    %v2793 = vunpack.c.l.b16 %v672
    %v2794 = vunpack.c.h.b16 %v672
    %v2795 = vunpack.c.l.b16 %v673
    %v2796 = vunpack.c.h.b16 %v673
    %v2797 = vunpack.c.l.b16 %v674
    %v2798 = vunpack.c.h.b16 %v674
    %v2799 = vunpack.c.l.b16 %v675
    %v2800 = vunpack.c.h.b16 %v675
    %v2801 = vunpack.c.l.b16 %v676
    %v2802 = vunpack.c.h.b16 %v676
    %v2803 = vunpack.c.l.b16 %v677
    %v2804 = vunpack.c.h.b16 %v677
    %v2805 = vunpack.c.l.b16 %v678
    %v2806 = vunpack.c.h.b16 %v678
    %v2807 = vunpack.c.l.b16 %v679
    %v2808 = vunpack.c.h.b16 %v679
    %v2809 = vunpack.c.l.b16 %v680
    %v2810 = vunpack.c.h.b16 %v680
    %v2811 = vunpack.c.l.b16 %v681
    %v2812 = vunpack.c.h.b16 %v681
    %v2813 = vunpack.c.l.b16 %v682
    %v2814 = vunpack.c.h.b16 %v682
    %v2815 = vunpack.c.l.b16 %v683
    %v2816 = vunpack.c.h.b16 %v683
    %v2817 = vunpack.c.l.b16 %v684
    %v2818 = vunpack.c.h.b16 %v684
    %v2819 = vunpack.c.l.b16 %v685
    %v2820 = vunpack.c.h.b16 %v685
    %v2821 = vunpack.c.l.b16 %v686
    %v2822 = vunpack.c.h.b16 %v686
    %v2823 = vunpack.c.l.b16 %v687
    %v2824 = vunpack.c.h.b16 %v687
    %v2825 = vunpack.c.l.b16 %v688
    %v2826 = vunpack.c.h.b16 %v688
    %v2827 = vunpack.c.l.b16 %v689
    %v2828 = vunpack.c.h.b16 %v689
    %v2829 = vunpack.c.l.b16 %v690
    %v2830 = vunpack.c.h.b16 %v690
    %v2831 = vunpack.c.l.b16 %v691
    %v2832 = vunpack.c.h.b16 %v691
    %v2833 = vunpack.c.l.b16 %v692
    %v2834 = vunpack.c.h.b16 %v692
    %v2835 = vunpack.c.l.b16 %v693
    %v2836 = vunpack.c.h.b16 %v693
    %v2837 = vunpack.c.l.b16 %v694
    %v2838 = vunpack.c.h.b16 %v694
    %v2839 = vunpack.c.l.b16 %v695
    %v2840 = vunpack.c.h.b16 %v695
    %v2841 = vunpack.c.l.b16 %v696
    %v2842 = vunpack.c.h.b16 %v696
    %v2843 = vunpack.c.l.b16 %v697
    %v2844 = vunpack.c.h.b16 %v697
    %v2845 = vunpack.c.l.b16 %v698
    %v2846 = vunpack.c.h.b16 %v698
    %v2847 = vunpack.c.l.b16 %v699
    %v2848 = vunpack.c.h.b16 %v699
    %v2849 = vunpack.c.l.b16 %v700
    %v2850 = vunpack.c.h.b16 %v700
    %v2851 = vunpack.c.l.b16 %v701
    %v2852 = vunpack.c.h.b16 %v701
    %v2853 = vunpack.c.l.b16 %v702
    %v2854 = vunpack.c.h.b16 %v702
    %v2855 = vunpack.c.l.b16 %v703
    %v2856 = vunpack.c.h.b16 %v703
    %v2857 = vunpack.c.l.b16 %v704
    %v2858 = vunpack.c.h.b16 %v704
    %v2859 = vunpack.c.l.b16 %v705
    %v2860 = vunpack.c.h.b16 %v705
    %v2861 = vunpack.c.l.b16 %v706
    %v2862 = vunpack.c.h.b16 %v706
    %v2863 = vunpack.c.l.b16 %v707
    %v2864 = vunpack.c.h.b16 %v707
    %v2865 = vunpack.c.l.b16 %v708
    %v2866 = vunpack.c.h.b16 %v708
    %v2867 = vunpack.c.l.b16 %v709
    %v2868 = vunpack.c.h.b16 %v709
    %v2869 = vunpack.c.l.b16 %v710
    %v2870 = vunpack.c.h.b16 %v710
    %v2871 = vunpack.c.l.b16 %v711
    %v2872 = vunpack.c.h.b16 %v711
    %v2873 = vunpack.c.l.b16 %v712
    %v2874 = vunpack.c.h.b16 %v712
    %v2875 = vunpack.c.l.b16 %v713
    %v2876 = vunpack.c.h.b16 %v713
    %v2877 = vunpack.c.l.b16 %v714
    %v2878 = vunpack.c.h.b16 %v714
    %v2879 = vunpack.c.l.b16 %v715
    %v2880 = vunpack.c.h.b16 %v715
    %v2881 = vunpack.c.l.b16 %v716
    %v2882 = vunpack.c.h.b16 %v716
    %v2883 = vunpack.c.l.b16 %v717
    %v2884 = vunpack.c.h.b16 %v717
    %v2885 = vunpack.c.l.b16 %v718
    %v2886 = vunpack.c.h.b16 %v718
    %v2887 = vunpack.c.l.b16 %v719
    %v2888 = vunpack.c.h.b16 %v719
    %v2889 = vunpack.c.l.b16 %v720
    %v2890 = vunpack.c.h.b16 %v720
    %v2891 = vunpack.c.l.b16 %v721
    %v2892 = vunpack.c.h.b16 %v721
    %v2893 = vunpack.c.l.b16 %v722
    %v2894 = vunpack.c.h.b16 %v722
    %v2895 = vunpack.c.l.b16 %v723
    %v2896 = vunpack.c.h.b16 %v723
    %v2897 = vunpack.c.l.b16 %v724
    %v2898 = vunpack.c.h.b16 %v724
    %v2899 = vunpack.c.l.b16 %v725
    %v2900 = vunpack.c.h.b16 %v725
    %v2901 = vunpack.c.l.b16 %v726
    %v2902 = vunpack.c.h.b16 %v726
    %v2903 = vunpack.c.l.b16 %v727
    %v2904 = vunpack.c.h.b16 %v727
    %v2905 = vunpack.c.l.b16 %v728
    %v2906 = vunpack.c.h.b16 %v728
    %v2907 = vunpack.c.l.b16 %v729
    %v2908 = vunpack.c.h.b16 %v729
    %v2909 = vunpack.c.l.b16 %v730
    %v2910 = vunpack.c.h.b16 %v730
    %v2911 = vunpack.c.l.b16 %v731
    %v2912 = vunpack.c.h.b16 %v731
    %v2913 = vunpack.c.l.b16 %v732
    %v2914 = vunpack.c.h.b16 %v732
    %v2915 = vunpack.c.l.b16 %v733
    %v2916 = vunpack.c.h.b16 %v733
    %v2917 = vunpack.c.l.b16 %v734
    %v2918 = vunpack.c.h.b16 %v734
    %v2919 = vunpack.c.l.b16 %v735
    %v2920 = vunpack.c.h.b16 %v735
    %v2921 = vunpack.c.l.b16 %v736
    %v2922 = vunpack.c.h.b16 %v736
    %v2923 = vunpack.c.l.b16 %v737
    %v2924 = vunpack.c.h.b16 %v737
    %v2925 = vunpack.c.l.b16 %v738
    %v2926 = vunpack.c.h.b16 %v738
    %v2927 = vunpack.c.l.b16 %v739
    %v2928 = vunpack.c.h.b16 %v739
    %v2929 = vunpack.c.l.b16 %v740
    %v2930 = vunpack.c.h.b16 %v740
    %v2931 = vunpack.c.l.b16 %v741
    %v2932 = vunpack.c.h.b16 %v741
    %v2933 = vunpack.c.l.b16 %v742
    %v2934 = vunpack.c.h.b16 %v742
    %v2935 = vunpack.c.l.b16 %v743
    %v2936 = vunpack.c.h.b16 %v743
    %v2937 = vunpack.c.l.b16 %v744
    %v2938 = vunpack.c.h.b16 %v744
    %v2939 = vunpack.c.l.b16 %v745
    %v2940 = vunpack.c.h.b16 %v745
    %v2941 = vunpack.c.l.b16 %v746
    %v2942 = vunpack.c.h.b16 %v746
    %v2943 = vunpack.c.l.b16 %v747
    %v2944 = vunpack.c.h.b16 %v747
    %v2945 = vunpack.c.l.b16 %v748
    %v2946 = vunpack.c.h.b16 %v748
    %v2947 = vunpack.c.l.b16 %v749
    %v2948 = vunpack.c.h.b16 %v749
    %v2949 = vunpack.c.l.b16 %v750
    %v2950 = vunpack.c.h.b16 %v750
    %v2951 = vunpack.c.l.b16 %v751
    %v2952 = vunpack.c.h.b16 %v751
    %v2953 = vunpack.c.l.b16 %v752
    %v2954 = vunpack.c.h.b16 %v752
    %v2955 = vunpack.c.l.b16 %v753
    %v2956 = vunpack.c.h.b16 %v753
    %v2957 = vunpack.c.l.b16 %v754
    %v2958 = vunpack.c.h.b16 %v754
    %v2959 = vunpack.c.l.b16 %v755
    %v2960 = vunpack.c.h.b16 %v755
    %v2961 = vunpack.c.l.b16 %v756
    %v2962 = vunpack.c.h.b16 %v756
    %v2963 = vunpack.c.l.b16 %v757
    %v2964 = vunpack.c.h.b16 %v757
    %v2965 = vunpack.c.l.b16 %v758
    %v2966 = vunpack.c.h.b16 %v758
    %v2967 = vunpack.c.l.b16 %v759
    %v2968 = vunpack.c.h.b16 %v759
    %v2969 = vunpack.c.l.b16 %v760
    %v2970 = vunpack.c.h.b16 %v760
    %v2971 = vunpack.c.l.b16 %v761
    %v2972 = vunpack.c.h.b16 %v761
    %v2973 = vunpack.c.l.b16 %v762
    %v2974 = vunpack.c.h.b16 %v762
    %v2975 = vunpack.c.l.b16 %v763
    %v2976 = vunpack.c.h.b16 %v763
    %v2977 = vunpack.c.l.b16 %v764
    %v2978 = vunpack.c.h.b16 %v764
    %v2979 = vunpack.c.l.b16 %v765
    %v2980 = vunpack.c.h.b16 %v765
    %v2981 = vunpack.c.l.b16 %v766
    %v2982 = vunpack.c.h.b16 %v766
    %v2983 = vunpack.c.l.b16 %v767
    %v2984 = vunpack.c.h.b16 %v767
    %v2985 = vunpack.c.l.b16 %v768
    %v2986 = vunpack.c.h.b16 %v768
    %v2987 = vunpack.c.l.b16 %v769
    %v2988 = vunpack.c.h.b16 %v769
    %v2989 = vunpack.c.l.b16 %v770
    %v2990 = vunpack.c.h.b16 %v770
    %v2991 = vunpack.c.l.b16 %v771
    %v2992 = vunpack.c.h.b16 %v771
    %v2993 = vunpack.c.l.b16 %v772
    %v2994 = vunpack.c.h.b16 %v772
    %v2995 = vunpack.c.l.b16 %v773
    %v2996 = vunpack.c.h.b16 %v773
    %v2997 = vunpack.c.l.b16 %v774
    %v2998 = vunpack.c.h.b16 %v774
    %v2999 = vunpack.c.l.b16 %v775
    %v3000 = vunpack.c.h.b16 %v775
    %v3001 = vunpack.c.l.b16 %v776
    %v3002 = vunpack.c.h.b16 %v776
    %v3003 = vunpack.c.l.b16 %v777
    %v3004 = vunpack.c.h.b16 %v777
    %v3005 = vunpack.c.l.b16 %v778
    %v3006 = vunpack.c.h.b16 %v778
    %v3007 = vunpack.c.l.b16 %v779
    %v3008 = vunpack.c.h.b16 %v779
    %v3009 = vunpack.c.l.b16 %v780
    %v3010 = vunpack.c.h.b16 %v780
    %v3011 = vunpack.c.l.b16 %v781
    %v3012 = vunpack.c.h.b16 %v781
    %v3013 = vunpack.c.l.b16 %v782
    %v3014 = vunpack.c.h.b16 %v782
    %v3015 = vunpack.c.l.b16 %v783
    %v3016 = vunpack.c.h.b16 %v783
    %v3017 = vunpack.c.l.b16 %v784
    %v3018 = vunpack.c.h.b16 %v784
    %v3019 = vunpack.c.l.b16 %v785
    %v3020 = vunpack.c.h.b16 %v785
    %v3021 = vunpack.c.l.b16 %v786
    %v3022 = vunpack.c.h.b16 %v786
    %v3023 = vunpack.c.l.b16 %v787
    %v3024 = vunpack.c.h.b16 %v787
    %v3025 = vunpack.c.l.b16 %v788
    %v3026 = vunpack.c.h.b16 %v788
    %v3027 = vunpack.c.l.b16 %v789
    %v3028 = vunpack.c.h.b16 %v789
    %v3029 = vunpack.c.l.b16 %v790
    %v3030 = vunpack.c.h.b16 %v790
    %v3031 = vunpack.c.l.b16 %v791
    %v3032 = vunpack.c.h.b16 %v791
    %v3033 = vunpack.c.l.b16 %v792
    %v3034 = vunpack.c.h.b16 %v792
    %v3035 = vunpack.c.l.b16 %v793
    %v3036 = vunpack.c.h.b16 %v793
    %v3037 = vunpack.c.l.b16 %v794
    %v3038 = vunpack.c.h.b16 %v794
    %v3039 = vunpack.c.l.b16 %v795
    %v3040 = vunpack.c.h.b16 %v795
    %v3041 = vunpack.c.l.b16 %v796
    %v3042 = vunpack.c.h.b16 %v796
    %v3043 = vunpack.c.l.b16 %v797
    %v3044 = vunpack.c.h.b16 %v797
    %v3045 = vunpack.c.l.b16 %v798
    %v3046 = vunpack.c.h.b16 %v798
    %v3047 = vunpack.c.l.b16 %v799
    %v3048 = vunpack.c.h.b16 %v799
    %v3049 = vunpack.c.l.b16 %v800
    %v3050 = vunpack.c.h.b16 %v800
    %v3051 = vunpack.c.l.b16 %v801
    %v3052 = vunpack.c.h.b16 %v801
    %v3053 = vunpack.c.l.b16 %v802
    %v3054 = vunpack.c.h.b16 %v802
    %v3055 = vunpack.c.l.b16 %v803
    %v3056 = vunpack.c.h.b16 %v803
    %v3057 = vunpack.c.l.b16 %v804
    %v3058 = vunpack.c.h.b16 %v804
    %v3059 = vunpack.c.l.b16 %v805
    %v3060 = vunpack.c.h.b16 %v805
    %v3061 = vunpack.c.l.b16 %v806
    %v3062 = vunpack.c.h.b16 %v806
    %v3063 = vunpack.c.l.b16 %v807
    %v3064 = vunpack.c.h.b16 %v807
    %v3065 = vunpack.c.l.b16 %v808
    %v3066 = vunpack.c.h.b16 %v808
    %v3067 = vunpack.c.l.b16 %v809
    %v3068 = vunpack.c.h.b16 %v809
    %v3069 = vunpack.c.l.b16 %v810
    %v3070 = vunpack.c.h.b16 %v810
    %v3071 = vunpack.c.l.b16 %v811
    %v3072 = vunpack.c.h.b16 %v811
    %v3073 = vunpack.c.l.b16 %v812
    %v3074 = vunpack.c.h.b16 %v812
    %v3075 = vunpack.c.l.b16 %v813
    %v3076 = vunpack.c.h.b16 %v813
    %v3077 = vunpack.c.l.b16 %v814
    %v3078 = vunpack.c.h.b16 %v814
    %v3079 = vunpack.c.l.b16 %v815
    %v3080 = vunpack.c.h.b16 %v815
    %v3081 = vunpack.c.l.b16 %v816
    %v3082 = vunpack.c.h.b16 %v816
    %v3083 = vunpack.c.l.b16 %v817
    %v3084 = vunpack.c.h.b16 %v817
    %v3085 = vunpack.c.l.b16 %v818
    %v3086 = vunpack.c.h.b16 %v818
    %v3087 = vunpack.c.l.b16 %v819
    %v3088 = vunpack.c.h.b16 %v819
    %v3089 = vunpack.c.l.b16 %v820
    %v3090 = vunpack.c.h.b16 %v820
    %v3091 = vunpack.c.l.b16 %v821
    %v3092 = vunpack.c.h.b16 %v821
    %v3093 = vunpack.c.l.b16 %v822
    %v3094 = vunpack.c.h.b16 %v822
    %v3095 = vunpack.c.l.b16 %v823
    %v3096 = vunpack.c.h.b16 %v823
    %v3097 = vunpack.c.l.b16 %v824
    %v3098 = vunpack.c.h.b16 %v824
    %v3099 = vunpack.c.l.b16 %v825
    %v3100 = vunpack.c.h.b16 %v825
    %v3101 = vunpack.c.l.b16 %v826
    %v3102 = vunpack.c.h.b16 %v826
    %v3103 = vunpack.c.l.b16 %v827
    %v3104 = vunpack.c.h.b16 %v827
    %v3105 = vunpack.c.l.b16 %v828
    %v3106 = vunpack.c.h.b16 %v828
    %v3107 = vunpack.c.l.b16 %v829
    %v3108 = vunpack.c.h.b16 %v829
    %v3109 = vunpack.c.l.b16 %v830
    %v3110 = vunpack.c.h.b16 %v830
    %v3111 = vunpack.c.l.b16 %v831
    %v3112 = vunpack.c.h.b16 %v831
    %v3113 = vunpack.c.l.b16 %v832
    %v3114 = vunpack.c.h.b16 %v832
    %v3115 = vunpack.c.l.b16 %v833
    %v3116 = vunpack.c.h.b16 %v833
    %v3117 = vunpack.c.l.b16 %v834
    %v3118 = vunpack.c.h.b16 %v834
    %v3119 = vunpack.c.l.b16 %v835
    %v3120 = vunpack.c.h.b16 %v835
    %v3121 = vunpack.c.l.b16 %v836
    %v3122 = vunpack.c.h.b16 %v836
    %v3123 = vunpack.c.l.b16 %v837
    %v3124 = vunpack.c.h.b16 %v837
    %v3125 = vunpack.c.l.b16 %v838
    %v3126 = vunpack.c.h.b16 %v838
    %v3127 = vunpack.c.l.b16 %v839
    %v3128 = vunpack.c.h.b16 %v839
    %v3129 = vunpack.c.l.b16 %v840
    %v3130 = vunpack.c.h.b16 %v840
    %v3131 = vunpack.c.l.b16 %v841
    %v3132 = vunpack.c.h.b16 %v841
    %v3133 = vunpack.c.l.b16 %v842
    %v3134 = vunpack.c.h.b16 %v842
    %v3135 = vunpack.c.l.b16 %v843
    %v3136 = vunpack.c.h.b16 %v843
    %v3137 = vunpack.c.l.b16 %v844
    %v3138 = vunpack.c.h.b16 %v844
    %v3139 = vunpack.c.l.b16 %v845
    %v3140 = vunpack.c.h.b16 %v845
    %v3141 = vunpack.c.l.b16 %v846
    %v3142 = vunpack.c.h.b16 %v846
    %v3143 = vunpack.c.l.b16 %v847
    %v3144 = vunpack.c.h.b16 %v847
    %v3145 = vunpack.c.l.b16 %v848
    %v3146 = vunpack.c.h.b16 %v848
    %v3147 = vunpack.c.l.b16 %v849
    %v3148 = vunpack.c.h.b16 %v849
    %v3149 = vunpack.c.l.b16 %v850
    %v3150 = vunpack.c.h.b16 %v850
    %v3151 = vunpack.c.l.b16 %v851
    %v3152 = vunpack.c.h.b16 %v851
    %v3153 = vunpack.c.l.b16 %v852
    %v3154 = vunpack.c.h.b16 %v852
    %v3155 = vunpack.c.l.b16 %v853
    %v3156 = vunpack.c.h.b16 %v853
    %v3157 = vunpack.c.l.b16 %v854
    %v3158 = vunpack.c.h.b16 %v854
    %v3159 = vpack.c.b16 %v1671, %v1623
    %v3160 = vpack.c.b16 %v1672, %v1624
    %v3161 = vpack.c.b16 %v1673, %v1625
    %v3162 = vpack.c.b16 %v1674, %v1626
    %v3163 = vpack.c.b16 %v1675, %v1627
    %v3164 = vpack.c.b16 %v1676, %v1628
    %v3165 = vpack.c.b16 %v1677, %v1629
    %v3166 = vpack.c.b16 %v1678, %v1630
    %v3167 = vpack.c.b16 %v1679, %v1631
    %v3168 = vpack.c.b16 %v1680, %v1632
    %v3169 = vpack.c.b16 %v1681, %v1633
    %v3170 = vpack.c.b16 %v1682, %v1634
    %v3171 = vpack.c.b16 %v1683, %v1635
    %v3172 = vpack.c.b16 %v1684, %v1636
    %v3173 = vpack.c.b16 %v1685, %v1637
    %v3174 = vpack.c.b16 %v1686, %v1638
    %v3175 = vpack.c.b16 %v1687, %v1639
    %v3176 = vpack.c.b16 %v1688, %v1640
    %v3177 = vpack.c.b16 %v1689, %v1641
    %v3178 = vpack.c.b16 %v1690, %v1642
    %v3179 = vpack.c.b16 %v1691, %v1643
    %v3180 = vpack.c.b16 %v1692, %v1644
    %v3181 = vpack.c.b16 %v1693, %v1645
    %v3182 = vpack.c.b16 %v1694, %v1646
    %v3183 = vpack.c.b16 %v1695, %v1647
    %v3184 = vpack.c.b16 %v1696, %v1648
    %v3185 = vpack.c.b16 %v1697, %v1649
    %v3186 = vpack.c.b16 %v1698, %v1650
    %v3187 = vpack.c.b16 %v1699, %v1651
    %v3188 = vpack.c.b16 %v1700, %v1652
    %v3189 = vpack.c.b16 %v1701, %v1653
    %v3190 = vpack.c.b16 %v1702, %v1654
    %v3191 = vpack.c.b16 %v1703, %v1655
    %v3192 = vpack.c.b16 %v1704, %v1656
    %v3193 = vpack.c.b16 %v1705, %v1657
    %v3194 = vpack.c.b16 %v1706, %v1658
    %v3195 = vpack.c.b16 %v1707, %v1659
    %v3196 = vpack.c.b16 %v1708, %v1660
    %v3197 = vpack.c.b16 %v1709, %v1661
    %v3198 = vpack.c.b16 %v1710, %v1662
    %v3199 = vpack.c.b16 %v1711, %v1663
    %v3200 = vpack.c.b16 %v1712, %v1664
    %v3201 = vpack.c.b16 %v1713, %v1665
    %v3202 = vpack.c.b16 %v1714, %v1666
    %v3203 = vpack.c.b16 %v1715, %v1667
    %v3204 = vpack.c.b16 %v1716, %v1668
    %v3205 = vpack.c.b16 %v1717, %v1669
    %v3206 = vpack.c.b16 %v1718, %v1670
    %v3207 = vpack.c.b16 %v1767, %v1719
    %v3208 = vpack.c.b16 %v1768, %v1720
    %v3209 = vpack.c.b16 %v1769, %v1721
    %v3210 = vpack.c.b16 %v1770, %v1722
    %v3211 = vpack.c.b16 %v1771, %v1723
    %v3212 = vpack.c.b16 %v1772, %v1724
    %v3213 = vpack.c.b16 %v1773, %v1725
    %v3214 = vpack.c.b16 %v1774, %v1726
    %v3215 = vpack.c.b16 %v1775, %v1727
    %v3216 = vpack.c.b16 %v1776, %v1728
    %v3217 = vpack.c.b16 %v1777, %v1729
    %v3218 = vpack.c.b16 %v1778, %v1730
    %v3219 = vpack.c.b16 %v1779, %v1731
    %v3220 = vpack.c.b16 %v1780, %v1732
    %v3221 = vpack.c.b16 %v1781, %v1733
    %v3222 = vpack.c.b16 %v1782, %v1734
    %v3223 = vpack.c.b16 %v1783, %v1735
    %v3224 = vpack.c.b16 %v1784, %v1736
    %v3225 = vpack.c.b16 %v1785, %v1737
    %v3226 = vpack.c.b16 %v1786, %v1738
    %v3227 = vpack.c.b16 %v1787, %v1739
    %v3228 = vpack.c.b16 %v1788, %v1740
    %v3229 = vpack.c.b16 %v1789, %v1741
    %v3230 = vpack.c.b16 %v1790, %v1742
    %v3231 = vpack.c.b16 %v1791, %v1743
    %v3232 = vpack.c.b16 %v1792, %v1744
    %v3233 = vpack.c.b16 %v1793, %v1745
    %v3234 = vpack.c.b16 %v1794, %v1746
    %v3235 = vpack.c.b16 %v1795, %v1747
    %v3236 = vpack.c.b16 %v1796, %v1748
    %v3237 = vpack.c.b16 %v1797, %v1749
    %v3238 = vpack.c.b16 %v1798, %v1750
    %v3239 = vpack.c.b16 %v1799, %v1751
    %v3240 = vpack.c.b16 %v1800, %v1752
    %v3241 = vpack.c.b16 %v1801, %v1753
    %v3242 = vpack.c.b16 %v1802, %v1754
    %v3243 = vpack.c.b16 %v1803, %v1755
    %v3244 = vpack.c.b16 %v1804, %v1756
    %v3245 = vpack.c.b16 %v1805, %v1757
    %v3246 = vpack.c.b16 %v1806, %v1758
    %v3247 = vpack.c.b16 %v1807, %v1759
    %v3248 = vpack.c.b16 %v1808, %v1760
    %v3249 = vpack.c.b16 %v1809, %v1761
    %v3250 = vpack.c.b16 %v1810, %v1762
    %v3251 = vpack.c.b16 %v1811, %v1763
    %v3252 = vpack.c.b16 %v1812, %v1764
    %v3253 = vpack.c.b16 %v1813, %v1765
    %v3254 = vpack.c.b16 %v1814, %v1766
    %v3255 = vpack.c.b16 %v1863, %v1815
    %v3256 = vpack.c.b16 %v1864, %v1816
    %v3257 = vpack.c.b16 %v1865, %v1817
    %v3258 = vpack.c.b16 %v1866, %v1818
    %v3259 = vpack.c.b16 %v1867, %v1819
    %v3260 = vpack.c.b16 %v1868, %v1820
    %v3261 = vpack.c.b16 %v1869, %v1821
    %v3262 = vpack.c.b16 %v1870, %v1822
    %v3263 = vpack.c.b16 %v1871, %v1823
    %v3264 = vpack.c.b16 %v1872, %v1824
    %v3265 = vpack.c.b16 %v1873, %v1825
    %v3266 = vpack.c.b16 %v1874, %v1826
    %v3267 = vpack.c.b16 %v1875, %v1827
    %v3268 = vpack.c.b16 %v1876, %v1828
    %v3269 = vpack.c.b16 %v1877, %v1829
    %v3270 = vpack.c.b16 %v1878, %v1830
    %v3271 = vpack.c.b16 %v1879, %v1831
    %v3272 = vpack.c.b16 %v1880, %v1832
    %v3273 = vpack.c.b16 %v1881, %v1833
    %v3274 = vpack.c.b16 %v1882, %v1834
    %v3275 = vpack.c.b16 %v1883, %v1835
    %v3276 = vpack.c.b16 %v1884, %v1836
    %v3277 = vpack.c.b16 %v1885, %v1837
    %v3278 = vpack.c.b16 %v1886, %v1838
    %v3279 = vpack.c.b16 %v1887, %v1839
    %v3280 = vpack.c.b16 %v1888, %v1840
    %v3281 = vpack.c.b16 %v1889, %v1841
    %v3282 = vpack.c.b16 %v1890, %v1842
    %v3283 = vpack.c.b16 %v1891, %v1843
    %v3284 = vpack.c.b16 %v1892, %v1844
    %v3285 = vpack.c.b16 %v1893, %v1845
    %v3286 = vpack.c.b16 %v1894, %v1846
    %v3287 = vpack.c.b16 %v1895, %v1847
    %v3288 = vpack.c.b16 %v1896, %v1848
    %v3289 = vpack.c.b16 %v1897, %v1849
    %v3290 = vpack.c.b16 %v1898, %v1850
    %v3291 = vpack.c.b16 %v1899, %v1851
    %v3292 = vpack.c.b16 %v1900, %v1852
    %v3293 = vpack.c.b16 %v1901, %v1853
    %v3294 = vpack.c.b16 %v1902, %v1854
    %v3295 = vpack.c.b16 %v1903, %v1855
    %v3296 = vpack.c.b16 %v1904, %v1856
    %v3297 = vpack.c.b16 %v1905, %v1857
    %v3298 = vpack.c.b16 %v1906, %v1858
    %v3299 = vpack.c.b16 %v1907, %v1859
    %v3300 = vpack.c.b16 %v1908, %v1860
    %v3301 = vpack.c.b16 %v1909, %v1861
    %v3302 = vpack.c.b16 %v1910, %v1862
    %v3303 = vpack.c.b16 %v1959, %v1911
    %v3304 = vpack.c.b16 %v1960, %v1912
    %v3305 = vpack.c.b16 %v1961, %v1913
    %v3306 = vpack.c.b16 %v1962, %v1914
    %v3307 = vpack.c.b16 %v1963, %v1915
    %v3308 = vpack.c.b16 %v1964, %v1916
    %v3309 = vpack.c.b16 %v1965, %v1917
    %v3310 = vpack.c.b16 %v1966, %v1918
    %v3311 = vpack.c.b16 %v1967, %v1919
    %v3312 = vpack.c.b16 %v1968, %v1920
    %v3313 = vpack.c.b16 %v1969, %v1921
    %v3314 = vpack.c.b16 %v1970, %v1922
    %v3315 = vpack.c.b16 %v1971, %v1923
    %v3316 = vpack.c.b16 %v1972, %v1924
    %v3317 = vpack.c.b16 %v1973, %v1925
    %v3318 = vpack.c.b16 %v1974, %v1926
    %v3319 = vpack.c.b16 %v1975, %v1927
    %v3320 = vpack.c.b16 %v1976, %v1928
    %v3321 = vpack.c.b16 %v1977, %v1929
    %v3322 = vpack.c.b16 %v1978, %v1930
    %v3323 = vpack.c.b16 %v1979, %v1931
    %v3324 = vpack.c.b16 %v1980, %v1932
    %v3325 = vpack.c.b16 %v1981, %v1933
    %v3326 = vpack.c.b16 %v1982, %v1934
    %v3327 = vpack.c.b16 %v1983, %v1935
    %v3328 = vpack.c.b16 %v1984, %v1936
    %v3329 = vpack.c.b16 %v1985, %v1937
    %v3330 = vpack.c.b16 %v1986, %v1938
    %v3331 = vpack.c.b16 %v1987, %v1939
    %v3332 = vpack.c.b16 %v1988, %v1940
    %v3333 = vpack.c.b16 %v1989, %v1941
    %v3334 = vpack.c.b16 %v1990, %v1942
    %v3335 = vpack.c.b16 %v1991, %v1943
    %v3336 = vpack.c.b16 %v1992, %v1944
    %v3337 = vpack.c.b16 %v1993, %v1945
    %v3338 = vpack.c.b16 %v1994, %v1946
    %v3339 = vpack.c.b16 %v1995, %v1947
    %v3340 = vpack.c.b16 %v1996, %v1948
    %v3341 = vpack.c.b16 %v1997, %v1949
    %v3342 = vpack.c.b16 %v1998, %v1950
    %v3343 = vpack.c.b16 %v1999, %v1951
    %v3344 = vpack.c.b16 %v2000, %v1952
    %v3345 = vpack.c.b16 %v2001, %v1953
    %v3346 = vpack.c.b16 %v2002, %v1954
    %v3347 = vpack.c.b16 %v2003, %v1955
    %v3348 = vpack.c.b16 %v2004, %v1956
    %v3349 = vpack.c.b16 %v2005, %v1957
    %v3350 = vpack.c.b16 %v2006, %v1958
    %v3351 = vpack.c.b16 %v2055, %v2007
    %v3352 = vpack.c.b16 %v2056, %v2008
    %v3353 = vpack.c.b16 %v2057, %v2009
    %v3354 = vpack.c.b16 %v2058, %v2010
    %v3355 = vpack.c.b16 %v2059, %v2011
    %v3356 = vpack.c.b16 %v2060, %v2012
    %v3357 = vpack.c.b16 %v2061, %v2013
    %v3358 = vpack.c.b16 %v2062, %v2014
    %v3359 = vpack.c.b16 %v2063, %v2015
    %v3360 = vpack.c.b16 %v2064, %v2016
    %v3361 = vpack.c.b16 %v2065, %v2017
    %v3362 = vpack.c.b16 %v2066, %v2018
    %v3363 = vpack.c.b16 %v2067, %v2019
    %v3364 = vpack.c.b16 %v2068, %v2020
    %v3365 = vpack.c.b16 %v2069, %v2021
    %v3366 = vpack.c.b16 %v2070, %v2022
    %v3367 = vpack.c.b16 %v2071, %v2023
    %v3368 = vpack.c.b16 %v2072, %v2024
    %v3369 = vpack.c.b16 %v2073, %v2025
    %v3370 = vpack.c.b16 %v2074, %v2026
    %v3371 = vpack.c.b16 %v2075, %v2027
    %v3372 = vpack.c.b16 %v2076, %v2028
    %v3373 = vpack.c.b16 %v2077, %v2029
    %v3374 = vpack.c.b16 %v2078, %v2030
    %v3375 = vpack.c.b16 %v2079, %v2031
    %v3376 = vpack.c.b16 %v2080, %v2032
    %v3377 = vpack.c.b16 %v2081, %v2033
    %v3378 = vpack.c.b16 %v2082, %v2034
    %v3379 = vpack.c.b16 %v2083, %v2035
    %v3380 = vpack.c.b16 %v2084, %v2036
    %v3381 = vpack.c.b16 %v2085, %v2037
    %v3382 = vpack.c.b16 %v2086, %v2038
    %v3383 = vpack.c.b16 %v2087, %v2039
    %v3384 = vpack.c.b16 %v2088, %v2040
    %v3385 = vpack.c.b16 %v2089, %v2041
    %v3386 = vpack.c.b16 %v2090, %v2042
    %v3387 = vpack.c.b16 %v2091, %v2043
    %v3388 = vpack.c.b16 %v2092, %v2044
    %v3389 = vpack.c.b16 %v2093, %v2045
    %v3390 = vpack.c.b16 %v2094, %v2046
    %v3391 = vpack.c.b16 %v2095, %v2047
    %v3392 = vpack.c.b16 %v2096, %v2048
    %v3393 = vpack.c.b16 %v2097, %v2049
    %v3394 = vpack.c.b16 %v2098, %v2050
    %v3395 = vpack.c.b16 %v2099, %v2051
    %v3396 = vpack.c.b16 %v2100, %v2052
    %v3397 = vpack.c.b16 %v2101, %v2053
    %v3398 = vpack.c.b16 %v2102, %v2054
    %v3399 = vpack.c.b16 %v2151, %v2103
    %v3400 = vpack.c.b16 %v2152, %v2104
    %v3401 = vpack.c.b16 %v2153, %v2105
    %v3402 = vpack.c.b16 %v2154, %v2106
    %v3403 = vpack.c.b16 %v2155, %v2107
    %v3404 = vpack.c.b16 %v2156, %v2108
    %v3405 = vpack.c.b16 %v2157, %v2109
    %v3406 = vpack.c.b16 %v2158, %v2110
    %v3407 = vpack.c.b16 %v2159, %v2111
    %v3408 = vpack.c.b16 %v2160, %v2112
    %v3409 = vpack.c.b16 %v2161, %v2113
    %v3410 = vpack.c.b16 %v2162, %v2114
    %v3411 = vpack.c.b16 %v2163, %v2115
    %v3412 = vpack.c.b16 %v2164, %v2116
    %v3413 = vpack.c.b16 %v2165, %v2117
    %v3414 = vpack.c.b16 %v2166, %v2118
    %v3415 = vpack.c.b16 %v2167, %v2119
    %v3416 = vpack.c.b16 %v2168, %v2120
    %v3417 = vpack.c.b16 %v2169, %v2121
    %v3418 = vpack.c.b16 %v2170, %v2122
    %v3419 = vpack.c.b16 %v2171, %v2123
    %v3420 = vpack.c.b16 %v2172, %v2124
    %v3421 = vpack.c.b16 %v2173, %v2125
    %v3422 = vpack.c.b16 %v2174, %v2126
    %v3423 = vpack.c.b16 %v2175, %v2127
    %v3424 = vpack.c.b16 %v2176, %v2128
    %v3425 = vpack.c.b16 %v2177, %v2129
    %v3426 = vpack.c.b16 %v2178, %v2130
    %v3427 = vpack.c.b16 %v2179, %v2131
    %v3428 = vpack.c.b16 %v2180, %v2132
    %v3429 = vpack.c.b16 %v2181, %v2133
    %v3430 = vpack.c.b16 %v2182, %v2134
    %v3431 = vpack.c.b16 %v2183, %v2135
    %v3432 = vpack.c.b16 %v2184, %v2136
    %v3433 = vpack.c.b16 %v2185, %v2137
    %v3434 = vpack.c.b16 %v2186, %v2138
    %v3435 = vpack.c.b16 %v2187, %v2139
    %v3436 = vpack.c.b16 %v2188, %v2140
    %v3437 = vpack.c.b16 %v2189, %v2141
    %v3438 = vpack.c.b16 %v2190, %v2142
    %v3439 = vpack.c.b16 %v2191, %v2143
    %v3440 = vpack.c.b16 %v2192, %v2144
    %v3441 = vpack.c.b16 %v2193, %v2145
    %v3442 = vpack.c.b16 %v2194, %v2146
    %v3443 = vpack.c.b16 %v2195, %v2147
    %v3444 = vpack.c.b16 %v2196, %v2148
    %v3445 = vpack.c.b16 %v2197, %v2149
    %v3446 = vpack.c.b16 %v2198, %v2150
    %v3447 = vpack.c.b16 %v2247, %v2199
    %v3448 = vpack.c.b16 %v2248, %v2200
    %v3449 = vpack.c.b16 %v2249, %v2201
    %v3450 = vpack.c.b16 %v2250, %v2202
    %v3451 = vpack.c.b16 %v2251, %v2203
    %v3452 = vpack.c.b16 %v2252, %v2204
    %v3453 = vpack.c.b16 %v2253, %v2205
    %v3454 = vpack.c.b16 %v2254, %v2206
    %v3455 = vpack.c.b16 %v2255, %v2207
    %v3456 = vpack.c.b16 %v2256, %v2208
    %v3457 = vpack.c.b16 %v2257, %v2209
    %v3458 = vpack.c.b16 %v2258, %v2210
    %v3459 = vpack.c.b16 %v2259, %v2211
    %v3460 = vpack.c.b16 %v2260, %v2212
    %v3461 = vpack.c.b16 %v2261, %v2213
    %v3462 = vpack.c.b16 %v2262, %v2214
    %v3463 = vpack.c.b16 %v2263, %v2215
    %v3464 = vpack.c.b16 %v2264, %v2216
    %v3465 = vpack.c.b16 %v2265, %v2217
    %v3466 = vpack.c.b16 %v2266, %v2218
    %v3467 = vpack.c.b16 %v2267, %v2219
    %v3468 = vpack.c.b16 %v2268, %v2220
    %v3469 = vpack.c.b16 %v2269, %v2221
    %v3470 = vpack.c.b16 %v2270, %v2222
    %v3471 = vpack.c.b16 %v2271, %v2223
    %v3472 = vpack.c.b16 %v2272, %v2224
    %v3473 = vpack.c.b16 %v2273, %v2225
    %v3474 = vpack.c.b16 %v2274, %v2226
    %v3475 = vpack.c.b16 %v2275, %v2227
    %v3476 = vpack.c.b16 %v2276, %v2228
    %v3477 = vpack.c.b16 %v2277, %v2229
    %v3478 = vpack.c.b16 %v2278, %v2230
    %v3479 = vpack.c.b16 %v2279, %v2231
    %v3480 = vpack.c.b16 %v2280, %v2232
    %v3481 = vpack.c.b16 %v2281, %v2233
    %v3482 = vpack.c.b16 %v2282, %v2234
    %v3483 = vpack.c.b16 %v2283, %v2235
    %v3484 = vpack.c.b16 %v2284, %v2236
    %v3485 = vpack.c.b16 %v2285, %v2237
    %v3486 = vpack.c.b16 %v2286, %v2238
    %v3487 = vpack.c.b16 %v2287, %v2239
    %v3488 = vpack.c.b16 %v2288, %v2240
    %v3489 = vpack.c.b16 %v2289, %v2241
    %v3490 = vpack.c.b16 %v2290, %v2242
    %v3491 = vpack.c.b16 %v2291, %v2243
    %v3492 = vpack.c.b16 %v2292, %v2244
    %v3493 = vpack.c.b16 %v2293, %v2245
    %v3494 = vpack.c.b16 %v2294, %v2246
    %v3495 = vpack.c.b16 %v2343, %v2295
    %v3496 = vpack.c.b16 %v2344, %v2296
    %v3497 = vpack.c.b16 %v2345, %v2297
    %v3498 = vpack.c.b16 %v2346, %v2298
    %v3499 = vpack.c.b16 %v2347, %v2299
    %v3500 = vpack.c.b16 %v2348, %v2300
    %v3501 = vpack.c.b16 %v2349, %v2301
    %v3502 = vpack.c.b16 %v2350, %v2302
    %v3503 = vpack.c.b16 %v2351, %v2303
    %v3504 = vpack.c.b16 %v2352, %v2304
    %v3505 = vpack.c.b16 %v2353, %v2305
    %v3506 = vpack.c.b16 %v2354, %v2306
    %v3507 = vpack.c.b16 %v2355, %v2307
    %v3508 = vpack.c.b16 %v2356, %v2308
    %v3509 = vpack.c.b16 %v2357, %v2309
    %v3510 = vpack.c.b16 %v2358, %v2310
    %v3511 = vpack.c.b16 %v2359, %v2311
    %v3512 = vpack.c.b16 %v2360, %v2312
    %v3513 = vpack.c.b16 %v2361, %v2313
    %v3514 = vpack.c.b16 %v2362, %v2314
    %v3515 = vpack.c.b16 %v2363, %v2315
    %v3516 = vpack.c.b16 %v2364, %v2316
    %v3517 = vpack.c.b16 %v2365, %v2317
    %v3518 = vpack.c.b16 %v2366, %v2318
    %v3519 = vpack.c.b16 %v2367, %v2319
    %v3520 = vpack.c.b16 %v2368, %v2320
    %v3521 = vpack.c.b16 %v2369, %v2321
    %v3522 = vpack.c.b16 %v2370, %v2322
    %v3523 = vpack.c.b16 %v2371, %v2323
    %v3524 = vpack.c.b16 %v2372, %v2324
    %v3525 = vpack.c.b16 %v2373, %v2325
    %v3526 = vpack.c.b16 %v2374, %v2326
    %v3527 = vpack.c.b16 %v2375, %v2327
    %v3528 = vpack.c.b16 %v2376, %v2328
    %v3529 = vpack.c.b16 %v2377, %v2329
    %v3530 = vpack.c.b16 %v2378, %v2330
    %v3531 = vpack.c.b16 %v2379, %v2331
    %v3532 = vpack.c.b16 %v2380, %v2332
    %v3533 = vpack.c.b16 %v2381, %v2333
    %v3534 = vpack.c.b16 %v2382, %v2334
    %v3535 = vpack.c.b16 %v2383, %v2335
    %v3536 = vpack.c.b16 %v2384, %v2336
    %v3537 = vpack.c.b16 %v2385, %v2337
    %v3538 = vpack.c.b16 %v2386, %v2338
    %v3539 = vpack.c.b16 %v2387, %v2339
    %v3540 = vpack.c.b16 %v2388, %v2340
    %v3541 = vpack.c.b16 %v2389, %v2341
    %v3542 = vpack.c.b16 %v2390, %v2342
    %v3543 = vpack.c.b16 %v2439, %v2391
    %v3544 = vpack.c.b16 %v2440, %v2392
    %v3545 = vpack.c.b16 %v2441, %v2393
    %v3546 = vpack.c.b16 %v2442, %v2394
    %v3547 = vpack.c.b16 %v2443, %v2395
    %v3548 = vpack.c.b16 %v2444, %v2396
    %v3549 = vpack.c.b16 %v2445, %v2397
    %v3550 = vpack.c.b16 %v2446, %v2398
    %v3551 = vpack.c.b16 %v2447, %v2399
    %v3552 = vpack.c.b16 %v2448, %v2400
    %v3553 = vpack.c.b16 %v2449, %v2401
    %v3554 = vpack.c.b16 %v2450, %v2402
    %v3555 = vpack.c.b16 %v2451, %v2403
    %v3556 = vpack.c.b16 %v2452, %v2404
    %v3557 = vpack.c.b16 %v2453, %v2405
    %v3558 = vpack.c.b16 %v2454, %v2406
    %v3559 = vpack.c.b16 %v2455, %v2407
    %v3560 = vpack.c.b16 %v2456, %v2408
    %v3561 = vpack.c.b16 %v2457, %v2409
    %v3562 = vpack.c.b16 %v2458, %v2410
    %v3563 = vpack.c.b16 %v2459, %v2411
    %v3564 = vpack.c.b16 %v2460, %v2412
    %v3565 = vpack.c.b16 %v2461, %v2413
    %v3566 = vpack.c.b16 %v2462, %v2414
    %v3567 = vpack.c.b16 %v2463, %v2415
    %v3568 = vpack.c.b16 %v2464, %v2416
    %v3569 = vpack.c.b16 %v2465, %v2417
    %v3570 = vpack.c.b16 %v2466, %v2418
    %v3571 = vpack.c.b16 %v2467, %v2419
    %v3572 = vpack.c.b16 %v2468, %v2420
    %v3573 = vpack.c.b16 %v2469, %v2421
    %v3574 = vpack.c.b16 %v2470, %v2422
    %v3575 = vpack.c.b16 %v2471, %v2423
    %v3576 = vpack.c.b16 %v2472, %v2424
    %v3577 = vpack.c.b16 %v2473, %v2425
    %v3578 = vpack.c.b16 %v2474, %v2426
    %v3579 = vpack.c.b16 %v2475, %v2427
    %v3580 = vpack.c.b16 %v2476, %v2428
    %v3581 = vpack.c.b16 %v2477, %v2429
    %v3582 = vpack.c.b16 %v2478, %v2430
    %v3583 = vpack.c.b16 %v2479, %v2431
    %v3584 = vpack.c.b16 %v2480, %v2432
    %v3585 = vpack.c.b16 %v2481, %v2433
    %v3586 = vpack.c.b16 %v2482, %v2434
    %v3587 = vpack.c.b16 %v2483, %v2435
    %v3588 = vpack.c.b16 %v2484, %v2436
    %v3589 = vpack.c.b16 %v2485, %v2437
    %v3590 = vpack.c.b16 %v2486, %v2438
    %v3591 = vpack.c.b16 %v2535, %v2487
    %v3592 = vpack.c.b16 %v2536, %v2488
    %v3593 = vpack.c.b16 %v2537, %v2489
    %v3594 = vpack.c.b16 %v2538, %v2490
    %v3595 = vpack.c.b16 %v2539, %v2491
    %v3596 = vpack.c.b16 %v2540, %v2492
    %v3597 = vpack.c.b16 %v2541, %v2493
    %v3598 = vpack.c.b16 %v2542, %v2494
    %v3599 = vpack.c.b16 %v2543, %v2495
    %v3600 = vpack.c.b16 %v2544, %v2496
    %v3601 = vpack.c.b16 %v2545, %v2497
    %v3602 = vpack.c.b16 %v2546, %v2498
    %v3603 = vpack.c.b16 %v2547, %v2499
    %v3604 = vpack.c.b16 %v2548, %v2500
    %v3605 = vpack.c.b16 %v2549, %v2501
    %v3606 = vpack.c.b16 %v2550, %v2502
    %v3607 = vpack.c.b16 %v2551, %v2503
    %v3608 = vpack.c.b16 %v2552, %v2504
    %v3609 = vpack.c.b16 %v2553, %v2505
    %v3610 = vpack.c.b16 %v2554, %v2506
    %v3611 = vpack.c.b16 %v2555, %v2507
    %v3612 = vpack.c.b16 %v2556, %v2508
    %v3613 = vpack.c.b16 %v2557, %v2509
    %v3614 = vpack.c.b16 %v2558, %v2510
    %v3615 = vpack.c.b16 %v2559, %v2511
    %v3616 = vpack.c.b16 %v2560, %v2512
    %v3617 = vpack.c.b16 %v2561, %v2513
    %v3618 = vpack.c.b16 %v2562, %v2514
    %v3619 = vpack.c.b16 %v2563, %v2515
    %v3620 = vpack.c.b16 %v2564, %v2516
    %v3621 = vpack.c.b16 %v2565, %v2517
    %v3622 = vpack.c.b16 %v2566, %v2518
    %v3623 = vpack.c.b16 %v2567, %v2519
    %v3624 = vpack.c.b16 %v2568, %v2520
    %v3625 = vpack.c.b16 %v2569, %v2521
    %v3626 = vpack.c.b16 %v2570, %v2522
    %v3627 = vpack.c.b16 %v2571, %v2523
    %v3628 = vpack.c.b16 %v2572, %v2524
    %v3629 = vpack.c.b16 %v2573, %v2525
    %v3630 = vpack.c.b16 %v2574, %v2526
    %v3631 = vpack.c.b16 %v2575, %v2527
    %v3632 = vpack.c.b16 %v2576, %v2528
    %v3633 = vpack.c.b16 %v2577, %v2529
    %v3634 = vpack.c.b16 %v2578, %v2530
    %v3635 = vpack.c.b16 %v2579, %v2531
    %v3636 = vpack.c.b16 %v2580, %v2532
    %v3637 = vpack.c.b16 %v2581, %v2533
    %v3638 = vpack.c.b16 %v2582, %v2534
    %v3639 = vpack.c.b16 %v2631, %v2583
    %v3640 = vpack.c.b16 %v2632, %v2584
    %v3641 = vpack.c.b16 %v2633, %v2585
    %v3642 = vpack.c.b16 %v2634, %v2586
    %v3643 = vpack.c.b16 %v2635, %v2587
    %v3644 = vpack.c.b16 %v2636, %v2588
    %v3645 = vpack.c.b16 %v2637, %v2589
    %v3646 = vpack.c.b16 %v2638, %v2590
    %v3647 = vpack.c.b16 %v2639, %v2591
    %v3648 = vpack.c.b16 %v2640, %v2592
    %v3649 = vpack.c.b16 %v2641, %v2593
    %v3650 = vpack.c.b16 %v2642, %v2594
    %v3651 = vpack.c.b16 %v2643, %v2595
    %v3652 = vpack.c.b16 %v2644, %v2596
    %v3653 = vpack.c.b16 %v2645, %v2597
    %v3654 = vpack.c.b16 %v2646, %v2598
    %v3655 = vpack.c.b16 %v2647, %v2599
    %v3656 = vpack.c.b16 %v2648, %v2600
    %v3657 = vpack.c.b16 %v2649, %v2601
    %v3658 = vpack.c.b16 %v2650, %v2602
    %v3659 = vpack.c.b16 %v2651, %v2603
    %v3660 = vpack.c.b16 %v2652, %v2604
    %v3661 = vpack.c.b16 %v2653, %v2605
    %v3662 = vpack.c.b16 %v2654, %v2606
    %v3663 = vpack.c.b16 %v2655, %v2607
    %v3664 = vpack.c.b16 %v2656, %v2608
    %v3665 = vpack.c.b16 %v2657, %v2609
    %v3666 = vpack.c.b16 %v2658, %v2610
    %v3667 = vpack.c.b16 %v2659, %v2611
    %v3668 = vpack.c.b16 %v2660, %v2612
    %v3669 = vpack.c.b16 %v2661, %v2613
    %v3670 = vpack.c.b16 %v2662, %v2614
    %v3671 = vpack.c.b16 %v2663, %v2615
    %v3672 = vpack.c.b16 %v2664, %v2616
    %v3673 = vpack.c.b16 %v2665, %v2617
    %v3674 = vpack.c.b16 %v2666, %v2618
    %v3675 = vpack.c.b16 %v2667, %v2619
    %v3676 = vpack.c.b16 %v2668, %v2620
    %v3677 = vpack.c.b16 %v2669, %v2621
    %v3678 = vpack.c.b16 %v2670, %v2622
    %v3679 = vpack.c.b16 %v2671, %v2623
    %v3680 = vpack.c.b16 %v2672, %v2624
    %v3681 = vpack.c.b16 %v2673, %v2625
    %v3682 = vpack.c.b16 %v2674, %v2626
    %v3683 = vpack.c.b16 %v2675, %v2627
    %v3684 = vpack.c.b16 %v2676, %v2628
    %v3685 = vpack.c.b16 %v2677, %v2629
    %v3686 = vpack.c.b16 %v2678, %v2630
    %v3687 = vpack.c.b16 %v2727, %v2679
    %v3688 = vpack.c.b16 %v2728, %v2680
    %v3689 = vpack.c.b16 %v2729, %v2681
    %v3690 = vpack.c.b16 %v2730, %v2682
    %v3691 = vpack.c.b16 %v2731, %v2683
    %v3692 = vpack.c.b16 %v2732, %v2684
    %v3693 = vpack.c.b16 %v2733, %v2685
    %v3694 = vpack.c.b16 %v2734, %v2686
    %v3695 = vpack.c.b16 %v2735, %v2687
    %v3696 = vpack.c.b16 %v2736, %v2688
    %v3697 = vpack.c.b16 %v2737, %v2689
    %v3698 = vpack.c.b16 %v2738, %v2690
    %v3699 = vpack.c.b16 %v2739, %v2691
    %v3700 = vpack.c.b16 %v2740, %v2692
    %v3701 = vpack.c.b16 %v2741, %v2693
    %v3702 = vpack.c.b16 %v2742, %v2694
    %v3703 = vpack.c.b16 %v2743, %v2695
    %v3704 = vpack.c.b16 %v2744, %v2696
    %v3705 = vpack.c.b16 %v2745, %v2697
    %v3706 = vpack.c.b16 %v2746, %v2698
    %v3707 = vpack.c.b16 %v2747, %v2699
    %v3708 = vpack.c.b16 %v2748, %v2700
    %v3709 = vpack.c.b16 %v2749, %v2701
    %v3710 = vpack.c.b16 %v2750, %v2702
    %v3711 = vpack.c.b16 %v2751, %v2703
    %v3712 = vpack.c.b16 %v2752, %v2704
    %v3713 = vpack.c.b16 %v2753, %v2705
    %v3714 = vpack.c.b16 %v2754, %v2706
    %v3715 = vpack.c.b16 %v2755, %v2707
    %v3716 = vpack.c.b16 %v2756, %v2708
    %v3717 = vpack.c.b16 %v2757, %v2709
    %v3718 = vpack.c.b16 %v2758, %v2710
    %v3719 = vpack.c.b16 %v2759, %v2711
    %v3720 = vpack.c.b16 %v2760, %v2712
    %v3721 = vpack.c.b16 %v2761, %v2713
    %v3722 = vpack.c.b16 %v2762, %v2714
    %v3723 = vpack.c.b16 %v2763, %v2715
    %v3724 = vpack.c.b16 %v2764, %v2716
    %v3725 = vpack.c.b16 %v2765, %v2717
    %v3726 = vpack.c.b16 %v2766, %v2718
    %v3727 = vpack.c.b16 %v2767, %v2719
    %v3728 = vpack.c.b16 %v2768, %v2720
    %v3729 = vpack.c.b16 %v2769, %v2721
    %v3730 = vpack.c.b16 %v2770, %v2722
    %v3731 = vpack.c.b16 %v2771, %v2723
    %v3732 = vpack.c.b16 %v2772, %v2724
    %v3733 = vpack.c.b16 %v2773, %v2725
    %v3734 = vpack.c.b16 %v2774, %v2726
    %v3735 = vpack.c.b16 %v2823, %v2775
    %v3736 = vpack.c.b16 %v2824, %v2776
    %v3737 = vpack.c.b16 %v2825, %v2777
    %v3738 = vpack.c.b16 %v2826, %v2778
    %v3739 = vpack.c.b16 %v2827, %v2779
    %v3740 = vpack.c.b16 %v2828, %v2780
    %v3741 = vpack.c.b16 %v2829, %v2781
    %v3742 = vpack.c.b16 %v2830, %v2782
    %v3743 = vpack.c.b16 %v2831, %v2783
    %v3744 = vpack.c.b16 %v2832, %v2784
    %v3745 = vpack.c.b16 %v2833, %v2785
    %v3746 = vpack.c.b16 %v2834, %v2786
    %v3747 = vpack.c.b16 %v2835, %v2787
    %v3748 = vpack.c.b16 %v2836, %v2788
    %v3749 = vpack.c.b16 %v2837, %v2789
    %v3750 = vpack.c.b16 %v2838, %v2790
    %v3751 = vpack.c.b16 %v2839, %v2791
    %v3752 = vpack.c.b16 %v2840, %v2792
    %v3753 = vpack.c.b16 %v2841, %v2793
    %v3754 = vpack.c.b16 %v2842, %v2794
    %v3755 = vpack.c.b16 %v2843, %v2795
    %v3756 = vpack.c.b16 %v2844, %v2796
    %v3757 = vpack.c.b16 %v2845, %v2797
    %v3758 = vpack.c.b16 %v2846, %v2798
    %v3759 = vpack.c.b16 %v2847, %v2799
    %v3760 = vpack.c.b16 %v2848, %v2800
    %v3761 = vpack.c.b16 %v2849, %v2801
    %v3762 = vpack.c.b16 %v2850, %v2802
    %v3763 = vpack.c.b16 %v2851, %v2803
    %v3764 = vpack.c.b16 %v2852, %v2804
    %v3765 = vpack.c.b16 %v2853, %v2805
    %v3766 = vpack.c.b16 %v2854, %v2806
    %v3767 = vpack.c.b16 %v2855, %v2807
    %v3768 = vpack.c.b16 %v2856, %v2808
    %v3769 = vpack.c.b16 %v2857, %v2809
    %v3770 = vpack.c.b16 %v2858, %v2810
    %v3771 = vpack.c.b16 %v2859, %v2811
    %v3772 = vpack.c.b16 %v2860, %v2812
    %v3773 = vpack.c.b16 %v2861, %v2813
    %v3774 = vpack.c.b16 %v2862, %v2814
    %v3775 = vpack.c.b16 %v2863, %v2815
    %v3776 = vpack.c.b16 %v2864, %v2816
    %v3777 = vpack.c.b16 %v2865, %v2817
    %v3778 = vpack.c.b16 %v2866, %v2818
    %v3779 = vpack.c.b16 %v2867, %v2819
    %v3780 = vpack.c.b16 %v2868, %v2820
    %v3781 = vpack.c.b16 %v2869, %v2821
    %v3782 = vpack.c.b16 %v2870, %v2822
    %v3783 = vpack.c.b16 %v2919, %v2871
    %v3784 = vpack.c.b16 %v2920, %v2872
    %v3785 = vpack.c.b16 %v2921, %v2873
    %v3786 = vpack.c.b16 %v2922, %v2874
    %v3787 = vpack.c.b16 %v2923, %v2875
    %v3788 = vpack.c.b16 %v2924, %v2876
    %v3789 = vpack.c.b16 %v2925, %v2877
    %v3790 = vpack.c.b16 %v2926, %v2878
    %v3791 = vpack.c.b16 %v2927, %v2879
    %v3792 = vpack.c.b16 %v2928, %v2880
    %v3793 = vpack.c.b16 %v2929, %v2881
    %v3794 = vpack.c.b16 %v2930, %v2882
    %v3795 = vpack.c.b16 %v2931, %v2883
    %v3796 = vpack.c.b16 %v2932, %v2884
    %v3797 = vpack.c.b16 %v2933, %v2885
    %v3798 = vpack.c.b16 %v2934, %v2886
    %v3799 = vpack.c.b16 %v2935, %v2887
    %v3800 = vpack.c.b16 %v2936, %v2888
    %v3801 = vpack.c.b16 %v2937, %v2889
    %v3802 = vpack.c.b16 %v2938, %v2890
    %v3803 = vpack.c.b16 %v2939, %v2891
    %v3804 = vpack.c.b16 %v2940, %v2892
    %v3805 = vpack.c.b16 %v2941, %v2893
    %v3806 = vpack.c.b16 %v2942, %v2894
    %v3807 = vpack.c.b16 %v2943, %v2895
    %v3808 = vpack.c.b16 %v2944, %v2896
    %v3809 = vpack.c.b16 %v2945, %v2897
    %v3810 = vpack.c.b16 %v2946, %v2898
    %v3811 = vpack.c.b16 %v2947, %v2899
    %v3812 = vpack.c.b16 %v2948, %v2900
    %v3813 = vpack.c.b16 %v2949, %v2901
    %v3814 = vpack.c.b16 %v2950, %v2902
    %v3815 = vpack.c.b16 %v2951, %v2903
    %v3816 = vpack.c.b16 %v2952, %v2904
    %v3817 = vpack.c.b16 %v2953, %v2905
    %v3818 = vpack.c.b16 %v2954, %v2906
    %v3819 = vpack.c.b16 %v2955, %v2907
    %v3820 = vpack.c.b16 %v2956, %v2908
    %v3821 = vpack.c.b16 %v2957, %v2909
    %v3822 = vpack.c.b16 %v2958, %v2910
    %v3823 = vpack.c.b16 %v2959, %v2911
    %v3824 = vpack.c.b16 %v2960, %v2912
    %v3825 = vpack.c.b16 %v2961, %v2913
    %v3826 = vpack.c.b16 %v2962, %v2914
    %v3827 = vpack.c.b16 %v2963, %v2915
    %v3828 = vpack.c.b16 %v2964, %v2916
    %v3829 = vpack.c.b16 %v2965, %v2917
    %v3830 = vpack.c.b16 %v2966, %v2918
    %v3831 = vpack.c.b16 %v3015, %v2967
    %v3832 = vpack.c.b16 %v3016, %v2968
    %v3833 = vpack.c.b16 %v3017, %v2969
    %v3834 = vpack.c.b16 %v3018, %v2970
    %v3835 = vpack.c.b16 %v3019, %v2971
    %v3836 = vpack.c.b16 %v3020, %v2972
    %v3837 = vpack.c.b16 %v3021, %v2973
    %v3838 = vpack.c.b16 %v3022, %v2974
    %v3839 = vpack.c.b16 %v3023, %v2975
    %v3840 = vpack.c.b16 %v3024, %v2976
    %v3841 = vpack.c.b16 %v3025, %v2977
    %v3842 = vpack.c.b16 %v3026, %v2978
    %v3843 = vpack.c.b16 %v3027, %v2979
    %v3844 = vpack.c.b16 %v3028, %v2980
    %v3845 = vpack.c.b16 %v3029, %v2981
    %v3846 = vpack.c.b16 %v3030, %v2982
    %v3847 = vpack.c.b16 %v3031, %v2983
    %v3848 = vpack.c.b16 %v3032, %v2984
    %v3849 = vpack.c.b16 %v3033, %v2985
    %v3850 = vpack.c.b16 %v3034, %v2986
    %v3851 = vpack.c.b16 %v3035, %v2987
    %v3852 = vpack.c.b16 %v3036, %v2988
    %v3853 = vpack.c.b16 %v3037, %v2989
    %v3854 = vpack.c.b16 %v3038, %v2990
    %v3855 = vpack.c.b16 %v3039, %v2991
    %v3856 = vpack.c.b16 %v3040, %v2992
    %v3857 = vpack.c.b16 %v3041, %v2993
    %v3858 = vpack.c.b16 %v3042, %v2994
    %v3859 = vpack.c.b16 %v3043, %v2995
    %v3860 = vpack.c.b16 %v3044, %v2996
    %v3861 = vpack.c.b16 %v3045, %v2997
    %v3862 = vpack.c.b16 %v3046, %v2998
    %v3863 = vpack.c.b16 %v3047, %v2999
    %v3864 = vpack.c.b16 %v3048, %v3000
    %v3865 = vpack.c.b16 %v3049, %v3001
    %v3866 = vpack.c.b16 %v3050, %v3002
    %v3867 = vpack.c.b16 %v3051, %v3003
    %v3868 = vpack.c.b16 %v3052, %v3004
    %v3869 = vpack.c.b16 %v3053, %v3005
    %v3870 = vpack.c.b16 %v3054, %v3006
    %v3871 = vpack.c.b16 %v3055, %v3007
    %v3872 = vpack.c.b16 %v3056, %v3008
    %v3873 = vpack.c.b16 %v3057, %v3009
    %v3874 = vpack.c.b16 %v3058, %v3010
    %v3875 = vpack.c.b16 %v3059, %v3011
    %v3876 = vpack.c.b16 %v3060, %v3012
    %v3877 = vpack.c.b16 %v3061, %v3013
    %v3878 = vpack.c.b16 %v3062, %v3014
    %v3879 = vpack.c.b16 %v3111, %v3063
    %v3880 = vpack.c.b16 %v3112, %v3064
    %v3881 = vpack.c.b16 %v3113, %v3065
    %v3882 = vpack.c.b16 %v3114, %v3066
    %v3883 = vpack.c.b16 %v3115, %v3067
    %v3884 = vpack.c.b16 %v3116, %v3068
    %v3885 = vpack.c.b16 %v3117, %v3069
    %v3886 = vpack.c.b16 %v3118, %v3070
    %v3887 = vpack.c.b16 %v3119, %v3071
    %v3888 = vpack.c.b16 %v3120, %v3072
    %v3889 = vpack.c.b16 %v3121, %v3073
    %v3890 = vpack.c.b16 %v3122, %v3074
    %v3891 = vpack.c.b16 %v3123, %v3075
    %v3892 = vpack.c.b16 %v3124, %v3076
    %v3893 = vpack.c.b16 %v3125, %v3077
    %v3894 = vpack.c.b16 %v3126, %v3078
    %v3895 = vpack.c.b16 %v3127, %v3079
    %v3896 = vpack.c.b16 %v3128, %v3080
    %v3897 = vpack.c.b16 %v3129, %v3081
    %v3898 = vpack.c.b16 %v3130, %v3082
    %v3899 = vpack.c.b16 %v3131, %v3083
    %v3900 = vpack.c.b16 %v3132, %v3084
    %v3901 = vpack.c.b16 %v3133, %v3085
    %v3902 = vpack.c.b16 %v3134, %v3086
    %v3903 = vpack.c.b16 %v3135, %v3087
    %v3904 = vpack.c.b16 %v3136, %v3088
    %v3905 = vpack.c.b16 %v3137, %v3089
    %v3906 = vpack.c.b16 %v3138, %v3090
    %v3907 = vpack.c.b16 %v3139, %v3091
    %v3908 = vpack.c.b16 %v3140, %v3092
    %v3909 = vpack.c.b16 %v3141, %v3093
    %v3910 = vpack.c.b16 %v3142, %v3094
    %v3911 = vpack.c.b16 %v3143, %v3095
    %v3912 = vpack.c.b16 %v3144, %v3096
    %v3913 = vpack.c.b16 %v3145, %v3097
    %v3914 = vpack.c.b16 %v3146, %v3098
    %v3915 = vpack.c.b16 %v3147, %v3099
    %v3916 = vpack.c.b16 %v3148, %v3100
    %v3917 = vpack.c.b16 %v3149, %v3101
    %v3918 = vpack.c.b16 %v3150, %v3102
    %v3919 = vpack.c.b16 %v3151, %v3103
    %v3920 = vpack.c.b16 %v3152, %v3104
    %v3921 = vpack.c.b16 %v3153, %v3105
    %v3922 = vpack.c.b16 %v3154, %v3106
    %v3923 = vpack.c.b16 %v3155, %v3107
    %v3924 = vpack.c.b16 %v3156, %v3108
    %v3925 = vpack.c.b16 %v3157, %v3109
    %v3926 = vpack.c.b16 %v3158, %v3110
    %4695 = vmatpush.bf16.msra.mxu0 %v3495
    %4696 = vmatpush.bf16.msra.mxu0 %v3447
    %4697 = vmatpush.bf16.msra.mxu0 %v3399
    %4698 = vmatpush.bf16.msra.mxu0 %v3351
    %4699 = vmatpush.bf16.msra.mxu0 %v3303
    %4700 = vmatpush.bf16.msra.mxu0 %v3255
    %4701 = vmatpush.bf16.msra.mxu0 %v3207
    %4702 = vmatpush.bf16.msra.mxu0 %v3159
    %4703 = vmatmul.bf16.gmra.mxu0 %v85
    %v4704 = vpop.f32.mrf.mxu0
    %v4705 = vadd.f32 0.0, %v4704
    %v4706 = vpop.f32.mrf.mxu0
    %v4707 = vadd.f32 0.0, %v4706
    %4708 = vdwg.mxu0
    %4709 = vmatpush.bf16.msra.mxu0 %v3879
    %4710 = vmatpush.bf16.msra.mxu0 %v3831
    %4711 = vmatpush.bf16.msra.mxu0 %v3783
    %4712 = vmatpush.bf16.msra.mxu0 %v3735
    %4713 = vmatpush.bf16.msra.mxu0 %v3687
    %4714 = vmatpush.bf16.msra.mxu0 %v3639
    %4715 = vmatpush.bf16.msra.mxu0 %v3591
    %4716 = vmatpush.bf16.msra.mxu0 %v3543
    %4717 = vmatmul.bf16.gmra.mxu0 %v86
    %v4718 = vpop.f32.mrf.mxu0
    %v4719 = vadd.f32 %v4705, %v4718
    %v4720 = vpop.f32.mrf.mxu0
    %v4721 = vadd.f32 %v4707, %v4720
    %4722 = vdwg.mxu0
    %4723 = vmatpush.bf16.msra.mxu0 %v3496
    %4724 = vmatpush.bf16.msra.mxu0 %v3448
    %4725 = vmatpush.bf16.msra.mxu0 %v3400
    %4726 = vmatpush.bf16.msra.mxu0 %v3352
    %4727 = vmatpush.bf16.msra.mxu0 %v3304
    %4728 = vmatpush.bf16.msra.mxu0 %v3256
    %4729 = vmatpush.bf16.msra.mxu0 %v3208
    %4730 = vmatpush.bf16.msra.mxu0 %v3160
    %4731 = vmatmul.bf16.gmra.mxu0 %v85
    %v4732 = vpop.f32.mrf.mxu0
    %v4733 = vadd.f32 0.0, %v4732
    %v4734 = vpop.f32.mrf.mxu0
    %v4735 = vadd.f32 0.0, %v4734
    %4736 = vdwg.mxu0
    %4737 = vmatpush.bf16.msra.mxu0 %v3880
    %4738 = vmatpush.bf16.msra.mxu0 %v3832
    %4739 = vmatpush.bf16.msra.mxu0 %v3784
    %4740 = vmatpush.bf16.msra.mxu0 %v3736
    %4741 = vmatpush.bf16.msra.mxu0 %v3688
    %4742 = vmatpush.bf16.msra.mxu0 %v3640
    %4743 = vmatpush.bf16.msra.mxu0 %v3592
    %4744 = vmatpush.bf16.msra.mxu0 %v3544
    %4745 = vmatmul.bf16.gmra.mxu0 %v86
    %v4746 = vpop.f32.mrf.mxu0
    %v4747 = vadd.f32 %v4733, %v4746
    %v4748 = vpop.f32.mrf.mxu0
    %v4749 = vadd.f32 %v4735, %v4748
    %4750 = vdwg.mxu0
    %4751 = vmatpush.bf16.msra.mxu0 %v3497
    %4752 = vmatpush.bf16.msra.mxu0 %v3449
    %4753 = vmatpush.bf16.msra.mxu0 %v3401
    %4754 = vmatpush.bf16.msra.mxu0 %v3353
    %4755 = vmatpush.bf16.msra.mxu0 %v3305
    %4756 = vmatpush.bf16.msra.mxu0 %v3257
    %4757 = vmatpush.bf16.msra.mxu0 %v3209
    %4758 = vmatpush.bf16.msra.mxu0 %v3161
    %4759 = vmatmul.bf16.gmra.mxu0 %v85
    %v4760 = vpop.f32.mrf.mxu0
    %v4761 = vadd.f32 0.0, %v4760
    %v4762 = vpop.f32.mrf.mxu0
    %v4763 = vadd.f32 0.0, %v4762
    %4764 = vdwg.mxu0
    %4765 = vmatpush.bf16.msra.mxu0 %v3881
    %4766 = vmatpush.bf16.msra.mxu0 %v3833
    %4767 = vmatpush.bf16.msra.mxu0 %v3785
    %4768 = vmatpush.bf16.msra.mxu0 %v3737
    %4769 = vmatpush.bf16.msra.mxu0 %v3689
    %4770 = vmatpush.bf16.msra.mxu0 %v3641
    %4771 = vmatpush.bf16.msra.mxu0 %v3593
    %4772 = vmatpush.bf16.msra.mxu0 %v3545
    %4773 = vmatmul.bf16.gmra.mxu0 %v86
    %v4774 = vpop.f32.mrf.mxu0
    %v4775 = vadd.f32 %v4761, %v4774
    %v4776 = vpop.f32.mrf.mxu0
    %v4777 = vadd.f32 %v4763, %v4776
    %4778 = vdwg.mxu0
    %4779 = vmatpush.bf16.msra.mxu0 %v3498
    %4780 = vmatpush.bf16.msra.mxu0 %v3450
    %4781 = vmatpush.bf16.msra.mxu0 %v3402
    %4782 = vmatpush.bf16.msra.mxu0 %v3354
    %4783 = vmatpush.bf16.msra.mxu0 %v3306
    %4784 = vmatpush.bf16.msra.mxu0 %v3258
    %4785 = vmatpush.bf16.msra.mxu0 %v3210
    %4786 = vmatpush.bf16.msra.mxu0 %v3162
    %4787 = vmatmul.bf16.gmra.mxu0 %v85
    %v4788 = vpop.f32.mrf.mxu0
    %v4789 = vadd.f32 0.0, %v4788
    %v4790 = vpop.f32.mrf.mxu0
    %v4791 = vadd.f32 0.0, %v4790
    %4792 = vdwg.mxu0
    %4793 = vmatpush.bf16.msra.mxu0 %v3882
    %4794 = vmatpush.bf16.msra.mxu0 %v3834
    %4795 = vmatpush.bf16.msra.mxu0 %v3786
    %4796 = vmatpush.bf16.msra.mxu0 %v3738
    %4797 = vmatpush.bf16.msra.mxu0 %v3690
    %4798 = vmatpush.bf16.msra.mxu0 %v3642
    %4799 = vmatpush.bf16.msra.mxu0 %v3594
    %4800 = vmatpush.bf16.msra.mxu0 %v3546
    %4801 = vmatmul.bf16.gmra.mxu0 %v86
    %v4802 = vpop.f32.mrf.mxu0
    %v4803 = vadd.f32 %v4789, %v4802
    %v4804 = vpop.f32.mrf.mxu0
    %v4805 = vadd.f32 %v4791, %v4804
    %4806 = vdwg.mxu0
    %4807 = vmatpush.bf16.msra.mxu0 %v3499
    %4808 = vmatpush.bf16.msra.mxu0 %v3451
    %4809 = vmatpush.bf16.msra.mxu0 %v3403
    %4810 = vmatpush.bf16.msra.mxu0 %v3355
    %4811 = vmatpush.bf16.msra.mxu0 %v3307
    %4812 = vmatpush.bf16.msra.mxu0 %v3259
    %4813 = vmatpush.bf16.msra.mxu0 %v3211
    %4814 = vmatpush.bf16.msra.mxu0 %v3163
    %4815 = vmatmul.bf16.gmra.mxu0 %v85
    %v4816 = vpop.f32.mrf.mxu0
    %v4817 = vadd.f32 0.0, %v4816
    %v4818 = vpop.f32.mrf.mxu0
    %v4819 = vadd.f32 0.0, %v4818
    %4820 = vdwg.mxu0
    %4821 = vmatpush.bf16.msra.mxu0 %v3883
    %4822 = vmatpush.bf16.msra.mxu0 %v3835
    %4823 = vmatpush.bf16.msra.mxu0 %v3787
    %4824 = vmatpush.bf16.msra.mxu0 %v3739
    %4825 = vmatpush.bf16.msra.mxu0 %v3691
    %4826 = vmatpush.bf16.msra.mxu0 %v3643
    %4827 = vmatpush.bf16.msra.mxu0 %v3595
    %4828 = vmatpush.bf16.msra.mxu0 %v3547
    %4829 = vmatmul.bf16.gmra.mxu0 %v86
    %v4830 = vpop.f32.mrf.mxu0
    %v4831 = vadd.f32 %v4817, %v4830
    %v4832 = vpop.f32.mrf.mxu0
    %v4833 = vadd.f32 %v4819, %v4832
    %4834 = vdwg.mxu0
    %4835 = vmatpush.bf16.msra.mxu0 %v3500
    %4836 = vmatpush.bf16.msra.mxu0 %v3452
    %4837 = vmatpush.bf16.msra.mxu0 %v3404
    %4838 = vmatpush.bf16.msra.mxu0 %v3356
    %4839 = vmatpush.bf16.msra.mxu0 %v3308
    %4840 = vmatpush.bf16.msra.mxu0 %v3260
    %4841 = vmatpush.bf16.msra.mxu0 %v3212
    %4842 = vmatpush.bf16.msra.mxu0 %v3164
    %4843 = vmatmul.bf16.gmra.mxu0 %v85
    %v4844 = vpop.f32.mrf.mxu0
    %v4845 = vadd.f32 0.0, %v4844
    %v4846 = vpop.f32.mrf.mxu0
    %v4847 = vadd.f32 0.0, %v4846
    %4848 = vdwg.mxu0
    %4849 = vmatpush.bf16.msra.mxu0 %v3884
    %4850 = vmatpush.bf16.msra.mxu0 %v3836
    %4851 = vmatpush.bf16.msra.mxu0 %v3788
    %4852 = vmatpush.bf16.msra.mxu0 %v3740
    %4853 = vmatpush.bf16.msra.mxu0 %v3692
    %4854 = vmatpush.bf16.msra.mxu0 %v3644
    %4855 = vmatpush.bf16.msra.mxu0 %v3596
    %4856 = vmatpush.bf16.msra.mxu0 %v3548
    %4857 = vmatmul.bf16.gmra.mxu0 %v86
    %v4858 = vpop.f32.mrf.mxu0
    %v4859 = vadd.f32 %v4845, %v4858
    %v4860 = vpop.f32.mrf.mxu0
    %v4861 = vadd.f32 %v4847, %v4860
    %4862 = vdwg.mxu0
    %4863 = vmatpush.bf16.msra.mxu0 %v3501
    %4864 = vmatpush.bf16.msra.mxu0 %v3453
    %4865 = vmatpush.bf16.msra.mxu0 %v3405
    %4866 = vmatpush.bf16.msra.mxu0 %v3357
    %4867 = vmatpush.bf16.msra.mxu0 %v3309
    %4868 = vmatpush.bf16.msra.mxu0 %v3261
    %4869 = vmatpush.bf16.msra.mxu0 %v3213
    %4870 = vmatpush.bf16.msra.mxu0 %v3165
    %4871 = vmatmul.bf16.gmra.mxu0 %v85
    %v4872 = vpop.f32.mrf.mxu0
    %v4873 = vadd.f32 0.0, %v4872
    %v4874 = vpop.f32.mrf.mxu0
    %v4875 = vadd.f32 0.0, %v4874
    %4876 = vdwg.mxu0
    %4877 = vmatpush.bf16.msra.mxu0 %v3885
    %4878 = vmatpush.bf16.msra.mxu0 %v3837
    %4879 = vmatpush.bf16.msra.mxu0 %v3789
    %4880 = vmatpush.bf16.msra.mxu0 %v3741
    %4881 = vmatpush.bf16.msra.mxu0 %v3693
    %4882 = vmatpush.bf16.msra.mxu0 %v3645
    %4883 = vmatpush.bf16.msra.mxu0 %v3597
    %4884 = vmatpush.bf16.msra.mxu0 %v3549
    %4885 = vmatmul.bf16.gmra.mxu0 %v86
    %v4886 = vpop.f32.mrf.mxu0
    %v4887 = vadd.f32 %v4873, %v4886
    %v4888 = vpop.f32.mrf.mxu0
    %v4889 = vadd.f32 %v4875, %v4888
    %4890 = vdwg.mxu0
    %4891 = vmatpush.bf16.msra.mxu0 %v3502
    %4892 = vmatpush.bf16.msra.mxu0 %v3454
    %4893 = vmatpush.bf16.msra.mxu0 %v3406
    %4894 = vmatpush.bf16.msra.mxu0 %v3358
    %4895 = vmatpush.bf16.msra.mxu0 %v3310
    %4896 = vmatpush.bf16.msra.mxu0 %v3262
    %4897 = vmatpush.bf16.msra.mxu0 %v3214
    %4898 = vmatpush.bf16.msra.mxu0 %v3166
    %4899 = vmatmul.bf16.gmra.mxu0 %v85
    %v4900 = vpop.f32.mrf.mxu0
    %v4901 = vadd.f32 0.0, %v4900
    %v4902 = vpop.f32.mrf.mxu0
    %v4903 = vadd.f32 0.0, %v4902
    %4904 = vdwg.mxu0
    %4905 = vmatpush.bf16.msra.mxu0 %v3886
    %4906 = vmatpush.bf16.msra.mxu0 %v3838
    %4907 = vmatpush.bf16.msra.mxu0 %v3790
    %4908 = vmatpush.bf16.msra.mxu0 %v3742
    %4909 = vmatpush.bf16.msra.mxu0 %v3694
    %4910 = vmatpush.bf16.msra.mxu0 %v3646
    %4911 = vmatpush.bf16.msra.mxu0 %v3598
    %4912 = vmatpush.bf16.msra.mxu0 %v3550
    %4913 = vmatmul.bf16.gmra.mxu0 %v86
    %v4914 = vpop.f32.mrf.mxu0
    %v4915 = vadd.f32 %v4901, %v4914
    %v4916 = vpop.f32.mrf.mxu0
    %v4917 = vadd.f32 %v4903, %v4916
    %4918 = vdwg.mxu0
    %4919 = vmatpush.bf16.msra.mxu0 %v3503
    %4920 = vmatpush.bf16.msra.mxu0 %v3455
    %4921 = vmatpush.bf16.msra.mxu0 %v3407
    %4922 = vmatpush.bf16.msra.mxu0 %v3359
    %4923 = vmatpush.bf16.msra.mxu0 %v3311
    %4924 = vmatpush.bf16.msra.mxu0 %v3263
    %4925 = vmatpush.bf16.msra.mxu0 %v3215
    %4926 = vmatpush.bf16.msra.mxu0 %v3167
    %4927 = vmatmul.bf16.gmra.mxu0 %v85
    %v4928 = vpop.f32.mrf.mxu0
    %v4929 = vadd.f32 0.0, %v4928
    %v4930 = vpop.f32.mrf.mxu0
    %v4931 = vadd.f32 0.0, %v4930
    %4932 = vdwg.mxu0
    %4933 = vmatpush.bf16.msra.mxu0 %v3887
    %4934 = vmatpush.bf16.msra.mxu0 %v3839
    %4935 = vmatpush.bf16.msra.mxu0 %v3791
    %4936 = vmatpush.bf16.msra.mxu0 %v3743
    %4937 = vmatpush.bf16.msra.mxu0 %v3695
    %4938 = vmatpush.bf16.msra.mxu0 %v3647
    %4939 = vmatpush.bf16.msra.mxu0 %v3599
    %4940 = vmatpush.bf16.msra.mxu0 %v3551
    %4941 = vmatmul.bf16.gmra.mxu0 %v86
    %v4942 = vpop.f32.mrf.mxu0
    %v4943 = vadd.f32 %v4929, %v4942
    %v4944 = vpop.f32.mrf.mxu0
    %v4945 = vadd.f32 %v4931, %v4944
    %4946 = vdwg.mxu0
    %4947 = vmatpush.bf16.msra.mxu0 %v3504
    %4948 = vmatpush.bf16.msra.mxu0 %v3456
    %4949 = vmatpush.bf16.msra.mxu0 %v3408
    %4950 = vmatpush.bf16.msra.mxu0 %v3360
    %4951 = vmatpush.bf16.msra.mxu0 %v3312
    %4952 = vmatpush.bf16.msra.mxu0 %v3264
    %4953 = vmatpush.bf16.msra.mxu0 %v3216
    %4954 = vmatpush.bf16.msra.mxu0 %v3168
    %4955 = vmatmul.bf16.gmra.mxu0 %v85
    %v4956 = vpop.f32.mrf.mxu0
    %v4957 = vadd.f32 0.0, %v4956
    %v4958 = vpop.f32.mrf.mxu0
    %v4959 = vadd.f32 0.0, %v4958
    %4960 = vdwg.mxu0
    %4961 = vmatpush.bf16.msra.mxu0 %v3888
    %4962 = vmatpush.bf16.msra.mxu0 %v3840
    %4963 = vmatpush.bf16.msra.mxu0 %v3792
    %4964 = vmatpush.bf16.msra.mxu0 %v3744
    %4965 = vmatpush.bf16.msra.mxu0 %v3696
    %4966 = vmatpush.bf16.msra.mxu0 %v3648
    %4967 = vmatpush.bf16.msra.mxu0 %v3600
    %4968 = vmatpush.bf16.msra.mxu0 %v3552
    %4969 = vmatmul.bf16.gmra.mxu0 %v86
    %v4970 = vpop.f32.mrf.mxu0
    %v4971 = vadd.f32 %v4957, %v4970
    %v4972 = vpop.f32.mrf.mxu0
    %v4973 = vadd.f32 %v4959, %v4972
    %4974 = vdwg.mxu0
    %4975 = vmatpush.bf16.msra.mxu0 %v3505
    %4976 = vmatpush.bf16.msra.mxu0 %v3457
    %4977 = vmatpush.bf16.msra.mxu0 %v3409
    %4978 = vmatpush.bf16.msra.mxu0 %v3361
    %4979 = vmatpush.bf16.msra.mxu0 %v3313
    %4980 = vmatpush.bf16.msra.mxu0 %v3265
    %4981 = vmatpush.bf16.msra.mxu0 %v3217
    %4982 = vmatpush.bf16.msra.mxu0 %v3169
    %4983 = vmatmul.bf16.gmra.mxu0 %v85
    %v4984 = vpop.f32.mrf.mxu0
    %v4985 = vadd.f32 0.0, %v4984
    %v4986 = vpop.f32.mrf.mxu0
    %v4987 = vadd.f32 0.0, %v4986
    %4988 = vdwg.mxu0
    %4989 = vmatpush.bf16.msra.mxu0 %v3889
    %4990 = vmatpush.bf16.msra.mxu0 %v3841
    %4991 = vmatpush.bf16.msra.mxu0 %v3793
    %4992 = vmatpush.bf16.msra.mxu0 %v3745
    %4993 = vmatpush.bf16.msra.mxu0 %v3697
    %4994 = vmatpush.bf16.msra.mxu0 %v3649
    %4995 = vmatpush.bf16.msra.mxu0 %v3601
    %4996 = vmatpush.bf16.msra.mxu0 %v3553
    %4997 = vmatmul.bf16.gmra.mxu0 %v86
    %v4998 = vpop.f32.mrf.mxu0
    %v4999 = vadd.f32 %v4985, %v4998
    %v5000 = vpop.f32.mrf.mxu0
    %v5001 = vadd.f32 %v4987, %v5000
    %5002 = vdwg.mxu0
    %5003 = vmatpush.bf16.msra.mxu0 %v3506
    %5004 = vmatpush.bf16.msra.mxu0 %v3458
    %5005 = vmatpush.bf16.msra.mxu0 %v3410
    %5006 = vmatpush.bf16.msra.mxu0 %v3362
    %5007 = vmatpush.bf16.msra.mxu0 %v3314
    %5008 = vmatpush.bf16.msra.mxu0 %v3266
    %5009 = vmatpush.bf16.msra.mxu0 %v3218
    %5010 = vmatpush.bf16.msra.mxu0 %v3170
    %5011 = vmatmul.bf16.gmra.mxu0 %v85
    %v5012 = vpop.f32.mrf.mxu0
    %v5013 = vadd.f32 0.0, %v5012
    %v5014 = vpop.f32.mrf.mxu0
    %v5015 = vadd.f32 0.0, %v5014
    %5016 = vdwg.mxu0
    %5017 = vmatpush.bf16.msra.mxu0 %v3890
    %5018 = vmatpush.bf16.msra.mxu0 %v3842
    %5019 = vmatpush.bf16.msra.mxu0 %v3794
    %5020 = vmatpush.bf16.msra.mxu0 %v3746
    %5021 = vmatpush.bf16.msra.mxu0 %v3698
    %5022 = vmatpush.bf16.msra.mxu0 %v3650
    %5023 = vmatpush.bf16.msra.mxu0 %v3602
    %5024 = vmatpush.bf16.msra.mxu0 %v3554
    %5025 = vmatmul.bf16.gmra.mxu0 %v86
    %v5026 = vpop.f32.mrf.mxu0
    %v5027 = vadd.f32 %v5013, %v5026
    %v5028 = vpop.f32.mrf.mxu0
    %v5029 = vadd.f32 %v5015, %v5028
    %5030 = vdwg.mxu0
    %5031 = vmatpush.bf16.msra.mxu0 %v3507
    %5032 = vmatpush.bf16.msra.mxu0 %v3459
    %5033 = vmatpush.bf16.msra.mxu0 %v3411
    %5034 = vmatpush.bf16.msra.mxu0 %v3363
    %5035 = vmatpush.bf16.msra.mxu0 %v3315
    %5036 = vmatpush.bf16.msra.mxu0 %v3267
    %5037 = vmatpush.bf16.msra.mxu0 %v3219
    %5038 = vmatpush.bf16.msra.mxu0 %v3171
    %5039 = vmatmul.bf16.gmra.mxu0 %v85
    %v5040 = vpop.f32.mrf.mxu0
    %v5041 = vadd.f32 0.0, %v5040
    %v5042 = vpop.f32.mrf.mxu0
    %v5043 = vadd.f32 0.0, %v5042
    %5044 = vdwg.mxu0
    %5045 = vmatpush.bf16.msra.mxu0 %v3891
    %5046 = vmatpush.bf16.msra.mxu0 %v3843
    %5047 = vmatpush.bf16.msra.mxu0 %v3795
    %5048 = vmatpush.bf16.msra.mxu0 %v3747
    %5049 = vmatpush.bf16.msra.mxu0 %v3699
    %5050 = vmatpush.bf16.msra.mxu0 %v3651
    %5051 = vmatpush.bf16.msra.mxu0 %v3603
    %5052 = vmatpush.bf16.msra.mxu0 %v3555
    %5053 = vmatmul.bf16.gmra.mxu0 %v86
    %v5054 = vpop.f32.mrf.mxu0
    %v5055 = vadd.f32 %v5041, %v5054
    %v5056 = vpop.f32.mrf.mxu0
    %v5057 = vadd.f32 %v5043, %v5056
    %5058 = vdwg.mxu0
    %5059 = vmatpush.bf16.msra.mxu0 %v3508
    %5060 = vmatpush.bf16.msra.mxu0 %v3460
    %5061 = vmatpush.bf16.msra.mxu0 %v3412
    %5062 = vmatpush.bf16.msra.mxu0 %v3364
    %5063 = vmatpush.bf16.msra.mxu0 %v3316
    %5064 = vmatpush.bf16.msra.mxu0 %v3268
    %5065 = vmatpush.bf16.msra.mxu0 %v3220
    %5066 = vmatpush.bf16.msra.mxu0 %v3172
    %5067 = vmatmul.bf16.gmra.mxu0 %v85
    %v5068 = vpop.f32.mrf.mxu0
    %v5069 = vadd.f32 0.0, %v5068
    %v5070 = vpop.f32.mrf.mxu0
    %v5071 = vadd.f32 0.0, %v5070
    %5072 = vdwg.mxu0
    %5073 = vmatpush.bf16.msra.mxu0 %v3892
    %5074 = vmatpush.bf16.msra.mxu0 %v3844
    %5075 = vmatpush.bf16.msra.mxu0 %v3796
    %5076 = vmatpush.bf16.msra.mxu0 %v3748
    %5077 = vmatpush.bf16.msra.mxu0 %v3700
    %5078 = vmatpush.bf16.msra.mxu0 %v3652
    %5079 = vmatpush.bf16.msra.mxu0 %v3604
    %5080 = vmatpush.bf16.msra.mxu0 %v3556
    %5081 = vmatmul.bf16.gmra.mxu0 %v86
    %v5082 = vpop.f32.mrf.mxu0
    %v5083 = vadd.f32 %v5069, %v5082
    %v5084 = vpop.f32.mrf.mxu0
    %v5085 = vadd.f32 %v5071, %v5084
    %5086 = vdwg.mxu0
    %5087 = vmatpush.bf16.msra.mxu0 %v3509
    %5088 = vmatpush.bf16.msra.mxu0 %v3461
    %5089 = vmatpush.bf16.msra.mxu0 %v3413
    %5090 = vmatpush.bf16.msra.mxu0 %v3365
    %5091 = vmatpush.bf16.msra.mxu0 %v3317
    %5092 = vmatpush.bf16.msra.mxu0 %v3269
    %5093 = vmatpush.bf16.msra.mxu0 %v3221
    %5094 = vmatpush.bf16.msra.mxu0 %v3173
    %5095 = vmatmul.bf16.gmra.mxu0 %v85
    %v5096 = vpop.f32.mrf.mxu0
    %v5097 = vadd.f32 0.0, %v5096
    %v5098 = vpop.f32.mrf.mxu0
    %v5099 = vadd.f32 0.0, %v5098
    %5100 = vdwg.mxu0
    %5101 = vmatpush.bf16.msra.mxu0 %v3893
    %5102 = vmatpush.bf16.msra.mxu0 %v3845
    %5103 = vmatpush.bf16.msra.mxu0 %v3797
    %5104 = vmatpush.bf16.msra.mxu0 %v3749
    %5105 = vmatpush.bf16.msra.mxu0 %v3701
    %5106 = vmatpush.bf16.msra.mxu0 %v3653
    %5107 = vmatpush.bf16.msra.mxu0 %v3605
    %5108 = vmatpush.bf16.msra.mxu0 %v3557
    %5109 = vmatmul.bf16.gmra.mxu0 %v86
    %v5110 = vpop.f32.mrf.mxu0
    %v5111 = vadd.f32 %v5097, %v5110
    %v5112 = vpop.f32.mrf.mxu0
    %v5113 = vadd.f32 %v5099, %v5112
    %5114 = vdwg.mxu0
    %5115 = vmatpush.bf16.msra.mxu0 %v3510
    %5116 = vmatpush.bf16.msra.mxu0 %v3462
    %5117 = vmatpush.bf16.msra.mxu0 %v3414
    %5118 = vmatpush.bf16.msra.mxu0 %v3366
    %5119 = vmatpush.bf16.msra.mxu0 %v3318
    %5120 = vmatpush.bf16.msra.mxu0 %v3270
    %5121 = vmatpush.bf16.msra.mxu0 %v3222
    %5122 = vmatpush.bf16.msra.mxu0 %v3174
    %5123 = vmatmul.bf16.gmra.mxu0 %v85
    %v5124 = vpop.f32.mrf.mxu0
    %v5125 = vadd.f32 0.0, %v5124
    %v5126 = vpop.f32.mrf.mxu0
    %v5127 = vadd.f32 0.0, %v5126
    %5128 = vdwg.mxu0
    %5129 = vmatpush.bf16.msra.mxu0 %v3894
    %5130 = vmatpush.bf16.msra.mxu0 %v3846
    %5131 = vmatpush.bf16.msra.mxu0 %v3798
    %5132 = vmatpush.bf16.msra.mxu0 %v3750
    %5133 = vmatpush.bf16.msra.mxu0 %v3702
    %5134 = vmatpush.bf16.msra.mxu0 %v3654
    %5135 = vmatpush.bf16.msra.mxu0 %v3606
    %5136 = vmatpush.bf16.msra.mxu0 %v3558
    %5137 = vmatmul.bf16.gmra.mxu0 %v86
    %v5138 = vpop.f32.mrf.mxu0
    %v5139 = vadd.f32 %v5125, %v5138
    %v5140 = vpop.f32.mrf.mxu0
    %v5141 = vadd.f32 %v5127, %v5140
    %5142 = vdwg.mxu0
    %5143 = vmatpush.bf16.msra.mxu0 %v3511
    %5144 = vmatpush.bf16.msra.mxu0 %v3463
    %5145 = vmatpush.bf16.msra.mxu0 %v3415
    %5146 = vmatpush.bf16.msra.mxu0 %v3367
    %5147 = vmatpush.bf16.msra.mxu0 %v3319
    %5148 = vmatpush.bf16.msra.mxu0 %v3271
    %5149 = vmatpush.bf16.msra.mxu0 %v3223
    %5150 = vmatpush.bf16.msra.mxu0 %v3175
    %5151 = vmatmul.bf16.gmra.mxu0 %v85
    %v5152 = vpop.f32.mrf.mxu0
    %v5153 = vadd.f32 0.0, %v5152
    %v5154 = vpop.f32.mrf.mxu0
    %v5155 = vadd.f32 0.0, %v5154
    %5156 = vdwg.mxu0
    %5157 = vmatpush.bf16.msra.mxu0 %v3895
    %5158 = vmatpush.bf16.msra.mxu0 %v3847
    %5159 = vmatpush.bf16.msra.mxu0 %v3799
    %5160 = vmatpush.bf16.msra.mxu0 %v3751
    %5161 = vmatpush.bf16.msra.mxu0 %v3703
    %5162 = vmatpush.bf16.msra.mxu0 %v3655
    %5163 = vmatpush.bf16.msra.mxu0 %v3607
    %5164 = vmatpush.bf16.msra.mxu0 %v3559
    %5165 = vmatmul.bf16.gmra.mxu0 %v86
    %v5166 = vpop.f32.mrf.mxu0
    %v5167 = vadd.f32 %v5153, %v5166
    %v5168 = vpop.f32.mrf.mxu0
    %v5169 = vadd.f32 %v5155, %v5168
    %5170 = vdwg.mxu0
    %5171 = vmatpush.bf16.msra.mxu0 %v3512
    %5172 = vmatpush.bf16.msra.mxu0 %v3464
    %5173 = vmatpush.bf16.msra.mxu0 %v3416
    %5174 = vmatpush.bf16.msra.mxu0 %v3368
    %5175 = vmatpush.bf16.msra.mxu0 %v3320
    %5176 = vmatpush.bf16.msra.mxu0 %v3272
    %5177 = vmatpush.bf16.msra.mxu0 %v3224
    %5178 = vmatpush.bf16.msra.mxu0 %v3176
    %5179 = vmatmul.bf16.gmra.mxu0 %v85
    %v5180 = vpop.f32.mrf.mxu0
    %v5181 = vadd.f32 0.0, %v5180
    %v5182 = vpop.f32.mrf.mxu0
    %v5183 = vadd.f32 0.0, %v5182
    %5184 = vdwg.mxu0
    %5185 = vmatpush.bf16.msra.mxu0 %v3896
    %5186 = vmatpush.bf16.msra.mxu0 %v3848
    %5187 = vmatpush.bf16.msra.mxu0 %v3800
    %5188 = vmatpush.bf16.msra.mxu0 %v3752
    %5189 = vmatpush.bf16.msra.mxu0 %v3704
    %5190 = vmatpush.bf16.msra.mxu0 %v3656
    %5191 = vmatpush.bf16.msra.mxu0 %v3608
    %5192 = vmatpush.bf16.msra.mxu0 %v3560
    %5193 = vmatmul.bf16.gmra.mxu0 %v86
    %v5194 = vpop.f32.mrf.mxu0
    %v5195 = vadd.f32 %v5181, %v5194
    %v5196 = vpop.f32.mrf.mxu0
    %v5197 = vadd.f32 %v5183, %v5196
    %5198 = vdwg.mxu0
    %5199 = vmatpush.bf16.msra.mxu0 %v3513
    %5200 = vmatpush.bf16.msra.mxu0 %v3465
    %5201 = vmatpush.bf16.msra.mxu0 %v3417
    %5202 = vmatpush.bf16.msra.mxu0 %v3369
    %5203 = vmatpush.bf16.msra.mxu0 %v3321
    %5204 = vmatpush.bf16.msra.mxu0 %v3273
    %5205 = vmatpush.bf16.msra.mxu0 %v3225
    %5206 = vmatpush.bf16.msra.mxu0 %v3177
    %5207 = vmatmul.bf16.gmra.mxu0 %v85
    %v5208 = vpop.f32.mrf.mxu0
    %v5209 = vadd.f32 0.0, %v5208
    %v5210 = vpop.f32.mrf.mxu0
    %v5211 = vadd.f32 0.0, %v5210
    %5212 = vdwg.mxu0
    %5213 = vmatpush.bf16.msra.mxu0 %v3897
    %5214 = vmatpush.bf16.msra.mxu0 %v3849
    %5215 = vmatpush.bf16.msra.mxu0 %v3801
    %5216 = vmatpush.bf16.msra.mxu0 %v3753
    %5217 = vmatpush.bf16.msra.mxu0 %v3705
    %5218 = vmatpush.bf16.msra.mxu0 %v3657
    %5219 = vmatpush.bf16.msra.mxu0 %v3609
    %5220 = vmatpush.bf16.msra.mxu0 %v3561
    %5221 = vmatmul.bf16.gmra.mxu0 %v86
    %v5222 = vpop.f32.mrf.mxu0
    %v5223 = vadd.f32 %v5209, %v5222
    %v5224 = vpop.f32.mrf.mxu0
    %v5225 = vadd.f32 %v5211, %v5224
    %5226 = vdwg.mxu0
    %5227 = vmatpush.bf16.msra.mxu0 %v3514
    %5228 = vmatpush.bf16.msra.mxu0 %v3466
    %5229 = vmatpush.bf16.msra.mxu0 %v3418
    %5230 = vmatpush.bf16.msra.mxu0 %v3370
    %5231 = vmatpush.bf16.msra.mxu0 %v3322
    %5232 = vmatpush.bf16.msra.mxu0 %v3274
    %5233 = vmatpush.bf16.msra.mxu0 %v3226
    %5234 = vmatpush.bf16.msra.mxu0 %v3178
    %5235 = vmatmul.bf16.gmra.mxu0 %v85
    %v5236 = vpop.f32.mrf.mxu0
    %v5237 = vadd.f32 0.0, %v5236
    %v5238 = vpop.f32.mrf.mxu0
    %v5239 = vadd.f32 0.0, %v5238
    %5240 = vdwg.mxu0
    %5241 = vmatpush.bf16.msra.mxu0 %v3898
    %5242 = vmatpush.bf16.msra.mxu0 %v3850
    %5243 = vmatpush.bf16.msra.mxu0 %v3802
    %5244 = vmatpush.bf16.msra.mxu0 %v3754
    %5245 = vmatpush.bf16.msra.mxu0 %v3706
    %5246 = vmatpush.bf16.msra.mxu0 %v3658
    %5247 = vmatpush.bf16.msra.mxu0 %v3610
    %5248 = vmatpush.bf16.msra.mxu0 %v3562
    %5249 = vmatmul.bf16.gmra.mxu0 %v86
    %v5250 = vpop.f32.mrf.mxu0
    %v5251 = vadd.f32 %v5237, %v5250
    %v5252 = vpop.f32.mrf.mxu0
    %v5253 = vadd.f32 %v5239, %v5252
    %5254 = vdwg.mxu0
    %5255 = vmatpush.bf16.msra.mxu0 %v3515
    %5256 = vmatpush.bf16.msra.mxu0 %v3467
    %5257 = vmatpush.bf16.msra.mxu0 %v3419
    %5258 = vmatpush.bf16.msra.mxu0 %v3371
    %5259 = vmatpush.bf16.msra.mxu0 %v3323
    %5260 = vmatpush.bf16.msra.mxu0 %v3275
    %5261 = vmatpush.bf16.msra.mxu0 %v3227
    %5262 = vmatpush.bf16.msra.mxu0 %v3179
    %5263 = vmatmul.bf16.gmra.mxu0 %v85
    %v5264 = vpop.f32.mrf.mxu0
    %v5265 = vadd.f32 0.0, %v5264
    %v5266 = vpop.f32.mrf.mxu0
    %v5267 = vadd.f32 0.0, %v5266
    %5268 = vdwg.mxu0
    %5269 = vmatpush.bf16.msra.mxu0 %v3899
    %5270 = vmatpush.bf16.msra.mxu0 %v3851
    %5271 = vmatpush.bf16.msra.mxu0 %v3803
    %5272 = vmatpush.bf16.msra.mxu0 %v3755
    %5273 = vmatpush.bf16.msra.mxu0 %v3707
    %5274 = vmatpush.bf16.msra.mxu0 %v3659
    %5275 = vmatpush.bf16.msra.mxu0 %v3611
    %5276 = vmatpush.bf16.msra.mxu0 %v3563
    %5277 = vmatmul.bf16.gmra.mxu0 %v86
    %v5278 = vpop.f32.mrf.mxu0
    %v5279 = vadd.f32 %v5265, %v5278
    %v5280 = vpop.f32.mrf.mxu0
    %v5281 = vadd.f32 %v5267, %v5280
    %5282 = vdwg.mxu0
    %5283 = vmatpush.bf16.msra.mxu0 %v3516
    %5284 = vmatpush.bf16.msra.mxu0 %v3468
    %5285 = vmatpush.bf16.msra.mxu0 %v3420
    %5286 = vmatpush.bf16.msra.mxu0 %v3372
    %5287 = vmatpush.bf16.msra.mxu0 %v3324
    %5288 = vmatpush.bf16.msra.mxu0 %v3276
    %5289 = vmatpush.bf16.msra.mxu0 %v3228
    %5290 = vmatpush.bf16.msra.mxu0 %v3180
    %5291 = vmatmul.bf16.gmra.mxu0 %v85
    %v5292 = vpop.f32.mrf.mxu0
    %v5293 = vadd.f32 0.0, %v5292
    %v5294 = vpop.f32.mrf.mxu0
    %v5295 = vadd.f32 0.0, %v5294
    %5296 = vdwg.mxu0
    %5297 = vmatpush.bf16.msra.mxu0 %v3900
    %5298 = vmatpush.bf16.msra.mxu0 %v3852
    %5299 = vmatpush.bf16.msra.mxu0 %v3804
    %5300 = vmatpush.bf16.msra.mxu0 %v3756
    %5301 = vmatpush.bf16.msra.mxu0 %v3708
    %5302 = vmatpush.bf16.msra.mxu0 %v3660
    %5303 = vmatpush.bf16.msra.mxu0 %v3612
    %5304 = vmatpush.bf16.msra.mxu0 %v3564
    %5305 = vmatmul.bf16.gmra.mxu0 %v86
    %v5306 = vpop.f32.mrf.mxu0
    %v5307 = vadd.f32 %v5293, %v5306
    %v5308 = vpop.f32.mrf.mxu0
    %v5309 = vadd.f32 %v5295, %v5308
    %5310 = vdwg.mxu0
    %5311 = vmatpush.bf16.msra.mxu0 %v3517
    %5312 = vmatpush.bf16.msra.mxu0 %v3469
    %5313 = vmatpush.bf16.msra.mxu0 %v3421
    %5314 = vmatpush.bf16.msra.mxu0 %v3373
    %5315 = vmatpush.bf16.msra.mxu0 %v3325
    %5316 = vmatpush.bf16.msra.mxu0 %v3277
    %5317 = vmatpush.bf16.msra.mxu0 %v3229
    %5318 = vmatpush.bf16.msra.mxu0 %v3181
    %5319 = vmatmul.bf16.gmra.mxu0 %v85
    %v5320 = vpop.f32.mrf.mxu0
    %v5321 = vadd.f32 0.0, %v5320
    %v5322 = vpop.f32.mrf.mxu0
    %v5323 = vadd.f32 0.0, %v5322
    %5324 = vdwg.mxu0
    %5325 = vmatpush.bf16.msra.mxu0 %v3901
    %5326 = vmatpush.bf16.msra.mxu0 %v3853
    %5327 = vmatpush.bf16.msra.mxu0 %v3805
    %5328 = vmatpush.bf16.msra.mxu0 %v3757
    %5329 = vmatpush.bf16.msra.mxu0 %v3709
    %5330 = vmatpush.bf16.msra.mxu0 %v3661
    %5331 = vmatpush.bf16.msra.mxu0 %v3613
    %5332 = vmatpush.bf16.msra.mxu0 %v3565
    %5333 = vmatmul.bf16.gmra.mxu0 %v86
    %v5334 = vpop.f32.mrf.mxu0
    %v5335 = vadd.f32 %v5321, %v5334
    %v5336 = vpop.f32.mrf.mxu0
    %v5337 = vadd.f32 %v5323, %v5336
    %5338 = vdwg.mxu0
    %5339 = vmatpush.bf16.msra.mxu0 %v3518
    %5340 = vmatpush.bf16.msra.mxu0 %v3470
    %5341 = vmatpush.bf16.msra.mxu0 %v3422
    %5342 = vmatpush.bf16.msra.mxu0 %v3374
    %5343 = vmatpush.bf16.msra.mxu0 %v3326
    %5344 = vmatpush.bf16.msra.mxu0 %v3278
    %5345 = vmatpush.bf16.msra.mxu0 %v3230
    %5346 = vmatpush.bf16.msra.mxu0 %v3182
    %5347 = vmatmul.bf16.gmra.mxu0 %v85
    %v5348 = vpop.f32.mrf.mxu0
    %v5349 = vadd.f32 0.0, %v5348
    %v5350 = vpop.f32.mrf.mxu0
    %v5351 = vadd.f32 0.0, %v5350
    %5352 = vdwg.mxu0
    %5353 = vmatpush.bf16.msra.mxu0 %v3902
    %5354 = vmatpush.bf16.msra.mxu0 %v3854
    %5355 = vmatpush.bf16.msra.mxu0 %v3806
    %5356 = vmatpush.bf16.msra.mxu0 %v3758
    %5357 = vmatpush.bf16.msra.mxu0 %v3710
    %5358 = vmatpush.bf16.msra.mxu0 %v3662
    %5359 = vmatpush.bf16.msra.mxu0 %v3614
    %5360 = vmatpush.bf16.msra.mxu0 %v3566
    %5361 = vmatmul.bf16.gmra.mxu0 %v86
    %v5362 = vpop.f32.mrf.mxu0
    %v5363 = vadd.f32 %v5349, %v5362
    %v5364 = vpop.f32.mrf.mxu0
    %v5365 = vadd.f32 %v5351, %v5364
    %5366 = vdwg.mxu0
    %5367 = vmatpush.bf16.msra.mxu0 %v3519
    %5368 = vmatpush.bf16.msra.mxu0 %v3471
    %5369 = vmatpush.bf16.msra.mxu0 %v3423
    %5370 = vmatpush.bf16.msra.mxu0 %v3375
    %5371 = vmatpush.bf16.msra.mxu0 %v3327
    %5372 = vmatpush.bf16.msra.mxu0 %v3279
    %5373 = vmatpush.bf16.msra.mxu0 %v3231
    %5374 = vmatpush.bf16.msra.mxu0 %v3183
    %5375 = vmatmul.bf16.gmra.mxu0 %v85
    %v5376 = vpop.f32.mrf.mxu0
    %v5377 = vadd.f32 0.0, %v5376
    %v5378 = vpop.f32.mrf.mxu0
    %v5379 = vadd.f32 0.0, %v5378
    %5380 = vdwg.mxu0
    %5381 = vmatpush.bf16.msra.mxu0 %v3903
    %5382 = vmatpush.bf16.msra.mxu0 %v3855
    %5383 = vmatpush.bf16.msra.mxu0 %v3807
    %5384 = vmatpush.bf16.msra.mxu0 %v3759
    %5385 = vmatpush.bf16.msra.mxu0 %v3711
    %5386 = vmatpush.bf16.msra.mxu0 %v3663
    %5387 = vmatpush.bf16.msra.mxu0 %v3615
    %5388 = vmatpush.bf16.msra.mxu0 %v3567
    %5389 = vmatmul.bf16.gmra.mxu0 %v86
    %v5390 = vpop.f32.mrf.mxu0
    %v5391 = vadd.f32 %v5377, %v5390
    %v5392 = vpop.f32.mrf.mxu0
    %v5393 = vadd.f32 %v5379, %v5392
    %5394 = vdwg.mxu0
    %5395 = vmatpush.bf16.msra.mxu0 %v3520
    %5396 = vmatpush.bf16.msra.mxu0 %v3472
    %5397 = vmatpush.bf16.msra.mxu0 %v3424
    %5398 = vmatpush.bf16.msra.mxu0 %v3376
    %5399 = vmatpush.bf16.msra.mxu0 %v3328
    %5400 = vmatpush.bf16.msra.mxu0 %v3280
    %5401 = vmatpush.bf16.msra.mxu0 %v3232
    %5402 = vmatpush.bf16.msra.mxu0 %v3184
    %5403 = vmatmul.bf16.gmra.mxu0 %v85
    %v5404 = vpop.f32.mrf.mxu0
    %v5405 = vadd.f32 0.0, %v5404
    %v5406 = vpop.f32.mrf.mxu0
    %v5407 = vadd.f32 0.0, %v5406
    %5408 = vdwg.mxu0
    %5409 = vmatpush.bf16.msra.mxu0 %v3904
    %5410 = vmatpush.bf16.msra.mxu0 %v3856
    %5411 = vmatpush.bf16.msra.mxu0 %v3808
    %5412 = vmatpush.bf16.msra.mxu0 %v3760
    %5413 = vmatpush.bf16.msra.mxu0 %v3712
    %5414 = vmatpush.bf16.msra.mxu0 %v3664
    %5415 = vmatpush.bf16.msra.mxu0 %v3616
    %5416 = vmatpush.bf16.msra.mxu0 %v3568
    %5417 = vmatmul.bf16.gmra.mxu0 %v86
    %v5418 = vpop.f32.mrf.mxu0
    %v5419 = vadd.f32 %v5405, %v5418
    %v5420 = vpop.f32.mrf.mxu0
    %v5421 = vadd.f32 %v5407, %v5420
    %5422 = vdwg.mxu0
    %5423 = vmatpush.bf16.msra.mxu0 %v3521
    %5424 = vmatpush.bf16.msra.mxu0 %v3473
    %5425 = vmatpush.bf16.msra.mxu0 %v3425
    %5426 = vmatpush.bf16.msra.mxu0 %v3377
    %5427 = vmatpush.bf16.msra.mxu0 %v3329
    %5428 = vmatpush.bf16.msra.mxu0 %v3281
    %5429 = vmatpush.bf16.msra.mxu0 %v3233
    %5430 = vmatpush.bf16.msra.mxu0 %v3185
    %5431 = vmatmul.bf16.gmra.mxu0 %v85
    %v5432 = vpop.f32.mrf.mxu0
    %v5433 = vadd.f32 0.0, %v5432
    %v5434 = vpop.f32.mrf.mxu0
    %v5435 = vadd.f32 0.0, %v5434
    %5436 = vdwg.mxu0
    %5437 = vmatpush.bf16.msra.mxu0 %v3905
    %5438 = vmatpush.bf16.msra.mxu0 %v3857
    %5439 = vmatpush.bf16.msra.mxu0 %v3809
    %5440 = vmatpush.bf16.msra.mxu0 %v3761
    %5441 = vmatpush.bf16.msra.mxu0 %v3713
    %5442 = vmatpush.bf16.msra.mxu0 %v3665
    %5443 = vmatpush.bf16.msra.mxu0 %v3617
    %5444 = vmatpush.bf16.msra.mxu0 %v3569
    %5445 = vmatmul.bf16.gmra.mxu0 %v86
    %v5446 = vpop.f32.mrf.mxu0
    %v5447 = vadd.f32 %v5433, %v5446
    %v5448 = vpop.f32.mrf.mxu0
    %v5449 = vadd.f32 %v5435, %v5448
    %5450 = vdwg.mxu0
    %5451 = vmatpush.bf16.msra.mxu0 %v3522
    %5452 = vmatpush.bf16.msra.mxu0 %v3474
    %5453 = vmatpush.bf16.msra.mxu0 %v3426
    %5454 = vmatpush.bf16.msra.mxu0 %v3378
    %5455 = vmatpush.bf16.msra.mxu0 %v3330
    %5456 = vmatpush.bf16.msra.mxu0 %v3282
    %5457 = vmatpush.bf16.msra.mxu0 %v3234
    %5458 = vmatpush.bf16.msra.mxu0 %v3186
    %5459 = vmatmul.bf16.gmra.mxu0 %v85
    %v5460 = vpop.f32.mrf.mxu0
    %v5461 = vadd.f32 0.0, %v5460
    %v5462 = vpop.f32.mrf.mxu0
    %v5463 = vadd.f32 0.0, %v5462
    %5464 = vdwg.mxu0
    %5465 = vmatpush.bf16.msra.mxu0 %v3906
    %5466 = vmatpush.bf16.msra.mxu0 %v3858
    %5467 = vmatpush.bf16.msra.mxu0 %v3810
    %5468 = vmatpush.bf16.msra.mxu0 %v3762
    %5469 = vmatpush.bf16.msra.mxu0 %v3714
    %5470 = vmatpush.bf16.msra.mxu0 %v3666
    %5471 = vmatpush.bf16.msra.mxu0 %v3618
    %5472 = vmatpush.bf16.msra.mxu0 %v3570
    %5473 = vmatmul.bf16.gmra.mxu0 %v86
    %v5474 = vpop.f32.mrf.mxu0
    %v5475 = vadd.f32 %v5461, %v5474
    %v5476 = vpop.f32.mrf.mxu0
    %v5477 = vadd.f32 %v5463, %v5476
    %5478 = vdwg.mxu0
    %5479 = vmatpush.bf16.msra.mxu0 %v3523
    %5480 = vmatpush.bf16.msra.mxu0 %v3475
    %5481 = vmatpush.bf16.msra.mxu0 %v3427
    %5482 = vmatpush.bf16.msra.mxu0 %v3379
    %5483 = vmatpush.bf16.msra.mxu0 %v3331
    %5484 = vmatpush.bf16.msra.mxu0 %v3283
    %5485 = vmatpush.bf16.msra.mxu0 %v3235
    %5486 = vmatpush.bf16.msra.mxu0 %v3187
    %5487 = vmatmul.bf16.gmra.mxu0 %v85
    %v5488 = vpop.f32.mrf.mxu0
    %v5489 = vadd.f32 0.0, %v5488
    %v5490 = vpop.f32.mrf.mxu0
    %v5491 = vadd.f32 0.0, %v5490
    %5492 = vdwg.mxu0
    %5493 = vmatpush.bf16.msra.mxu0 %v3907
    %5494 = vmatpush.bf16.msra.mxu0 %v3859
    %5495 = vmatpush.bf16.msra.mxu0 %v3811
    %5496 = vmatpush.bf16.msra.mxu0 %v3763
    %5497 = vmatpush.bf16.msra.mxu0 %v3715
    %5498 = vmatpush.bf16.msra.mxu0 %v3667
    %5499 = vmatpush.bf16.msra.mxu0 %v3619
    %5500 = vmatpush.bf16.msra.mxu0 %v3571
    %5501 = vmatmul.bf16.gmra.mxu0 %v86
    %v5502 = vpop.f32.mrf.mxu0
    %v5503 = vadd.f32 %v5489, %v5502
    %v5504 = vpop.f32.mrf.mxu0
    %v5505 = vadd.f32 %v5491, %v5504
    %5506 = vdwg.mxu0
    %5507 = vmatpush.bf16.msra.mxu0 %v3524
    %5508 = vmatpush.bf16.msra.mxu0 %v3476
    %5509 = vmatpush.bf16.msra.mxu0 %v3428
    %5510 = vmatpush.bf16.msra.mxu0 %v3380
    %5511 = vmatpush.bf16.msra.mxu0 %v3332
    %5512 = vmatpush.bf16.msra.mxu0 %v3284
    %5513 = vmatpush.bf16.msra.mxu0 %v3236
    %5514 = vmatpush.bf16.msra.mxu0 %v3188
    %5515 = vmatmul.bf16.gmra.mxu0 %v85
    %v5516 = vpop.f32.mrf.mxu0
    %v5517 = vadd.f32 0.0, %v5516
    %v5518 = vpop.f32.mrf.mxu0
    %v5519 = vadd.f32 0.0, %v5518
    %5520 = vdwg.mxu0
    %5521 = vmatpush.bf16.msra.mxu0 %v3908
    %5522 = vmatpush.bf16.msra.mxu0 %v3860
    %5523 = vmatpush.bf16.msra.mxu0 %v3812
    %5524 = vmatpush.bf16.msra.mxu0 %v3764
    %5525 = vmatpush.bf16.msra.mxu0 %v3716
    %5526 = vmatpush.bf16.msra.mxu0 %v3668
    %5527 = vmatpush.bf16.msra.mxu0 %v3620
    %5528 = vmatpush.bf16.msra.mxu0 %v3572
    %5529 = vmatmul.bf16.gmra.mxu0 %v86
    %v5530 = vpop.f32.mrf.mxu0
    %v5531 = vadd.f32 %v5517, %v5530
    %v5532 = vpop.f32.mrf.mxu0
    %v5533 = vadd.f32 %v5519, %v5532
    %5534 = vdwg.mxu0
    %5535 = vmatpush.bf16.msra.mxu0 %v3525
    %5536 = vmatpush.bf16.msra.mxu0 %v3477
    %5537 = vmatpush.bf16.msra.mxu0 %v3429
    %5538 = vmatpush.bf16.msra.mxu0 %v3381
    %5539 = vmatpush.bf16.msra.mxu0 %v3333
    %5540 = vmatpush.bf16.msra.mxu0 %v3285
    %5541 = vmatpush.bf16.msra.mxu0 %v3237
    %5542 = vmatpush.bf16.msra.mxu0 %v3189
    %5543 = vmatmul.bf16.gmra.mxu0 %v85
    %v5544 = vpop.f32.mrf.mxu0
    %v5545 = vadd.f32 0.0, %v5544
    %v5546 = vpop.f32.mrf.mxu0
    %v5547 = vadd.f32 0.0, %v5546
    %5548 = vdwg.mxu0
    %5549 = vmatpush.bf16.msra.mxu0 %v3909
    %5550 = vmatpush.bf16.msra.mxu0 %v3861
    %5551 = vmatpush.bf16.msra.mxu0 %v3813
    %5552 = vmatpush.bf16.msra.mxu0 %v3765
    %5553 = vmatpush.bf16.msra.mxu0 %v3717
    %5554 = vmatpush.bf16.msra.mxu0 %v3669
    %5555 = vmatpush.bf16.msra.mxu0 %v3621
    %5556 = vmatpush.bf16.msra.mxu0 %v3573
    %5557 = vmatmul.bf16.gmra.mxu0 %v86
    %v5558 = vpop.f32.mrf.mxu0
    %v5559 = vadd.f32 %v5545, %v5558
    %v5560 = vpop.f32.mrf.mxu0
    %v5561 = vadd.f32 %v5547, %v5560
    %5562 = vdwg.mxu0
    %5563 = vmatpush.bf16.msra.mxu0 %v3526
    %5564 = vmatpush.bf16.msra.mxu0 %v3478
    %5565 = vmatpush.bf16.msra.mxu0 %v3430
    %5566 = vmatpush.bf16.msra.mxu0 %v3382
    %5567 = vmatpush.bf16.msra.mxu0 %v3334
    %5568 = vmatpush.bf16.msra.mxu0 %v3286
    %5569 = vmatpush.bf16.msra.mxu0 %v3238
    %5570 = vmatpush.bf16.msra.mxu0 %v3190
    %5571 = vmatmul.bf16.gmra.mxu0 %v85
    %v5572 = vpop.f32.mrf.mxu0
    %v5573 = vadd.f32 0.0, %v5572
    %v5574 = vpop.f32.mrf.mxu0
    %v5575 = vadd.f32 0.0, %v5574
    %5576 = vdwg.mxu0
    %5577 = vmatpush.bf16.msra.mxu0 %v3910
    %5578 = vmatpush.bf16.msra.mxu0 %v3862
    %5579 = vmatpush.bf16.msra.mxu0 %v3814
    %5580 = vmatpush.bf16.msra.mxu0 %v3766
    %5581 = vmatpush.bf16.msra.mxu0 %v3718
    %5582 = vmatpush.bf16.msra.mxu0 %v3670
    %5583 = vmatpush.bf16.msra.mxu0 %v3622
    %5584 = vmatpush.bf16.msra.mxu0 %v3574
    %5585 = vmatmul.bf16.gmra.mxu0 %v86
    %v5586 = vpop.f32.mrf.mxu0
    %v5587 = vadd.f32 %v5573, %v5586
    %v5588 = vpop.f32.mrf.mxu0
    %v5589 = vadd.f32 %v5575, %v5588
    %5590 = vdwg.mxu0
    %5591 = vmatpush.bf16.msra.mxu0 %v3527
    %5592 = vmatpush.bf16.msra.mxu0 %v3479
    %5593 = vmatpush.bf16.msra.mxu0 %v3431
    %5594 = vmatpush.bf16.msra.mxu0 %v3383
    %5595 = vmatpush.bf16.msra.mxu0 %v3335
    %5596 = vmatpush.bf16.msra.mxu0 %v3287
    %5597 = vmatpush.bf16.msra.mxu0 %v3239
    %5598 = vmatpush.bf16.msra.mxu0 %v3191
    %5599 = vmatmul.bf16.gmra.mxu0 %v85
    %v5600 = vpop.f32.mrf.mxu0
    %v5601 = vadd.f32 0.0, %v5600
    %v5602 = vpop.f32.mrf.mxu0
    %v5603 = vadd.f32 0.0, %v5602
    %5604 = vdwg.mxu0
    %5605 = vmatpush.bf16.msra.mxu0 %v3911
    %5606 = vmatpush.bf16.msra.mxu0 %v3863
    %5607 = vmatpush.bf16.msra.mxu0 %v3815
    %5608 = vmatpush.bf16.msra.mxu0 %v3767
    %5609 = vmatpush.bf16.msra.mxu0 %v3719
    %5610 = vmatpush.bf16.msra.mxu0 %v3671
    %5611 = vmatpush.bf16.msra.mxu0 %v3623
    %5612 = vmatpush.bf16.msra.mxu0 %v3575
    %5613 = vmatmul.bf16.gmra.mxu0 %v86
    %v5614 = vpop.f32.mrf.mxu0
    %v5615 = vadd.f32 %v5601, %v5614
    %v5616 = vpop.f32.mrf.mxu0
    %v5617 = vadd.f32 %v5603, %v5616
    %5618 = vdwg.mxu0
    %5619 = vmatpush.bf16.msra.mxu0 %v3528
    %5620 = vmatpush.bf16.msra.mxu0 %v3480
    %5621 = vmatpush.bf16.msra.mxu0 %v3432
    %5622 = vmatpush.bf16.msra.mxu0 %v3384
    %5623 = vmatpush.bf16.msra.mxu0 %v3336
    %5624 = vmatpush.bf16.msra.mxu0 %v3288
    %5625 = vmatpush.bf16.msra.mxu0 %v3240
    %5626 = vmatpush.bf16.msra.mxu0 %v3192
    %5627 = vmatmul.bf16.gmra.mxu0 %v85
    %v5628 = vpop.f32.mrf.mxu0
    %v5629 = vadd.f32 0.0, %v5628
    %v5630 = vpop.f32.mrf.mxu0
    %v5631 = vadd.f32 0.0, %v5630
    %5632 = vdwg.mxu0
    %5633 = vmatpush.bf16.msra.mxu0 %v3912
    %5634 = vmatpush.bf16.msra.mxu0 %v3864
    %5635 = vmatpush.bf16.msra.mxu0 %v3816
    %5636 = vmatpush.bf16.msra.mxu0 %v3768
    %5637 = vmatpush.bf16.msra.mxu0 %v3720
    %5638 = vmatpush.bf16.msra.mxu0 %v3672
    %5639 = vmatpush.bf16.msra.mxu0 %v3624
    %5640 = vmatpush.bf16.msra.mxu0 %v3576
    %5641 = vmatmul.bf16.gmra.mxu0 %v86
    %v5642 = vpop.f32.mrf.mxu0
    %v5643 = vadd.f32 %v5629, %v5642
    %v5644 = vpop.f32.mrf.mxu0
    %v5645 = vadd.f32 %v5631, %v5644
    %5646 = vdwg.mxu0
    %5647 = vmatpush.bf16.msra.mxu0 %v3529
    %5648 = vmatpush.bf16.msra.mxu0 %v3481
    %5649 = vmatpush.bf16.msra.mxu0 %v3433
    %5650 = vmatpush.bf16.msra.mxu0 %v3385
    %5651 = vmatpush.bf16.msra.mxu0 %v3337
    %5652 = vmatpush.bf16.msra.mxu0 %v3289
    %5653 = vmatpush.bf16.msra.mxu0 %v3241
    %5654 = vmatpush.bf16.msra.mxu0 %v3193
    %5655 = vmatmul.bf16.gmra.mxu0 %v85
    %v5656 = vpop.f32.mrf.mxu0
    %v5657 = vadd.f32 0.0, %v5656
    %v5658 = vpop.f32.mrf.mxu0
    %v5659 = vadd.f32 0.0, %v5658
    %5660 = vdwg.mxu0
    %5661 = vmatpush.bf16.msra.mxu0 %v3913
    %5662 = vmatpush.bf16.msra.mxu0 %v3865
    %5663 = vmatpush.bf16.msra.mxu0 %v3817
    %5664 = vmatpush.bf16.msra.mxu0 %v3769
    %5665 = vmatpush.bf16.msra.mxu0 %v3721
    %5666 = vmatpush.bf16.msra.mxu0 %v3673
    %5667 = vmatpush.bf16.msra.mxu0 %v3625
    %5668 = vmatpush.bf16.msra.mxu0 %v3577
    %5669 = vmatmul.bf16.gmra.mxu0 %v86
    %v5670 = vpop.f32.mrf.mxu0
    %v5671 = vadd.f32 %v5657, %v5670
    %v5672 = vpop.f32.mrf.mxu0
    %v5673 = vadd.f32 %v5659, %v5672
    %5674 = vdwg.mxu0
    %5675 = vmatpush.bf16.msra.mxu0 %v3530
    %5676 = vmatpush.bf16.msra.mxu0 %v3482
    %5677 = vmatpush.bf16.msra.mxu0 %v3434
    %5678 = vmatpush.bf16.msra.mxu0 %v3386
    %5679 = vmatpush.bf16.msra.mxu0 %v3338
    %5680 = vmatpush.bf16.msra.mxu0 %v3290
    %5681 = vmatpush.bf16.msra.mxu0 %v3242
    %5682 = vmatpush.bf16.msra.mxu0 %v3194
    %5683 = vmatmul.bf16.gmra.mxu0 %v85
    %v5684 = vpop.f32.mrf.mxu0
    %v5685 = vadd.f32 0.0, %v5684
    %v5686 = vpop.f32.mrf.mxu0
    %v5687 = vadd.f32 0.0, %v5686
    %5688 = vdwg.mxu0
    %5689 = vmatpush.bf16.msra.mxu0 %v3914
    %5690 = vmatpush.bf16.msra.mxu0 %v3866
    %5691 = vmatpush.bf16.msra.mxu0 %v3818
    %5692 = vmatpush.bf16.msra.mxu0 %v3770
    %5693 = vmatpush.bf16.msra.mxu0 %v3722
    %5694 = vmatpush.bf16.msra.mxu0 %v3674
    %5695 = vmatpush.bf16.msra.mxu0 %v3626
    %5696 = vmatpush.bf16.msra.mxu0 %v3578
    %5697 = vmatmul.bf16.gmra.mxu0 %v86
    %v5698 = vpop.f32.mrf.mxu0
    %v5699 = vadd.f32 %v5685, %v5698
    %v5700 = vpop.f32.mrf.mxu0
    %v5701 = vadd.f32 %v5687, %v5700
    %5702 = vdwg.mxu0
    %5703 = vmatpush.bf16.msra.mxu0 %v3531
    %5704 = vmatpush.bf16.msra.mxu0 %v3483
    %5705 = vmatpush.bf16.msra.mxu0 %v3435
    %5706 = vmatpush.bf16.msra.mxu0 %v3387
    %5707 = vmatpush.bf16.msra.mxu0 %v3339
    %5708 = vmatpush.bf16.msra.mxu0 %v3291
    %5709 = vmatpush.bf16.msra.mxu0 %v3243
    %5710 = vmatpush.bf16.msra.mxu0 %v3195
    %5711 = vmatmul.bf16.gmra.mxu0 %v85
    %v5712 = vpop.f32.mrf.mxu0
    %v5713 = vadd.f32 0.0, %v5712
    %v5714 = vpop.f32.mrf.mxu0
    %v5715 = vadd.f32 0.0, %v5714
    %5716 = vdwg.mxu0
    %5717 = vmatpush.bf16.msra.mxu0 %v3915
    %5718 = vmatpush.bf16.msra.mxu0 %v3867
    %5719 = vmatpush.bf16.msra.mxu0 %v3819
    %5720 = vmatpush.bf16.msra.mxu0 %v3771
    %5721 = vmatpush.bf16.msra.mxu0 %v3723
    %5722 = vmatpush.bf16.msra.mxu0 %v3675
    %5723 = vmatpush.bf16.msra.mxu0 %v3627
    %5724 = vmatpush.bf16.msra.mxu0 %v3579
    %5725 = vmatmul.bf16.gmra.mxu0 %v86
    %v5726 = vpop.f32.mrf.mxu0
    %v5727 = vadd.f32 %v5713, %v5726
    %v5728 = vpop.f32.mrf.mxu0
    %v5729 = vadd.f32 %v5715, %v5728
    %5730 = vdwg.mxu0
    %5731 = vmatpush.bf16.msra.mxu0 %v3532
    %5732 = vmatpush.bf16.msra.mxu0 %v3484
    %5733 = vmatpush.bf16.msra.mxu0 %v3436
    %5734 = vmatpush.bf16.msra.mxu0 %v3388
    %5735 = vmatpush.bf16.msra.mxu0 %v3340
    %5736 = vmatpush.bf16.msra.mxu0 %v3292
    %5737 = vmatpush.bf16.msra.mxu0 %v3244
    %5738 = vmatpush.bf16.msra.mxu0 %v3196
    %5739 = vmatmul.bf16.gmra.mxu0 %v85
    %v5740 = vpop.f32.mrf.mxu0
    %v5741 = vadd.f32 0.0, %v5740
    %v5742 = vpop.f32.mrf.mxu0
    %v5743 = vadd.f32 0.0, %v5742
    %5744 = vdwg.mxu0
    %5745 = vmatpush.bf16.msra.mxu0 %v3916
    %5746 = vmatpush.bf16.msra.mxu0 %v3868
    %5747 = vmatpush.bf16.msra.mxu0 %v3820
    %5748 = vmatpush.bf16.msra.mxu0 %v3772
    %5749 = vmatpush.bf16.msra.mxu0 %v3724
    %5750 = vmatpush.bf16.msra.mxu0 %v3676
    %5751 = vmatpush.bf16.msra.mxu0 %v3628
    %5752 = vmatpush.bf16.msra.mxu0 %v3580
    %5753 = vmatmul.bf16.gmra.mxu0 %v86
    %v5754 = vpop.f32.mrf.mxu0
    %v5755 = vadd.f32 %v5741, %v5754
    %v5756 = vpop.f32.mrf.mxu0
    %v5757 = vadd.f32 %v5743, %v5756
    %5758 = vdwg.mxu0
    %5759 = vmatpush.bf16.msra.mxu0 %v3533
    %5760 = vmatpush.bf16.msra.mxu0 %v3485
    %5761 = vmatpush.bf16.msra.mxu0 %v3437
    %5762 = vmatpush.bf16.msra.mxu0 %v3389
    %5763 = vmatpush.bf16.msra.mxu0 %v3341
    %5764 = vmatpush.bf16.msra.mxu0 %v3293
    %5765 = vmatpush.bf16.msra.mxu0 %v3245
    %5766 = vmatpush.bf16.msra.mxu0 %v3197
    %5767 = vmatmul.bf16.gmra.mxu0 %v85
    %v5768 = vpop.f32.mrf.mxu0
    %v5769 = vadd.f32 0.0, %v5768
    %v5770 = vpop.f32.mrf.mxu0
    %v5771 = vadd.f32 0.0, %v5770
    %5772 = vdwg.mxu0
    %5773 = vmatpush.bf16.msra.mxu0 %v3917
    %5774 = vmatpush.bf16.msra.mxu0 %v3869
    %5775 = vmatpush.bf16.msra.mxu0 %v3821
    %5776 = vmatpush.bf16.msra.mxu0 %v3773
    %5777 = vmatpush.bf16.msra.mxu0 %v3725
    %5778 = vmatpush.bf16.msra.mxu0 %v3677
    %5779 = vmatpush.bf16.msra.mxu0 %v3629
    %5780 = vmatpush.bf16.msra.mxu0 %v3581
    %5781 = vmatmul.bf16.gmra.mxu0 %v86
    %v5782 = vpop.f32.mrf.mxu0
    %v5783 = vadd.f32 %v5769, %v5782
    %v5784 = vpop.f32.mrf.mxu0
    %v5785 = vadd.f32 %v5771, %v5784
    %5786 = vdwg.mxu0
    %5787 = vmatpush.bf16.msra.mxu0 %v3534
    %5788 = vmatpush.bf16.msra.mxu0 %v3486
    %5789 = vmatpush.bf16.msra.mxu0 %v3438
    %5790 = vmatpush.bf16.msra.mxu0 %v3390
    %5791 = vmatpush.bf16.msra.mxu0 %v3342
    %5792 = vmatpush.bf16.msra.mxu0 %v3294
    %5793 = vmatpush.bf16.msra.mxu0 %v3246
    %5794 = vmatpush.bf16.msra.mxu0 %v3198
    %5795 = vmatmul.bf16.gmra.mxu0 %v85
    %v5796 = vpop.f32.mrf.mxu0
    %v5797 = vadd.f32 0.0, %v5796
    %v5798 = vpop.f32.mrf.mxu0
    %v5799 = vadd.f32 0.0, %v5798
    %5800 = vdwg.mxu0
    %5801 = vmatpush.bf16.msra.mxu0 %v3918
    %5802 = vmatpush.bf16.msra.mxu0 %v3870
    %5803 = vmatpush.bf16.msra.mxu0 %v3822
    %5804 = vmatpush.bf16.msra.mxu0 %v3774
    %5805 = vmatpush.bf16.msra.mxu0 %v3726
    %5806 = vmatpush.bf16.msra.mxu0 %v3678
    %5807 = vmatpush.bf16.msra.mxu0 %v3630
    %5808 = vmatpush.bf16.msra.mxu0 %v3582
    %5809 = vmatmul.bf16.gmra.mxu0 %v86
    %v5810 = vpop.f32.mrf.mxu0
    %v5811 = vadd.f32 %v5797, %v5810
    %v5812 = vpop.f32.mrf.mxu0
    %v5813 = vadd.f32 %v5799, %v5812
    %5814 = vdwg.mxu0
    %5815 = vmatpush.bf16.msra.mxu0 %v3535
    %5816 = vmatpush.bf16.msra.mxu0 %v3487
    %5817 = vmatpush.bf16.msra.mxu0 %v3439
    %5818 = vmatpush.bf16.msra.mxu0 %v3391
    %5819 = vmatpush.bf16.msra.mxu0 %v3343
    %5820 = vmatpush.bf16.msra.mxu0 %v3295
    %5821 = vmatpush.bf16.msra.mxu0 %v3247
    %5822 = vmatpush.bf16.msra.mxu0 %v3199
    %5823 = vmatmul.bf16.gmra.mxu0 %v85
    %v5824 = vpop.f32.mrf.mxu0
    %v5825 = vadd.f32 0.0, %v5824
    %v5826 = vpop.f32.mrf.mxu0
    %v5827 = vadd.f32 0.0, %v5826
    %5828 = vdwg.mxu0
    %5829 = vmatpush.bf16.msra.mxu0 %v3919
    %5830 = vmatpush.bf16.msra.mxu0 %v3871
    %5831 = vmatpush.bf16.msra.mxu0 %v3823
    %5832 = vmatpush.bf16.msra.mxu0 %v3775
    %5833 = vmatpush.bf16.msra.mxu0 %v3727
    %5834 = vmatpush.bf16.msra.mxu0 %v3679
    %5835 = vmatpush.bf16.msra.mxu0 %v3631
    %5836 = vmatpush.bf16.msra.mxu0 %v3583
    %5837 = vmatmul.bf16.gmra.mxu0 %v86
    %v5838 = vpop.f32.mrf.mxu0
    %v5839 = vadd.f32 %v5825, %v5838
    %v5840 = vpop.f32.mrf.mxu0
    %v5841 = vadd.f32 %v5827, %v5840
    %5842 = vdwg.mxu0
    %5843 = vmatpush.bf16.msra.mxu0 %v3536
    %5844 = vmatpush.bf16.msra.mxu0 %v3488
    %5845 = vmatpush.bf16.msra.mxu0 %v3440
    %5846 = vmatpush.bf16.msra.mxu0 %v3392
    %5847 = vmatpush.bf16.msra.mxu0 %v3344
    %5848 = vmatpush.bf16.msra.mxu0 %v3296
    %5849 = vmatpush.bf16.msra.mxu0 %v3248
    %5850 = vmatpush.bf16.msra.mxu0 %v3200
    %5851 = vmatmul.bf16.gmra.mxu0 %v85
    %v5852 = vpop.f32.mrf.mxu0
    %v5853 = vadd.f32 0.0, %v5852
    %v5854 = vpop.f32.mrf.mxu0
    %v5855 = vadd.f32 0.0, %v5854
    %5856 = vdwg.mxu0
    %5857 = vmatpush.bf16.msra.mxu0 %v3920
    %5858 = vmatpush.bf16.msra.mxu0 %v3872
    %5859 = vmatpush.bf16.msra.mxu0 %v3824
    %5860 = vmatpush.bf16.msra.mxu0 %v3776
    %5861 = vmatpush.bf16.msra.mxu0 %v3728
    %5862 = vmatpush.bf16.msra.mxu0 %v3680
    %5863 = vmatpush.bf16.msra.mxu0 %v3632
    %5864 = vmatpush.bf16.msra.mxu0 %v3584
    %5865 = vmatmul.bf16.gmra.mxu0 %v86
    %v5866 = vpop.f32.mrf.mxu0
    %v5867 = vadd.f32 %v5853, %v5866
    %v5868 = vpop.f32.mrf.mxu0
    %v5869 = vadd.f32 %v5855, %v5868
    %5870 = vdwg.mxu0
    %5871 = vmatpush.bf16.msra.mxu0 %v3537
    %5872 = vmatpush.bf16.msra.mxu0 %v3489
    %5873 = vmatpush.bf16.msra.mxu0 %v3441
    %5874 = vmatpush.bf16.msra.mxu0 %v3393
    %5875 = vmatpush.bf16.msra.mxu0 %v3345
    %5876 = vmatpush.bf16.msra.mxu0 %v3297
    %5877 = vmatpush.bf16.msra.mxu0 %v3249
    %5878 = vmatpush.bf16.msra.mxu0 %v3201
    %5879 = vmatmul.bf16.gmra.mxu0 %v85
    %v5880 = vpop.f32.mrf.mxu0
    %v5881 = vadd.f32 0.0, %v5880
    %v5882 = vpop.f32.mrf.mxu0
    %v5883 = vadd.f32 0.0, %v5882
    %5884 = vdwg.mxu0
    %5885 = vmatpush.bf16.msra.mxu0 %v3921
    %5886 = vmatpush.bf16.msra.mxu0 %v3873
    %5887 = vmatpush.bf16.msra.mxu0 %v3825
    %5888 = vmatpush.bf16.msra.mxu0 %v3777
    %5889 = vmatpush.bf16.msra.mxu0 %v3729
    %5890 = vmatpush.bf16.msra.mxu0 %v3681
    %5891 = vmatpush.bf16.msra.mxu0 %v3633
    %5892 = vmatpush.bf16.msra.mxu0 %v3585
    %5893 = vmatmul.bf16.gmra.mxu0 %v86
    %v5894 = vpop.f32.mrf.mxu0
    %v5895 = vadd.f32 %v5881, %v5894
    %v5896 = vpop.f32.mrf.mxu0
    %v5897 = vadd.f32 %v5883, %v5896
    %5898 = vdwg.mxu0
    %5899 = vmatpush.bf16.msra.mxu0 %v3538
    %5900 = vmatpush.bf16.msra.mxu0 %v3490
    %5901 = vmatpush.bf16.msra.mxu0 %v3442
    %5902 = vmatpush.bf16.msra.mxu0 %v3394
    %5903 = vmatpush.bf16.msra.mxu0 %v3346
    %5904 = vmatpush.bf16.msra.mxu0 %v3298
    %5905 = vmatpush.bf16.msra.mxu0 %v3250
    %5906 = vmatpush.bf16.msra.mxu0 %v3202
    %5907 = vmatmul.bf16.gmra.mxu0 %v85
    %v5908 = vpop.f32.mrf.mxu0
    %v5909 = vadd.f32 0.0, %v5908
    %v5910 = vpop.f32.mrf.mxu0
    %v5911 = vadd.f32 0.0, %v5910
    %5912 = vdwg.mxu0
    %5913 = vmatpush.bf16.msra.mxu0 %v3922
    %5914 = vmatpush.bf16.msra.mxu0 %v3874
    %5915 = vmatpush.bf16.msra.mxu0 %v3826
    %5916 = vmatpush.bf16.msra.mxu0 %v3778
    %5917 = vmatpush.bf16.msra.mxu0 %v3730
    %5918 = vmatpush.bf16.msra.mxu0 %v3682
    %5919 = vmatpush.bf16.msra.mxu0 %v3634
    %5920 = vmatpush.bf16.msra.mxu0 %v3586
    %5921 = vmatmul.bf16.gmra.mxu0 %v86
    %v5922 = vpop.f32.mrf.mxu0
    %v5923 = vadd.f32 %v5909, %v5922
    %v5924 = vpop.f32.mrf.mxu0
    %v5925 = vadd.f32 %v5911, %v5924
    %5926 = vdwg.mxu0
    %5927 = vmatpush.bf16.msra.mxu0 %v3539
    %5928 = vmatpush.bf16.msra.mxu0 %v3491
    %5929 = vmatpush.bf16.msra.mxu0 %v3443
    %5930 = vmatpush.bf16.msra.mxu0 %v3395
    %5931 = vmatpush.bf16.msra.mxu0 %v3347
    %5932 = vmatpush.bf16.msra.mxu0 %v3299
    %5933 = vmatpush.bf16.msra.mxu0 %v3251
    %5934 = vmatpush.bf16.msra.mxu0 %v3203
    %5935 = vmatmul.bf16.gmra.mxu0 %v85
    %v5936 = vpop.f32.mrf.mxu0
    %v5937 = vadd.f32 0.0, %v5936
    %v5938 = vpop.f32.mrf.mxu0
    %v5939 = vadd.f32 0.0, %v5938
    %5940 = vdwg.mxu0
    %5941 = vmatpush.bf16.msra.mxu0 %v3923
    %5942 = vmatpush.bf16.msra.mxu0 %v3875
    %5943 = vmatpush.bf16.msra.mxu0 %v3827
    %5944 = vmatpush.bf16.msra.mxu0 %v3779
    %5945 = vmatpush.bf16.msra.mxu0 %v3731
    %5946 = vmatpush.bf16.msra.mxu0 %v3683
    %5947 = vmatpush.bf16.msra.mxu0 %v3635
    %5948 = vmatpush.bf16.msra.mxu0 %v3587
    %5949 = vmatmul.bf16.gmra.mxu0 %v86
    %v5950 = vpop.f32.mrf.mxu0
    %v5951 = vadd.f32 %v5937, %v5950
    %v5952 = vpop.f32.mrf.mxu0
    %v5953 = vadd.f32 %v5939, %v5952
    %5954 = vdwg.mxu0
    %5955 = vmatpush.bf16.msra.mxu0 %v3540
    %5956 = vmatpush.bf16.msra.mxu0 %v3492
    %5957 = vmatpush.bf16.msra.mxu0 %v3444
    %5958 = vmatpush.bf16.msra.mxu0 %v3396
    %5959 = vmatpush.bf16.msra.mxu0 %v3348
    %5960 = vmatpush.bf16.msra.mxu0 %v3300
    %5961 = vmatpush.bf16.msra.mxu0 %v3252
    %5962 = vmatpush.bf16.msra.mxu0 %v3204
    %5963 = vmatmul.bf16.gmra.mxu0 %v85
    %v5964 = vpop.f32.mrf.mxu0
    %v5965 = vadd.f32 0.0, %v5964
    %v5966 = vpop.f32.mrf.mxu0
    %v5967 = vadd.f32 0.0, %v5966
    %5968 = vdwg.mxu0
    %5969 = vmatpush.bf16.msra.mxu0 %v3924
    %5970 = vmatpush.bf16.msra.mxu0 %v3876
    %5971 = vmatpush.bf16.msra.mxu0 %v3828
    %5972 = vmatpush.bf16.msra.mxu0 %v3780
    %5973 = vmatpush.bf16.msra.mxu0 %v3732
    %5974 = vmatpush.bf16.msra.mxu0 %v3684
    %5975 = vmatpush.bf16.msra.mxu0 %v3636
    %5976 = vmatpush.bf16.msra.mxu0 %v3588
    %5977 = vmatmul.bf16.gmra.mxu0 %v86
    %v5978 = vpop.f32.mrf.mxu0
    %v5979 = vadd.f32 %v5965, %v5978
    %v5980 = vpop.f32.mrf.mxu0
    %v5981 = vadd.f32 %v5967, %v5980
    %5982 = vdwg.mxu0
    %5983 = vmatpush.bf16.msra.mxu0 %v3541
    %5984 = vmatpush.bf16.msra.mxu0 %v3493
    %5985 = vmatpush.bf16.msra.mxu0 %v3445
    %5986 = vmatpush.bf16.msra.mxu0 %v3397
    %5987 = vmatpush.bf16.msra.mxu0 %v3349
    %5988 = vmatpush.bf16.msra.mxu0 %v3301
    %5989 = vmatpush.bf16.msra.mxu0 %v3253
    %5990 = vmatpush.bf16.msra.mxu0 %v3205
    %5991 = vmatmul.bf16.gmra.mxu0 %v85
    %v5992 = vpop.f32.mrf.mxu0
    %v5993 = vadd.f32 0.0, %v5992
    %v5994 = vpop.f32.mrf.mxu0
    %v5995 = vadd.f32 0.0, %v5994
    %5996 = vdwg.mxu0
    %5997 = vmatpush.bf16.msra.mxu0 %v3925
    %5998 = vmatpush.bf16.msra.mxu0 %v3877
    %5999 = vmatpush.bf16.msra.mxu0 %v3829
    %6000 = vmatpush.bf16.msra.mxu0 %v3781
    %6001 = vmatpush.bf16.msra.mxu0 %v3733
    %6002 = vmatpush.bf16.msra.mxu0 %v3685
    %6003 = vmatpush.bf16.msra.mxu0 %v3637
    %6004 = vmatpush.bf16.msra.mxu0 %v3589
    %6005 = vmatmul.bf16.gmra.mxu0 %v86
    %v6006 = vpop.f32.mrf.mxu0
    %v6007 = vadd.f32 %v5993, %v6006
    %v6008 = vpop.f32.mrf.mxu0
    %v6009 = vadd.f32 %v5995, %v6008
    %6010 = vdwg.mxu0
    %6011 = vmatpush.bf16.msra.mxu0 %v3542
    %6012 = vmatpush.bf16.msra.mxu0 %v3494
    %6013 = vmatpush.bf16.msra.mxu0 %v3446
    %6014 = vmatpush.bf16.msra.mxu0 %v3398
    %6015 = vmatpush.bf16.msra.mxu0 %v3350
    %6016 = vmatpush.bf16.msra.mxu0 %v3302
    %6017 = vmatpush.bf16.msra.mxu0 %v3254
    %6018 = vmatpush.bf16.msra.mxu0 %v3206
    %6019 = vmatmul.bf16.gmra.mxu0 %v85
    %v6020 = vpop.f32.mrf.mxu0
    %v6021 = vadd.f32 0.0, %v6020
    %v6022 = vpop.f32.mrf.mxu0
    %v6023 = vadd.f32 0.0, %v6022
    %6024 = vdwg.mxu0
    %6025 = vmatpush.bf16.msra.mxu0 %v3926
    %6026 = vmatpush.bf16.msra.mxu0 %v3878
    %6027 = vmatpush.bf16.msra.mxu0 %v3830
    %6028 = vmatpush.bf16.msra.mxu0 %v3782
    %6029 = vmatpush.bf16.msra.mxu0 %v3734
    %6030 = vmatpush.bf16.msra.mxu0 %v3686
    %6031 = vmatpush.bf16.msra.mxu0 %v3638
    %6032 = vmatpush.bf16.msra.mxu0 %v3590
    %6033 = vmatmul.bf16.gmra.mxu0 %v86
    %v6034 = vpop.f32.mrf.mxu0
    %v6035 = vadd.f32 %v6021, %v6034
    %v6036 = vpop.f32.mrf.mxu0
    %v6037 = vadd.f32 %v6023, %v6036
    %6038 = vdwg.mxu0
    %6039 = vmatpush.xpose.msra.mxu0 0.0
    %6040 = vmatpush.xpose.msra.mxu0 0.0
    %6041 = vmatpush.xpose.msra.mxu0 0.0
    %6042 = vmatpush.xpose.msra.mxu0 0.0
    %6043 = vmatpush.xpose.msra.mxu0 0.0
    %6044 = vmatpush.xpose.msra.mxu0 0.0
    %6045 = vmatpush.xpose.msra.mxu0 0.0
    %6046 = vmatpush.xpose.msra.mxu0 0.0
    %6047 = vmatpush.xpose.msra.mxu0 0.0
    %6048 = vmatpush.xpose.msra.mxu0 0.0
    %6049 = vmatpush.xpose.msra.mxu0 0.0
    %6050 = vmatpush.xpose.msra.mxu0 0.0
    %6051 = vmatpush.xpose.msra.mxu0 0.0
    %6052 = vmatpush.xpose.msra.mxu0 0.0
    %6053 = vmatpush.xpose.msra.mxu0 0.0
    %6054 = vmatpush.xpose.msra.mxu0 %v5167
    %6055 = vmatmul.f32.gmra.mxu0 %v4719
    %v6056 = vpop.f32.mrf.mxu0
    %v6057 = vadd.f32 0.0, %v6056
    %6058 = vdwg.mxu0
    %6059 = vmatpush.xpose.msra.mxu0 0.0
    %6060 = vmatpush.xpose.msra.mxu0 0.0
    %6061 = vmatpush.xpose.msra.mxu0 0.0
    %6062 = vmatpush.xpose.msra.mxu0 0.0
    %6063 = vmatpush.xpose.msra.mxu0 0.0
    %6064 = vmatpush.xpose.msra.mxu0 0.0
    %6065 = vmatpush.xpose.msra.mxu0 0.0
    %6066 = vmatpush.xpose.msra.mxu0 0.0
    %6067 = vmatpush.xpose.msra.mxu0 0.0
    %6068 = vmatpush.xpose.msra.mxu0 0.0
    %6069 = vmatpush.xpose.msra.mxu0 0.0
    %6070 = vmatpush.xpose.msra.mxu0 0.0
    %6071 = vmatpush.xpose.msra.mxu0 0.0
    %6072 = vmatpush.xpose.msra.mxu0 0.0
    %6073 = vmatpush.xpose.msra.mxu0 0.0
    %6074 = vmatpush.xpose.msra.mxu0 %v5195
    %6075 = vmatmul.f32.gmra.mxu0 %v4747
    %v6076 = vpop.f32.mrf.mxu0
    %v6077 = vadd.f32 %v6057, %v6076
    %6078 = vdwg.mxu0
    %6079 = vmatpush.xpose.msra.mxu0 0.0
    %6080 = vmatpush.xpose.msra.mxu0 0.0
    %6081 = vmatpush.xpose.msra.mxu0 0.0
    %6082 = vmatpush.xpose.msra.mxu0 0.0
    %6083 = vmatpush.xpose.msra.mxu0 0.0
    %6084 = vmatpush.xpose.msra.mxu0 0.0
    %6085 = vmatpush.xpose.msra.mxu0 0.0
    %6086 = vmatpush.xpose.msra.mxu0 0.0
    %6087 = vmatpush.xpose.msra.mxu0 0.0
    %6088 = vmatpush.xpose.msra.mxu0 0.0
    %6089 = vmatpush.xpose.msra.mxu0 0.0
    %6090 = vmatpush.xpose.msra.mxu0 0.0
    %6091 = vmatpush.xpose.msra.mxu0 0.0
    %6092 = vmatpush.xpose.msra.mxu0 0.0
    %6093 = vmatpush.xpose.msra.mxu0 0.0
    %6094 = vmatpush.xpose.msra.mxu0 %v5223
    %6095 = vmatmul.f32.gmra.mxu0 %v4775
    %v6096 = vpop.f32.mrf.mxu0
    %v6097 = vadd.f32 0.0, %v6096
    %6098 = vdwg.mxu0
    %6099 = vmatpush.xpose.msra.mxu0 0.0
    %6100 = vmatpush.xpose.msra.mxu0 0.0
    %6101 = vmatpush.xpose.msra.mxu0 0.0
    %6102 = vmatpush.xpose.msra.mxu0 0.0
    %6103 = vmatpush.xpose.msra.mxu0 0.0
    %6104 = vmatpush.xpose.msra.mxu0 0.0
    %6105 = vmatpush.xpose.msra.mxu0 0.0
    %6106 = vmatpush.xpose.msra.mxu0 0.0
    %6107 = vmatpush.xpose.msra.mxu0 0.0
    %6108 = vmatpush.xpose.msra.mxu0 0.0
    %6109 = vmatpush.xpose.msra.mxu0 0.0
    %6110 = vmatpush.xpose.msra.mxu0 0.0
    %6111 = vmatpush.xpose.msra.mxu0 0.0
    %6112 = vmatpush.xpose.msra.mxu0 0.0
    %6113 = vmatpush.xpose.msra.mxu0 0.0
    %6114 = vmatpush.xpose.msra.mxu0 %v5251
    %6115 = vmatmul.f32.gmra.mxu0 %v4803
    %v6116 = vpop.f32.mrf.mxu0
    %v6117 = vadd.f32 %v6097, %v6116
    %6118 = vdwg.mxu0
    %6119 = vmatpush.xpose.msra.mxu0 0.0
    %6120 = vmatpush.xpose.msra.mxu0 0.0
    %6121 = vmatpush.xpose.msra.mxu0 0.0
    %6122 = vmatpush.xpose.msra.mxu0 0.0
    %6123 = vmatpush.xpose.msra.mxu0 0.0
    %6124 = vmatpush.xpose.msra.mxu0 0.0
    %6125 = vmatpush.xpose.msra.mxu0 0.0
    %6126 = vmatpush.xpose.msra.mxu0 0.0
    %6127 = vmatpush.xpose.msra.mxu0 0.0
    %6128 = vmatpush.xpose.msra.mxu0 0.0
    %6129 = vmatpush.xpose.msra.mxu0 0.0
    %6130 = vmatpush.xpose.msra.mxu0 0.0
    %6131 = vmatpush.xpose.msra.mxu0 0.0
    %6132 = vmatpush.xpose.msra.mxu0 0.0
    %6133 = vmatpush.xpose.msra.mxu0 0.0
    %6134 = vmatpush.xpose.msra.mxu0 %v5279
    %6135 = vmatmul.f32.gmra.mxu0 %v4831
    %v6136 = vpop.f32.mrf.mxu0
    %v6137 = vadd.f32 0.0, %v6136
    %6138 = vdwg.mxu0
    %6139 = vmatpush.xpose.msra.mxu0 0.0
    %6140 = vmatpush.xpose.msra.mxu0 0.0
    %6141 = vmatpush.xpose.msra.mxu0 0.0
    %6142 = vmatpush.xpose.msra.mxu0 0.0
    %6143 = vmatpush.xpose.msra.mxu0 0.0
    %6144 = vmatpush.xpose.msra.mxu0 0.0
    %6145 = vmatpush.xpose.msra.mxu0 0.0
    %6146 = vmatpush.xpose.msra.mxu0 0.0
    %6147 = vmatpush.xpose.msra.mxu0 0.0
    %6148 = vmatpush.xpose.msra.mxu0 0.0
    %6149 = vmatpush.xpose.msra.mxu0 0.0
    %6150 = vmatpush.xpose.msra.mxu0 0.0
    %6151 = vmatpush.xpose.msra.mxu0 0.0
    %6152 = vmatpush.xpose.msra.mxu0 0.0
    %6153 = vmatpush.xpose.msra.mxu0 0.0
    %6154 = vmatpush.xpose.msra.mxu0 %v5307
    %6155 = vmatmul.f32.gmra.mxu0 %v4859
    %v6156 = vpop.f32.mrf.mxu0
    %v6157 = vadd.f32 %v6137, %v6156
    %6158 = vdwg.mxu0
    %6159 = vmatpush.xpose.msra.mxu0 0.0
    %6160 = vmatpush.xpose.msra.mxu0 0.0
    %6161 = vmatpush.xpose.msra.mxu0 0.0
    %6162 = vmatpush.xpose.msra.mxu0 0.0
    %6163 = vmatpush.xpose.msra.mxu0 0.0
    %6164 = vmatpush.xpose.msra.mxu0 0.0
    %6165 = vmatpush.xpose.msra.mxu0 0.0
    %6166 = vmatpush.xpose.msra.mxu0 0.0
    %6167 = vmatpush.xpose.msra.mxu0 0.0
    %6168 = vmatpush.xpose.msra.mxu0 0.0
    %6169 = vmatpush.xpose.msra.mxu0 0.0
    %6170 = vmatpush.xpose.msra.mxu0 0.0
    %6171 = vmatpush.xpose.msra.mxu0 0.0
    %6172 = vmatpush.xpose.msra.mxu0 0.0
    %6173 = vmatpush.xpose.msra.mxu0 0.0
    %6174 = vmatpush.xpose.msra.mxu0 %v5335
    %6175 = vmatmul.f32.gmra.mxu0 %v4887
    %v6176 = vpop.f32.mrf.mxu0
    %v6177 = vadd.f32 0.0, %v6176
    %6178 = vdwg.mxu0
    %6179 = vmatpush.xpose.msra.mxu0 0.0
    %6180 = vmatpush.xpose.msra.mxu0 0.0
    %6181 = vmatpush.xpose.msra.mxu0 0.0
    %6182 = vmatpush.xpose.msra.mxu0 0.0
    %6183 = vmatpush.xpose.msra.mxu0 0.0
    %6184 = vmatpush.xpose.msra.mxu0 0.0
    %6185 = vmatpush.xpose.msra.mxu0 0.0
    %6186 = vmatpush.xpose.msra.mxu0 0.0
    %6187 = vmatpush.xpose.msra.mxu0 0.0
    %6188 = vmatpush.xpose.msra.mxu0 0.0
    %6189 = vmatpush.xpose.msra.mxu0 0.0
    %6190 = vmatpush.xpose.msra.mxu0 0.0
    %6191 = vmatpush.xpose.msra.mxu0 0.0
    %6192 = vmatpush.xpose.msra.mxu0 0.0
    %6193 = vmatpush.xpose.msra.mxu0 0.0
    %6194 = vmatpush.xpose.msra.mxu0 %v5363
    %6195 = vmatmul.f32.gmra.mxu0 %v4915
    %v6196 = vpop.f32.mrf.mxu0
    %v6197 = vadd.f32 %v6177, %v6196
    %6198 = vdwg.mxu0
    %6199 = vmatpush.xpose.msra.mxu0 0.0
    %6200 = vmatpush.xpose.msra.mxu0 0.0
    %6201 = vmatpush.xpose.msra.mxu0 0.0
    %6202 = vmatpush.xpose.msra.mxu0 0.0
    %6203 = vmatpush.xpose.msra.mxu0 0.0
    %6204 = vmatpush.xpose.msra.mxu0 0.0
    %6205 = vmatpush.xpose.msra.mxu0 0.0
    %6206 = vmatpush.xpose.msra.mxu0 0.0
    %6207 = vmatpush.xpose.msra.mxu0 0.0
    %6208 = vmatpush.xpose.msra.mxu0 0.0
    %6209 = vmatpush.xpose.msra.mxu0 0.0
    %6210 = vmatpush.xpose.msra.mxu0 0.0
    %6211 = vmatpush.xpose.msra.mxu0 0.0
    %6212 = vmatpush.xpose.msra.mxu0 0.0
    %6213 = vmatpush.xpose.msra.mxu0 0.0
    %6214 = vmatpush.xpose.msra.mxu0 %v5391
    %6215 = vmatmul.f32.gmra.mxu0 %v4943
    %v6216 = vpop.f32.mrf.mxu0
    %v6217 = vadd.f32 0.0, %v6216
    %6218 = vdwg.mxu0
    %6219 = vmatpush.xpose.msra.mxu0 0.0
    %6220 = vmatpush.xpose.msra.mxu0 0.0
    %6221 = vmatpush.xpose.msra.mxu0 0.0
    %6222 = vmatpush.xpose.msra.mxu0 0.0
    %6223 = vmatpush.xpose.msra.mxu0 0.0
    %6224 = vmatpush.xpose.msra.mxu0 0.0
    %6225 = vmatpush.xpose.msra.mxu0 0.0
    %6226 = vmatpush.xpose.msra.mxu0 0.0
    %6227 = vmatpush.xpose.msra.mxu0 0.0
    %6228 = vmatpush.xpose.msra.mxu0 0.0
    %6229 = vmatpush.xpose.msra.mxu0 0.0
    %6230 = vmatpush.xpose.msra.mxu0 0.0
    %6231 = vmatpush.xpose.msra.mxu0 0.0
    %6232 = vmatpush.xpose.msra.mxu0 0.0
    %6233 = vmatpush.xpose.msra.mxu0 0.0
    %6234 = vmatpush.xpose.msra.mxu0 %v5419
    %6235 = vmatmul.f32.gmra.mxu0 %v4971
    %v6236 = vpop.f32.mrf.mxu0
    %v6237 = vadd.f32 %v6217, %v6236
    %6238 = vdwg.mxu0
    %6239 = vmatpush.xpose.msra.mxu0 0.0
    %6240 = vmatpush.xpose.msra.mxu0 0.0
    %6241 = vmatpush.xpose.msra.mxu0 0.0
    %6242 = vmatpush.xpose.msra.mxu0 0.0
    %6243 = vmatpush.xpose.msra.mxu0 0.0
    %6244 = vmatpush.xpose.msra.mxu0 0.0
    %6245 = vmatpush.xpose.msra.mxu0 0.0
    %6246 = vmatpush.xpose.msra.mxu0 0.0
    %6247 = vmatpush.xpose.msra.mxu0 0.0
    %6248 = vmatpush.xpose.msra.mxu0 0.0
    %6249 = vmatpush.xpose.msra.mxu0 0.0
    %6250 = vmatpush.xpose.msra.mxu0 0.0
    %6251 = vmatpush.xpose.msra.mxu0 0.0
    %6252 = vmatpush.xpose.msra.mxu0 0.0
    %6253 = vmatpush.xpose.msra.mxu0 0.0
    %6254 = vmatpush.xpose.msra.mxu0 %v5447
    %6255 = vmatmul.f32.gmra.mxu0 %v4999
    %v6256 = vpop.f32.mrf.mxu0
    %v6257 = vadd.f32 0.0, %v6256
    %6258 = vdwg.mxu0
    %6259 = vmatpush.xpose.msra.mxu0 0.0
    %6260 = vmatpush.xpose.msra.mxu0 0.0
    %6261 = vmatpush.xpose.msra.mxu0 0.0
    %6262 = vmatpush.xpose.msra.mxu0 0.0
    %6263 = vmatpush.xpose.msra.mxu0 0.0
    %6264 = vmatpush.xpose.msra.mxu0 0.0
    %6265 = vmatpush.xpose.msra.mxu0 0.0
    %6266 = vmatpush.xpose.msra.mxu0 0.0
    %6267 = vmatpush.xpose.msra.mxu0 0.0
    %6268 = vmatpush.xpose.msra.mxu0 0.0
    %6269 = vmatpush.xpose.msra.mxu0 0.0
    %6270 = vmatpush.xpose.msra.mxu0 0.0
    %6271 = vmatpush.xpose.msra.mxu0 0.0
    %6272 = vmatpush.xpose.msra.mxu0 0.0
    %6273 = vmatpush.xpose.msra.mxu0 0.0
    %6274 = vmatpush.xpose.msra.mxu0 %v5475
    %6275 = vmatmul.f32.gmra.mxu0 %v5027
    %v6276 = vpop.f32.mrf.mxu0
    %v6277 = vadd.f32 %v6257, %v6276
    %6278 = vdwg.mxu0
    %6279 = vmatpush.xpose.msra.mxu0 0.0
    %6280 = vmatpush.xpose.msra.mxu0 0.0
    %6281 = vmatpush.xpose.msra.mxu0 0.0
    %6282 = vmatpush.xpose.msra.mxu0 0.0
    %6283 = vmatpush.xpose.msra.mxu0 0.0
    %6284 = vmatpush.xpose.msra.mxu0 0.0
    %6285 = vmatpush.xpose.msra.mxu0 0.0
    %6286 = vmatpush.xpose.msra.mxu0 0.0
    %6287 = vmatpush.xpose.msra.mxu0 0.0
    %6288 = vmatpush.xpose.msra.mxu0 0.0
    %6289 = vmatpush.xpose.msra.mxu0 0.0
    %6290 = vmatpush.xpose.msra.mxu0 0.0
    %6291 = vmatpush.xpose.msra.mxu0 0.0
    %6292 = vmatpush.xpose.msra.mxu0 0.0
    %6293 = vmatpush.xpose.msra.mxu0 0.0
    %6294 = vmatpush.xpose.msra.mxu0 %v5503
    %6295 = vmatmul.f32.gmra.mxu0 %v5055
    %v6296 = vpop.f32.mrf.mxu0
    %v6297 = vadd.f32 0.0, %v6296
    %6298 = vdwg.mxu0
    %6299 = vmatpush.xpose.msra.mxu0 0.0
    %6300 = vmatpush.xpose.msra.mxu0 0.0
    %6301 = vmatpush.xpose.msra.mxu0 0.0
    %6302 = vmatpush.xpose.msra.mxu0 0.0
    %6303 = vmatpush.xpose.msra.mxu0 0.0
    %6304 = vmatpush.xpose.msra.mxu0 0.0
    %6305 = vmatpush.xpose.msra.mxu0 0.0
    %6306 = vmatpush.xpose.msra.mxu0 0.0
    %6307 = vmatpush.xpose.msra.mxu0 0.0
    %6308 = vmatpush.xpose.msra.mxu0 0.0
    %6309 = vmatpush.xpose.msra.mxu0 0.0
    %6310 = vmatpush.xpose.msra.mxu0 0.0
    %6311 = vmatpush.xpose.msra.mxu0 0.0
    %6312 = vmatpush.xpose.msra.mxu0 0.0
    %6313 = vmatpush.xpose.msra.mxu0 0.0
    %6314 = vmatpush.xpose.msra.mxu0 %v5531
    %6315 = vmatmul.f32.gmra.mxu0 %v5083
    %v6316 = vpop.f32.mrf.mxu0
    %v6317 = vadd.f32 %v6297, %v6316
    %6318 = vdwg.mxu0
    %6319 = vmatpush.xpose.msra.mxu0 0.0
    %6320 = vmatpush.xpose.msra.mxu0 0.0
    %6321 = vmatpush.xpose.msra.mxu0 0.0
    %6322 = vmatpush.xpose.msra.mxu0 0.0
    %6323 = vmatpush.xpose.msra.mxu0 0.0
    %6324 = vmatpush.xpose.msra.mxu0 0.0
    %6325 = vmatpush.xpose.msra.mxu0 0.0
    %6326 = vmatpush.xpose.msra.mxu0 0.0
    %6327 = vmatpush.xpose.msra.mxu0 0.0
    %6328 = vmatpush.xpose.msra.mxu0 0.0
    %6329 = vmatpush.xpose.msra.mxu0 0.0
    %6330 = vmatpush.xpose.msra.mxu0 0.0
    %6331 = vmatpush.xpose.msra.mxu0 0.0
    %6332 = vmatpush.xpose.msra.mxu0 0.0
    %6333 = vmatpush.xpose.msra.mxu0 0.0
    %6334 = vmatpush.xpose.msra.mxu0 %v5559
    %6335 = vmatmul.f32.gmra.mxu0 %v5111
    %v6336 = vpop.f32.mrf.mxu0
    %v6337 = vadd.f32 0.0, %v6336
    %6338 = vdwg.mxu0
    %6339 = vmatpush.xpose.msra.mxu0 0.0
    %6340 = vmatpush.xpose.msra.mxu0 0.0
    %6341 = vmatpush.xpose.msra.mxu0 0.0
    %6342 = vmatpush.xpose.msra.mxu0 0.0
    %6343 = vmatpush.xpose.msra.mxu0 0.0
    %6344 = vmatpush.xpose.msra.mxu0 0.0
    %6345 = vmatpush.xpose.msra.mxu0 0.0
    %6346 = vmatpush.xpose.msra.mxu0 0.0
    %6347 = vmatpush.xpose.msra.mxu0 0.0
    %6348 = vmatpush.xpose.msra.mxu0 0.0
    %6349 = vmatpush.xpose.msra.mxu0 0.0
    %6350 = vmatpush.xpose.msra.mxu0 0.0
    %6351 = vmatpush.xpose.msra.mxu0 0.0
    %6352 = vmatpush.xpose.msra.mxu0 0.0
    %6353 = vmatpush.xpose.msra.mxu0 0.0
    %6354 = vmatpush.xpose.msra.mxu0 %v5587
    %6355 = vmatmul.f32.gmra.mxu0 %v5139
    %v6356 = vpop.f32.mrf.mxu0
    %v6357 = vadd.f32 %v6337, %v6356
    %6358 = vdwg.mxu0
    %6359 = vmatpush.xpose.msra.mxu0 0.0
    %6360 = vmatpush.xpose.msra.mxu0 0.0
    %6361 = vmatpush.xpose.msra.mxu0 0.0
    %6362 = vmatpush.xpose.msra.mxu0 0.0
    %6363 = vmatpush.xpose.msra.mxu0 0.0
    %6364 = vmatpush.xpose.msra.mxu0 0.0
    %6365 = vmatpush.xpose.msra.mxu0 0.0
    %6366 = vmatpush.xpose.msra.mxu0 0.0
    %6367 = vmatpush.xpose.msra.mxu0 0.0
    %6368 = vmatpush.xpose.msra.mxu0 0.0
    %6369 = vmatpush.xpose.msra.mxu0 0.0
    %6370 = vmatpush.xpose.msra.mxu0 0.0
    %6371 = vmatpush.xpose.msra.mxu0 0.0
    %6372 = vmatpush.xpose.msra.mxu0 0.0
    %6373 = vmatpush.xpose.msra.mxu0 0.0
    %6374 = vmatpush.xpose.msra.mxu0 %v5169
    %6375 = vmatmul.f32.gmra.mxu0 %v4721
    %v6376 = vpop.f32.mrf.mxu0
    %v6377 = vadd.f32 0.0, %v6376
    %6378 = vdwg.mxu0
    %6379 = vmatpush.xpose.msra.mxu0 0.0
    %6380 = vmatpush.xpose.msra.mxu0 0.0
    %6381 = vmatpush.xpose.msra.mxu0 0.0
    %6382 = vmatpush.xpose.msra.mxu0 0.0
    %6383 = vmatpush.xpose.msra.mxu0 0.0
    %6384 = vmatpush.xpose.msra.mxu0 0.0
    %6385 = vmatpush.xpose.msra.mxu0 0.0
    %6386 = vmatpush.xpose.msra.mxu0 0.0
    %6387 = vmatpush.xpose.msra.mxu0 0.0
    %6388 = vmatpush.xpose.msra.mxu0 0.0
    %6389 = vmatpush.xpose.msra.mxu0 0.0
    %6390 = vmatpush.xpose.msra.mxu0 0.0
    %6391 = vmatpush.xpose.msra.mxu0 0.0
    %6392 = vmatpush.xpose.msra.mxu0 0.0
    %6393 = vmatpush.xpose.msra.mxu0 0.0
    %6394 = vmatpush.xpose.msra.mxu0 %v5197
    %6395 = vmatmul.f32.gmra.mxu0 %v4749
    %v6396 = vpop.f32.mrf.mxu0
    %v6397 = vadd.f32 %v6377, %v6396
    %6398 = vdwg.mxu0
    %6399 = vmatpush.xpose.msra.mxu0 0.0
    %6400 = vmatpush.xpose.msra.mxu0 0.0
    %6401 = vmatpush.xpose.msra.mxu0 0.0
    %6402 = vmatpush.xpose.msra.mxu0 0.0
    %6403 = vmatpush.xpose.msra.mxu0 0.0
    %6404 = vmatpush.xpose.msra.mxu0 0.0
    %6405 = vmatpush.xpose.msra.mxu0 0.0
    %6406 = vmatpush.xpose.msra.mxu0 0.0
    %6407 = vmatpush.xpose.msra.mxu0 0.0
    %6408 = vmatpush.xpose.msra.mxu0 0.0
    %6409 = vmatpush.xpose.msra.mxu0 0.0
    %6410 = vmatpush.xpose.msra.mxu0 0.0
    %6411 = vmatpush.xpose.msra.mxu0 0.0
    %6412 = vmatpush.xpose.msra.mxu0 0.0
    %6413 = vmatpush.xpose.msra.mxu0 0.0
    %6414 = vmatpush.xpose.msra.mxu0 %v5225
    %6415 = vmatmul.f32.gmra.mxu0 %v4777
    %v6416 = vpop.f32.mrf.mxu0
    %v6417 = vadd.f32 0.0, %v6416
    %6418 = vdwg.mxu0
    %6419 = vmatpush.xpose.msra.mxu0 0.0
    %6420 = vmatpush.xpose.msra.mxu0 0.0
    %6421 = vmatpush.xpose.msra.mxu0 0.0
    %6422 = vmatpush.xpose.msra.mxu0 0.0
    %6423 = vmatpush.xpose.msra.mxu0 0.0
    %6424 = vmatpush.xpose.msra.mxu0 0.0
    %6425 = vmatpush.xpose.msra.mxu0 0.0
    %6426 = vmatpush.xpose.msra.mxu0 0.0
    %6427 = vmatpush.xpose.msra.mxu0 0.0
    %6428 = vmatpush.xpose.msra.mxu0 0.0
    %6429 = vmatpush.xpose.msra.mxu0 0.0
    %6430 = vmatpush.xpose.msra.mxu0 0.0
    %6431 = vmatpush.xpose.msra.mxu0 0.0
    %6432 = vmatpush.xpose.msra.mxu0 0.0
    %6433 = vmatpush.xpose.msra.mxu0 0.0
    %6434 = vmatpush.xpose.msra.mxu0 %v5253
    %6435 = vmatmul.f32.gmra.mxu0 %v4805
    %v6436 = vpop.f32.mrf.mxu0
    %v6437 = vadd.f32 %v6417, %v6436
    %6438 = vdwg.mxu0
    %6439 = vmatpush.xpose.msra.mxu0 0.0
    %6440 = vmatpush.xpose.msra.mxu0 0.0
    %6441 = vmatpush.xpose.msra.mxu0 0.0
    %6442 = vmatpush.xpose.msra.mxu0 0.0
    %6443 = vmatpush.xpose.msra.mxu0 0.0
    %6444 = vmatpush.xpose.msra.mxu0 0.0
    %6445 = vmatpush.xpose.msra.mxu0 0.0
    %6446 = vmatpush.xpose.msra.mxu0 0.0
    %6447 = vmatpush.xpose.msra.mxu0 0.0
    %6448 = vmatpush.xpose.msra.mxu0 0.0
    %6449 = vmatpush.xpose.msra.mxu0 0.0
    %6450 = vmatpush.xpose.msra.mxu0 0.0
    %6451 = vmatpush.xpose.msra.mxu0 0.0
    %6452 = vmatpush.xpose.msra.mxu0 0.0
    %6453 = vmatpush.xpose.msra.mxu0 0.0
    %6454 = vmatpush.xpose.msra.mxu0 %v5281
    %6455 = vmatmul.f32.gmra.mxu0 %v4833
    %v6456 = vpop.f32.mrf.mxu0
    %v6457 = vadd.f32 0.0, %v6456
    %6458 = vdwg.mxu0
    %6459 = vmatpush.xpose.msra.mxu0 0.0
    %6460 = vmatpush.xpose.msra.mxu0 0.0
    %6461 = vmatpush.xpose.msra.mxu0 0.0
    %6462 = vmatpush.xpose.msra.mxu0 0.0
    %6463 = vmatpush.xpose.msra.mxu0 0.0
    %6464 = vmatpush.xpose.msra.mxu0 0.0
    %6465 = vmatpush.xpose.msra.mxu0 0.0
    %6466 = vmatpush.xpose.msra.mxu0 0.0
    %6467 = vmatpush.xpose.msra.mxu0 0.0
    %6468 = vmatpush.xpose.msra.mxu0 0.0
    %6469 = vmatpush.xpose.msra.mxu0 0.0
    %6470 = vmatpush.xpose.msra.mxu0 0.0
    %6471 = vmatpush.xpose.msra.mxu0 0.0
    %6472 = vmatpush.xpose.msra.mxu0 0.0
    %6473 = vmatpush.xpose.msra.mxu0 0.0
    %6474 = vmatpush.xpose.msra.mxu0 %v5309
    %6475 = vmatmul.f32.gmra.mxu0 %v4861
    %v6476 = vpop.f32.mrf.mxu0
    %v6477 = vadd.f32 %v6457, %v6476
    %6478 = vdwg.mxu0
    %6479 = vmatpush.xpose.msra.mxu0 0.0
    %6480 = vmatpush.xpose.msra.mxu0 0.0
    %6481 = vmatpush.xpose.msra.mxu0 0.0
    %6482 = vmatpush.xpose.msra.mxu0 0.0
    %6483 = vmatpush.xpose.msra.mxu0 0.0
    %6484 = vmatpush.xpose.msra.mxu0 0.0
    %6485 = vmatpush.xpose.msra.mxu0 0.0
    %6486 = vmatpush.xpose.msra.mxu0 0.0
    %6487 = vmatpush.xpose.msra.mxu0 0.0
    %6488 = vmatpush.xpose.msra.mxu0 0.0
    %6489 = vmatpush.xpose.msra.mxu0 0.0
    %6490 = vmatpush.xpose.msra.mxu0 0.0
    %6491 = vmatpush.xpose.msra.mxu0 0.0
    %6492 = vmatpush.xpose.msra.mxu0 0.0
    %6493 = vmatpush.xpose.msra.mxu0 0.0
    %6494 = vmatpush.xpose.msra.mxu0 %v5337
    %6495 = vmatmul.f32.gmra.mxu0 %v4889
    %v6496 = vpop.f32.mrf.mxu0
    %v6497 = vadd.f32 0.0, %v6496
    %6498 = vdwg.mxu0
    %6499 = vmatpush.xpose.msra.mxu0 0.0
    %6500 = vmatpush.xpose.msra.mxu0 0.0
    %6501 = vmatpush.xpose.msra.mxu0 0.0
    %6502 = vmatpush.xpose.msra.mxu0 0.0
    %6503 = vmatpush.xpose.msra.mxu0 0.0
    %6504 = vmatpush.xpose.msra.mxu0 0.0
    %6505 = vmatpush.xpose.msra.mxu0 0.0
    %6506 = vmatpush.xpose.msra.mxu0 0.0
    %6507 = vmatpush.xpose.msra.mxu0 0.0
    %6508 = vmatpush.xpose.msra.mxu0 0.0
    %6509 = vmatpush.xpose.msra.mxu0 0.0
    %6510 = vmatpush.xpose.msra.mxu0 0.0
    %6511 = vmatpush.xpose.msra.mxu0 0.0
    %6512 = vmatpush.xpose.msra.mxu0 0.0
    %6513 = vmatpush.xpose.msra.mxu0 0.0
    %6514 = vmatpush.xpose.msra.mxu0 %v5365
    %6515 = vmatmul.f32.gmra.mxu0 %v4917
    %v6516 = vpop.f32.mrf.mxu0
    %v6517 = vadd.f32 %v6497, %v6516
    %6518 = vdwg.mxu0
    %6519 = vmatpush.xpose.msra.mxu0 0.0
    %6520 = vmatpush.xpose.msra.mxu0 0.0
    %6521 = vmatpush.xpose.msra.mxu0 0.0
    %6522 = vmatpush.xpose.msra.mxu0 0.0
    %6523 = vmatpush.xpose.msra.mxu0 0.0
    %6524 = vmatpush.xpose.msra.mxu0 0.0
    %6525 = vmatpush.xpose.msra.mxu0 0.0
    %6526 = vmatpush.xpose.msra.mxu0 0.0
    %6527 = vmatpush.xpose.msra.mxu0 0.0
    %6528 = vmatpush.xpose.msra.mxu0 0.0
    %6529 = vmatpush.xpose.msra.mxu0 0.0
    %6530 = vmatpush.xpose.msra.mxu0 0.0
    %6531 = vmatpush.xpose.msra.mxu0 0.0
    %6532 = vmatpush.xpose.msra.mxu0 0.0
    %6533 = vmatpush.xpose.msra.mxu0 0.0
    %6534 = vmatpush.xpose.msra.mxu0 %v5393
    %6535 = vmatmul.f32.gmra.mxu0 %v4945
    %v6536 = vpop.f32.mrf.mxu0
    %v6537 = vadd.f32 0.0, %v6536
    %6538 = vdwg.mxu0
    %6539 = vmatpush.xpose.msra.mxu0 0.0
    %6540 = vmatpush.xpose.msra.mxu0 0.0
    %6541 = vmatpush.xpose.msra.mxu0 0.0
    %6542 = vmatpush.xpose.msra.mxu0 0.0
    %6543 = vmatpush.xpose.msra.mxu0 0.0
    %6544 = vmatpush.xpose.msra.mxu0 0.0
    %6545 = vmatpush.xpose.msra.mxu0 0.0
    %6546 = vmatpush.xpose.msra.mxu0 0.0
    %6547 = vmatpush.xpose.msra.mxu0 0.0
    %6548 = vmatpush.xpose.msra.mxu0 0.0
    %6549 = vmatpush.xpose.msra.mxu0 0.0
    %6550 = vmatpush.xpose.msra.mxu0 0.0
    %6551 = vmatpush.xpose.msra.mxu0 0.0
    %6552 = vmatpush.xpose.msra.mxu0 0.0
    %6553 = vmatpush.xpose.msra.mxu0 0.0
    %6554 = vmatpush.xpose.msra.mxu0 %v5421
    %6555 = vmatmul.f32.gmra.mxu0 %v4973
    %v6556 = vpop.f32.mrf.mxu0
    %v6557 = vadd.f32 %v6537, %v6556
    %6558 = vdwg.mxu0
    %6559 = vmatpush.xpose.msra.mxu0 0.0
    %6560 = vmatpush.xpose.msra.mxu0 0.0
    %6561 = vmatpush.xpose.msra.mxu0 0.0
    %6562 = vmatpush.xpose.msra.mxu0 0.0
    %6563 = vmatpush.xpose.msra.mxu0 0.0
    %6564 = vmatpush.xpose.msra.mxu0 0.0
    %6565 = vmatpush.xpose.msra.mxu0 0.0
    %6566 = vmatpush.xpose.msra.mxu0 0.0
    %6567 = vmatpush.xpose.msra.mxu0 0.0
    %6568 = vmatpush.xpose.msra.mxu0 0.0
    %6569 = vmatpush.xpose.msra.mxu0 0.0
    %6570 = vmatpush.xpose.msra.mxu0 0.0
    %6571 = vmatpush.xpose.msra.mxu0 0.0
    %6572 = vmatpush.xpose.msra.mxu0 0.0
    %6573 = vmatpush.xpose.msra.mxu0 0.0
    %6574 = vmatpush.xpose.msra.mxu0 %v5449
    %6575 = vmatmul.f32.gmra.mxu0 %v5001
    %v6576 = vpop.f32.mrf.mxu0
    %v6577 = vadd.f32 0.0, %v6576
    %6578 = vdwg.mxu0
    %6579 = vmatpush.xpose.msra.mxu0 0.0
    %6580 = vmatpush.xpose.msra.mxu0 0.0
    %6581 = vmatpush.xpose.msra.mxu0 0.0
    %6582 = vmatpush.xpose.msra.mxu0 0.0
    %6583 = vmatpush.xpose.msra.mxu0 0.0
    %6584 = vmatpush.xpose.msra.mxu0 0.0
    %6585 = vmatpush.xpose.msra.mxu0 0.0
    %6586 = vmatpush.xpose.msra.mxu0 0.0
    %6587 = vmatpush.xpose.msra.mxu0 0.0
    %6588 = vmatpush.xpose.msra.mxu0 0.0
    %6589 = vmatpush.xpose.msra.mxu0 0.0
    %6590 = vmatpush.xpose.msra.mxu0 0.0
    %6591 = vmatpush.xpose.msra.mxu0 0.0
    %6592 = vmatpush.xpose.msra.mxu0 0.0
    %6593 = vmatpush.xpose.msra.mxu0 0.0
    %6594 = vmatpush.xpose.msra.mxu0 %v5477
    %6595 = vmatmul.f32.gmra.mxu0 %v5029
    %v6596 = vpop.f32.mrf.mxu0
    %v6597 = vadd.f32 %v6577, %v6596
    %6598 = vdwg.mxu0
    %6599 = vmatpush.xpose.msra.mxu0 0.0
    %6600 = vmatpush.xpose.msra.mxu0 0.0
    %6601 = vmatpush.xpose.msra.mxu0 0.0
    %6602 = vmatpush.xpose.msra.mxu0 0.0
    %6603 = vmatpush.xpose.msra.mxu0 0.0
    %6604 = vmatpush.xpose.msra.mxu0 0.0
    %6605 = vmatpush.xpose.msra.mxu0 0.0
    %6606 = vmatpush.xpose.msra.mxu0 0.0
    %6607 = vmatpush.xpose.msra.mxu0 0.0
    %6608 = vmatpush.xpose.msra.mxu0 0.0
    %6609 = vmatpush.xpose.msra.mxu0 0.0
    %6610 = vmatpush.xpose.msra.mxu0 0.0
    %6611 = vmatpush.xpose.msra.mxu0 0.0
    %6612 = vmatpush.xpose.msra.mxu0 0.0
    %6613 = vmatpush.xpose.msra.mxu0 0.0
    %6614 = vmatpush.xpose.msra.mxu0 %v5505
    %6615 = vmatmul.f32.gmra.mxu0 %v5057
    %v6616 = vpop.f32.mrf.mxu0
    %v6617 = vadd.f32 0.0, %v6616
    %6618 = vdwg.mxu0
    %6619 = vmatpush.xpose.msra.mxu0 0.0
    %6620 = vmatpush.xpose.msra.mxu0 0.0
    %6621 = vmatpush.xpose.msra.mxu0 0.0
    %6622 = vmatpush.xpose.msra.mxu0 0.0
    %6623 = vmatpush.xpose.msra.mxu0 0.0
    %6624 = vmatpush.xpose.msra.mxu0 0.0
    %6625 = vmatpush.xpose.msra.mxu0 0.0
    %6626 = vmatpush.xpose.msra.mxu0 0.0
    %6627 = vmatpush.xpose.msra.mxu0 0.0
    %6628 = vmatpush.xpose.msra.mxu0 0.0
    %6629 = vmatpush.xpose.msra.mxu0 0.0
    %6630 = vmatpush.xpose.msra.mxu0 0.0
    %6631 = vmatpush.xpose.msra.mxu0 0.0
    %6632 = vmatpush.xpose.msra.mxu0 0.0
    %6633 = vmatpush.xpose.msra.mxu0 0.0
    %6634 = vmatpush.xpose.msra.mxu0 %v5533
    %6635 = vmatmul.f32.gmra.mxu0 %v5085
    %v6636 = vpop.f32.mrf.mxu0
    %v6637 = vadd.f32 %v6617, %v6636
    %6638 = vdwg.mxu0
    %6639 = vmatpush.xpose.msra.mxu0 0.0
    %6640 = vmatpush.xpose.msra.mxu0 0.0
    %6641 = vmatpush.xpose.msra.mxu0 0.0
    %6642 = vmatpush.xpose.msra.mxu0 0.0
    %6643 = vmatpush.xpose.msra.mxu0 0.0
    %6644 = vmatpush.xpose.msra.mxu0 0.0
    %6645 = vmatpush.xpose.msra.mxu0 0.0
    %6646 = vmatpush.xpose.msra.mxu0 0.0
    %6647 = vmatpush.xpose.msra.mxu0 0.0
    %6648 = vmatpush.xpose.msra.mxu0 0.0
    %6649 = vmatpush.xpose.msra.mxu0 0.0
    %6650 = vmatpush.xpose.msra.mxu0 0.0
    %6651 = vmatpush.xpose.msra.mxu0 0.0
    %6652 = vmatpush.xpose.msra.mxu0 0.0
    %6653 = vmatpush.xpose.msra.mxu0 0.0
    %6654 = vmatpush.xpose.msra.mxu0 %v5561
    %6655 = vmatmul.f32.gmra.mxu0 %v5113
    %v6656 = vpop.f32.mrf.mxu0
    %v6657 = vadd.f32 0.0, %v6656
    %6658 = vdwg.mxu0
    %6659 = vmatpush.xpose.msra.mxu0 0.0
    %6660 = vmatpush.xpose.msra.mxu0 0.0
    %6661 = vmatpush.xpose.msra.mxu0 0.0
    %6662 = vmatpush.xpose.msra.mxu0 0.0
    %6663 = vmatpush.xpose.msra.mxu0 0.0
    %6664 = vmatpush.xpose.msra.mxu0 0.0
    %6665 = vmatpush.xpose.msra.mxu0 0.0
    %6666 = vmatpush.xpose.msra.mxu0 0.0
    %6667 = vmatpush.xpose.msra.mxu0 0.0
    %6668 = vmatpush.xpose.msra.mxu0 0.0
    %6669 = vmatpush.xpose.msra.mxu0 0.0
    %6670 = vmatpush.xpose.msra.mxu0 0.0
    %6671 = vmatpush.xpose.msra.mxu0 0.0
    %6672 = vmatpush.xpose.msra.mxu0 0.0
    %6673 = vmatpush.xpose.msra.mxu0 0.0
    %6674 = vmatpush.xpose.msra.mxu0 %v5589
    %6675 = vmatmul.f32.gmra.mxu0 %v5141
    %v6676 = vpop.f32.mrf.mxu0
    %v6677 = vadd.f32 %v6657, %v6676
    %6678 = vdwg.mxu0
    %v6679 = vmul.f32 %v6077, 0.0625
    %v6680 = vmul.f32 %v6117, 0.0625
    %v6681 = vmul.f32 %v6157, 0.0625
    %v6682 = vmul.f32 %v6197, 0.0625
    %v6683 = vmul.f32 %v6237, 0.0625
    %v6684 = vmul.f32 %v6277, 0.0625
    %v6685 = vmul.f32 %v6317, 0.0625
    %v6686 = vmul.f32 %v6357, 0.0625
    %v6687 = vmul.f32 %v6397, 0.0625
    %v6688 = vmul.f32 %v6437, 0.0625
    %v6689 = vmul.f32 %v6477, 0.0625
    %v6690 = vmul.f32 %v6517, 0.0625
    %v6691 = vmul.f32 %v6557, 0.0625
    %v6692 = vmul.f32 %v6597, 0.0625
    %v6693 = vmul.f32 %v6637, 0.0625
    %v6694 = vmul.f32 %v6677, 0.0625
    %vm6695 = vcmask 64512
    %v6696 = vsel %vm6695, %v6679, -inf
    %6697 = vmax.xlane.f32.xlu0 %v6696
    %v6698 = vpop.xlane.xlu0 %6697
    %v6699 = vsel %vm6695, %v6680, -inf
    %6700 = vmax.xlane.f32.xlu0 %v6699
    %v6701 = vpop.xlane.xlu0 %6700
    %v6702 = vsel %vm6695, %v6681, -inf
    %6703 = vmax.xlane.f32.xlu0 %v6702
    %v6704 = vpop.xlane.xlu0 %6703
    %v6705 = vsel %vm6695, %v6682, -inf
    %6706 = vmax.xlane.f32.xlu0 %v6705
    %v6707 = vpop.xlane.xlu0 %6706
    %v6708 = vsel %vm6695, %v6683, -inf
    %6709 = vmax.xlane.f32.xlu0 %v6708
    %v6710 = vpop.xlane.xlu0 %6709
    %v6711 = vsel %vm6695, %v6684, -inf
    %6712 = vmax.xlane.f32.xlu0 %v6711
    %v6713 = vpop.xlane.xlu0 %6712
    %v6714 = vsel %vm6695, %v6685, -inf
    %6715 = vmax.xlane.f32.xlu0 %v6714
    %v6716 = vpop.xlane.xlu0 %6715
    %v6717 = vsel %vm6695, %v6686, -inf
    %6718 = vmax.xlane.f32.xlu0 %v6717
    %v6719 = vpop.xlane.xlu0 %6718
    %v6720 = vsel %vm6695, %v6687, -inf
    %6721 = vmax.xlane.f32.xlu0 %v6720
    %v6722 = vpop.xlane.xlu0 %6721
    %v6723 = vsel %vm6695, %v6688, -inf
    %6724 = vmax.xlane.f32.xlu0 %v6723
    %v6725 = vpop.xlane.xlu0 %6724
    %v6726 = vsel %vm6695, %v6689, -inf
    %6727 = vmax.xlane.f32.xlu0 %v6726
    %v6728 = vpop.xlane.xlu0 %6727
    %v6729 = vsel %vm6695, %v6690, -inf
    %6730 = vmax.xlane.f32.xlu0 %v6729
    %v6731 = vpop.xlane.xlu0 %6730
    %v6732 = vsel %vm6695, %v6691, -inf
    %6733 = vmax.xlane.f32.xlu0 %v6732
    %v6734 = vpop.xlane.xlu0 %6733
    %v6735 = vsel %vm6695, %v6692, -inf
    %6736 = vmax.xlane.f32.xlu0 %v6735
    %v6737 = vpop.xlane.xlu0 %6736
    %v6738 = vsel %vm6695, %v6693, -inf
    %6739 = vmax.xlane.f32.xlu0 %v6738
    %v6740 = vpop.xlane.xlu0 %6739
    %v6741 = vsel %vm6695, %v6694, -inf
    %6742 = vmax.xlane.f32.xlu0 %v6741
    %v6743 = vpop.xlane.xlu0 %6742
    %v6744 = vsub.f32 %v6679, %v6698
    %v6745 = vsub.f32 %v6680, %v6701
    %v6746 = vsub.f32 %v6681, %v6704
    %v6747 = vsub.f32 %v6682, %v6707
    %v6748 = vsub.f32 %v6683, %v6710
    %v6749 = vsub.f32 %v6684, %v6713
    %v6750 = vsub.f32 %v6685, %v6716
    %v6751 = vsub.f32 %v6686, %v6719
    %v6752 = vsub.f32 %v6687, %v6722
    %v6753 = vsub.f32 %v6688, %v6725
    %v6754 = vsub.f32 %v6689, %v6728
    %v6755 = vsub.f32 %v6690, %v6731
    %v6756 = vsub.f32 %v6691, %v6734
    %v6757 = vsub.f32 %v6692, %v6737
    %v6758 = vsub.f32 %v6693, %v6740
    %v6759 = vsub.f32 %v6694, %v6743
    %v6760 = vmul.f32 %v6744, 1.442695
    %v6761 = vpow.pop %v6760
    %v6762 = vmul.f32 %v6745, 1.442695
    %v6763 = vpow.pop %v6762
    %v6764 = vmul.f32 %v6746, 1.442695
    %v6765 = vpow.pop %v6764
    %v6766 = vmul.f32 %v6747, 1.442695
    %v6767 = vpow.pop %v6766
    %v6768 = vmul.f32 %v6748, 1.442695
    %v6769 = vpow.pop %v6768
    %v6770 = vmul.f32 %v6749, 1.442695
    %v6771 = vpow.pop %v6770
    %v6772 = vmul.f32 %v6750, 1.442695
    %v6773 = vpow.pop %v6772
    %v6774 = vmul.f32 %v6751, 1.442695
    %v6775 = vpow.pop %v6774
    %v6776 = vmul.f32 %v6752, 1.442695
    %v6777 = vpow.pop %v6776
    %v6778 = vmul.f32 %v6753, 1.442695
    %v6779 = vpow.pop %v6778
    %v6780 = vmul.f32 %v6754, 1.442695
    %v6781 = vpow.pop %v6780
    %v6782 = vmul.f32 %v6755, 1.442695
    %v6783 = vpow.pop %v6782
    %v6784 = vmul.f32 %v6756, 1.442695
    %v6785 = vpow.pop %v6784
    %v6786 = vmul.f32 %v6757, 1.442695
    %v6787 = vpow.pop %v6786
    %v6788 = vmul.f32 %v6758, 1.442695
    %v6789 = vpow.pop %v6788
    %v6790 = vmul.f32 %v6759, 1.442695
    %v6791 = vpow.pop %v6790
    %v6792 = vsel %vm6695, %v6761, 0.0
    %6793 = vadd.xlane.f32.xlu0 %v6792
    %v6794 = vpop.xlane.xlu0 %6793
    %v6795 = vsel %vm6695, %v6763, 0.0
    %6796 = vadd.xlane.f32.xlu0 %v6795
    %v6797 = vpop.xlane.xlu0 %6796
    %v6798 = vsel %vm6695, %v6765, 0.0
    %6799 = vadd.xlane.f32.xlu0 %v6798
    %v6800 = vpop.xlane.xlu0 %6799
    %v6801 = vsel %vm6695, %v6767, 0.0
    %6802 = vadd.xlane.f32.xlu0 %v6801
    %v6803 = vpop.xlane.xlu0 %6802
    %v6804 = vsel %vm6695, %v6769, 0.0
    %6805 = vadd.xlane.f32.xlu0 %v6804
    %v6806 = vpop.xlane.xlu0 %6805
    %v6807 = vsel %vm6695, %v6771, 0.0
    %6808 = vadd.xlane.f32.xlu0 %v6807
    %v6809 = vpop.xlane.xlu0 %6808
    %v6810 = vsel %vm6695, %v6773, 0.0
    %6811 = vadd.xlane.f32.xlu0 %v6810
    %v6812 = vpop.xlane.xlu0 %6811
    %v6813 = vsel %vm6695, %v6775, 0.0
    %6814 = vadd.xlane.f32.xlu0 %v6813
    %v6815 = vpop.xlane.xlu0 %6814
    %v6816 = vsel %vm6695, %v6777, 0.0
    %6817 = vadd.xlane.f32.xlu0 %v6816
    %v6818 = vpop.xlane.xlu0 %6817
    %v6819 = vsel %vm6695, %v6779, 0.0
    %6820 = vadd.xlane.f32.xlu0 %v6819
    %v6821 = vpop.xlane.xlu0 %6820
    %v6822 = vsel %vm6695, %v6781, 0.0
    %6823 = vadd.xlane.f32.xlu0 %v6822
    %v6824 = vpop.xlane.xlu0 %6823
    %v6825 = vsel %vm6695, %v6783, 0.0
    %6826 = vadd.xlane.f32.xlu0 %v6825
    %v6827 = vpop.xlane.xlu0 %6826
    %v6828 = vsel %vm6695, %v6785, 0.0
    %6829 = vadd.xlane.f32.xlu0 %v6828
    %v6830 = vpop.xlane.xlu0 %6829
    %v6831 = vsel %vm6695, %v6787, 0.0
    %6832 = vadd.xlane.f32.xlu0 %v6831
    %v6833 = vpop.xlane.xlu0 %6832
    %v6834 = vsel %vm6695, %v6789, 0.0
    %6835 = vadd.xlane.f32.xlu0 %v6834
    %v6836 = vpop.xlane.xlu0 %6835
    %v6837 = vsel %vm6695, %v6791, 0.0
    %6838 = vadd.xlane.f32.xlu0 %v6837
    %v6839 = vpop.xlane.xlu0 %6838
    %v6840 = vrcp.pop %v6794
    %v6841 = vrcp.pop %v6797
    %v6842 = vrcp.pop %v6800
    %v6843 = vrcp.pop %v6803
    %v6844 = vrcp.pop %v6806
    %v6845 = vrcp.pop %v6809
    %v6846 = vrcp.pop %v6812
    %v6847 = vrcp.pop %v6815
    %v6848 = vrcp.pop %v6818
    %v6849 = vrcp.pop %v6821
    %v6850 = vrcp.pop %v6824
    %v6851 = vrcp.pop %v6827
    %v6852 = vrcp.pop %v6830
    %v6853 = vrcp.pop %v6833
    %v6854 = vrcp.pop %v6836
    %v6855 = vrcp.pop %v6839
    %v6856 = vmul.f32 %v6794, %v6840
    %v6857 = vmul.f32 %v6797, %v6841
    %v6858 = vmul.f32 %v6800, %v6842
    %v6859 = vmul.f32 %v6803, %v6843
    %v6860 = vmul.f32 %v6806, %v6844
    %v6861 = vmul.f32 %v6809, %v6845
    %v6862 = vmul.f32 %v6812, %v6846
    %v6863 = vmul.f32 %v6815, %v6847
    %v6864 = vmul.f32 %v6818, %v6848
    %v6865 = vmul.f32 %v6821, %v6849
    %v6866 = vmul.f32 %v6824, %v6850
    %v6867 = vmul.f32 %v6827, %v6851
    %v6868 = vmul.f32 %v6830, %v6852
    %v6869 = vmul.f32 %v6833, %v6853
    %v6870 = vmul.f32 %v6836, %v6854
    %v6871 = vmul.f32 %v6839, %v6855
    %v6872 = vsub.f32 2.0, %v6856
    %v6873 = vsub.f32 2.0, %v6857
    %v6874 = vsub.f32 2.0, %v6858
    %v6875 = vsub.f32 2.0, %v6859
    %v6876 = vsub.f32 2.0, %v6860
    %v6877 = vsub.f32 2.0, %v6861
    %v6878 = vsub.f32 2.0, %v6862
    %v6879 = vsub.f32 2.0, %v6863
    %v6880 = vsub.f32 2.0, %v6864
    %v6881 = vsub.f32 2.0, %v6865
    %v6882 = vsub.f32 2.0, %v6866
    %v6883 = vsub.f32 2.0, %v6867
    %v6884 = vsub.f32 2.0, %v6868
    %v6885 = vsub.f32 2.0, %v6869
    %v6886 = vsub.f32 2.0, %v6870
    %v6887 = vsub.f32 2.0, %v6871
    %v6888 = vmul.f32 %v6840, %v6872
    %v6889 = vmul.f32 %v6841, %v6873
    %v6890 = vmul.f32 %v6842, %v6874
    %v6891 = vmul.f32 %v6843, %v6875
    %v6892 = vmul.f32 %v6844, %v6876
    %v6893 = vmul.f32 %v6845, %v6877
    %v6894 = vmul.f32 %v6846, %v6878
    %v6895 = vmul.f32 %v6847, %v6879
    %v6896 = vmul.f32 %v6848, %v6880
    %v6897 = vmul.f32 %v6849, %v6881
    %v6898 = vmul.f32 %v6850, %v6882
    %v6899 = vmul.f32 %v6851, %v6883
    %v6900 = vmul.f32 %v6852, %v6884
    %v6901 = vmul.f32 %v6853, %v6885
    %v6902 = vmul.f32 %v6854, %v6886
    %v6903 = vmul.f32 %v6855, %v6887
    %v6904 = vmul.f32 %v6761, %v6888
    %v6905 = vmul.f32 %v6763, %v6889
    %v6906 = vmul.f32 %v6765, %v6890
    %v6907 = vmul.f32 %v6767, %v6891
    %v6908 = vmul.f32 %v6769, %v6892
    %v6909 = vmul.f32 %v6771, %v6893
    %v6910 = vmul.f32 %v6773, %v6894
    %v6911 = vmul.f32 %v6775, %v6895
    %v6912 = vmul.f32 %v6777, %v6896
    %v6913 = vmul.f32 %v6779, %v6897
    %v6914 = vmul.f32 %v6781, %v6898
    %v6915 = vmul.f32 %v6783, %v6899
    %v6916 = vmul.f32 %v6785, %v6900
    %v6917 = vmul.f32 %v6787, %v6901
    %v6918 = vmul.f32 %v6789, %v6902
    %v6919 = vmul.f32 %v6791, %v6903
    %6920 = vst.msk [vmem:[%s5] sm:$0xff] %vm6695, %v6904
    %6921 = vst.msk [vmem:[%s5 + $0x8] sm:$0xff] %vm6695, %v6905
    %6922 = vst.msk [vmem:[%s5 + $0x10] sm:$0xff] %vm6695, %v6906
    %6923 = vst.msk [vmem:[%s5 + $0x18] sm:$0xff] %vm6695, %v6907
    %6924 = vst.msk [vmem:[%s5 + $0x20] sm:$0xff] %vm6695, %v6908
    %6925 = vst.msk [vmem:[%s5 + $0x28] sm:$0xff] %vm6695, %v6909
    %6926 = vst.msk [vmem:[%s5 + $0x30] sm:$0xff] %vm6695, %v6910
    %6927 = vst.msk [vmem:[%s5 + $0x38] sm:$0xff] %vm6695, %v6911
    %6928 = vst.msk [vmem:[%s5 + $0x40] sm:$0xff] %vm6695, %v6912
    %6929 = vst.msk [vmem:[%s5 + $0x48] sm:$0xff] %vm6695, %v6913
    %6930 = vst.msk [vmem:[%s5 + $0x50] sm:$0xff] %vm6695, %v6914
    %6931 = vst.msk [vmem:[%s5 + $0x58] sm:$0xff] %vm6695, %v6915
    %6932 = vst.msk [vmem:[%s5 + $0x60] sm:$0xff] %vm6695, %v6916
    %6933 = vst.msk [vmem:[%s5 + $0x68] sm:$0xff] %vm6695, %v6917
    %6934 = vst.msk [vmem:[%s5 + $0x70] sm:$0xff] %vm6695, %v6918
    %6935 = vst.msk [vmem:[%s5 + $0x78] sm:$0xff] %vm6695, %v6919
    %v6937 = vsel %vm6695, %v6904, 0
    %6939 = vmatpush.msra.mxu0 0.0
    %6940 = vmatpush.msra.mxu0 0.0
    %6941 = vmatpush.msra.mxu0 0.0
    %6942 = vmatpush.msra.mxu0 0.0
    %6943 = vmatpush.msra.mxu0 0.0
    %6944 = vmatpush.msra.mxu0 0.0
    %6945 = vmatpush.msra.mxu0 0.0
    %6946 = vmatpush.msra.mxu0 0.0
    %6947 = vmatpush.msra.mxu0 0.0
    %6948 = vmatpush.msra.mxu0 0.0
    %6949 = vmatpush.msra.mxu0 0.0
    %6950 = vmatpush.msra.mxu0 0.0
    %6951 = vmatpush.msra.mxu0 0.0
    %6952 = vmatpush.msra.mxu0 0.0
    %6953 = vmatpush.msra.mxu0 0.0
    %6954 = vmatpush.msra.mxu0 %v5615
    %6955 = vmatmul.f32.gmra.mxu0 %v6937
    %v6956 = vpop.f32.mrf.mxu0
    %v6957 = vadd.f32 0.0, %v6956
    %6958 = vdwg.mxu0
    %6959 = vmatpush.msra.mxu0 0.0
    %6960 = vmatpush.msra.mxu0 0.0
    %6961 = vmatpush.msra.mxu0 0.0
    %6962 = vmatpush.msra.mxu0 0.0
    %6963 = vmatpush.msra.mxu0 0.0
    %6964 = vmatpush.msra.mxu0 0.0
    %6965 = vmatpush.msra.mxu0 0.0
    %6966 = vmatpush.msra.mxu0 0.0
    %6967 = vmatpush.msra.mxu0 0.0
    %6968 = vmatpush.msra.mxu0 0.0
    %6969 = vmatpush.msra.mxu0 0.0
    %6970 = vmatpush.msra.mxu0 0.0
    %6971 = vmatpush.msra.mxu0 0.0
    %6972 = vmatpush.msra.mxu0 0.0
    %6973 = vmatpush.msra.mxu0 0.0
    %6974 = vmatpush.msra.mxu0 %v5643
    %6975 = vmatmul.f32.gmra.mxu0 %v6937
    %v6976 = vpop.f32.mrf.mxu0
    %v6977 = vadd.f32 0.0, %v6976
    %6978 = vdwg.mxu0
    %v6980 = vsel %vm6695, %v6905, 0
    %6982 = vmatpush.msra.mxu0 0.0
    %6983 = vmatpush.msra.mxu0 0.0
    %6984 = vmatpush.msra.mxu0 0.0
    %6985 = vmatpush.msra.mxu0 0.0
    %6986 = vmatpush.msra.mxu0 0.0
    %6987 = vmatpush.msra.mxu0 0.0
    %6988 = vmatpush.msra.mxu0 0.0
    %6989 = vmatpush.msra.mxu0 0.0
    %6990 = vmatpush.msra.mxu0 0.0
    %6991 = vmatpush.msra.mxu0 0.0
    %6992 = vmatpush.msra.mxu0 0.0
    %6993 = vmatpush.msra.mxu0 0.0
    %6994 = vmatpush.msra.mxu0 0.0
    %6995 = vmatpush.msra.mxu0 0.0
    %6996 = vmatpush.msra.mxu0 0.0
    %6997 = vmatpush.msra.mxu0 %v5671
    %6998 = vmatmul.f32.gmra.mxu0 %v6980
    %v6999 = vpop.f32.mrf.mxu0
    %v7000 = vadd.f32 0.0, %v6999
    %7001 = vdwg.mxu0
    %7002 = vmatpush.msra.mxu0 0.0
    %7003 = vmatpush.msra.mxu0 0.0
    %7004 = vmatpush.msra.mxu0 0.0
    %7005 = vmatpush.msra.mxu0 0.0
    %7006 = vmatpush.msra.mxu0 0.0
    %7007 = vmatpush.msra.mxu0 0.0
    %7008 = vmatpush.msra.mxu0 0.0
    %7009 = vmatpush.msra.mxu0 0.0
    %7010 = vmatpush.msra.mxu0 0.0
    %7011 = vmatpush.msra.mxu0 0.0
    %7012 = vmatpush.msra.mxu0 0.0
    %7013 = vmatpush.msra.mxu0 0.0
    %7014 = vmatpush.msra.mxu0 0.0
    %7015 = vmatpush.msra.mxu0 0.0
    %7016 = vmatpush.msra.mxu0 0.0
    %7017 = vmatpush.msra.mxu0 %v5699
    %7018 = vmatmul.f32.gmra.mxu0 %v6980
    %v7019 = vpop.f32.mrf.mxu0
    %v7020 = vadd.f32 0.0, %v7019
    %7021 = vdwg.mxu0
    %v7023 = vsel %vm6695, %v6906, 0
    %7025 = vmatpush.msra.mxu0 0.0
    %7026 = vmatpush.msra.mxu0 0.0
    %7027 = vmatpush.msra.mxu0 0.0
    %7028 = vmatpush.msra.mxu0 0.0
    %7029 = vmatpush.msra.mxu0 0.0
    %7030 = vmatpush.msra.mxu0 0.0
    %7031 = vmatpush.msra.mxu0 0.0
    %7032 = vmatpush.msra.mxu0 0.0
    %7033 = vmatpush.msra.mxu0 0.0
    %7034 = vmatpush.msra.mxu0 0.0
    %7035 = vmatpush.msra.mxu0 0.0
    %7036 = vmatpush.msra.mxu0 0.0
    %7037 = vmatpush.msra.mxu0 0.0
    %7038 = vmatpush.msra.mxu0 0.0
    %7039 = vmatpush.msra.mxu0 0.0
    %7040 = vmatpush.msra.mxu0 %v5727
    %7041 = vmatmul.f32.gmra.mxu0 %v7023
    %v7042 = vpop.f32.mrf.mxu0
    %v7043 = vadd.f32 0.0, %v7042
    %7044 = vdwg.mxu0
    %7045 = vmatpush.msra.mxu0 0.0
    %7046 = vmatpush.msra.mxu0 0.0
    %7047 = vmatpush.msra.mxu0 0.0
    %7048 = vmatpush.msra.mxu0 0.0
    %7049 = vmatpush.msra.mxu0 0.0
    %7050 = vmatpush.msra.mxu0 0.0
    %7051 = vmatpush.msra.mxu0 0.0
    %7052 = vmatpush.msra.mxu0 0.0
    %7053 = vmatpush.msra.mxu0 0.0
    %7054 = vmatpush.msra.mxu0 0.0
    %7055 = vmatpush.msra.mxu0 0.0
    %7056 = vmatpush.msra.mxu0 0.0
    %7057 = vmatpush.msra.mxu0 0.0
    %7058 = vmatpush.msra.mxu0 0.0
    %7059 = vmatpush.msra.mxu0 0.0
    %7060 = vmatpush.msra.mxu0 %v5755
    %7061 = vmatmul.f32.gmra.mxu0 %v7023
    %v7062 = vpop.f32.mrf.mxu0
    %v7063 = vadd.f32 0.0, %v7062
    %7064 = vdwg.mxu0
    %v7066 = vsel %vm6695, %v6907, 0
    %7068 = vmatpush.msra.mxu0 0.0
    %7069 = vmatpush.msra.mxu0 0.0
    %7070 = vmatpush.msra.mxu0 0.0
    %7071 = vmatpush.msra.mxu0 0.0
    %7072 = vmatpush.msra.mxu0 0.0
    %7073 = vmatpush.msra.mxu0 0.0
    %7074 = vmatpush.msra.mxu0 0.0
    %7075 = vmatpush.msra.mxu0 0.0
    %7076 = vmatpush.msra.mxu0 0.0
    %7077 = vmatpush.msra.mxu0 0.0
    %7078 = vmatpush.msra.mxu0 0.0
    %7079 = vmatpush.msra.mxu0 0.0
    %7080 = vmatpush.msra.mxu0 0.0
    %7081 = vmatpush.msra.mxu0 0.0
    %7082 = vmatpush.msra.mxu0 0.0
    %7083 = vmatpush.msra.mxu0 %v5783
    %7084 = vmatmul.f32.gmra.mxu0 %v7066
    %v7085 = vpop.f32.mrf.mxu0
    %v7086 = vadd.f32 0.0, %v7085
    %7087 = vdwg.mxu0
    %7088 = vmatpush.msra.mxu0 0.0
    %7089 = vmatpush.msra.mxu0 0.0
    %7090 = vmatpush.msra.mxu0 0.0
    %7091 = vmatpush.msra.mxu0 0.0
    %7092 = vmatpush.msra.mxu0 0.0
    %7093 = vmatpush.msra.mxu0 0.0
    %7094 = vmatpush.msra.mxu0 0.0
    %7095 = vmatpush.msra.mxu0 0.0
    %7096 = vmatpush.msra.mxu0 0.0
    %7097 = vmatpush.msra.mxu0 0.0
    %7098 = vmatpush.msra.mxu0 0.0
    %7099 = vmatpush.msra.mxu0 0.0
    %7100 = vmatpush.msra.mxu0 0.0
    %7101 = vmatpush.msra.mxu0 0.0
    %7102 = vmatpush.msra.mxu0 0.0
    %7103 = vmatpush.msra.mxu0 %v5811
    %7104 = vmatmul.f32.gmra.mxu0 %v7066
    %v7105 = vpop.f32.mrf.mxu0
    %v7106 = vadd.f32 0.0, %v7105
    %7107 = vdwg.mxu0
    %v7109 = vsel %vm6695, %v6908, 0
    %7111 = vmatpush.msra.mxu0 0.0
    %7112 = vmatpush.msra.mxu0 0.0
    %7113 = vmatpush.msra.mxu0 0.0
    %7114 = vmatpush.msra.mxu0 0.0
    %7115 = vmatpush.msra.mxu0 0.0
    %7116 = vmatpush.msra.mxu0 0.0
    %7117 = vmatpush.msra.mxu0 0.0
    %7118 = vmatpush.msra.mxu0 0.0
    %7119 = vmatpush.msra.mxu0 0.0
    %7120 = vmatpush.msra.mxu0 0.0
    %7121 = vmatpush.msra.mxu0 0.0
    %7122 = vmatpush.msra.mxu0 0.0
    %7123 = vmatpush.msra.mxu0 0.0
    %7124 = vmatpush.msra.mxu0 0.0
    %7125 = vmatpush.msra.mxu0 0.0
    %7126 = vmatpush.msra.mxu0 %v5839
    %7127 = vmatmul.f32.gmra.mxu0 %v7109
    %v7128 = vpop.f32.mrf.mxu0
    %v7129 = vadd.f32 0.0, %v7128
    %7130 = vdwg.mxu0
    %7131 = vmatpush.msra.mxu0 0.0
    %7132 = vmatpush.msra.mxu0 0.0
    %7133 = vmatpush.msra.mxu0 0.0
    %7134 = vmatpush.msra.mxu0 0.0
    %7135 = vmatpush.msra.mxu0 0.0
    %7136 = vmatpush.msra.mxu0 0.0
    %7137 = vmatpush.msra.mxu0 0.0
    %7138 = vmatpush.msra.mxu0 0.0
    %7139 = vmatpush.msra.mxu0 0.0
    %7140 = vmatpush.msra.mxu0 0.0
    %7141 = vmatpush.msra.mxu0 0.0
    %7142 = vmatpush.msra.mxu0 0.0
    %7143 = vmatpush.msra.mxu0 0.0
    %7144 = vmatpush.msra.mxu0 0.0
    %7145 = vmatpush.msra.mxu0 0.0
    %7146 = vmatpush.msra.mxu0 %v5867
    %7147 = vmatmul.f32.gmra.mxu0 %v7109
    %v7148 = vpop.f32.mrf.mxu0
    %v7149 = vadd.f32 0.0, %v7148
    %7150 = vdwg.mxu0
    %v7152 = vsel %vm6695, %v6909, 0
    %7154 = vmatpush.msra.mxu0 0.0
    %7155 = vmatpush.msra.mxu0 0.0
    %7156 = vmatpush.msra.mxu0 0.0
    %7157 = vmatpush.msra.mxu0 0.0
    %7158 = vmatpush.msra.mxu0 0.0
    %7159 = vmatpush.msra.mxu0 0.0
    %7160 = vmatpush.msra.mxu0 0.0
    %7161 = vmatpush.msra.mxu0 0.0
    %7162 = vmatpush.msra.mxu0 0.0
    %7163 = vmatpush.msra.mxu0 0.0
    %7164 = vmatpush.msra.mxu0 0.0
    %7165 = vmatpush.msra.mxu0 0.0
    %7166 = vmatpush.msra.mxu0 0.0
    %7167 = vmatpush.msra.mxu0 0.0
    %7168 = vmatpush.msra.mxu0 0.0
    %7169 = vmatpush.msra.mxu0 %v5895
    %7170 = vmatmul.f32.gmra.mxu0 %v7152
    %v7171 = vpop.f32.mrf.mxu0
    %v7172 = vadd.f32 0.0, %v7171
    %7173 = vdwg.mxu0
    %7174 = vmatpush.msra.mxu0 0.0
    %7175 = vmatpush.msra.mxu0 0.0
    %7176 = vmatpush.msra.mxu0 0.0
    %7177 = vmatpush.msra.mxu0 0.0
    %7178 = vmatpush.msra.mxu0 0.0
    %7179 = vmatpush.msra.mxu0 0.0
    %7180 = vmatpush.msra.mxu0 0.0
    %7181 = vmatpush.msra.mxu0 0.0
    %7182 = vmatpush.msra.mxu0 0.0
    %7183 = vmatpush.msra.mxu0 0.0
    %7184 = vmatpush.msra.mxu0 0.0
    %7185 = vmatpush.msra.mxu0 0.0
    %7186 = vmatpush.msra.mxu0 0.0
    %7187 = vmatpush.msra.mxu0 0.0
    %7188 = vmatpush.msra.mxu0 0.0
    %7189 = vmatpush.msra.mxu0 %v5923
    %7190 = vmatmul.f32.gmra.mxu0 %v7152
    %v7191 = vpop.f32.mrf.mxu0
    %v7192 = vadd.f32 0.0, %v7191
    %7193 = vdwg.mxu0
    %v7195 = vsel %vm6695, %v6910, 0
    %7197 = vmatpush.msra.mxu0 0.0
    %7198 = vmatpush.msra.mxu0 0.0
    %7199 = vmatpush.msra.mxu0 0.0
    %7200 = vmatpush.msra.mxu0 0.0
    %7201 = vmatpush.msra.mxu0 0.0
    %7202 = vmatpush.msra.mxu0 0.0
    %7203 = vmatpush.msra.mxu0 0.0
    %7204 = vmatpush.msra.mxu0 0.0
    %7205 = vmatpush.msra.mxu0 0.0
    %7206 = vmatpush.msra.mxu0 0.0
    %7207 = vmatpush.msra.mxu0 0.0
    %7208 = vmatpush.msra.mxu0 0.0
    %7209 = vmatpush.msra.mxu0 0.0
    %7210 = vmatpush.msra.mxu0 0.0
    %7211 = vmatpush.msra.mxu0 0.0
    %7212 = vmatpush.msra.mxu0 %v5951
    %7213 = vmatmul.f32.gmra.mxu0 %v7195
    %v7214 = vpop.f32.mrf.mxu0
    %v7215 = vadd.f32 0.0, %v7214
    %7216 = vdwg.mxu0
    %7217 = vmatpush.msra.mxu0 0.0
    %7218 = vmatpush.msra.mxu0 0.0
    %7219 = vmatpush.msra.mxu0 0.0
    %7220 = vmatpush.msra.mxu0 0.0
    %7221 = vmatpush.msra.mxu0 0.0
    %7222 = vmatpush.msra.mxu0 0.0
    %7223 = vmatpush.msra.mxu0 0.0
    %7224 = vmatpush.msra.mxu0 0.0
    %7225 = vmatpush.msra.mxu0 0.0
    %7226 = vmatpush.msra.mxu0 0.0
    %7227 = vmatpush.msra.mxu0 0.0
    %7228 = vmatpush.msra.mxu0 0.0
    %7229 = vmatpush.msra.mxu0 0.0
    %7230 = vmatpush.msra.mxu0 0.0
    %7231 = vmatpush.msra.mxu0 0.0
    %7232 = vmatpush.msra.mxu0 %v5979
    %7233 = vmatmul.f32.gmra.mxu0 %v7195
    %v7234 = vpop.f32.mrf.mxu0
    %v7235 = vadd.f32 0.0, %v7234
    %7236 = vdwg.mxu0
    %v7238 = vsel %vm6695, %v6911, 0
    %7240 = vmatpush.msra.mxu0 0.0
    %7241 = vmatpush.msra.mxu0 0.0
    %7242 = vmatpush.msra.mxu0 0.0
    %7243 = vmatpush.msra.mxu0 0.0
    %7244 = vmatpush.msra.mxu0 0.0
    %7245 = vmatpush.msra.mxu0 0.0
    %7246 = vmatpush.msra.mxu0 0.0
    %7247 = vmatpush.msra.mxu0 0.0
    %7248 = vmatpush.msra.mxu0 0.0
    %7249 = vmatpush.msra.mxu0 0.0
    %7250 = vmatpush.msra.mxu0 0.0
    %7251 = vmatpush.msra.mxu0 0.0
    %7252 = vmatpush.msra.mxu0 0.0
    %7253 = vmatpush.msra.mxu0 0.0
    %7254 = vmatpush.msra.mxu0 0.0
    %7255 = vmatpush.msra.mxu0 %v6007
    %7256 = vmatmul.f32.gmra.mxu0 %v7238
    %v7257 = vpop.f32.mrf.mxu0
    %v7258 = vadd.f32 0.0, %v7257
    %7259 = vdwg.mxu0
    %7260 = vmatpush.msra.mxu0 0.0
    %7261 = vmatpush.msra.mxu0 0.0
    %7262 = vmatpush.msra.mxu0 0.0
    %7263 = vmatpush.msra.mxu0 0.0
    %7264 = vmatpush.msra.mxu0 0.0
    %7265 = vmatpush.msra.mxu0 0.0
    %7266 = vmatpush.msra.mxu0 0.0
    %7267 = vmatpush.msra.mxu0 0.0
    %7268 = vmatpush.msra.mxu0 0.0
    %7269 = vmatpush.msra.mxu0 0.0
    %7270 = vmatpush.msra.mxu0 0.0
    %7271 = vmatpush.msra.mxu0 0.0
    %7272 = vmatpush.msra.mxu0 0.0
    %7273 = vmatpush.msra.mxu0 0.0
    %7274 = vmatpush.msra.mxu0 0.0
    %7275 = vmatpush.msra.mxu0 %v6035
    %7276 = vmatmul.f32.gmra.mxu0 %v7238
    %v7277 = vpop.f32.mrf.mxu0
    %v7278 = vadd.f32 0.0, %v7277
    %7279 = vdwg.mxu0
    %v7281 = vsel %vm6695, %v6912, 0
    %7283 = vmatpush.msra.mxu0 0.0
    %7284 = vmatpush.msra.mxu0 0.0
    %7285 = vmatpush.msra.mxu0 0.0
    %7286 = vmatpush.msra.mxu0 0.0
    %7287 = vmatpush.msra.mxu0 0.0
    %7288 = vmatpush.msra.mxu0 0.0
    %7289 = vmatpush.msra.mxu0 0.0
    %7290 = vmatpush.msra.mxu0 0.0
    %7291 = vmatpush.msra.mxu0 0.0
    %7292 = vmatpush.msra.mxu0 0.0
    %7293 = vmatpush.msra.mxu0 0.0
    %7294 = vmatpush.msra.mxu0 0.0
    %7295 = vmatpush.msra.mxu0 0.0
    %7296 = vmatpush.msra.mxu0 0.0
    %7297 = vmatpush.msra.mxu0 0.0
    %7298 = vmatpush.msra.mxu0 %v5617
    %7299 = vmatmul.f32.gmra.mxu0 %v7281
    %v7300 = vpop.f32.mrf.mxu0
    %v7301 = vadd.f32 0.0, %v7300
    %7302 = vdwg.mxu0
    %7303 = vmatpush.msra.mxu0 0.0
    %7304 = vmatpush.msra.mxu0 0.0
    %7305 = vmatpush.msra.mxu0 0.0
    %7306 = vmatpush.msra.mxu0 0.0
    %7307 = vmatpush.msra.mxu0 0.0
    %7308 = vmatpush.msra.mxu0 0.0
    %7309 = vmatpush.msra.mxu0 0.0
    %7310 = vmatpush.msra.mxu0 0.0
    %7311 = vmatpush.msra.mxu0 0.0
    %7312 = vmatpush.msra.mxu0 0.0
    %7313 = vmatpush.msra.mxu0 0.0
    %7314 = vmatpush.msra.mxu0 0.0
    %7315 = vmatpush.msra.mxu0 0.0
    %7316 = vmatpush.msra.mxu0 0.0
    %7317 = vmatpush.msra.mxu0 0.0
    %7318 = vmatpush.msra.mxu0 %v5645
    %7319 = vmatmul.f32.gmra.mxu0 %v7281
    %v7320 = vpop.f32.mrf.mxu0
    %v7321 = vadd.f32 0.0, %v7320
    %7322 = vdwg.mxu0
    %v7324 = vsel %vm6695, %v6913, 0
    %7326 = vmatpush.msra.mxu0 0.0
    %7327 = vmatpush.msra.mxu0 0.0
    %7328 = vmatpush.msra.mxu0 0.0
    %7329 = vmatpush.msra.mxu0 0.0
    %7330 = vmatpush.msra.mxu0 0.0
    %7331 = vmatpush.msra.mxu0 0.0
    %7332 = vmatpush.msra.mxu0 0.0
    %7333 = vmatpush.msra.mxu0 0.0
    %7334 = vmatpush.msra.mxu0 0.0
    %7335 = vmatpush.msra.mxu0 0.0
    %7336 = vmatpush.msra.mxu0 0.0
    %7337 = vmatpush.msra.mxu0 0.0
    %7338 = vmatpush.msra.mxu0 0.0
    %7339 = vmatpush.msra.mxu0 0.0
    %7340 = vmatpush.msra.mxu0 0.0
    %7341 = vmatpush.msra.mxu0 %v5673
    %7342 = vmatmul.f32.gmra.mxu0 %v7324
    %v7343 = vpop.f32.mrf.mxu0
    %v7344 = vadd.f32 0.0, %v7343
    %7345 = vdwg.mxu0
    %7346 = vmatpush.msra.mxu0 0.0
    %7347 = vmatpush.msra.mxu0 0.0
    %7348 = vmatpush.msra.mxu0 0.0
    %7349 = vmatpush.msra.mxu0 0.0
    %7350 = vmatpush.msra.mxu0 0.0
    %7351 = vmatpush.msra.mxu0 0.0
    %7352 = vmatpush.msra.mxu0 0.0
    %7353 = vmatpush.msra.mxu0 0.0
    %7354 = vmatpush.msra.mxu0 0.0
    %7355 = vmatpush.msra.mxu0 0.0
    %7356 = vmatpush.msra.mxu0 0.0
    %7357 = vmatpush.msra.mxu0 0.0
    %7358 = vmatpush.msra.mxu0 0.0
    %7359 = vmatpush.msra.mxu0 0.0
    %7360 = vmatpush.msra.mxu0 0.0
    %7361 = vmatpush.msra.mxu0 %v5701
    %7362 = vmatmul.f32.gmra.mxu0 %v7324
    %v7363 = vpop.f32.mrf.mxu0
    %v7364 = vadd.f32 0.0, %v7363
    %7365 = vdwg.mxu0
    %v7367 = vsel %vm6695, %v6914, 0
    %7369 = vmatpush.msra.mxu0 0.0
    %7370 = vmatpush.msra.mxu0 0.0
    %7371 = vmatpush.msra.mxu0 0.0
    %7372 = vmatpush.msra.mxu0 0.0
    %7373 = vmatpush.msra.mxu0 0.0
    %7374 = vmatpush.msra.mxu0 0.0
    %7375 = vmatpush.msra.mxu0 0.0
    %7376 = vmatpush.msra.mxu0 0.0
    %7377 = vmatpush.msra.mxu0 0.0
    %7378 = vmatpush.msra.mxu0 0.0
    %7379 = vmatpush.msra.mxu0 0.0
    %7380 = vmatpush.msra.mxu0 0.0
    %7381 = vmatpush.msra.mxu0 0.0
    %7382 = vmatpush.msra.mxu0 0.0
    %7383 = vmatpush.msra.mxu0 0.0
    %7384 = vmatpush.msra.mxu0 %v5729
    %7385 = vmatmul.f32.gmra.mxu0 %v7367
    %v7386 = vpop.f32.mrf.mxu0
    %v7387 = vadd.f32 0.0, %v7386
    %7388 = vdwg.mxu0
    %7389 = vmatpush.msra.mxu0 0.0
    %7390 = vmatpush.msra.mxu0 0.0
    %7391 = vmatpush.msra.mxu0 0.0
    %7392 = vmatpush.msra.mxu0 0.0
    %7393 = vmatpush.msra.mxu0 0.0
    %7394 = vmatpush.msra.mxu0 0.0
    %7395 = vmatpush.msra.mxu0 0.0
    %7396 = vmatpush.msra.mxu0 0.0
    %7397 = vmatpush.msra.mxu0 0.0
    %7398 = vmatpush.msra.mxu0 0.0
    %7399 = vmatpush.msra.mxu0 0.0
    %7400 = vmatpush.msra.mxu0 0.0
    %7401 = vmatpush.msra.mxu0 0.0
    %7402 = vmatpush.msra.mxu0 0.0
    %7403 = vmatpush.msra.mxu0 0.0
    %7404 = vmatpush.msra.mxu0 %v5757
    %7405 = vmatmul.f32.gmra.mxu0 %v7367
    %v7406 = vpop.f32.mrf.mxu0
    %v7407 = vadd.f32 0.0, %v7406
    %7408 = vdwg.mxu0
    %v7410 = vsel %vm6695, %v6915, 0
    %7412 = vmatpush.msra.mxu0 0.0
    %7413 = vmatpush.msra.mxu0 0.0
    %7414 = vmatpush.msra.mxu0 0.0
    %7415 = vmatpush.msra.mxu0 0.0
    %7416 = vmatpush.msra.mxu0 0.0
    %7417 = vmatpush.msra.mxu0 0.0
    %7418 = vmatpush.msra.mxu0 0.0
    %7419 = vmatpush.msra.mxu0 0.0
    %7420 = vmatpush.msra.mxu0 0.0
    %7421 = vmatpush.msra.mxu0 0.0
    %7422 = vmatpush.msra.mxu0 0.0
    %7423 = vmatpush.msra.mxu0 0.0
    %7424 = vmatpush.msra.mxu0 0.0
    %7425 = vmatpush.msra.mxu0 0.0
    %7426 = vmatpush.msra.mxu0 0.0
    %7427 = vmatpush.msra.mxu0 %v5785
    %7428 = vmatmul.f32.gmra.mxu0 %v7410
    %v7429 = vpop.f32.mrf.mxu0
    %v7430 = vadd.f32 0.0, %v7429
    %7431 = vdwg.mxu0
    %7432 = vmatpush.msra.mxu0 0.0
    %7433 = vmatpush.msra.mxu0 0.0
    %7434 = vmatpush.msra.mxu0 0.0
    %7435 = vmatpush.msra.mxu0 0.0
    %7436 = vmatpush.msra.mxu0 0.0
    %7437 = vmatpush.msra.mxu0 0.0
    %7438 = vmatpush.msra.mxu0 0.0
    %7439 = vmatpush.msra.mxu0 0.0
    %7440 = vmatpush.msra.mxu0 0.0
    %7441 = vmatpush.msra.mxu0 0.0
    %7442 = vmatpush.msra.mxu0 0.0
    %7443 = vmatpush.msra.mxu0 0.0
    %7444 = vmatpush.msra.mxu0 0.0
    %7445 = vmatpush.msra.mxu0 0.0
    %7446 = vmatpush.msra.mxu0 0.0
    %7447 = vmatpush.msra.mxu0 %v5813
    %7448 = vmatmul.f32.gmra.mxu0 %v7410
    %v7449 = vpop.f32.mrf.mxu0
    %v7450 = vadd.f32 0.0, %v7449
    %7451 = vdwg.mxu0
    %v7453 = vsel %vm6695, %v6916, 0
    %7455 = vmatpush.msra.mxu0 0.0
    %7456 = vmatpush.msra.mxu0 0.0
    %7457 = vmatpush.msra.mxu0 0.0
    %7458 = vmatpush.msra.mxu0 0.0
    %7459 = vmatpush.msra.mxu0 0.0
    %7460 = vmatpush.msra.mxu0 0.0
    %7461 = vmatpush.msra.mxu0 0.0
    %7462 = vmatpush.msra.mxu0 0.0
    %7463 = vmatpush.msra.mxu0 0.0
    %7464 = vmatpush.msra.mxu0 0.0
    %7465 = vmatpush.msra.mxu0 0.0
    %7466 = vmatpush.msra.mxu0 0.0
    %7467 = vmatpush.msra.mxu0 0.0
    %7468 = vmatpush.msra.mxu0 0.0
    %7469 = vmatpush.msra.mxu0 0.0
    %7470 = vmatpush.msra.mxu0 %v5841
    %7471 = vmatmul.f32.gmra.mxu0 %v7453
    %v7472 = vpop.f32.mrf.mxu0
    %v7473 = vadd.f32 0.0, %v7472
    %7474 = vdwg.mxu0
    %7475 = vmatpush.msra.mxu0 0.0
    %7476 = vmatpush.msra.mxu0 0.0
    %7477 = vmatpush.msra.mxu0 0.0
    %7478 = vmatpush.msra.mxu0 0.0
    %7479 = vmatpush.msra.mxu0 0.0
    %7480 = vmatpush.msra.mxu0 0.0
    %7481 = vmatpush.msra.mxu0 0.0
    %7482 = vmatpush.msra.mxu0 0.0
    %7483 = vmatpush.msra.mxu0 0.0
    %7484 = vmatpush.msra.mxu0 0.0
    %7485 = vmatpush.msra.mxu0 0.0
    %7486 = vmatpush.msra.mxu0 0.0
    %7487 = vmatpush.msra.mxu0 0.0
    %7488 = vmatpush.msra.mxu0 0.0
    %7489 = vmatpush.msra.mxu0 0.0
    %7490 = vmatpush.msra.mxu0 %v5869
    %7491 = vmatmul.f32.gmra.mxu0 %v7453
    %v7492 = vpop.f32.mrf.mxu0
    %v7493 = vadd.f32 0.0, %v7492
    %7494 = vdwg.mxu0
    %v7496 = vsel %vm6695, %v6917, 0
    %7498 = vmatpush.msra.mxu0 0.0
    %7499 = vmatpush.msra.mxu0 0.0
    %7500 = vmatpush.msra.mxu0 0.0
    %7501 = vmatpush.msra.mxu0 0.0
    %7502 = vmatpush.msra.mxu0 0.0
    %7503 = vmatpush.msra.mxu0 0.0
    %7504 = vmatpush.msra.mxu0 0.0
    %7505 = vmatpush.msra.mxu0 0.0
    %7506 = vmatpush.msra.mxu0 0.0
    %7507 = vmatpush.msra.mxu0 0.0
    %7508 = vmatpush.msra.mxu0 0.0
    %7509 = vmatpush.msra.mxu0 0.0
    %7510 = vmatpush.msra.mxu0 0.0
    %7511 = vmatpush.msra.mxu0 0.0
    %7512 = vmatpush.msra.mxu0 0.0
    %7513 = vmatpush.msra.mxu0 %v5897
    %7514 = vmatmul.f32.gmra.mxu0 %v7496
    %v7515 = vpop.f32.mrf.mxu0
    %v7516 = vadd.f32 0.0, %v7515
    %7517 = vdwg.mxu0
    %7518 = vmatpush.msra.mxu0 0.0
    %7519 = vmatpush.msra.mxu0 0.0
    %7520 = vmatpush.msra.mxu0 0.0
    %7521 = vmatpush.msra.mxu0 0.0
    %7522 = vmatpush.msra.mxu0 0.0
    %7523 = vmatpush.msra.mxu0 0.0
    %7524 = vmatpush.msra.mxu0 0.0
    %7525 = vmatpush.msra.mxu0 0.0
    %7526 = vmatpush.msra.mxu0 0.0
    %7527 = vmatpush.msra.mxu0 0.0
    %7528 = vmatpush.msra.mxu0 0.0
    %7529 = vmatpush.msra.mxu0 0.0
    %7530 = vmatpush.msra.mxu0 0.0
    %7531 = vmatpush.msra.mxu0 0.0
    %7532 = vmatpush.msra.mxu0 0.0
    %7533 = vmatpush.msra.mxu0 %v5925
    %7534 = vmatmul.f32.gmra.mxu0 %v7496
    %v7535 = vpop.f32.mrf.mxu0
    %v7536 = vadd.f32 0.0, %v7535
    %7537 = vdwg.mxu0
    %v7539 = vsel %vm6695, %v6918, 0
    %7541 = vmatpush.msra.mxu0 0.0
    %7542 = vmatpush.msra.mxu0 0.0
    %7543 = vmatpush.msra.mxu0 0.0
    %7544 = vmatpush.msra.mxu0 0.0
    %7545 = vmatpush.msra.mxu0 0.0
    %7546 = vmatpush.msra.mxu0 0.0
    %7547 = vmatpush.msra.mxu0 0.0
    %7548 = vmatpush.msra.mxu0 0.0
    %7549 = vmatpush.msra.mxu0 0.0
    %7550 = vmatpush.msra.mxu0 0.0
    %7551 = vmatpush.msra.mxu0 0.0
    %7552 = vmatpush.msra.mxu0 0.0
    %7553 = vmatpush.msra.mxu0 0.0
    %7554 = vmatpush.msra.mxu0 0.0
    %7555 = vmatpush.msra.mxu0 0.0
    %7556 = vmatpush.msra.mxu0 %v5953
    %7557 = vmatmul.f32.gmra.mxu0 %v7539
    %v7558 = vpop.f32.mrf.mxu0
    %v7559 = vadd.f32 0.0, %v7558
    %7560 = vdwg.mxu0
    %7561 = vmatpush.msra.mxu0 0.0
    %7562 = vmatpush.msra.mxu0 0.0
    %7563 = vmatpush.msra.mxu0 0.0
    %7564 = vmatpush.msra.mxu0 0.0
    %7565 = vmatpush.msra.mxu0 0.0
    %7566 = vmatpush.msra.mxu0 0.0
    %7567 = vmatpush.msra.mxu0 0.0
    %7568 = vmatpush.msra.mxu0 0.0
    %7569 = vmatpush.msra.mxu0 0.0
    %7570 = vmatpush.msra.mxu0 0.0
    %7571 = vmatpush.msra.mxu0 0.0
    %7572 = vmatpush.msra.mxu0 0.0
    %7573 = vmatpush.msra.mxu0 0.0
    %7574 = vmatpush.msra.mxu0 0.0
    %7575 = vmatpush.msra.mxu0 0.0
    %7576 = vmatpush.msra.mxu0 %v5981
    %7577 = vmatmul.f32.gmra.mxu0 %v7539
    %v7578 = vpop.f32.mrf.mxu0
    %v7579 = vadd.f32 0.0, %v7578
    %7580 = vdwg.mxu0
    %v7582 = vsel %vm6695, %v6919, 0
    %7584 = vmatpush.msra.mxu0 0.0
    %7585 = vmatpush.msra.mxu0 0.0
    %7586 = vmatpush.msra.mxu0 0.0
    %7587 = vmatpush.msra.mxu0 0.0
    %7588 = vmatpush.msra.mxu0 0.0
    %7589 = vmatpush.msra.mxu0 0.0
    %7590 = vmatpush.msra.mxu0 0.0
    %7591 = vmatpush.msra.mxu0 0.0
    %7592 = vmatpush.msra.mxu0 0.0
    %7593 = vmatpush.msra.mxu0 0.0
    %7594 = vmatpush.msra.mxu0 0.0
    %7595 = vmatpush.msra.mxu0 0.0
    %7596 = vmatpush.msra.mxu0 0.0
    %7597 = vmatpush.msra.mxu0 0.0
    %7598 = vmatpush.msra.mxu0 0.0
    %7599 = vmatpush.msra.mxu0 %v6009
    %7600 = vmatmul.f32.gmra.mxu0 %v7582
    %v7601 = vpop.f32.mrf.mxu0
    %v7602 = vadd.f32 0.0, %v7601
    %7603 = vdwg.mxu0
    %7604 = vmatpush.msra.mxu0 0.0
    %7605 = vmatpush.msra.mxu0 0.0
    %7606 = vmatpush.msra.mxu0 0.0
    %7607 = vmatpush.msra.mxu0 0.0
    %7608 = vmatpush.msra.mxu0 0.0
    %7609 = vmatpush.msra.mxu0 0.0
    %7610 = vmatpush.msra.mxu0 0.0
    %7611 = vmatpush.msra.mxu0 0.0
    %7612 = vmatpush.msra.mxu0 0.0
    %7613 = vmatpush.msra.mxu0 0.0
    %7614 = vmatpush.msra.mxu0 0.0
    %7615 = vmatpush.msra.mxu0 0.0
    %7616 = vmatpush.msra.mxu0 0.0
    %7617 = vmatpush.msra.mxu0 0.0
    %7618 = vmatpush.msra.mxu0 0.0
    %7619 = vmatpush.msra.mxu0 %v6037
    %7620 = vmatmul.f32.gmra.mxu0 %v7582
    %v7621 = vpop.f32.mrf.mxu0
    %v7622 = vadd.f32 0.0, %v7621
    %7623 = vdwg.mxu0
    %v7624 = vld [vmem:[#allocation7] sm:$0xff]
    %v7625 = vld [vmem:[#allocation7 + $0x8] sm:$0xff]
    %v7626 = vld [vmem:[#allocation7 + $0x10] sm:$0xff]
    %v7627 = vld [vmem:[#allocation7 + $0x18] sm:$0xff]
    %v7628 = vld [vmem:[#allocation7 + $0x20] sm:$0xff]
    %v7629 = vld [vmem:[#allocation7 + $0x28] sm:$0xff]
    %v7630 = vld [vmem:[#allocation7 + $0x30] sm:$0xff]
    %v7631 = vld [vmem:[#allocation7 + $0x38] sm:$0xff]
    %v7632 = vld [vmem:[#allocation7 + $0x40] sm:$0xff]
    %v7633 = vld [vmem:[#allocation7 + $0x48] sm:$0xff]
    %v7634 = vld [vmem:[#allocation7 + $0x50] sm:$0xff]
    %v7635 = vld [vmem:[#allocation7 + $0x58] sm:$0xff]
    %v7636 = vld [vmem:[#allocation7 + $0x60] sm:$0xff]
    %v7637 = vld [vmem:[#allocation7 + $0x68] sm:$0xff]
    %v7638 = vld [vmem:[#allocation7 + $0x70] sm:$0xff]
    %v7639 = vld [vmem:[#allocation7 + $0x78] sm:$0xff]
    %v7640 = vld [vmem:[#allocation7 + $0x80] sm:$0xff]
    %v7641 = vld [vmem:[#allocation7 + $0x88] sm:$0xff]
    %v7642 = vld [vmem:[#allocation7 + $0x90] sm:$0xff]
    %v7643 = vld [vmem:[#allocation7 + $0x98] sm:$0xff]
    %v7644 = vld [vmem:[#allocation7 + $0xa0] sm:$0xff]
    %v7645 = vld [vmem:[#allocation7 + $0xa8] sm:$0xff]
    %v7646 = vld [vmem:[#allocation7 + $0xb0] sm:$0xff]
    %v7647 = vld [vmem:[#allocation7 + $0xb8] sm:$0xff]
    %v7648 = vld [vmem:[#allocation7 + $0xc0] sm:$0xff]
    %v7649 = vld [vmem:[#allocation7 + $0xc8] sm:$0xff]
    %v7650 = vld [vmem:[#allocation7 + $0xd0] sm:$0xff]
    %v7651 = vld [vmem:[#allocation7 + $0xd8] sm:$0xff]
    %v7652 = vld [vmem:[#allocation7 + $0xe0] sm:$0xff]
    %v7653 = vld [vmem:[#allocation7 + $0xe8] sm:$0xff]
    %v7654 = vld [vmem:[#allocation7 + $0xf0] sm:$0xff]
    %v7655 = vld [vmem:[#allocation7 + $0xf8] sm:$0xff]
    %v7656 = vld [vmem:[#allocation7 + $0x100] sm:$0xff]
    %v7657 = vld [vmem:[#allocation7 + $0x108] sm:$0xff]
    %v7658 = vld [vmem:[#allocation7 + $0x110] sm:$0xff]
    %v7659 = vld [vmem:[#allocation7 + $0x118] sm:$0xff]
    %v7660 = vld [vmem:[#allocation7 + $0x120] sm:$0xff]
    %v7661 = vld [vmem:[#allocation7 + $0x128] sm:$0xff]
    %v7662 = vld [vmem:[#allocation7 + $0x130] sm:$0xff]
    %v7663 = vld [vmem:[#allocation7 + $0x138] sm:$0xff]
    %v7664 = vld [vmem:[#allocation7 + $0x140] sm:$0xff]
    %v7665 = vld [vmem:[#allocation7 + $0x148] sm:$0xff]
    %v7666 = vld [vmem:[#allocation7 + $0x150] sm:$0xff]
    %v7667 = vld [vmem:[#allocation7 + $0x158] sm:$0xff]
    %v7668 = vld [vmem:[#allocation7 + $0x160] sm:$0xff]
    %v7669 = vld [vmem:[#allocation7 + $0x168] sm:$0xff]
    %v7670 = vld [vmem:[#allocation7 + $0x170] sm:$0xff]
    %v7671 = vld [vmem:[#allocation7 + $0x178] sm:$0xff]
    %v7672 = vld [vmem:[#allocation7 + $0x180] sm:$0xff]
    %v7673 = vld [vmem:[#allocation7 + $0x188] sm:$0xff]
    %v7674 = vld [vmem:[#allocation7 + $0x190] sm:$0xff]
    %v7675 = vld [vmem:[#allocation7 + $0x198] sm:$0xff]
    %v7676 = vld [vmem:[#allocation7 + $0x1a0] sm:$0xff]
    %v7677 = vld [vmem:[#allocation7 + $0x1a8] sm:$0xff]
    %v7678 = vld [vmem:[#allocation7 + $0x1b0] sm:$0xff]
    %v7679 = vld [vmem:[#allocation7 + $0x1b8] sm:$0xff]
    %v7680 = vld [vmem:[#allocation7 + $0x1c0] sm:$0xff]
    %v7681 = vld [vmem:[#allocation7 + $0x1c8] sm:$0xff]
    %v7682 = vld [vmem:[#allocation7 + $0x1d0] sm:$0xff]
    %v7683 = vld [vmem:[#allocation7 + $0x1d8] sm:$0xff]
    %v7684 = vld [vmem:[#allocation7 + $0x1e0] sm:$0xff]
    %v7685 = vld [vmem:[#allocation7 + $0x1e8] sm:$0xff]
    %v7686 = vld [vmem:[#allocation7 + $0x1f0] sm:$0xff]
    %v7687 = vld [vmem:[#allocation7 + $0x1f8] sm:$0xff]
    %v7688 = vld [vmem:[#allocation7 + $0x200] sm:$0xff]
    %v7689 = vld [vmem:[#allocation7 + $0x208] sm:$0xff]
    %v7690 = vld [vmem:[#allocation7 + $0x210] sm:$0xff]
    %v7691 = vld [vmem:[#allocation7 + $0x218] sm:$0xff]
    %v7692 = vld [vmem:[#allocation7 + $0x220] sm:$0xff]
    %v7693 = vld [vmem:[#allocation7 + $0x228] sm:$0xff]
    %v7694 = vld [vmem:[#allocation7 + $0x230] sm:$0xff]
    %v7695 = vld [vmem:[#allocation7 + $0x238] sm:$0xff]
    %v7696 = vld [vmem:[#allocation7 + $0x240] sm:$0xff]
    %v7697 = vld [vmem:[#allocation7 + $0x248] sm:$0xff]
    %v7698 = vld [vmem:[#allocation7 + $0x250] sm:$0xff]
    %v7699 = vld [vmem:[#allocation7 + $0x258] sm:$0xff]
    %v7700 = vld [vmem:[#allocation7 + $0x260] sm:$0xff]
    %v7701 = vld [vmem:[#allocation7 + $0x268] sm:$0xff]
    %v7702 = vld [vmem:[#allocation7 + $0x270] sm:$0xff]
    %v7703 = vld [vmem:[#allocation7 + $0x278] sm:$0xff]
    %v7704 = vld [vmem:[#allocation7 + $0x280] sm:$0xff]
    %v7705 = vld [vmem:[#allocation7 + $0x288] sm:$0xff]
    %v7706 = vld [vmem:[#allocation7 + $0x290] sm:$0xff]
    %v7707 = vld [vmem:[#allocation7 + $0x298] sm:$0xff]
    %v7708 = vld [vmem:[#allocation7 + $0x2a0] sm:$0xff]
    %v7709 = vld [vmem:[#allocation7 + $0x2a8] sm:$0xff]
    %v7710 = vld [vmem:[#allocation7 + $0x2b0] sm:$0xff]
    %v7711 = vld [vmem:[#allocation7 + $0x2b8] sm:$0xff]
    %v7712 = vld [vmem:[#allocation7 + $0x2c0] sm:$0xff]
    %v7713 = vld [vmem:[#allocation7 + $0x2c8] sm:$0xff]
    %v7714 = vld [vmem:[#allocation7 + $0x2d0] sm:$0xff]
    %v7715 = vld [vmem:[#allocation7 + $0x2d8] sm:$0xff]
    %v7716 = vld [vmem:[#allocation7 + $0x2e0] sm:$0xff]
    %v7717 = vld [vmem:[#allocation7 + $0x2e8] sm:$0xff]
    %v7718 = vld [vmem:[#allocation7 + $0x2f0] sm:$0xff]
    %v7719 = vld [vmem:[#allocation7 + $0x2f8] sm:$0xff]
    %v7720 = vld [vmem:[#allocation7 + $0x300] sm:$0xff]
    %v7721 = vld [vmem:[#allocation7 + $0x308] sm:$0xff]
    %v7722 = vld [vmem:[#allocation7 + $0x310] sm:$0xff]
    %v7723 = vld [vmem:[#allocation7 + $0x318] sm:$0xff]
    %v7724 = vld [vmem:[#allocation7 + $0x320] sm:$0xff]
    %v7725 = vld [vmem:[#allocation7 + $0x328] sm:$0xff]
    %v7726 = vld [vmem:[#allocation7 + $0x330] sm:$0xff]
    %v7727 = vld [vmem:[#allocation7 + $0x338] sm:$0xff]
    %v7728 = vld [vmem:[#allocation7 + $0x340] sm:$0xff]
    %v7729 = vld [vmem:[#allocation7 + $0x348] sm:$0xff]
    %v7730 = vld [vmem:[#allocation7 + $0x350] sm:$0xff]
    %v7731 = vld [vmem:[#allocation7 + $0x358] sm:$0xff]
    %v7732 = vld [vmem:[#allocation7 + $0x360] sm:$0xff]
    %v7733 = vld [vmem:[#allocation7 + $0x368] sm:$0xff]
    %v7734 = vld [vmem:[#allocation7 + $0x370] sm:$0xff]
    %v7735 = vld [vmem:[#allocation7 + $0x378] sm:$0xff]
    %v7736 = vld [vmem:[#allocation7 + $0x380] sm:$0xff]
    %v7737 = vld [vmem:[#allocation7 + $0x388] sm:$0xff]
    %v7738 = vld [vmem:[#allocation7 + $0x390] sm:$0xff]
    %v7739 = vld [vmem:[#allocation7 + $0x398] sm:$0xff]
    %v7740 = vld [vmem:[#allocation7 + $0x3a0] sm:$0xff]
    %v7741 = vld [vmem:[#allocation7 + $0x3a8] sm:$0xff]
    %v7742 = vld [vmem:[#allocation7 + $0x3b0] sm:$0xff]
    %v7743 = vld [vmem:[#allocation7 + $0x3b8] sm:$0xff]
    %v7744 = vld [vmem:[#allocation7 + $0x3c0] sm:$0xff]
    %v7745 = vld [vmem:[#allocation7 + $0x3c8] sm:$0xff]
    %v7746 = vld [vmem:[#allocation7 + $0x3d0] sm:$0xff]
    %v7747 = vld [vmem:[#allocation7 + $0x3d8] sm:$0xff]
    %v7748 = vld [vmem:[#allocation7 + $0x3e0] sm:$0xff]
    %v7749 = vld [vmem:[#allocation7 + $0x3e8] sm:$0xff]
    %v7750 = vld [vmem:[#allocation7 + $0x3f0] sm:$0xff]
    %v7751 = vld [vmem:[#allocation7 + $0x3f8] sm:$0xff]
    %v7752 = vld [vmem:[#allocation7 + $0x400] sm:$0xff]
    %v7753 = vld [vmem:[#allocation7 + $0x408] sm:$0xff]
    %v7754 = vld [vmem:[#allocation7 + $0x410] sm:$0xff]
    %v7755 = vld [vmem:[#allocation7 + $0x418] sm:$0xff]
    %v7756 = vld [vmem:[#allocation7 + $0x420] sm:$0xff]
    %v7757 = vld [vmem:[#allocation7 + $0x428] sm:$0xff]
    %v7758 = vld [vmem:[#allocation7 + $0x430] sm:$0xff]
    %v7759 = vld [vmem:[#allocation7 + $0x438] sm:$0xff]
    %v7760 = vld [vmem:[#allocation7 + $0x440] sm:$0xff]
    %v7761 = vld [vmem:[#allocation7 + $0x448] sm:$0xff]
    %v7762 = vld [vmem:[#allocation7 + $0x450] sm:$0xff]
    %v7763 = vld [vmem:[#allocation7 + $0x458] sm:$0xff]
    %v7764 = vld [vmem:[#allocation7 + $0x460] sm:$0xff]
    %v7765 = vld [vmem:[#allocation7 + $0x468] sm:$0xff]
    %v7766 = vld [vmem:[#allocation7 + $0x470] sm:$0xff]
    %v7767 = vld [vmem:[#allocation7 + $0x478] sm:$0xff]
    %v7768 = vld [vmem:[#allocation7 + $0x480] sm:$0xff]
    %v7769 = vld [vmem:[#allocation7 + $0x488] sm:$0xff]
    %v7770 = vld [vmem:[#allocation7 + $0x490] sm:$0xff]
    %v7771 = vld [vmem:[#allocation7 + $0x498] sm:$0xff]
    %v7772 = vld [vmem:[#allocation7 + $0x4a0] sm:$0xff]
    %v7773 = vld [vmem:[#allocation7 + $0x4a8] sm:$0xff]
    %v7774 = vld [vmem:[#allocation7 + $0x4b0] sm:$0xff]
    %v7775 = vld [vmem:[#allocation7 + $0x4b8] sm:$0xff]
    %v7776 = vld [vmem:[#allocation7 + $0x4c0] sm:$0xff]
    %v7777 = vld [vmem:[#allocation7 + $0x4c8] sm:$0xff]
    %v7778 = vld [vmem:[#allocation7 + $0x4d0] sm:$0xff]
    %v7779 = vld [vmem:[#allocation7 + $0x4d8] sm:$0xff]
    %v7780 = vld [vmem:[#allocation7 + $0x4e0] sm:$0xff]
    %v7781 = vld [vmem:[#allocation7 + $0x4e8] sm:$0xff]
    %v7782 = vld [vmem:[#allocation7 + $0x4f0] sm:$0xff]
    %v7783 = vld [vmem:[#allocation7 + $0x4f8] sm:$0xff]
    %v7784 = vld [vmem:[#allocation7 + $0x500] sm:$0xff]
    %v7785 = vld [vmem:[#allocation7 + $0x508] sm:$0xff]
    %v7786 = vld [vmem:[#allocation7 + $0x510] sm:$0xff]
    %v7787 = vld [vmem:[#allocation7 + $0x518] sm:$0xff]
    %v7788 = vld [vmem:[#allocation7 + $0x520] sm:$0xff]
    %v7789 = vld [vmem:[#allocation7 + $0x528] sm:$0xff]
    %v7790 = vld [vmem:[#allocation7 + $0x530] sm:$0xff]
    %v7791 = vld [vmem:[#allocation7 + $0x538] sm:$0xff]
    %v7792 = vld [vmem:[#allocation7 + $0x540] sm:$0xff]
    %v7793 = vld [vmem:[#allocation7 + $0x548] sm:$0xff]
    %v7794 = vld [vmem:[#allocation7 + $0x550] sm:$0xff]
    %v7795 = vld [vmem:[#allocation7 + $0x558] sm:$0xff]
    %v7796 = vld [vmem:[#allocation7 + $0x560] sm:$0xff]
    %v7797 = vld [vmem:[#allocation7 + $0x568] sm:$0xff]
    %v7798 = vld [vmem:[#allocation7 + $0x570] sm:$0xff]
    %v7799 = vld [vmem:[#allocation7 + $0x578] sm:$0xff]
    %v7800 = vld [vmem:[#allocation7 + $0x580] sm:$0xff]
    %v7801 = vld [vmem:[#allocation7 + $0x588] sm:$0xff]
    %v7802 = vld [vmem:[#allocation7 + $0x590] sm:$0xff]
    %v7803 = vld [vmem:[#allocation7 + $0x598] sm:$0xff]
    %v7804 = vld [vmem:[#allocation7 + $0x5a0] sm:$0xff]
    %v7805 = vld [vmem:[#allocation7 + $0x5a8] sm:$0xff]
    %v7806 = vld [vmem:[#allocation7 + $0x5b0] sm:$0xff]
    %v7807 = vld [vmem:[#allocation7 + $0x5b8] sm:$0xff]
    %v7808 = vld [vmem:[#allocation7 + $0x5c0] sm:$0xff]
    %v7809 = vld [vmem:[#allocation7 + $0x5c8] sm:$0xff]
    %v7810 = vld [vmem:[#allocation7 + $0x5d0] sm:$0xff]
    %v7811 = vld [vmem:[#allocation7 + $0x5d8] sm:$0xff]
    %v7812 = vld [vmem:[#allocation7 + $0x5e0] sm:$0xff]
    %v7813 = vld [vmem:[#allocation7 + $0x5e8] sm:$0xff]
    %v7814 = vld [vmem:[#allocation7 + $0x5f0] sm:$0xff]
    %v7815 = vld [vmem:[#allocation7 + $0x5f8] sm:$0xff]
    %v7816 = vld [vmem:[#allocation7 + $0x600] sm:$0xff]
    %v7817 = vld [vmem:[#allocation7 + $0x608] sm:$0xff]
    %v7818 = vld [vmem:[#allocation7 + $0x610] sm:$0xff]
    %v7819 = vld [vmem:[#allocation7 + $0x618] sm:$0xff]
    %v7820 = vld [vmem:[#allocation7 + $0x620] sm:$0xff]
    %v7821 = vld [vmem:[#allocation7 + $0x628] sm:$0xff]
    %v7822 = vld [vmem:[#allocation7 + $0x630] sm:$0xff]
    %v7823 = vld [vmem:[#allocation7 + $0x638] sm:$0xff]
    %v7824 = vld [vmem:[#allocation7 + $0x640] sm:$0xff]
    %v7825 = vld [vmem:[#allocation7 + $0x648] sm:$0xff]
    %v7826 = vld [vmem:[#allocation7 + $0x650] sm:$0xff]
    %v7827 = vld [vmem:[#allocation7 + $0x658] sm:$0xff]
    %v7828 = vld [vmem:[#allocation7 + $0x660] sm:$0xff]
    %v7829 = vld [vmem:[#allocation7 + $0x668] sm:$0xff]
    %v7830 = vld [vmem:[#allocation7 + $0x670] sm:$0xff]
    %v7831 = vld [vmem:[#allocation7 + $0x678] sm:$0xff]
    %v7832 = vld [vmem:[#allocation7 + $0x680] sm:$0xff]
    %v7833 = vld [vmem:[#allocation7 + $0x688] sm:$0xff]
    %v7834 = vld [vmem:[#allocation7 + $0x690] sm:$0xff]
    %v7835 = vld [vmem:[#allocation7 + $0x698] sm:$0xff]
    %v7836 = vld [vmem:[#allocation7 + $0x6a0] sm:$0xff]
    %v7837 = vld [vmem:[#allocation7 + $0x6a8] sm:$0xff]
    %v7838 = vld [vmem:[#allocation7 + $0x6b0] sm:$0xff]
    %v7839 = vld [vmem:[#allocation7 + $0x6b8] sm:$0xff]
    %v7840 = vld [vmem:[#allocation7 + $0x6c0] sm:$0xff]
    %v7841 = vld [vmem:[#allocation7 + $0x6c8] sm:$0xff]
    %v7842 = vld [vmem:[#allocation7 + $0x6d0] sm:$0xff]
    %v7843 = vld [vmem:[#allocation7 + $0x6d8] sm:$0xff]
    %v7844 = vld [vmem:[#allocation7 + $0x6e0] sm:$0xff]
    %v7845 = vld [vmem:[#allocation7 + $0x6e8] sm:$0xff]
    %v7846 = vld [vmem:[#allocation7 + $0x6f0] sm:$0xff]
    %v7847 = vld [vmem:[#allocation7 + $0x6f8] sm:$0xff]
    %v7848 = vld [vmem:[#allocation7 + $0x700] sm:$0xff]
    %v7849 = vld [vmem:[#allocation7 + $0x708] sm:$0xff]
    %v7850 = vld [vmem:[#allocation7 + $0x710] sm:$0xff]
    %v7851 = vld [vmem:[#allocation7 + $0x718] sm:$0xff]
    %v7852 = vld [vmem:[#allocation7 + $0x720] sm:$0xff]
    %v7853 = vld [vmem:[#allocation7 + $0x728] sm:$0xff]
    %v7854 = vld [vmem:[#allocation7 + $0x730] sm:$0xff]
    %v7855 = vld [vmem:[#allocation7 + $0x738] sm:$0xff]
    %v7856 = vld [vmem:[#allocation7 + $0x740] sm:$0xff]
    %v7857 = vld [vmem:[#allocation7 + $0x748] sm:$0xff]
    %v7858 = vld [vmem:[#allocation7 + $0x750] sm:$0xff]
    %v7859 = vld [vmem:[#allocation7 + $0x758] sm:$0xff]
    %v7860 = vld [vmem:[#allocation7 + $0x760] sm:$0xff]
    %v7861 = vld [vmem:[#allocation7 + $0x768] sm:$0xff]
    %v7862 = vld [vmem:[#allocation7 + $0x770] sm:$0xff]
    %v7863 = vld [vmem:[#allocation7 + $0x778] sm:$0xff]
    %v7864 = vld [vmem:[#allocation7 + $0x780] sm:$0xff]
    %v7865 = vld [vmem:[#allocation7 + $0x788] sm:$0xff]
    %v7866 = vld [vmem:[#allocation7 + $0x790] sm:$0xff]
    %v7867 = vld [vmem:[#allocation7 + $0x798] sm:$0xff]
    %v7868 = vld [vmem:[#allocation7 + $0x7a0] sm:$0xff]
    %v7869 = vld [vmem:[#allocation7 + $0x7a8] sm:$0xff]
    %v7870 = vld [vmem:[#allocation7 + $0x7b0] sm:$0xff]
    %v7871 = vld [vmem:[#allocation7 + $0x7b8] sm:$0xff]
    %v7872 = vld [vmem:[#allocation7 + $0x7c0] sm:$0xff]
    %v7873 = vld [vmem:[#allocation7 + $0x7c8] sm:$0xff]
    %v7874 = vld [vmem:[#allocation7 + $0x7d0] sm:$0xff]
    %v7875 = vld [vmem:[#allocation7 + $0x7d8] sm:$0xff]
    %v7876 = vld [vmem:[#allocation7 + $0x7e0] sm:$0xff]
    %v7877 = vld [vmem:[#allocation7 + $0x7e8] sm:$0xff]
    %v7878 = vld [vmem:[#allocation7 + $0x7f0] sm:$0xff]
    %v7879 = vld [vmem:[#allocation7 + $0x7f8] sm:$0xff]
    %v7880 = vunpack.c.l.bf16 %v7624
    %v7881 = vunpack.c.h.bf16 %v7624
    %v7882 = vunpack.c.l.bf16 %v7625
    %v7883 = vunpack.c.h.bf16 %v7625
    %v7884 = vunpack.c.l.bf16 %v7626
    %v7885 = vunpack.c.h.bf16 %v7626
    %v7886 = vunpack.c.l.bf16 %v7627
    %v7887 = vunpack.c.h.bf16 %v7627
    %v7888 = vunpack.c.l.bf16 %v7628
    %v7889 = vunpack.c.h.bf16 %v7628
    %v7890 = vunpack.c.l.bf16 %v7629
    %v7891 = vunpack.c.h.bf16 %v7629
    %v7892 = vunpack.c.l.bf16 %v7630
    %v7893 = vunpack.c.h.bf16 %v7630
    %v7894 = vunpack.c.l.bf16 %v7631
    %v7895 = vunpack.c.h.bf16 %v7631
    %v7896 = vunpack.c.l.bf16 %v7632
    %v7897 = vunpack.c.h.bf16 %v7632
    %v7898 = vunpack.c.l.bf16 %v7633
    %v7899 = vunpack.c.h.bf16 %v7633
    %v7900 = vunpack.c.l.bf16 %v7634
    %v7901 = vunpack.c.h.bf16 %v7634
    %v7902 = vunpack.c.l.bf16 %v7635
    %v7903 = vunpack.c.h.bf16 %v7635
    %v7904 = vunpack.c.l.bf16 %v7636
    %v7905 = vunpack.c.h.bf16 %v7636
    %v7906 = vunpack.c.l.bf16 %v7637
    %v7907 = vunpack.c.h.bf16 %v7637
    %v7908 = vunpack.c.l.bf16 %v7638
    %v7909 = vunpack.c.h.bf16 %v7638
    %v7910 = vunpack.c.l.bf16 %v7639
    %v7911 = vunpack.c.h.bf16 %v7639
    %v7912 = vunpack.c.l.bf16 %v7640
    %v7913 = vunpack.c.h.bf16 %v7640
    %v7914 = vunpack.c.l.bf16 %v7641
    %v7915 = vunpack.c.h.bf16 %v7641
    %v7916 = vunpack.c.l.bf16 %v7642
    %v7917 = vunpack.c.h.bf16 %v7642
    %v7918 = vunpack.c.l.bf16 %v7643
    %v7919 = vunpack.c.h.bf16 %v7643
    %v7920 = vunpack.c.l.bf16 %v7644
    %v7921 = vunpack.c.h.bf16 %v7644
    %v7922 = vunpack.c.l.bf16 %v7645
    %v7923 = vunpack.c.h.bf16 %v7645
    %v7924 = vunpack.c.l.bf16 %v7646
    %v7925 = vunpack.c.h.bf16 %v7646
    %v7926 = vunpack.c.l.bf16 %v7647
    %v7927 = vunpack.c.h.bf16 %v7647
    %v7928 = vunpack.c.l.bf16 %v7648
    %v7929 = vunpack.c.h.bf16 %v7648
    %v7930 = vunpack.c.l.bf16 %v7649
    %v7931 = vunpack.c.h.bf16 %v7649
    %v7932 = vunpack.c.l.bf16 %v7650
    %v7933 = vunpack.c.h.bf16 %v7650
    %v7934 = vunpack.c.l.bf16 %v7651
    %v7935 = vunpack.c.h.bf16 %v7651
    %v7936 = vunpack.c.l.bf16 %v7652
    %v7937 = vunpack.c.h.bf16 %v7652
    %v7938 = vunpack.c.l.bf16 %v7653
    %v7939 = vunpack.c.h.bf16 %v7653
    %v7940 = vunpack.c.l.bf16 %v7654
    %v7941 = vunpack.c.h.bf16 %v7654
    %v7942 = vunpack.c.l.bf16 %v7655
    %v7943 = vunpack.c.h.bf16 %v7655
    %v7944 = vunpack.c.l.bf16 %v7656
    %v7945 = vunpack.c.h.bf16 %v7656
    %v7946 = vunpack.c.l.bf16 %v7657
    %v7947 = vunpack.c.h.bf16 %v7657
    %v7948 = vunpack.c.l.bf16 %v7658
    %v7949 = vunpack.c.h.bf16 %v7658
    %v7950 = vunpack.c.l.bf16 %v7659
    %v7951 = vunpack.c.h.bf16 %v7659
    %v7952 = vunpack.c.l.bf16 %v7660
    %v7953 = vunpack.c.h.bf16 %v7660
    %v7954 = vunpack.c.l.bf16 %v7661
    %v7955 = vunpack.c.h.bf16 %v7661
    %v7956 = vunpack.c.l.bf16 %v7662
    %v7957 = vunpack.c.h.bf16 %v7662
    %v7958 = vunpack.c.l.bf16 %v7663
    %v7959 = vunpack.c.h.bf16 %v7663
    %v7960 = vunpack.c.l.bf16 %v7664
    %v7961 = vunpack.c.h.bf16 %v7664
    %v7962 = vunpack.c.l.bf16 %v7665
    %v7963 = vunpack.c.h.bf16 %v7665
    %v7964 = vunpack.c.l.bf16 %v7666
    %v7965 = vunpack.c.h.bf16 %v7666
    %v7966 = vunpack.c.l.bf16 %v7667
    %v7967 = vunpack.c.h.bf16 %v7667
    %v7968 = vunpack.c.l.bf16 %v7668
    %v7969 = vunpack.c.h.bf16 %v7668
    %v7970 = vunpack.c.l.bf16 %v7669
    %v7971 = vunpack.c.h.bf16 %v7669
    %v7972 = vunpack.c.l.bf16 %v7670
    %v7973 = vunpack.c.h.bf16 %v7670
    %v7974 = vunpack.c.l.bf16 %v7671
    %v7975 = vunpack.c.h.bf16 %v7671
    %v7976 = vunpack.c.l.bf16 %v7672
    %v7977 = vunpack.c.h.bf16 %v7672
    %v7978 = vunpack.c.l.bf16 %v7673
    %v7979 = vunpack.c.h.bf16 %v7673
    %v7980 = vunpack.c.l.bf16 %v7674
    %v7981 = vunpack.c.h.bf16 %v7674
    %v7982 = vunpack.c.l.bf16 %v7675
    %v7983 = vunpack.c.h.bf16 %v7675
    %v7984 = vunpack.c.l.bf16 %v7676
    %v7985 = vunpack.c.h.bf16 %v7676
    %v7986 = vunpack.c.l.bf16 %v7677
    %v7987 = vunpack.c.h.bf16 %v7677
    %v7988 = vunpack.c.l.bf16 %v7678
    %v7989 = vunpack.c.h.bf16 %v7678
    %v7990 = vunpack.c.l.bf16 %v7679
    %v7991 = vunpack.c.h.bf16 %v7679
    %v7992 = vunpack.c.l.bf16 %v7680
    %v7993 = vunpack.c.h.bf16 %v7680
    %v7994 = vunpack.c.l.bf16 %v7681
    %v7995 = vunpack.c.h.bf16 %v7681
    %v7996 = vunpack.c.l.bf16 %v7682
    %v7997 = vunpack.c.h.bf16 %v7682
    %v7998 = vunpack.c.l.bf16 %v7683
    %v7999 = vunpack.c.h.bf16 %v7683
    %v8000 = vunpack.c.l.bf16 %v7684
    %v8001 = vunpack.c.h.bf16 %v7684
    %v8002 = vunpack.c.l.bf16 %v7685
    %v8003 = vunpack.c.h.bf16 %v7685
    %v8004 = vunpack.c.l.bf16 %v7686
    %v8005 = vunpack.c.h.bf16 %v7686
    %v8006 = vunpack.c.l.bf16 %v7687
    %v8007 = vunpack.c.h.bf16 %v7687
    %v8008 = vunpack.c.l.bf16 %v7688
    %v8009 = vunpack.c.h.bf16 %v7688
    %v8010 = vunpack.c.l.bf16 %v7689
    %v8011 = vunpack.c.h.bf16 %v7689
    %v8012 = vunpack.c.l.bf16 %v7690
    %v8013 = vunpack.c.h.bf16 %v7690
    %v8014 = vunpack.c.l.bf16 %v7691
    %v8015 = vunpack.c.h.bf16 %v7691
    %v8016 = vunpack.c.l.bf16 %v7692
    %v8017 = vunpack.c.h.bf16 %v7692
    %v8018 = vunpack.c.l.bf16 %v7693
    %v8019 = vunpack.c.h.bf16 %v7693
    %v8020 = vunpack.c.l.bf16 %v7694
    %v8021 = vunpack.c.h.bf16 %v7694
    %v8022 = vunpack.c.l.bf16 %v7695
    %v8023 = vunpack.c.h.bf16 %v7695
    %v8024 = vunpack.c.l.bf16 %v7696
    %v8025 = vunpack.c.h.bf16 %v7696
    %v8026 = vunpack.c.l.bf16 %v7697
    %v8027 = vunpack.c.h.bf16 %v7697
    %v8028 = vunpack.c.l.bf16 %v7698
    %v8029 = vunpack.c.h.bf16 %v7698
    %v8030 = vunpack.c.l.bf16 %v7699
    %v8031 = vunpack.c.h.bf16 %v7699
    %v8032 = vunpack.c.l.bf16 %v7700
    %v8033 = vunpack.c.h.bf16 %v7700
    %v8034 = vunpack.c.l.bf16 %v7701
    %v8035 = vunpack.c.h.bf16 %v7701
    %v8036 = vunpack.c.l.bf16 %v7702
    %v8037 = vunpack.c.h.bf16 %v7702
    %v8038 = vunpack.c.l.bf16 %v7703
    %v8039 = vunpack.c.h.bf16 %v7703
    %v8040 = vunpack.c.l.bf16 %v7704
    %v8041 = vunpack.c.h.bf16 %v7704
    %v8042 = vunpack.c.l.bf16 %v7705
    %v8043 = vunpack.c.h.bf16 %v7705
    %v8044 = vunpack.c.l.bf16 %v7706
    %v8045 = vunpack.c.h.bf16 %v7706
    %v8046 = vunpack.c.l.bf16 %v7707
    %v8047 = vunpack.c.h.bf16 %v7707
    %v8048 = vunpack.c.l.bf16 %v7708
    %v8049 = vunpack.c.h.bf16 %v7708
    %v8050 = vunpack.c.l.bf16 %v7709
    %v8051 = vunpack.c.h.bf16 %v7709
    %v8052 = vunpack.c.l.bf16 %v7710
    %v8053 = vunpack.c.h.bf16 %v7710
    %v8054 = vunpack.c.l.bf16 %v7711
    %v8055 = vunpack.c.h.bf16 %v7711
    %v8056 = vunpack.c.l.bf16 %v7712
    %v8057 = vunpack.c.h.bf16 %v7712
    %v8058 = vunpack.c.l.bf16 %v7713
    %v8059 = vunpack.c.h.bf16 %v7713
    %v8060 = vunpack.c.l.bf16 %v7714
    %v8061 = vunpack.c.h.bf16 %v7714
    %v8062 = vunpack.c.l.bf16 %v7715
    %v8063 = vunpack.c.h.bf16 %v7715
    %v8064 = vunpack.c.l.bf16 %v7716
    %v8065 = vunpack.c.h.bf16 %v7716
    %v8066 = vunpack.c.l.bf16 %v7717
    %v8067 = vunpack.c.h.bf16 %v7717
    %v8068 = vunpack.c.l.bf16 %v7718
    %v8069 = vunpack.c.h.bf16 %v7718
    %v8070 = vunpack.c.l.bf16 %v7719
    %v8071 = vunpack.c.h.bf16 %v7719
    %v8072 = vunpack.c.l.bf16 %v7720
    %v8073 = vunpack.c.h.bf16 %v7720
    %v8074 = vunpack.c.l.bf16 %v7721
    %v8075 = vunpack.c.h.bf16 %v7721
    %v8076 = vunpack.c.l.bf16 %v7722
    %v8077 = vunpack.c.h.bf16 %v7722
    %v8078 = vunpack.c.l.bf16 %v7723
    %v8079 = vunpack.c.h.bf16 %v7723
    %v8080 = vunpack.c.l.bf16 %v7724
    %v8081 = vunpack.c.h.bf16 %v7724
    %v8082 = vunpack.c.l.bf16 %v7725
    %v8083 = vunpack.c.h.bf16 %v7725
    %v8084 = vunpack.c.l.bf16 %v7726
    %v8085 = vunpack.c.h.bf16 %v7726
    %v8086 = vunpack.c.l.bf16 %v7727
    %v8087 = vunpack.c.h.bf16 %v7727
    %v8088 = vunpack.c.l.bf16 %v7728
    %v8089 = vunpack.c.h.bf16 %v7728
    %v8090 = vunpack.c.l.bf16 %v7729
    %v8091 = vunpack.c.h.bf16 %v7729
    %v8092 = vunpack.c.l.bf16 %v7730
    %v8093 = vunpack.c.h.bf16 %v7730
    %v8094 = vunpack.c.l.bf16 %v7731
    %v8095 = vunpack.c.h.bf16 %v7731
    %v8096 = vunpack.c.l.bf16 %v7732
    %v8097 = vunpack.c.h.bf16 %v7732
    %v8098 = vunpack.c.l.bf16 %v7733
    %v8099 = vunpack.c.h.bf16 %v7733
    %v8100 = vunpack.c.l.bf16 %v7734
    %v8101 = vunpack.c.h.bf16 %v7734
    %v8102 = vunpack.c.l.bf16 %v7735
    %v8103 = vunpack.c.h.bf16 %v7735
    %v8104 = vunpack.c.l.bf16 %v7736
    %v8105 = vunpack.c.h.bf16 %v7736
    %v8106 = vunpack.c.l.bf16 %v7737
    %v8107 = vunpack.c.h.bf16 %v7737
    %v8108 = vunpack.c.l.bf16 %v7738
    %v8109 = vunpack.c.h.bf16 %v7738
    %v8110 = vunpack.c.l.bf16 %v7739
    %v8111 = vunpack.c.h.bf16 %v7739
    %v8112 = vunpack.c.l.bf16 %v7740
    %v8113 = vunpack.c.h.bf16 %v7740
    %v8114 = vunpack.c.l.bf16 %v7741
    %v8115 = vunpack.c.h.bf16 %v7741
    %v8116 = vunpack.c.l.bf16 %v7742
    %v8117 = vunpack.c.h.bf16 %v7742
    %v8118 = vunpack.c.l.bf16 %v7743
    %v8119 = vunpack.c.h.bf16 %v7743
    %v8120 = vunpack.c.l.bf16 %v7744
    %v8121 = vunpack.c.h.bf16 %v7744
    %v8122 = vunpack.c.l.bf16 %v7745
    %v8123 = vunpack.c.h.bf16 %v7745
    %v8124 = vunpack.c.l.bf16 %v7746
    %v8125 = vunpack.c.h.bf16 %v7746
    %v8126 = vunpack.c.l.bf16 %v7747
    %v8127 = vunpack.c.h.bf16 %v7747
    %v8128 = vunpack.c.l.bf16 %v7748
    %v8129 = vunpack.c.h.bf16 %v7748
    %v8130 = vunpack.c.l.bf16 %v7749
    %v8131 = vunpack.c.h.bf16 %v7749
    %v8132 = vunpack.c.l.bf16 %v7750
    %v8133 = vunpack.c.h.bf16 %v7750
    %v8134 = vunpack.c.l.bf16 %v7751
    %v8135 = vunpack.c.h.bf16 %v7751
    %v8136 = vunpack.c.l.bf16 %v7752
    %v8137 = vunpack.c.h.bf16 %v7752
    %v8138 = vunpack.c.l.bf16 %v7753
    %v8139 = vunpack.c.h.bf16 %v7753
    %v8140 = vunpack.c.l.bf16 %v7754
    %v8141 = vunpack.c.h.bf16 %v7754
    %v8142 = vunpack.c.l.bf16 %v7755
    %v8143 = vunpack.c.h.bf16 %v7755
    %v8144 = vunpack.c.l.bf16 %v7756
    %v8145 = vunpack.c.h.bf16 %v7756
    %v8146 = vunpack.c.l.bf16 %v7757
    %v8147 = vunpack.c.h.bf16 %v7757
    %v8148 = vunpack.c.l.bf16 %v7758
    %v8149 = vunpack.c.h.bf16 %v7758
    %v8150 = vunpack.c.l.bf16 %v7759
    %v8151 = vunpack.c.h.bf16 %v7759
    %v8152 = vunpack.c.l.bf16 %v7760
    %v8153 = vunpack.c.h.bf16 %v7760
    %v8154 = vunpack.c.l.bf16 %v7761
    %v8155 = vunpack.c.h.bf16 %v7761
    %v8156 = vunpack.c.l.bf16 %v7762
    %v8157 = vunpack.c.h.bf16 %v7762
    %v8158 = vunpack.c.l.bf16 %v7763
    %v8159 = vunpack.c.h.bf16 %v7763
    %v8160 = vunpack.c.l.bf16 %v7764
    %v8161 = vunpack.c.h.bf16 %v7764
    %v8162 = vunpack.c.l.bf16 %v7765
    %v8163 = vunpack.c.h.bf16 %v7765
    %v8164 = vunpack.c.l.bf16 %v7766
    %v8165 = vunpack.c.h.bf16 %v7766
    %v8166 = vunpack.c.l.bf16 %v7767
    %v8167 = vunpack.c.h.bf16 %v7767
    %v8168 = vunpack.c.l.bf16 %v7768
    %v8169 = vunpack.c.h.bf16 %v7768
    %v8170 = vunpack.c.l.bf16 %v7769
    %v8171 = vunpack.c.h.bf16 %v7769
    %v8172 = vunpack.c.l.bf16 %v7770
    %v8173 = vunpack.c.h.bf16 %v7770
    %v8174 = vunpack.c.l.bf16 %v7771
    %v8175 = vunpack.c.h.bf16 %v7771
    %v8176 = vunpack.c.l.bf16 %v7772
    %v8177 = vunpack.c.h.bf16 %v7772
    %v8178 = vunpack.c.l.bf16 %v7773
    %v8179 = vunpack.c.h.bf16 %v7773
    %v8180 = vunpack.c.l.bf16 %v7774
    %v8181 = vunpack.c.h.bf16 %v7774
    %v8182 = vunpack.c.l.bf16 %v7775
    %v8183 = vunpack.c.h.bf16 %v7775
    %v8184 = vunpack.c.l.bf16 %v7776
    %v8185 = vunpack.c.h.bf16 %v7776
    %v8186 = vunpack.c.l.bf16 %v7777
    %v8187 = vunpack.c.h.bf16 %v7777
    %v8188 = vunpack.c.l.bf16 %v7778
    %v8189 = vunpack.c.h.bf16 %v7778
    %v8190 = vunpack.c.l.bf16 %v7779
    %v8191 = vunpack.c.h.bf16 %v7779
    %v8192 = vunpack.c.l.bf16 %v7780
    %v8193 = vunpack.c.h.bf16 %v7780
    %v8194 = vunpack.c.l.bf16 %v7781
    %v8195 = vunpack.c.h.bf16 %v7781
    %v8196 = vunpack.c.l.bf16 %v7782
    %v8197 = vunpack.c.h.bf16 %v7782
    %v8198 = vunpack.c.l.bf16 %v7783
    %v8199 = vunpack.c.h.bf16 %v7783
    %v8200 = vunpack.c.l.bf16 %v7784
    %v8201 = vunpack.c.h.bf16 %v7784
    %v8202 = vunpack.c.l.bf16 %v7785
    %v8203 = vunpack.c.h.bf16 %v7785
    %v8204 = vunpack.c.l.bf16 %v7786
    %v8205 = vunpack.c.h.bf16 %v7786
    %v8206 = vunpack.c.l.bf16 %v7787
    %v8207 = vunpack.c.h.bf16 %v7787
    %v8208 = vunpack.c.l.bf16 %v7788
    %v8209 = vunpack.c.h.bf16 %v7788
    %v8210 = vunpack.c.l.bf16 %v7789
    %v8211 = vunpack.c.h.bf16 %v7789
    %v8212 = vunpack.c.l.bf16 %v7790
    %v8213 = vunpack.c.h.bf16 %v7790
    %v8214 = vunpack.c.l.bf16 %v7791
    %v8215 = vunpack.c.h.bf16 %v7791
    %v8216 = vunpack.c.l.bf16 %v7792
    %v8217 = vunpack.c.h.bf16 %v7792
    %v8218 = vunpack.c.l.bf16 %v7793
    %v8219 = vunpack.c.h.bf16 %v7793
    %v8220 = vunpack.c.l.bf16 %v7794
    %v8221 = vunpack.c.h.bf16 %v7794
    %v8222 = vunpack.c.l.bf16 %v7795
    %v8223 = vunpack.c.h.bf16 %v7795
    %v8224 = vunpack.c.l.bf16 %v7796
    %v8225 = vunpack.c.h.bf16 %v7796
    %v8226 = vunpack.c.l.bf16 %v7797
    %v8227 = vunpack.c.h.bf16 %v7797
    %v8228 = vunpack.c.l.bf16 %v7798
    %v8229 = vunpack.c.h.bf16 %v7798
    %v8230 = vunpack.c.l.bf16 %v7799
    %v8231 = vunpack.c.h.bf16 %v7799
    %v8232 = vunpack.c.l.bf16 %v7800
    %v8233 = vunpack.c.h.bf16 %v7800
    %v8234 = vunpack.c.l.bf16 %v7801
    %v8235 = vunpack.c.h.bf16 %v7801
    %v8236 = vunpack.c.l.bf16 %v7802
    %v8237 = vunpack.c.h.bf16 %v7802
    %v8238 = vunpack.c.l.bf16 %v7803
    %v8239 = vunpack.c.h.bf16 %v7803
    %v8240 = vunpack.c.l.bf16 %v7804
    %v8241 = vunpack.c.h.bf16 %v7804
    %v8242 = vunpack.c.l.bf16 %v7805
    %v8243 = vunpack.c.h.bf16 %v7805
    %v8244 = vunpack.c.l.bf16 %v7806
    %v8245 = vunpack.c.h.bf16 %v7806
    %v8246 = vunpack.c.l.bf16 %v7807
    %v8247 = vunpack.c.h.bf16 %v7807
    %v8248 = vunpack.c.l.bf16 %v7808
    %v8249 = vunpack.c.h.bf16 %v7808
    %v8250 = vunpack.c.l.bf16 %v7809
    %v8251 = vunpack.c.h.bf16 %v7809
    %v8252 = vunpack.c.l.bf16 %v7810
    %v8253 = vunpack.c.h.bf16 %v7810
    %v8254 = vunpack.c.l.bf16 %v7811
    %v8255 = vunpack.c.h.bf16 %v7811
    %v8256 = vunpack.c.l.bf16 %v7812
    %v8257 = vunpack.c.h.bf16 %v7812
    %v8258 = vunpack.c.l.bf16 %v7813
    %v8259 = vunpack.c.h.bf16 %v7813
    %v8260 = vunpack.c.l.bf16 %v7814
    %v8261 = vunpack.c.h.bf16 %v7814
    %v8262 = vunpack.c.l.bf16 %v7815
    %v8263 = vunpack.c.h.bf16 %v7815
    %v8264 = vunpack.c.l.bf16 %v7816
    %v8265 = vunpack.c.h.bf16 %v7816
    %v8266 = vunpack.c.l.bf16 %v7817
    %v8267 = vunpack.c.h.bf16 %v7817
    %v8268 = vunpack.c.l.bf16 %v7818
    %v8269 = vunpack.c.h.bf16 %v7818
    %v8270 = vunpack.c.l.bf16 %v7819
    %v8271 = vunpack.c.h.bf16 %v7819
    %v8272 = vunpack.c.l.bf16 %v7820
    %v8273 = vunpack.c.h.bf16 %v7820
    %v8274 = vunpack.c.l.bf16 %v7821
    %v8275 = vunpack.c.h.bf16 %v7821
    %v8276 = vunpack.c.l.bf16 %v7822
    %v8277 = vunpack.c.h.bf16 %v7822
    %v8278 = vunpack.c.l.bf16 %v7823
    %v8279 = vunpack.c.h.bf16 %v7823
    %v8280 = vunpack.c.l.bf16 %v7824
    %v8281 = vunpack.c.h.bf16 %v7824
    %v8282 = vunpack.c.l.bf16 %v7825
    %v8283 = vunpack.c.h.bf16 %v7825
    %v8284 = vunpack.c.l.bf16 %v7826
    %v8285 = vunpack.c.h.bf16 %v7826
    %v8286 = vunpack.c.l.bf16 %v7827
    %v8287 = vunpack.c.h.bf16 %v7827
    %v8288 = vunpack.c.l.bf16 %v7828
    %v8289 = vunpack.c.h.bf16 %v7828
    %v8290 = vunpack.c.l.bf16 %v7829
    %v8291 = vunpack.c.h.bf16 %v7829
    %v8292 = vunpack.c.l.bf16 %v7830
    %v8293 = vunpack.c.h.bf16 %v7830
    %v8294 = vunpack.c.l.bf16 %v7831
    %v8295 = vunpack.c.h.bf16 %v7831
    %v8296 = vunpack.c.l.bf16 %v7832
    %v8297 = vunpack.c.h.bf16 %v7832
    %v8298 = vunpack.c.l.bf16 %v7833
    %v8299 = vunpack.c.h.bf16 %v7833
    %v8300 = vunpack.c.l.bf16 %v7834
    %v8301 = vunpack.c.h.bf16 %v7834
    %v8302 = vunpack.c.l.bf16 %v7835
    %v8303 = vunpack.c.h.bf16 %v7835
    %v8304 = vunpack.c.l.bf16 %v7836
    %v8305 = vunpack.c.h.bf16 %v7836
    %v8306 = vunpack.c.l.bf16 %v7837
    %v8307 = vunpack.c.h.bf16 %v7837
    %v8308 = vunpack.c.l.bf16 %v7838
    %v8309 = vunpack.c.h.bf16 %v7838
    %v8310 = vunpack.c.l.bf16 %v7839
    %v8311 = vunpack.c.h.bf16 %v7839
    %v8312 = vunpack.c.l.bf16 %v7840
    %v8313 = vunpack.c.h.bf16 %v7840
    %v8314 = vunpack.c.l.bf16 %v7841
    %v8315 = vunpack.c.h.bf16 %v7841
    %v8316 = vunpack.c.l.bf16 %v7842
    %v8317 = vunpack.c.h.bf16 %v7842
    %v8318 = vunpack.c.l.bf16 %v7843
    %v8319 = vunpack.c.h.bf16 %v7843
    %v8320 = vunpack.c.l.bf16 %v7844
    %v8321 = vunpack.c.h.bf16 %v7844
    %v8322 = vunpack.c.l.bf16 %v7845
    %v8323 = vunpack.c.h.bf16 %v7845
    %v8324 = vunpack.c.l.bf16 %v7846
    %v8325 = vunpack.c.h.bf16 %v7846
    %v8326 = vunpack.c.l.bf16 %v7847
    %v8327 = vunpack.c.h.bf16 %v7847
    %v8328 = vunpack.c.l.bf16 %v7848
    %v8329 = vunpack.c.h.bf16 %v7848
    %v8330 = vunpack.c.l.bf16 %v7849
    %v8331 = vunpack.c.h.bf16 %v7849
    %v8332 = vunpack.c.l.bf16 %v7850
    %v8333 = vunpack.c.h.bf16 %v7850
    %v8334 = vunpack.c.l.bf16 %v7851
    %v8335 = vunpack.c.h.bf16 %v7851
    %v8336 = vunpack.c.l.bf16 %v7852
    %v8337 = vunpack.c.h.bf16 %v7852
    %v8338 = vunpack.c.l.bf16 %v7853
    %v8339 = vunpack.c.h.bf16 %v7853
    %v8340 = vunpack.c.l.bf16 %v7854
    %v8341 = vunpack.c.h.bf16 %v7854
    %v8342 = vunpack.c.l.bf16 %v7855
    %v8343 = vunpack.c.h.bf16 %v7855
    %v8344 = vunpack.c.l.bf16 %v7856
    %v8345 = vunpack.c.h.bf16 %v7856
    %v8346 = vunpack.c.l.bf16 %v7857
    %v8347 = vunpack.c.h.bf16 %v7857
    %v8348 = vunpack.c.l.bf16 %v7858
    %v8349 = vunpack.c.h.bf16 %v7858
    %v8350 = vunpack.c.l.bf16 %v7859
    %v8351 = vunpack.c.h.bf16 %v7859
    %v8352 = vunpack.c.l.bf16 %v7860
    %v8353 = vunpack.c.h.bf16 %v7860
    %v8354 = vunpack.c.l.bf16 %v7861
    %v8355 = vunpack.c.h.bf16 %v7861
    %v8356 = vunpack.c.l.bf16 %v7862
    %v8357 = vunpack.c.h.bf16 %v7862
    %v8358 = vunpack.c.l.bf16 %v7863
    %v8359 = vunpack.c.h.bf16 %v7863
    %v8360 = vunpack.c.l.bf16 %v7864
    %v8361 = vunpack.c.h.bf16 %v7864
    %v8362 = vunpack.c.l.bf16 %v7865
    %v8363 = vunpack.c.h.bf16 %v7865
    %v8364 = vunpack.c.l.bf16 %v7866
    %v8365 = vunpack.c.h.bf16 %v7866
    %v8366 = vunpack.c.l.bf16 %v7867
    %v8367 = vunpack.c.h.bf16 %v7867
    %v8368 = vunpack.c.l.bf16 %v7868
    %v8369 = vunpack.c.h.bf16 %v7868
    %v8370 = vunpack.c.l.bf16 %v7869
    %v8371 = vunpack.c.h.bf16 %v7869
    %v8372 = vunpack.c.l.bf16 %v7870
    %v8373 = vunpack.c.h.bf16 %v7870
    %v8374 = vunpack.c.l.bf16 %v7871
    %v8375 = vunpack.c.h.bf16 %v7871
    %v8376 = vunpack.c.l.bf16 %v7872
    %v8377 = vunpack.c.h.bf16 %v7872
    %v8378 = vunpack.c.l.bf16 %v7873
    %v8379 = vunpack.c.h.bf16 %v7873
    %v8380 = vunpack.c.l.bf16 %v7874
    %v8381 = vunpack.c.h.bf16 %v7874
    %v8382 = vunpack.c.l.bf16 %v7875
    %v8383 = vunpack.c.h.bf16 %v7875
    %v8384 = vunpack.c.l.bf16 %v7876
    %v8385 = vunpack.c.h.bf16 %v7876
    %v8386 = vunpack.c.l.bf16 %v7877
    %v8387 = vunpack.c.h.bf16 %v7877
    %v8388 = vunpack.c.l.bf16 %v7878
    %v8389 = vunpack.c.h.bf16 %v7878
    %v8390 = vunpack.c.l.bf16 %v7879
    %v8391 = vunpack.c.h.bf16 %v7879
    %8392 = vmatpush.msra.mxu0 %v7910
    %8393 = vmatpush.msra.mxu0 %v7908
    %8394 = vmatpush.msra.mxu0 %v7906
    %8395 = vmatpush.msra.mxu0 %v7904
    %8396 = vmatpush.msra.mxu0 %v7902
    %8397 = vmatpush.msra.mxu0 %v7900
    %8398 = vmatpush.msra.mxu0 %v7898
    %8399 = vmatpush.msra.mxu0 %v7896
    %8400 = vmatpush.msra.mxu0 %v7894
    %8401 = vmatpush.msra.mxu0 %v7892
    %8402 = vmatpush.msra.mxu0 %v7890
    %8403 = vmatpush.msra.mxu0 %v7888
    %8404 = vmatpush.msra.mxu0 %v7886
    %8405 = vmatpush.msra.mxu0 %v7884
    %8406 = vmatpush.msra.mxu0 %v7882
    %8407 = vmatpush.msra.mxu0 %v7880
    %8408 = vmatmul.f32.gmra.mxu0 %v6957
    %v8409 = vpop.f32.mrf.mxu0
    %v8410 = vadd.f32 %v81, %v8409
    %8411 = vmatmul.f32.gmra.mxu0 %v7301
    %v8412 = vpop.f32.mrf.mxu0
    %v8413 = vadd.f32 %v83, %v8412
    %8414 = vdwg.mxu0
    %8415 = vmatpush.msra.mxu0 %v7942
    %8416 = vmatpush.msra.mxu0 %v7940
    %8417 = vmatpush.msra.mxu0 %v7938
    %8418 = vmatpush.msra.mxu0 %v7936
    %8419 = vmatpush.msra.mxu0 %v7934
    %8420 = vmatpush.msra.mxu0 %v7932
    %8421 = vmatpush.msra.mxu0 %v7930
    %8422 = vmatpush.msra.mxu0 %v7928
    %8423 = vmatpush.msra.mxu0 %v7926
    %8424 = vmatpush.msra.mxu0 %v7924
    %8425 = vmatpush.msra.mxu0 %v7922
    %8426 = vmatpush.msra.mxu0 %v7920
    %8427 = vmatpush.msra.mxu0 %v7918
    %8428 = vmatpush.msra.mxu0 %v7916
    %8429 = vmatpush.msra.mxu0 %v7914
    %8430 = vmatpush.msra.mxu0 %v7912
    %8431 = vmatmul.f32.gmra.mxu0 %v6977
    %v8432 = vpop.f32.mrf.mxu0
    %v8433 = vadd.f32 %v8410, %v8432
    %8434 = vmatmul.f32.gmra.mxu0 %v7321
    %v8435 = vpop.f32.mrf.mxu0
    %v8436 = vadd.f32 %v8413, %v8435
    %8437 = vdwg.mxu0
    %8438 = vmatpush.msra.mxu0 %v7974
    %8439 = vmatpush.msra.mxu0 %v7972
    %8440 = vmatpush.msra.mxu0 %v7970
    %8441 = vmatpush.msra.mxu0 %v7968
    %8442 = vmatpush.msra.mxu0 %v7966
    %8443 = vmatpush.msra.mxu0 %v7964
    %8444 = vmatpush.msra.mxu0 %v7962
    %8445 = vmatpush.msra.mxu0 %v7960
    %8446 = vmatpush.msra.mxu0 %v7958
    %8447 = vmatpush.msra.mxu0 %v7956
    %8448 = vmatpush.msra.mxu0 %v7954
    %8449 = vmatpush.msra.mxu0 %v7952
    %8450 = vmatpush.msra.mxu0 %v7950
    %8451 = vmatpush.msra.mxu0 %v7948
    %8452 = vmatpush.msra.mxu0 %v7946
    %8453 = vmatpush.msra.mxu0 %v7944
    %8454 = vmatmul.f32.gmra.mxu0 %v7000
    %v8455 = vpop.f32.mrf.mxu0
    %v8456 = vadd.f32 %v8433, %v8455
    %8457 = vmatmul.f32.gmra.mxu0 %v7344
    %v8458 = vpop.f32.mrf.mxu0
    %v8459 = vadd.f32 %v8436, %v8458
    %8460 = vdwg.mxu0
    %8461 = vmatpush.msra.mxu0 %v8006
    %8462 = vmatpush.msra.mxu0 %v8004
    %8463 = vmatpush.msra.mxu0 %v8002
    %8464 = vmatpush.msra.mxu0 %v8000
    %8465 = vmatpush.msra.mxu0 %v7998
    %8466 = vmatpush.msra.mxu0 %v7996
    %8467 = vmatpush.msra.mxu0 %v7994
    %8468 = vmatpush.msra.mxu0 %v7992
    %8469 = vmatpush.msra.mxu0 %v7990
    %8470 = vmatpush.msra.mxu0 %v7988
    %8471 = vmatpush.msra.mxu0 %v7986
    %8472 = vmatpush.msra.mxu0 %v7984
    %8473 = vmatpush.msra.mxu0 %v7982
    %8474 = vmatpush.msra.mxu0 %v7980
    %8475 = vmatpush.msra.mxu0 %v7978
    %8476 = vmatpush.msra.mxu0 %v7976
    %8477 = vmatmul.f32.gmra.mxu0 %v7020
    %v8478 = vpop.f32.mrf.mxu0
    %v8479 = vadd.f32 %v8456, %v8478
    %8480 = vmatmul.f32.gmra.mxu0 %v7364
    %v8481 = vpop.f32.mrf.mxu0
    %v8482 = vadd.f32 %v8459, %v8481
    %8483 = vdwg.mxu0
    %8484 = vmatpush.msra.mxu0 %v8038
    %8485 = vmatpush.msra.mxu0 %v8036
    %8486 = vmatpush.msra.mxu0 %v8034
    %8487 = vmatpush.msra.mxu0 %v8032
    %8488 = vmatpush.msra.mxu0 %v8030
    %8489 = vmatpush.msra.mxu0 %v8028
    %8490 = vmatpush.msra.mxu0 %v8026
    %8491 = vmatpush.msra.mxu0 %v8024
    %8492 = vmatpush.msra.mxu0 %v8022
    %8493 = vmatpush.msra.mxu0 %v8020
    %8494 = vmatpush.msra.mxu0 %v8018
    %8495 = vmatpush.msra.mxu0 %v8016
    %8496 = vmatpush.msra.mxu0 %v8014
    %8497 = vmatpush.msra.mxu0 %v8012
    %8498 = vmatpush.msra.mxu0 %v8010
    %8499 = vmatpush.msra.mxu0 %v8008
    %8500 = vmatmul.f32.gmra.mxu0 %v7043
    %v8501 = vpop.f32.mrf.mxu0
    %v8502 = vadd.f32 %v8479, %v8501
    %8503 = vmatmul.f32.gmra.mxu0 %v7387
    %v8504 = vpop.f32.mrf.mxu0
    %v8505 = vadd.f32 %v8482, %v8504
    %8506 = vdwg.mxu0
    %8507 = vmatpush.msra.mxu0 %v8070
    %8508 = vmatpush.msra.mxu0 %v8068
    %8509 = vmatpush.msra.mxu0 %v8066
    %8510 = vmatpush.msra.mxu0 %v8064
    %8511 = vmatpush.msra.mxu0 %v8062
    %8512 = vmatpush.msra.mxu0 %v8060
    %8513 = vmatpush.msra.mxu0 %v8058
    %8514 = vmatpush.msra.mxu0 %v8056
    %8515 = vmatpush.msra.mxu0 %v8054
    %8516 = vmatpush.msra.mxu0 %v8052
    %8517 = vmatpush.msra.mxu0 %v8050
    %8518 = vmatpush.msra.mxu0 %v8048
    %8519 = vmatpush.msra.mxu0 %v8046
    %8520 = vmatpush.msra.mxu0 %v8044
    %8521 = vmatpush.msra.mxu0 %v8042
    %8522 = vmatpush.msra.mxu0 %v8040
    %8523 = vmatmul.f32.gmra.mxu0 %v7063
    %v8524 = vpop.f32.mrf.mxu0
    %v8525 = vadd.f32 %v8502, %v8524
    %8526 = vmatmul.f32.gmra.mxu0 %v7407
    %v8527 = vpop.f32.mrf.mxu0
    %v8528 = vadd.f32 %v8505, %v8527
    %8529 = vdwg.mxu0
    %8530 = vmatpush.msra.mxu0 %v8102
    %8531 = vmatpush.msra.mxu0 %v8100
    %8532 = vmatpush.msra.mxu0 %v8098
    %8533 = vmatpush.msra.mxu0 %v8096
    %8534 = vmatpush.msra.mxu0 %v8094
    %8535 = vmatpush.msra.mxu0 %v8092
    %8536 = vmatpush.msra.mxu0 %v8090
    %8537 = vmatpush.msra.mxu0 %v8088
    %8538 = vmatpush.msra.mxu0 %v8086
    %8539 = vmatpush.msra.mxu0 %v8084
    %8540 = vmatpush.msra.mxu0 %v8082
    %8541 = vmatpush.msra.mxu0 %v8080
    %8542 = vmatpush.msra.mxu0 %v8078
    %8543 = vmatpush.msra.mxu0 %v8076
    %8544 = vmatpush.msra.mxu0 %v8074
    %8545 = vmatpush.msra.mxu0 %v8072
    %8546 = vmatmul.f32.gmra.mxu0 %v7086
    %v8547 = vpop.f32.mrf.mxu0
    %v8548 = vadd.f32 %v8525, %v8547
    %8549 = vmatmul.f32.gmra.mxu0 %v7430
    %v8550 = vpop.f32.mrf.mxu0
    %v8551 = vadd.f32 %v8528, %v8550
    %8552 = vdwg.mxu0
    %8553 = vmatpush.msra.mxu0 %v8134
    %8554 = vmatpush.msra.mxu0 %v8132
    %8555 = vmatpush.msra.mxu0 %v8130
    %8556 = vmatpush.msra.mxu0 %v8128
    %8557 = vmatpush.msra.mxu0 %v8126
    %8558 = vmatpush.msra.mxu0 %v8124
    %8559 = vmatpush.msra.mxu0 %v8122
    %8560 = vmatpush.msra.mxu0 %v8120
    %8561 = vmatpush.msra.mxu0 %v8118
    %8562 = vmatpush.msra.mxu0 %v8116
    %8563 = vmatpush.msra.mxu0 %v8114
    %8564 = vmatpush.msra.mxu0 %v8112
    %8565 = vmatpush.msra.mxu0 %v8110
    %8566 = vmatpush.msra.mxu0 %v8108
    %8567 = vmatpush.msra.mxu0 %v8106
    %8568 = vmatpush.msra.mxu0 %v8104
    %8569 = vmatmul.f32.gmra.mxu0 %v7106
    %v8570 = vpop.f32.mrf.mxu0
    %v8571 = vadd.f32 %v8548, %v8570
    %8572 = vmatmul.f32.gmra.mxu0 %v7450
    %v8573 = vpop.f32.mrf.mxu0
    %v8574 = vadd.f32 %v8551, %v8573
    %8575 = vdwg.mxu0
    %8576 = vmatpush.msra.mxu0 %v8166
    %8577 = vmatpush.msra.mxu0 %v8164
    %8578 = vmatpush.msra.mxu0 %v8162
    %8579 = vmatpush.msra.mxu0 %v8160
    %8580 = vmatpush.msra.mxu0 %v8158
    %8581 = vmatpush.msra.mxu0 %v8156
    %8582 = vmatpush.msra.mxu0 %v8154
    %8583 = vmatpush.msra.mxu0 %v8152
    %8584 = vmatpush.msra.mxu0 %v8150
    %8585 = vmatpush.msra.mxu0 %v8148
    %8586 = vmatpush.msra.mxu0 %v8146
    %8587 = vmatpush.msra.mxu0 %v8144
    %8588 = vmatpush.msra.mxu0 %v8142
    %8589 = vmatpush.msra.mxu0 %v8140
    %8590 = vmatpush.msra.mxu0 %v8138
    %8591 = vmatpush.msra.mxu0 %v8136
    %8592 = vmatmul.f32.gmra.mxu0 %v7129
    %v8593 = vpop.f32.mrf.mxu0
    %v8594 = vadd.f32 %v8571, %v8593
    %8595 = vmatmul.f32.gmra.mxu0 %v7473
    %v8596 = vpop.f32.mrf.mxu0
    %v8597 = vadd.f32 %v8574, %v8596
    %8598 = vdwg.mxu0
    %8599 = vmatpush.msra.mxu0 %v8198
    %8600 = vmatpush.msra.mxu0 %v8196
    %8601 = vmatpush.msra.mxu0 %v8194
    %8602 = vmatpush.msra.mxu0 %v8192
    %8603 = vmatpush.msra.mxu0 %v8190
    %8604 = vmatpush.msra.mxu0 %v8188
    %8605 = vmatpush.msra.mxu0 %v8186
    %8606 = vmatpush.msra.mxu0 %v8184
    %8607 = vmatpush.msra.mxu0 %v8182
    %8608 = vmatpush.msra.mxu0 %v8180
    %8609 = vmatpush.msra.mxu0 %v8178
    %8610 = vmatpush.msra.mxu0 %v8176
    %8611 = vmatpush.msra.mxu0 %v8174
    %8612 = vmatpush.msra.mxu0 %v8172
    %8613 = vmatpush.msra.mxu0 %v8170
    %8614 = vmatpush.msra.mxu0 %v8168
    %8615 = vmatmul.f32.gmra.mxu0 %v7149
    %v8616 = vpop.f32.mrf.mxu0
    %v8617 = vadd.f32 %v8594, %v8616
    %8618 = vmatmul.f32.gmra.mxu0 %v7493
    %v8619 = vpop.f32.mrf.mxu0
    %v8620 = vadd.f32 %v8597, %v8619
    %8621 = vdwg.mxu0
    %8622 = vmatpush.msra.mxu0 %v8230
    %8623 = vmatpush.msra.mxu0 %v8228
    %8624 = vmatpush.msra.mxu0 %v8226
    %8625 = vmatpush.msra.mxu0 %v8224
    %8626 = vmatpush.msra.mxu0 %v8222
    %8627 = vmatpush.msra.mxu0 %v8220
    %8628 = vmatpush.msra.mxu0 %v8218
    %8629 = vmatpush.msra.mxu0 %v8216
    %8630 = vmatpush.msra.mxu0 %v8214
    %8631 = vmatpush.msra.mxu0 %v8212
    %8632 = vmatpush.msra.mxu0 %v8210
    %8633 = vmatpush.msra.mxu0 %v8208
    %8634 = vmatpush.msra.mxu0 %v8206
    %8635 = vmatpush.msra.mxu0 %v8204
    %8636 = vmatpush.msra.mxu0 %v8202
    %8637 = vmatpush.msra.mxu0 %v8200
    %8638 = vmatmul.f32.gmra.mxu0 %v7172
    %v8639 = vpop.f32.mrf.mxu0
    %v8640 = vadd.f32 %v8617, %v8639
    %8641 = vmatmul.f32.gmra.mxu0 %v7516
    %v8642 = vpop.f32.mrf.mxu0
    %v8643 = vadd.f32 %v8620, %v8642
    %8644 = vdwg.mxu0
    %8645 = vmatpush.msra.mxu0 %v8262
    %8646 = vmatpush.msra.mxu0 %v8260
    %8647 = vmatpush.msra.mxu0 %v8258
    %8648 = vmatpush.msra.mxu0 %v8256
    %8649 = vmatpush.msra.mxu0 %v8254
    %8650 = vmatpush.msra.mxu0 %v8252
    %8651 = vmatpush.msra.mxu0 %v8250
    %8652 = vmatpush.msra.mxu0 %v8248
    %8653 = vmatpush.msra.mxu0 %v8246
    %8654 = vmatpush.msra.mxu0 %v8244
    %8655 = vmatpush.msra.mxu0 %v8242
    %8656 = vmatpush.msra.mxu0 %v8240
    %8657 = vmatpush.msra.mxu0 %v8238
    %8658 = vmatpush.msra.mxu0 %v8236
    %8659 = vmatpush.msra.mxu0 %v8234
    %8660 = vmatpush.msra.mxu0 %v8232
    %8661 = vmatmul.f32.gmra.mxu0 %v7192
    %v8662 = vpop.f32.mrf.mxu0
    %v8663 = vadd.f32 %v8640, %v8662
    %8664 = vmatmul.f32.gmra.mxu0 %v7536
    %v8665 = vpop.f32.mrf.mxu0
    %v8666 = vadd.f32 %v8643, %v8665
    %8667 = vdwg.mxu0
    %8668 = vmatpush.msra.mxu0 %v8294
    %8669 = vmatpush.msra.mxu0 %v8292
    %8670 = vmatpush.msra.mxu0 %v8290
    %8671 = vmatpush.msra.mxu0 %v8288
    %8672 = vmatpush.msra.mxu0 %v8286
    %8673 = vmatpush.msra.mxu0 %v8284
    %8674 = vmatpush.msra.mxu0 %v8282
    %8675 = vmatpush.msra.mxu0 %v8280
    %8676 = vmatpush.msra.mxu0 %v8278
    %8677 = vmatpush.msra.mxu0 %v8276
    %8678 = vmatpush.msra.mxu0 %v8274
    %8679 = vmatpush.msra.mxu0 %v8272
    %8680 = vmatpush.msra.mxu0 %v8270
    %8681 = vmatpush.msra.mxu0 %v8268
    %8682 = vmatpush.msra.mxu0 %v8266
    %8683 = vmatpush.msra.mxu0 %v8264
    %8684 = vmatmul.f32.gmra.mxu0 %v7215
    %v8685 = vpop.f32.mrf.mxu0
    %v8686 = vadd.f32 %v8663, %v8685
    %8687 = vmatmul.f32.gmra.mxu0 %v7559
    %v8688 = vpop.f32.mrf.mxu0
    %v8689 = vadd.f32 %v8666, %v8688
    %8690 = vdwg.mxu0
    %8691 = vmatpush.msra.mxu0 %v8326
    %8692 = vmatpush.msra.mxu0 %v8324
    %8693 = vmatpush.msra.mxu0 %v8322
    %8694 = vmatpush.msra.mxu0 %v8320
    %8695 = vmatpush.msra.mxu0 %v8318
    %8696 = vmatpush.msra.mxu0 %v8316
    %8697 = vmatpush.msra.mxu0 %v8314
    %8698 = vmatpush.msra.mxu0 %v8312
    %8699 = vmatpush.msra.mxu0 %v8310
    %8700 = vmatpush.msra.mxu0 %v8308
    %8701 = vmatpush.msra.mxu0 %v8306
    %8702 = vmatpush.msra.mxu0 %v8304
    %8703 = vmatpush.msra.mxu0 %v8302
    %8704 = vmatpush.msra.mxu0 %v8300
    %8705 = vmatpush.msra.mxu0 %v8298
    %8706 = vmatpush.msra.mxu0 %v8296
    %8707 = vmatmul.f32.gmra.mxu0 %v7235
    %v8708 = vpop.f32.mrf.mxu0
    %v8709 = vadd.f32 %v8686, %v8708
    %8710 = vmatmul.f32.gmra.mxu0 %v7579
    %v8711 = vpop.f32.mrf.mxu0
    %v8712 = vadd.f32 %v8689, %v8711
    %8713 = vdwg.mxu0
    %8714 = vmatpush.msra.mxu0 %v8358
    %8715 = vmatpush.msra.mxu0 %v8356
    %8716 = vmatpush.msra.mxu0 %v8354
    %8717 = vmatpush.msra.mxu0 %v8352
    %8718 = vmatpush.msra.mxu0 %v8350
    %8719 = vmatpush.msra.mxu0 %v8348
    %8720 = vmatpush.msra.mxu0 %v8346
    %8721 = vmatpush.msra.mxu0 %v8344
    %8722 = vmatpush.msra.mxu0 %v8342
    %8723 = vmatpush.msra.mxu0 %v8340
    %8724 = vmatpush.msra.mxu0 %v8338
    %8725 = vmatpush.msra.mxu0 %v8336
    %8726 = vmatpush.msra.mxu0 %v8334
    %8727 = vmatpush.msra.mxu0 %v8332
    %8728 = vmatpush.msra.mxu0 %v8330
    %8729 = vmatpush.msra.mxu0 %v8328
    %8730 = vmatmul.f32.gmra.mxu0 %v7258
    %v8731 = vpop.f32.mrf.mxu0
    %v8732 = vadd.f32 %v8709, %v8731
    %8733 = vmatmul.f32.gmra.mxu0 %v7602
    %v8734 = vpop.f32.mrf.mxu0
    %v8735 = vadd.f32 %v8712, %v8734
    %8736 = vdwg.mxu0
    %8737 = vmatpush.msra.mxu0 %v8390
    %8738 = vmatpush.msra.mxu0 %v8388
    %8739 = vmatpush.msra.mxu0 %v8386
    %8740 = vmatpush.msra.mxu0 %v8384
    %8741 = vmatpush.msra.mxu0 %v8382
    %8742 = vmatpush.msra.mxu0 %v8380
    %8743 = vmatpush.msra.mxu0 %v8378
    %8744 = vmatpush.msra.mxu0 %v8376
    %8745 = vmatpush.msra.mxu0 %v8374
    %8746 = vmatpush.msra.mxu0 %v8372
    %8747 = vmatpush.msra.mxu0 %v8370
    %8748 = vmatpush.msra.mxu0 %v8368
    %8749 = vmatpush.msra.mxu0 %v8366
    %8750 = vmatpush.msra.mxu0 %v8364
    %8751 = vmatpush.msra.mxu0 %v8362
    %8752 = vmatpush.msra.mxu0 %v8360
    %8753 = vmatmul.f32.gmra.mxu0 %v7278
    %v8754 = vpop.f32.mrf.mxu0
    %v8755 = vadd.f32 %v8732, %v8754
    %8756 = vmatmul.f32.gmra.mxu0 %v7622
    %v8757 = vpop.f32.mrf.mxu0
    %v8758 = vadd.f32 %v8735, %v8757
    %8759 = vdwg.mxu0
    %8760 = vmatpush.msra.mxu0 %v7911
    %8761 = vmatpush.msra.mxu0 %v7909
    %8762 = vmatpush.msra.mxu0 %v7907
    %8763 = vmatpush.msra.mxu0 %v7905
    %8764 = vmatpush.msra.mxu0 %v7903
    %8765 = vmatpush.msra.mxu0 %v7901
    %8766 = vmatpush.msra.mxu0 %v7899
    %8767 = vmatpush.msra.mxu0 %v7897
    %8768 = vmatpush.msra.mxu0 %v7895
    %8769 = vmatpush.msra.mxu0 %v7893
    %8770 = vmatpush.msra.mxu0 %v7891
    %8771 = vmatpush.msra.mxu0 %v7889
    %8772 = vmatpush.msra.mxu0 %v7887
    %8773 = vmatpush.msra.mxu0 %v7885
    %8774 = vmatpush.msra.mxu0 %v7883
    %8775 = vmatpush.msra.mxu0 %v7881
    %8776 = vmatmul.f32.gmra.mxu0 %v6957
    %v8777 = vpop.f32.mrf.mxu0
    %v8778 = vadd.f32 %v82, %v8777
    %8779 = vmatmul.f32.gmra.mxu0 %v7301
    %v8780 = vpop.f32.mrf.mxu0
    %v8781 = vadd.f32 %v84, %v8780
    %8782 = vdwg.mxu0
    %8783 = vmatpush.msra.mxu0 %v7943
    %8784 = vmatpush.msra.mxu0 %v7941
    %8785 = vmatpush.msra.mxu0 %v7939
    %8786 = vmatpush.msra.mxu0 %v7937
    %8787 = vmatpush.msra.mxu0 %v7935
    %8788 = vmatpush.msra.mxu0 %v7933
    %8789 = vmatpush.msra.mxu0 %v7931
    %8790 = vmatpush.msra.mxu0 %v7929
    %8791 = vmatpush.msra.mxu0 %v7927
    %8792 = vmatpush.msra.mxu0 %v7925
    %8793 = vmatpush.msra.mxu0 %v7923
    %8794 = vmatpush.msra.mxu0 %v7921
    %8795 = vmatpush.msra.mxu0 %v7919
    %8796 = vmatpush.msra.mxu0 %v7917
    %8797 = vmatpush.msra.mxu0 %v7915
    %8798 = vmatpush.msra.mxu0 %v7913
    %8799 = vmatmul.f32.gmra.mxu0 %v6977
    %v8800 = vpop.f32.mrf.mxu0
    %v8801 = vadd.f32 %v8778, %v8800
    %8802 = vmatmul.f32.gmra.mxu0 %v7321
    %v8803 = vpop.f32.mrf.mxu0
    %v8804 = vadd.f32 %v8781, %v8803
    %8805 = vdwg.mxu0
    %8806 = vmatpush.msra.mxu0 %v7975
    %8807 = vmatpush.msra.mxu0 %v7973
    %8808 = vmatpush.msra.mxu0 %v7971
    %8809 = vmatpush.msra.mxu0 %v7969
    %8810 = vmatpush.msra.mxu0 %v7967
    %8811 = vmatpush.msra.mxu0 %v7965
    %8812 = vmatpush.msra.mxu0 %v7963
    %8813 = vmatpush.msra.mxu0 %v7961
    %8814 = vmatpush.msra.mxu0 %v7959
    %8815 = vmatpush.msra.mxu0 %v7957
    %8816 = vmatpush.msra.mxu0 %v7955
    %8817 = vmatpush.msra.mxu0 %v7953
    %8818 = vmatpush.msra.mxu0 %v7951
    %8819 = vmatpush.msra.mxu0 %v7949
    %8820 = vmatpush.msra.mxu0 %v7947
    %8821 = vmatpush.msra.mxu0 %v7945
    %8822 = vmatmul.f32.gmra.mxu0 %v7000
    %v8823 = vpop.f32.mrf.mxu0
    %v8824 = vadd.f32 %v8801, %v8823
    %8825 = vmatmul.f32.gmra.mxu0 %v7344
    %v8826 = vpop.f32.mrf.mxu0
    %v8827 = vadd.f32 %v8804, %v8826
    %8828 = vdwg.mxu0
    %8829 = vmatpush.msra.mxu0 %v8007
    %8830 = vmatpush.msra.mxu0 %v8005
    %8831 = vmatpush.msra.mxu0 %v8003
    %8832 = vmatpush.msra.mxu0 %v8001
    %8833 = vmatpush.msra.mxu0 %v7999
    %8834 = vmatpush.msra.mxu0 %v7997
    %8835 = vmatpush.msra.mxu0 %v7995
    %8836 = vmatpush.msra.mxu0 %v7993
    %8837 = vmatpush.msra.mxu0 %v7991
    %8838 = vmatpush.msra.mxu0 %v7989
    %8839 = vmatpush.msra.mxu0 %v7987
    %8840 = vmatpush.msra.mxu0 %v7985
    %8841 = vmatpush.msra.mxu0 %v7983
    %8842 = vmatpush.msra.mxu0 %v7981
    %8843 = vmatpush.msra.mxu0 %v7979
    %8844 = vmatpush.msra.mxu0 %v7977
    %8845 = vmatmul.f32.gmra.mxu0 %v7020
    %v8846 = vpop.f32.mrf.mxu0
    %v8847 = vadd.f32 %v8824, %v8846
    %8848 = vmatmul.f32.gmra.mxu0 %v7364
    %v8849 = vpop.f32.mrf.mxu0
    %v8850 = vadd.f32 %v8827, %v8849
    %8851 = vdwg.mxu0
    %8852 = vmatpush.msra.mxu0 %v8039
    %8853 = vmatpush.msra.mxu0 %v8037
    %8854 = vmatpush.msra.mxu0 %v8035
    %8855 = vmatpush.msra.mxu0 %v8033
    %8856 = vmatpush.msra.mxu0 %v8031
    %8857 = vmatpush.msra.mxu0 %v8029
    %8858 = vmatpush.msra.mxu0 %v8027
    %8859 = vmatpush.msra.mxu0 %v8025
    %8860 = vmatpush.msra.mxu0 %v8023
    %8861 = vmatpush.msra.mxu0 %v8021
    %8862 = vmatpush.msra.mxu0 %v8019
    %8863 = vmatpush.msra.mxu0 %v8017
    %8864 = vmatpush.msra.mxu0 %v8015
    %8865 = vmatpush.msra.mxu0 %v8013
    %8866 = vmatpush.msra.mxu0 %v8011
    %8867 = vmatpush.msra.mxu0 %v8009
    %8868 = vmatmul.f32.gmra.mxu0 %v7043
    %v8869 = vpop.f32.mrf.mxu0
    %v8870 = vadd.f32 %v8847, %v8869
    %8871 = vmatmul.f32.gmra.mxu0 %v7387
    %v8872 = vpop.f32.mrf.mxu0
    %v8873 = vadd.f32 %v8850, %v8872
    %8874 = vdwg.mxu0
    %8875 = vmatpush.msra.mxu0 %v8071
    %8876 = vmatpush.msra.mxu0 %v8069
    %8877 = vmatpush.msra.mxu0 %v8067
    %8878 = vmatpush.msra.mxu0 %v8065
    %8879 = vmatpush.msra.mxu0 %v8063
    %8880 = vmatpush.msra.mxu0 %v8061
    %8881 = vmatpush.msra.mxu0 %v8059
    %8882 = vmatpush.msra.mxu0 %v8057
    %8883 = vmatpush.msra.mxu0 %v8055
    %8884 = vmatpush.msra.mxu0 %v8053
    %8885 = vmatpush.msra.mxu0 %v8051
    %8886 = vmatpush.msra.mxu0 %v8049
    %8887 = vmatpush.msra.mxu0 %v8047
    %8888 = vmatpush.msra.mxu0 %v8045
    %8889 = vmatpush.msra.mxu0 %v8043
    %8890 = vmatpush.msra.mxu0 %v8041
    %8891 = vmatmul.f32.gmra.mxu0 %v7063
    %v8892 = vpop.f32.mrf.mxu0
    %v8893 = vadd.f32 %v8870, %v8892
    %8894 = vmatmul.f32.gmra.mxu0 %v7407
    %v8895 = vpop.f32.mrf.mxu0
    %v8896 = vadd.f32 %v8873, %v8895
    %8897 = vdwg.mxu0
    %8898 = vmatpush.msra.mxu0 %v8103
    %8899 = vmatpush.msra.mxu0 %v8101
    %8900 = vmatpush.msra.mxu0 %v8099
    %8901 = vmatpush.msra.mxu0 %v8097
    %8902 = vmatpush.msra.mxu0 %v8095
    %8903 = vmatpush.msra.mxu0 %v8093
    %8904 = vmatpush.msra.mxu0 %v8091
    %8905 = vmatpush.msra.mxu0 %v8089
    %8906 = vmatpush.msra.mxu0 %v8087
    %8907 = vmatpush.msra.mxu0 %v8085
    %8908 = vmatpush.msra.mxu0 %v8083
    %8909 = vmatpush.msra.mxu0 %v8081
    %8910 = vmatpush.msra.mxu0 %v8079
    %8911 = vmatpush.msra.mxu0 %v8077
    %8912 = vmatpush.msra.mxu0 %v8075
    %8913 = vmatpush.msra.mxu0 %v8073
    %8914 = vmatmul.f32.gmra.mxu0 %v7086
    %v8915 = vpop.f32.mrf.mxu0
    %v8916 = vadd.f32 %v8893, %v8915
    %8917 = vmatmul.f32.gmra.mxu0 %v7430
    %v8918 = vpop.f32.mrf.mxu0
    %v8919 = vadd.f32 %v8896, %v8918
    %8920 = vdwg.mxu0
    %8921 = vmatpush.msra.mxu0 %v8135
    %8922 = vmatpush.msra.mxu0 %v8133
    %8923 = vmatpush.msra.mxu0 %v8131
    %8924 = vmatpush.msra.mxu0 %v8129
    %8925 = vmatpush.msra.mxu0 %v8127
    %8926 = vmatpush.msra.mxu0 %v8125
    %8927 = vmatpush.msra.mxu0 %v8123
    %8928 = vmatpush.msra.mxu0 %v8121
    %8929 = vmatpush.msra.mxu0 %v8119
    %8930 = vmatpush.msra.mxu0 %v8117
    %8931 = vmatpush.msra.mxu0 %v8115
    %8932 = vmatpush.msra.mxu0 %v8113
    %8933 = vmatpush.msra.mxu0 %v8111
    %8934 = vmatpush.msra.mxu0 %v8109
    %8935 = vmatpush.msra.mxu0 %v8107
    %8936 = vmatpush.msra.mxu0 %v8105
    %8937 = vmatmul.f32.gmra.mxu0 %v7106
    %v8938 = vpop.f32.mrf.mxu0
    %v8939 = vadd.f32 %v8916, %v8938
    %8940 = vmatmul.f32.gmra.mxu0 %v7450
    %v8941 = vpop.f32.mrf.mxu0
    %v8942 = vadd.f32 %v8919, %v8941
    %8943 = vdwg.mxu0
    %8944 = vmatpush.msra.mxu0 %v8167
    %8945 = vmatpush.msra.mxu0 %v8165
    %8946 = vmatpush.msra.mxu0 %v8163
    %8947 = vmatpush.msra.mxu0 %v8161
    %8948 = vmatpush.msra.mxu0 %v8159
    %8949 = vmatpush.msra.mxu0 %v8157
    %8950 = vmatpush.msra.mxu0 %v8155
    %8951 = vmatpush.msra.mxu0 %v8153
    %8952 = vmatpush.msra.mxu0 %v8151
    %8953 = vmatpush.msra.mxu0 %v8149
    %8954 = vmatpush.msra.mxu0 %v8147
    %8955 = vmatpush.msra.mxu0 %v8145
    %8956 = vmatpush.msra.mxu0 %v8143
    %8957 = vmatpush.msra.mxu0 %v8141
    %8958 = vmatpush.msra.mxu0 %v8139
    %8959 = vmatpush.msra.mxu0 %v8137
    %8960 = vmatmul.f32.gmra.mxu0 %v7129
    %v8961 = vpop.f32.mrf.mxu0
    %v8962 = vadd.f32 %v8939, %v8961
    %8963 = vmatmul.f32.gmra.mxu0 %v7473
    %v8964 = vpop.f32.mrf.mxu0
    %v8965 = vadd.f32 %v8942, %v8964
    %8966 = vdwg.mxu0
    %8967 = vmatpush.msra.mxu0 %v8199
    %8968 = vmatpush.msra.mxu0 %v8197
    %8969 = vmatpush.msra.mxu0 %v8195
    %8970 = vmatpush.msra.mxu0 %v8193
    %8971 = vmatpush.msra.mxu0 %v8191
    %8972 = vmatpush.msra.mxu0 %v8189
    %8973 = vmatpush.msra.mxu0 %v8187
    %8974 = vmatpush.msra.mxu0 %v8185
    %8975 = vmatpush.msra.mxu0 %v8183
    %8976 = vmatpush.msra.mxu0 %v8181
    %8977 = vmatpush.msra.mxu0 %v8179
    %8978 = vmatpush.msra.mxu0 %v8177
    %8979 = vmatpush.msra.mxu0 %v8175
    %8980 = vmatpush.msra.mxu0 %v8173
    %8981 = vmatpush.msra.mxu0 %v8171
    %8982 = vmatpush.msra.mxu0 %v8169
    %8983 = vmatmul.f32.gmra.mxu0 %v7149
    %v8984 = vpop.f32.mrf.mxu0
    %v8985 = vadd.f32 %v8962, %v8984
    %8986 = vmatmul.f32.gmra.mxu0 %v7493
    %v8987 = vpop.f32.mrf.mxu0
    %v8988 = vadd.f32 %v8965, %v8987
    %8989 = vdwg.mxu0
    %8990 = vmatpush.msra.mxu0 %v8231
    %8991 = vmatpush.msra.mxu0 %v8229
    %8992 = vmatpush.msra.mxu0 %v8227
    %8993 = vmatpush.msra.mxu0 %v8225
    %8994 = vmatpush.msra.mxu0 %v8223
    %8995 = vmatpush.msra.mxu0 %v8221
    %8996 = vmatpush.msra.mxu0 %v8219
    %8997 = vmatpush.msra.mxu0 %v8217
    %8998 = vmatpush.msra.mxu0 %v8215
    %8999 = vmatpush.msra.mxu0 %v8213
    %9000 = vmatpush.msra.mxu0 %v8211
    %9001 = vmatpush.msra.mxu0 %v8209
    %9002 = vmatpush.msra.mxu0 %v8207
    %9003 = vmatpush.msra.mxu0 %v8205
    %9004 = vmatpush.msra.mxu0 %v8203
    %9005 = vmatpush.msra.mxu0 %v8201
    %9006 = vmatmul.f32.gmra.mxu0 %v7172
    %v9007 = vpop.f32.mrf.mxu0
    %v9008 = vadd.f32 %v8985, %v9007
    %9009 = vmatmul.f32.gmra.mxu0 %v7516
    %v9010 = vpop.f32.mrf.mxu0
    %v9011 = vadd.f32 %v8988, %v9010
    %9012 = vdwg.mxu0
    %9013 = vmatpush.msra.mxu0 %v8263
    %9014 = vmatpush.msra.mxu0 %v8261
    %9015 = vmatpush.msra.mxu0 %v8259
    %9016 = vmatpush.msra.mxu0 %v8257
    %9017 = vmatpush.msra.mxu0 %v8255
    %9018 = vmatpush.msra.mxu0 %v8253
    %9019 = vmatpush.msra.mxu0 %v8251
    %9020 = vmatpush.msra.mxu0 %v8249
    %9021 = vmatpush.msra.mxu0 %v8247
    %9022 = vmatpush.msra.mxu0 %v8245
    %9023 = vmatpush.msra.mxu0 %v8243
    %9024 = vmatpush.msra.mxu0 %v8241
    %9025 = vmatpush.msra.mxu0 %v8239
    %9026 = vmatpush.msra.mxu0 %v8237
    %9027 = vmatpush.msra.mxu0 %v8235
    %9028 = vmatpush.msra.mxu0 %v8233
    %9029 = vmatmul.f32.gmra.mxu0 %v7192
    %v9030 = vpop.f32.mrf.mxu0
    %v9031 = vadd.f32 %v9008, %v9030
    %9032 = vmatmul.f32.gmra.mxu0 %v7536
    %v9033 = vpop.f32.mrf.mxu0
    %v9034 = vadd.f32 %v9011, %v9033
    %9035 = vdwg.mxu0
    %9036 = vmatpush.msra.mxu0 %v8295
    %9037 = vmatpush.msra.mxu0 %v8293
    %9038 = vmatpush.msra.mxu0 %v8291
    %9039 = vmatpush.msra.mxu0 %v8289
    %9040 = vmatpush.msra.mxu0 %v8287
    %9041 = vmatpush.msra.mxu0 %v8285
    %9042 = vmatpush.msra.mxu0 %v8283
    %9043 = vmatpush.msra.mxu0 %v8281
    %9044 = vmatpush.msra.mxu0 %v8279
    %9045 = vmatpush.msra.mxu0 %v8277
    %9046 = vmatpush.msra.mxu0 %v8275
    %9047 = vmatpush.msra.mxu0 %v8273
    %9048 = vmatpush.msra.mxu0 %v8271
    %9049 = vmatpush.msra.mxu0 %v8269
    %9050 = vmatpush.msra.mxu0 %v8267
    %9051 = vmatpush.msra.mxu0 %v8265
    %9052 = vmatmul.f32.gmra.mxu0 %v7215
    %v9053 = vpop.f32.mrf.mxu0
    %v9054 = vadd.f32 %v9031, %v9053
    %9055 = vmatmul.f32.gmra.mxu0 %v7559
    %v9056 = vpop.f32.mrf.mxu0
    %v9057 = vadd.f32 %v9034, %v9056
    %9058 = vdwg.mxu0
    %9059 = vmatpush.msra.mxu0 %v8327
    %9060 = vmatpush.msra.mxu0 %v8325
    %9061 = vmatpush.msra.mxu0 %v8323
    %9062 = vmatpush.msra.mxu0 %v8321
    %9063 = vmatpush.msra.mxu0 %v8319
    %9064 = vmatpush.msra.mxu0 %v8317
    %9065 = vmatpush.msra.mxu0 %v8315
    %9066 = vmatpush.msra.mxu0 %v8313
    %9067 = vmatpush.msra.mxu0 %v8311
    %9068 = vmatpush.msra.mxu0 %v8309
    %9069 = vmatpush.msra.mxu0 %v8307
    %9070 = vmatpush.msra.mxu0 %v8305
    %9071 = vmatpush.msra.mxu0 %v8303
    %9072 = vmatpush.msra.mxu0 %v8301
    %9073 = vmatpush.msra.mxu0 %v8299
    %9074 = vmatpush.msra.mxu0 %v8297
    %9075 = vmatmul.f32.gmra.mxu0 %v7235
    %v9076 = vpop.f32.mrf.mxu0
    %v9077 = vadd.f32 %v9054, %v9076
    %9078 = vmatmul.f32.gmra.mxu0 %v7579
    %v9079 = vpop.f32.mrf.mxu0
    %v9080 = vadd.f32 %v9057, %v9079
    %9081 = vdwg.mxu0
    %9082 = vmatpush.msra.mxu0 %v8359
    %9083 = vmatpush.msra.mxu0 %v8357
    %9084 = vmatpush.msra.mxu0 %v8355
    %9085 = vmatpush.msra.mxu0 %v8353
    %9086 = vmatpush.msra.mxu0 %v8351
    %9087 = vmatpush.msra.mxu0 %v8349
    %9088 = vmatpush.msra.mxu0 %v8347
    %9089 = vmatpush.msra.mxu0 %v8345
    %9090 = vmatpush.msra.mxu0 %v8343
    %9091 = vmatpush.msra.mxu0 %v8341
    %9092 = vmatpush.msra.mxu0 %v8339
    %9093 = vmatpush.msra.mxu0 %v8337
    %9094 = vmatpush.msra.mxu0 %v8335
    %9095 = vmatpush.msra.mxu0 %v8333
    %9096 = vmatpush.msra.mxu0 %v8331
    %9097 = vmatpush.msra.mxu0 %v8329
    %9098 = vmatmul.f32.gmra.mxu0 %v7258
    %v9099 = vpop.f32.mrf.mxu0
    %v9100 = vadd.f32 %v9077, %v9099
    %9101 = vmatmul.f32.gmra.mxu0 %v7602
    %v9102 = vpop.f32.mrf.mxu0
    %v9103 = vadd.f32 %v9080, %v9102
    %9104 = vdwg.mxu0
    %9105 = vmatpush.msra.mxu0 %v8391
    %9106 = vmatpush.msra.mxu0 %v8389
    %9107 = vmatpush.msra.mxu0 %v8387
    %9108 = vmatpush.msra.mxu0 %v8385
    %9109 = vmatpush.msra.mxu0 %v8383
    %9110 = vmatpush.msra.mxu0 %v8381
    %9111 = vmatpush.msra.mxu0 %v8379
    %9112 = vmatpush.msra.mxu0 %v8377
    %9113 = vmatpush.msra.mxu0 %v8375
    %9114 = vmatpush.msra.mxu0 %v8373
    %9115 = vmatpush.msra.mxu0 %v8371
    %9116 = vmatpush.msra.mxu0 %v8369
    %9117 = vmatpush.msra.mxu0 %v8367
    %9118 = vmatpush.msra.mxu0 %v8365
    %9119 = vmatpush.msra.mxu0 %v8363
    %9120 = vmatpush.msra.mxu0 %v8361
    %9121 = vmatmul.f32.gmra.mxu0 %v7278
    %v9122 = vpop.f32.mrf.mxu0
    %v9123 = vadd.f32 %v9100, %v9122
    %9124 = vmatmul.f32.gmra.mxu0 %v7622
    %v9125 = vpop.f32.mrf.mxu0
    %v9126 = vadd.f32 %v9103, %v9125
    %9127 = vdwg.mxu0
    %v9128 = vadd.f32 %v8755, %v9123
    %9129 = vadd.xlane.f32.xlu0 %v9128
    %v9130 = vpop.xlane.xlu0 %9129
    %v9131 = vadd.f32 %v8758, %v9126
    %9132 = vadd.xlane.f32.xlu0 %v9131
    %v9133 = vpop.xlane.xlu0 %9132
    %v9134 = vrcp.pop 256.0
    %v9135 = vmul.f32 256.0, %v9134
    %v9136 = vsub.f32 1.0, %v9135
    %v9137 = vmul.f32 %v9134, %v9136
    %v9138 = vadd.f32 %v9134, %v9137
    %vm9139 = vweird.f32 %v9134
    %v9140 = vsel %vm9139, %v9134, %v9138
    %v9141 = vmul.f32 %v9130, %v9140
    %v9142 = vmul.f32 %v9133, %v9140
    %v9143 = vsub.f32 %v8755, %v9141
    %v9144 = vsub.f32 %v9123, %v9141
    %v9145 = vsub.f32 %v8758, %v9142
    %v9146 = vsub.f32 %v9126, %v9142
    %v9147 = vmul.f32 %v9143, %v9143
    %v9148 = vmul.f32 %v9144, %v9144
    %v9149 = vmul.f32 %v9145, %v9145
    %v9150 = vmul.f32 %v9146, %v9146
    %v9151 = vadd.f32 %v9147, %v9148
    %9152 = vadd.xlane.f32.xlu0 %v9151
    %v9153 = vpop.xlane.xlu0 %9152
    %v9154 = vadd.f32 %v9149, %v9150
    %9155 = vadd.xlane.f32.xlu0 %v9154
    %v9156 = vpop.xlane.xlu0 %9155
    %v9157 = vmul.f32 %v9153, %v9140
    %v9158 = vmul.f32 %v9156, %v9140
    %v9159 = vadd.f32 %v9157, 1e-06
    %v9160 = vadd.f32 %v9158, 1e-06
    %v9161 = vrsqrt.pop %v9159
    %v9162 = vmul.f32 %v9161, %v9159
    %v9163 = vmul.f32 %v9162, %v9161
    %v9164 = vmul.f32 0.5, %v9163
    %v9165 = vsub.f32 1.5, %v9164
    %v9166 = vmul.f32 %v9161, %v9165
    %vm9167 = vweird.f32 %v9159
    %vm9168 = vweird.f32 %v9161
    %vm9169 = vmor %vm9167, %vm9168
    %v9170 = vsel %vm9169, %v9161, %v9166
    %v9171 = vrsqrt.pop %v9160
    %v9172 = vmul.f32 %v9171, %v9160
    %v9173 = vmul.f32 %v9172, %v9171
    %v9174 = vmul.f32 0.5, %v9173
    %v9175 = vsub.f32 1.5, %v9174
    %v9176 = vmul.f32 %v9171, %v9175
    %vm9177 = vweird.f32 %v9160
    %vm9178 = vweird.f32 %v9171
    %vm9179 = vmor %vm9177, %vm9178
    %v9180 = vsel %vm9179, %v9171, %v9176
    %v9181 = vmul.f32 %v9143, %v9170
    %v9182 = vmul.f32 %v9144, %v9170
    %v9183 = vmul.f32 %v9145, %v9180
    %v9184 = vmul.f32 %v9146, %v9180
    %v9185 = vld [vmem:[#allocation8] ss:$2 sm:$0x3]
    %v9187 = vperm.slane %v9185, 0
    %v9188 = vperm.slane %v9185, 1
    %v9191 = vmul.f32 %v9181, %v9187
    %v9192 = vmul.f32 %v9182, %v9188
    %v9193 = vmul.f32 %v9183, %v9187
    %v9194 = vmul.f32 %v9184, %v9188
    %s9195 = scalar_lea.vmem [#allocation8], 1
    %v9196 = vld [vmem:[%s9195] ss:$2 sm:$0x3]
    %v9198 = vperm.slane %v9196, 0
    %v9199 = vperm.slane %v9196, 1
    %v9202 = vadd.f32 %v9191, %v9198
    %v9203 = vadd.f32 %v9192, %v9199
    %v9204 = vadd.f32 %v9193, %v9198
    %v9205 = vadd.f32 %v9194, %v9199
    %9206 = vst [vmem:[#allocation10] sm:$0xff] %v9202
    %9207 = vst [vmem:[#allocation10 + $0x8] sm:$0xff] %v9203
    %9208 = vst [vmem:[#allocation10 + $0x10] sm:$0xff] %v9204
    %9209 = vst [vmem:[#allocation10 + $0x18] sm:$0xff] %v9205
    // Predicated region
    $region34: #{tpu_custom_call.1} parent=1 // pred_check
      _
    $region35: #{tpu_custom_call.1} parent=1 // pred_check_branch
      %9211 = sbr.rel (0) target = $region37
    $region36: #{tpu_custom_call.1} parent=1 // pred_region
      %9213 = vsyncadd [#allocation4], 0
      %s9214 = sshll.u32 [#allocation10], 4
      %s9215 = int_to_ptr.vmem [resolvable:$true] %s9214
      %s9216 = sshll.u32 %s4, 4
      %s9217 = int_to_ptr.hbm [resolvable:$true] %s9216
      %9222 = dma.vmem_to_hbm [thread:$0]  %s9215, 512, %s9217, [#allocation4], 256, 256, 16
    $region37: #{tpu_custom_call.1} parent=1 // pred_fallthru
      _
    // Predicated region
    $region38: #{tpu_custom_call.1} parent=1 // pred_check
      _
    $region39: #{tpu_custom_call.1} parent=1 // pred_check_branch
      %9224 = sbr.rel (0) target = $region41
    $region40: #{tpu_custom_call.1} parent=1 // pred_region
      _
    $region41: #{tpu_custom_call.1} parent=1 // pred_fallthru
      _
    // Predicated region
    $region42: #{tpu_custom_call.1} parent=1 // pred_check
      _
    $region43: #{tpu_custom_call.1} parent=1 // pred_check_branch
      %9226 = sbr.rel (0) target = $region45
    $region44: #{tpu_custom_call.1} parent=1 // pred_region
      %9228 = dma.done [#allocation4], 512
    $region45: #{tpu_custom_call.1} parent=1 // pred_fallthru
      _
    // Predicated region
    $region46: #{tpu_custom_call.1} parent=1 // pred_check
      _
    $region47: #{tpu_custom_call.1} parent=1 // pred_check_branch
      %9230 = sbr.rel (0) target = $region49
    $region48: #{tpu_custom_call.1} parent=1 // pred_region
      _
    $region49: #{tpu_custom_call.1} parent=1 // pred_fallthru
      _
    %9231 = vsyncpa [#allocation3], 1
    %9232 = vsyncpa [#allocation6], 1
    %9233 = vsyncpa [#allocation9], 1
    %9234 = vsyncpa [#allocation4], 1

</llo_original>
